<compile_context>
chip_gen: v5e
topology: v5e:2x2
jax: 0.10.0
libtpu: 0.0.40
codegen_flags: <defaults>
</compile_context>

<pallas_src>
import functools

import jax
import jax.numpy as jnp
from jax.experimental import pallas as pl
from jax.experimental.pallas import tpu as pltpu


# ------------------------------ Fused kernel --------------------------------
def fused_convblock_kernel(x_ref, w1_ref, w2_ref, s1_ref, b1_ref, s2_ref,
                           b2_ref, o_ref, y1_buf, *, stride: int, tile_h: int,
                           wo1: int, acc_rows_l1: int, acc_rows_l2: int):
    """One (batch, row-tile) step of the fused ConvBlock.

    x_ref:  (Hp, Wp, Cin)         padded bf16 image for this batch element
    w1_ref: (3, 3, Cin, C1)       dense block-diagonal HWIO weight, layer 1
    w2_ref: (3, 3, C1, C2)        dense block-diagonal HWIO weight, layer 2
    s*_ref/b*_ref: (1, C)         folded BN scale / bias (f32)
    o_ref:  (TILE_H, Wo, C2)      output row-tile
    y1_buf: (TILE_H+2, Wo+16, C1) VMEM-only bf16 layer-1 intermediate (padded)
    """
    s = stride
    th = tile_h
    rows1 = th + 2                      # layer-1 rows incl. top/bottom halo
    PADL = 8                            # aligned left padding in y1_buf
    Cin = x_ref.shape[-1]
    C1 = w1_ref.shape[-1]
    C2 = w2_ref.shape[-1]

    ht = pl.program_id(1)
    n_ht = pl.num_programs(1)
    base = pl.multiple_of(ht * (th * s), th * s)   # first padded-x row of tile

    s1 = s1_ref[...]
    b1 = b1_ref[...]
    s2 = s2_ref[...]
    b2 = b2_ref[...]

    # ---- invariant zero-padding columns: written once per image (h axis is
    # "arbitrary", so this runs before any other row-tile of this image). ----
    @pl.when(ht == 0)
    def _():
        zcols = jnp.zeros((rows1, PADL, C1), y1_buf.dtype)
        y1_buf[:, 0:PADL, :] = zcols
        y1_buf[:, PADL + wo1:PADL + wo1 + 8, :] = zcols

    # ---------------- layer 1: 3x3 grouped conv (stride s) + BN + ReLU ------
    # Row-chunked, value-carried f32 accumulation: one store per chunk, no
    # per-tap VMEM accumulator read-modify-write.
    for r0 in range(0, rows1, acc_rows_l1):
        rc = min(acc_rows_l1, rows1 - r0)
        acc = None
        for ky in range(3):
            for kx in range(3):
                row0 = base + r0 * s + ky
                if s == 1:
                    patch = x_ref[pl.ds(row0, rc), pl.ds(kx, wo1), :]
                else:
                    patch = x_ref[pl.ds(row0, rc, stride=s),
                                  pl.ds(kx, wo1, stride=s), :]
                contrib = jnp.dot(patch.reshape(rc * wo1, Cin),
                                  w1_ref[ky, kx],
                                  preferred_element_type=jnp.float32)
                acc = contrib if acc is None else acc + contrib
        y1 = jnp.maximum(acc * s1 + b1, 0.0)
        y1_buf[r0:r0 + rc, PADL:PADL + wo1, :] = (
            y1.reshape(rc, wo1, C1).astype(y1_buf.dtype))

    # zero-padding rows for layer 2 at the image top/bottom boundary
    zrow = jnp.zeros((1, PADL + wo1 + 8, C1), y1_buf.dtype)

    @pl.when(ht == 0)
    def _():
        y1_buf[0:1, :, :] = zrow

    @pl.when(ht == n_ht - 1)
    def _():
        y1_buf[rows1 - 1:rows1, :, :] = zrow

    # ---------------- layer 2: 3x3 grouped conv (stride 1) + BN -------------
    for r0 in range(0, th, acc_rows_l2):
        rc = min(acc_rows_l2, th - r0)
        acc = None
        for ky in range(3):
            for kx in range(3):
                patch = y1_buf[r0 + ky:r0 + ky + rc,
                               PADL - 1 + kx:PADL - 1 + kx + wo1, :]
                contrib = jnp.dot(patch.reshape(rc * wo1, C1),
                                  w2_ref[ky, kx],
                                  preferred_element_type=jnp.float32)
                acc = contrib if acc is None else acc + contrib
        y2 = acc * s2 + b2                        # no activation on layer 2
        o_ref[r0:r0 + rc, :, :] = y2.reshape(rc, wo1, C2).astype(o_ref.dtype)


def _vmem_limit_bytes() -> int:
    """~3/4 of per-core VMEM (96 MiB on v5e/v6e, ~48 MiB on v7x)."""
    try:
        cap = pltpu.get_tpu_info().vmem_capacity_bytes
        return max(32 * 1024 * 1024, int(cap) * 3 // 4)
    except Exception:
        return 64 * 1024 * 1024


def fused_conv_block(x_nhwc, w1, w2, s1, b1, s2, b2, *, stride: int,
                     tile_h: int):
    N, H, W, Cin = x_nhwc.shape
    KH, KW, _, C1 = w1.shape
    C2 = w2.shape[-1]
    s = stride
    Ho = (H + 2 - KH) // s + 1
    Wo = (W + 2 - KW) // s + 1
    assert Ho % tile_h == 0, (Ho, tile_h)
    assert Wo % 8 == 0, Wo
    n_ht = Ho // tile_h
    rows1 = tile_h + 2

    cdt = jnp.bfloat16                     # native MXU dtype on v5e/v6e/v7x
    out_dt = x_nhwc.dtype

    # rows get s+1 halo padding so boundary row-tiles never read out of range;
    # cols get the normal conv padding of 1.  Cast before pad so the padded
    # HBM copy is bf16 (half the bytes).
    xp = jnp.pad(x_nhwc.astype(cdt), ((0, 0), (s + 1, s + 1), (1, 1), (0, 0)))
    Hp, Wp = H + 2 * (s + 1), W + 2

    w1 = w1.astype(cdt)
    w2 = w2.astype(cdt)
    s1 = s1.reshape(1, C1).astype(jnp.float32)
    b1 = b1.reshape(1, C1).astype(jnp.float32)
    s2 = s2.reshape(1, C2).astype(jnp.float32)
    b2 = b2.reshape(1, C2).astype(jnp.float32)

    # Row-chunk sizes keeping each carried f32 accumulator <= ~96 KiB.
    MAX_ACC_BYTES = 96 * 1024
    acc_rows_l1 = max(1, min(rows1, MAX_ACC_BYTES // (Wo * C1 * 4)))
    acc_rows_l2 = max(1, min(tile_h, MAX_ACC_BYTES // (Wo * C2 * 4)))

    kernel = functools.partial(fused_convblock_kernel, stride=s,
                               tile_h=tile_h, wo1=Wo,
                               acc_rows_l1=acc_rows_l1,
                               acc_rows_l2=acc_rows_l2)

    return pl.pallas_call(
        kernel,
        out_shape=jax.ShapeDtypeStruct((N, Ho, Wo, C2), out_dt),
        grid_spec=pltpu.PrefetchScalarGridSpec(
            num_scalar_prefetch=0,
            grid=(N, n_ht),
            in_specs=[
                # padded image: DMA'd once per batch element, reused across
                # all row-tiles (index map constant in the row-tile axis).
                pl.BlockSpec((None, Hp, Wp, Cin), lambda n, h: (n, 0, 0, 0)),
                # weights & folded BN params stay VMEM-resident.
                pl.BlockSpec((KH, KW, Cin, C1), lambda n, h: (0, 0, 0, 0)),
                pl.BlockSpec((KH, KW, C1, C2), lambda n, h: (0, 0, 0, 0)),
                pl.BlockSpec((1, C1), lambda n, h: (0, 0)),
                pl.BlockSpec((1, C1), lambda n, h: (0, 0)),
                pl.BlockSpec((1, C2), lambda n, h: (0, 0)),
                pl.BlockSpec((1, C2), lambda n, h: (0, 0)),
            ],
            out_specs=pl.BlockSpec((None, tile_h, Wo, C2),
                                   lambda n, h: (n, h, 0, 0)),
            scratch_shapes=[
                pltpu.VMEM((rows1, Wo + 16, C1), cdt),   # padded y1 tile
            ],
        ),
        compiler_params=pltpu.CompilerParams(
            # h must run sequentially per image (scratch reuse / hoisted pad
            # zeroing); megacore still splits over the batch axis.
            dimension_semantics=("parallel", "arbitrary"),
            vmem_limit_bytes=_vmem_limit_bytes()),
    )(xp, w1, w2, s1, b1, s2, b2)


# ------------------------------ Parameter glue -------------------------------
def grouped_to_dense_hwio(w_grouped, cin, groups):
    """(Cout, Cin//g, kh, kw) grouped OIHW weight -> dense block-diagonal HWIO."""
    cout, cin_g, kh, kw = w_grouped.shape
    cout_g = cout // groups
    dense = jnp.zeros((cout, cin, kh, kw), jnp.float32)
    for g in range(groups):
        dense = dense.at[g * cout_g:(g + 1) * cout_g,
                         g * cin_g:(g + 1) * cin_g].set(
            w_grouped[g * cout_g:(g + 1) * cout_g])
    return jnp.transpose(dense, (2, 3, 1, 0))  # HWIO


def fold_bn(gamma, beta, mean, var, eps=1e-5):
    scale = gamma / jnp.sqrt(var + eps)
    bias = beta - mean * scale
    return scale, bias


@functools.partial(jax.jit, static_argnames=("stride", "tile_h"))
def conv_block_forward(x_nchw, params, *, stride: int = 1, tile_h: int = 8):
    """ConvBlock forward (pre_activation=False). Input/output NCHW."""
    x = jnp.transpose(x_nchw, (0, 2, 3, 1))          # NCHW -> NHWC
    y = fused_conv_block(x, params["w1_hwio"], params["w2_hwio"],
                         params["s1"], params["b1"], params["s2"], params["b2"],
                         stride=stride, tile_h=tile_h)
    return jnp.transpose(y, (0, 3, 1, 2))            # NHWC -> NCHW


# ----------------------------- Pure-JAX reference ----------------------------
def reference_forward(x_nchw, w1_g, w2_g, bn1, bn2, *, stride: int, groups: int):
    def bn(y, p):
        s, b = fold_bn(*p)
        return y * s.reshape(1, -1, 1, 1) + b.reshape(1, -1, 1, 1)

    y = jax.lax.conv_general_dilated(
        x_nchw, w1_g, (stride, stride), ((1, 1), (1, 1)),
        dimension_numbers=("NCHW", "OIHW", "NCHW"),
        feature_group_count=groups, precision=jax.lax.Precision.HIGHEST)
    y = jnp.maximum(bn(y, bn1), 0.0)
    y = jax.lax.conv_general_dilated(
        y, w2_g, (1, 1), ((1, 1), (1, 1)),
        dimension_numbers=("NCHW", "OIHW", "NCHW"),
        feature_group_count=groups, precision=jax.lax.Precision.HIGHEST)
    return bn(y, bn2)


# ----------------------------------- Main ------------------------------------
if __name__ == "__main__":
    # groups=32 forces channels to be multiples of 32; pick a small but
    # lane-dense config: Cin=128, B=128 -> C1=256, C2=128 (multiples of 128).
    N, Cin, H, W = 2, 128, 16, 16
    B = 128                 # block_base_channel
    G = 32                  # groups
    STRIDE = 1
    C1, C2 = 2 * B, B

    key = jax.random.PRNGKey(0)
    keys = jax.random.split(key, 11)

    x = jax.random.normal(keys[0], (N, Cin, H, W), jnp.float32)

    # grouped conv weights, PyTorch layout (Cout, Cin//g, 3, 3)
    w1_g = jax.random.normal(keys[1], (C1, Cin // G, 3, 3), jnp.float32) * 0.1
    w2_g = jax.random.normal(keys[2], (C2, C1 // G, 3, 3), jnp.float32) * 0.1

    # BatchNorm (eval-mode) params
    g1 = 1.0 + 0.1 * jax.random.normal(keys[3], (C1,), jnp.float32)
    be1 = 0.05 * jax.random.normal(keys[4], (C1,), jnp.float32)
    m1 = 0.1 * jax.random.normal(keys[5], (C1,), jnp.float32)
    v1 = 0.5 + jax.random.uniform(keys[6], (C1,), jnp.float32)
    g2 = 1.0 + 0.1 * jax.random.normal(keys[7], (C2,), jnp.float32)
    be2 = 0.05 * jax.random.normal(keys[8], (C2,), jnp.float32)
    m2 = 0.1 * jax.random.normal(keys[9], (C2,), jnp.float32)
    v2 = 0.5 + jax.random.uniform(keys[10], (C2,), jnp.float32)

    s1, bb1 = fold_bn(g1, be1, m1, v1)
    s2, bb2 = fold_bn(g2, be2, m2, v2)
    params = {
        "w1_hwio": grouped_to_dense_hwio(w1_g, Cin, G),
        "w2_hwio": grouped_to_dense_hwio(w2_g, C1, G),
        "s1": s1, "b1": bb1, "s2": s2, "b2": bb2,
    }

    out = conv_block_forward(x, params, stride=STRIDE, tile_h=8)
    out = jax.block_until_ready(out)

    ref = reference_forward(x, w1_g, w2_g, (g1, be1, m1, v1),
                            (g2, be2, m2, v2), stride=STRIDE, groups=G)
    ref = jax.block_until_ready(ref)

    assert out.shape == (N, C2, H // STRIDE, W // STRIDE), out.shape
    # bf16 MXU operands vs. the f32 reference -> loose tolerance (expected
    # per-element error is O(1e-3); 5e-2 leaves a large safety margin).
    max_err = float(jnp.max(jnp.abs(out - ref)))
    assert jnp.allclose(out, ref, rtol=5e-2, atol=5e-2), max_err

    print("KERNEL_OK")
</pallas_src>

<mosaic_0001>
module attributes {stable_mosaic.version = 11 : i64} {
  func.func @fused_convblock_kernel(%arg0: i32, %arg1: i32, %arg2: memref<1x20x18x128xbf16, #tpu.memory_space<vmem>>, %arg3: memref<3x3x128x256xbf16, #tpu.memory_space<vmem>>, %arg4: memref<3x3x256x128xbf16, #tpu.memory_space<vmem>>, %arg5: memref<1x256xf32, #tpu.memory_space<vmem>>, %arg6: memref<1x256xf32, #tpu.memory_space<vmem>>, %arg7: memref<1x128xf32, #tpu.memory_space<vmem>>, %arg8: memref<1x128xf32, #tpu.memory_space<vmem>>, %arg9: memref<1x8x16x128xf32, #tpu.memory_space<vmem>>, %arg10: memref<10x32x256xbf16, #tpu.memory_space<vmem>>) attributes {dimension_semantics = [#tpu.dimension_semantics<parallel>, #tpu.dimension_semantics<arbitrary>], iteration_bounds = array<i64: 2, 2>, scalar_prefetch = 0 : i64, scratch_operands = 1 : i64, tpu.core_type = #tpu.core_type<tc>, window_params = [{transform_indices = @transform_0, window_bounds = array<i64: 1, 20, 18, 128>}, {pipeline_mode = #tpu.pipeline_mode<synchronous>, transform_indices = @transform_1, window_bounds = array<i64: 3, 3, 128, 256>}, {pipeline_mode = #tpu.pipeline_mode<synchronous>, transform_indices = @transform_2, window_bounds = array<i64: 3, 3, 256, 128>}, {pipeline_mode = #tpu.pipeline_mode<synchronous>, transform_indices = @transform_3, window_bounds = array<i64: 1, 256>}, {pipeline_mode = #tpu.pipeline_mode<synchronous>, transform_indices = @transform_4, window_bounds = array<i64: 1, 256>}, {pipeline_mode = #tpu.pipeline_mode<synchronous>, transform_indices = @transform_5, window_bounds = array<i64: 1, 128>}, {pipeline_mode = #tpu.pipeline_mode<synchronous>, transform_indices = @transform_6, window_bounds = array<i64: 1, 128>}, {transform_indices = @transform_7, window_bounds = array<i64: 1, 8, 16, 128>}]} {
    %c8_i32 = arith.constant 8 : i32
    %0 = arith.muli %arg1, %c8_i32 : i32
    %1 = tpu.assume_multiple %0, 8 : i32
    %c0 = arith.constant 0 : index
    %c0_0 = arith.constant 0 : index
    %2 = vector.load %arg5[%c0, %c0_0] : memref<1x256xf32, #tpu.memory_space<vmem>>, vector<1x256xf32>
    %c0_1 = arith.constant 0 : index
    %c0_2 = arith.constant 0 : index
    %3 = vector.load %arg6[%c0_1, %c0_2] : memref<1x256xf32, #tpu.memory_space<vmem>>, vector<1x256xf32>
    %c0_3 = arith.constant 0 : index
    %c0_4 = arith.constant 0 : index
    %4 = vector.load %arg7[%c0_3, %c0_4] : memref<1x128xf32, #tpu.memory_space<vmem>>, vector<1x128xf32>
    %c0_5 = arith.constant 0 : index
    %c0_6 = arith.constant 0 : index
    %5 = vector.load %arg8[%c0_5, %c0_6] : memref<1x128xf32, #tpu.memory_space<vmem>>, vector<1x128xf32>
    %c0_i32 = arith.constant 0 : i32
    %6 = arith.cmpi eq, %arg1, %c0_i32 : i32
    %7 = arith.extui %6 : i1 to i32
    %c0_i32_7 = arith.constant 0 : i32
    %8 = arith.cmpi ne, %7, %c0_i32_7 : i32
    scf.if %8 {
      %cst_267 = arith.constant 0.000000e+00 : bf16
      %273 = vector.broadcast %cst_267 : bf16 to vector<10x8x256xbf16>
      %c0_268 = arith.constant 0 : index
      %c0_269 = arith.constant 0 : index
      %c0_270 = arith.constant 0 : index
      %274 = vector.load %arg10[%c0_268, %c0_269, %c0_270] : memref<10x32x256xbf16, #tpu.memory_space<vmem>>, vector<10x8x256xbf16>
      tpu.vector_store %arg10[%c0_268, %c0_269, %c0_270], %273 {strides = array<i32>} : memref<10x32x256xbf16, #tpu.memory_space<vmem>>, vector<10x8x256xbf16>,
      %c0_271 = arith.constant 0 : index
      %c24 = arith.constant 24 : index
      %c0_272 = arith.constant 0 : index
      %275 = vector.load %arg10[%c0_271, %c24, %c0_272] : memref<10x32x256xbf16, #tpu.memory_space<vmem>>, vector<10x8x256xbf16>
      tpu.vector_store %arg10[%c0_271, %c24, %c0_272], %273 {strides = array<i32>} : memref<10x32x256xbf16, #tpu.memory_space<vmem>>, vector<10x8x256xbf16>,
    } else {
    }
    %c0_i32_8 = arith.constant 0 : i32
    %9 = arith.addi %1, %c0_i32_8 : i32
    %c0_i32_9 = arith.constant 0 : i32
    %10 = arith.addi %9, %c0_i32_9 : i32
    %c0_10 = arith.constant 0 : index
    %11 = arith.index_cast %10 : i32 to index
    %c0_11 = arith.constant 0 : index
    %c0_12 = arith.constant 0 : index
    %12 = vector.load %arg2[%c0_10, %11, %c0_11, %c0_12] : memref<1x20x18x128xbf16, #tpu.memory_space<vmem>>, vector<1x6x16x128xbf16>
    %13 = vector.shape_cast %12 : vector<1x6x16x128xbf16> to vector<6x16x128xbf16>
    %14 = vector.shape_cast %13 : vector<6x16x128xbf16> to vector<96x128xbf16>
    %c0_13 = arith.constant 0 : index
    %c0_14 = arith.constant 0 : index
    %c0_15 = arith.constant 0 : index
    %c0_16 = arith.constant 0 : index
    %15 = vector.load %arg3[%c0_13, %c0_14, %c0_15, %c0_16] : memref<3x3x128x256xbf16, #tpu.memory_space<vmem>>, vector<1x1x128x256xbf16>
    %16 = vector.shape_cast %15 : vector<1x1x128x256xbf16> to vector<128x256xbf16>
    %cst = arith.constant dense<0.000000e+00> : vector<96x256xf32>
    %17 = tpu.matmul %14, %16, %cst {dimension_numbers = #tpu.dot_dimension_numbers<[1], [0], [0], [1], [0, 0, 1, 1], [], []>} : vector<96x128xbf16>, vector<128x256xbf16>, vector<96x256xf32> -> vector<96x256xf32>
    %c0_i32_17 = arith.constant 0 : i32
    %18 = arith.addi %1, %c0_i32_17 : i32
    %c0_i32_18 = arith.constant 0 : i32
    %19 = arith.addi %18, %c0_i32_18 : i32
    %c0_19 = arith.constant 0 : index
    %20 = arith.index_cast %19 : i32 to index
    %c1 = arith.constant 1 : index
    %c0_20 = arith.constant 0 : index
    %21 = vector.load %arg2[%c0_19, %20, %c1, %c0_20] : memref<1x20x18x128xbf16, #tpu.memory_space<vmem>>, vector<1x6x16x128xbf16>
    %22 = vector.shape_cast %21 : vector<1x6x16x128xbf16> to vector<6x16x128xbf16>
    %23 = vector.shape_cast %22 : vector<6x16x128xbf16> to vector<96x128xbf16>
    %c0_21 = arith.constant 0 : index
    %c1_22 = arith.constant 1 : index
    %c0_23 = arith.constant 0 : index
    %c0_24 = arith.constant 0 : index
    %24 = vector.load %arg3[%c0_21, %c1_22, %c0_23, %c0_24] : memref<3x3x128x256xbf16, #tpu.memory_space<vmem>>, vector<1x1x128x256xbf16>
    %25 = vector.shape_cast %24 : vector<1x1x128x256xbf16> to vector<128x256xbf16>
    %cst_25 = arith.constant dense<0.000000e+00> : vector<96x256xf32>
    %26 = tpu.matmul %23, %25, %cst_25 {dimension_numbers = #tpu.dot_dimension_numbers<[1], [0], [0], [1], [0, 0, 1, 1], [], []>} : vector<96x128xbf16>, vector<128x256xbf16>, vector<96x256xf32> -> vector<96x256xf32>
    %27 = arith.addf %17, %26 : vector<96x256xf32>
    %c0_i32_26 = arith.constant 0 : i32
    %28 = arith.addi %1, %c0_i32_26 : i32
    %c0_i32_27 = arith.constant 0 : i32
    %29 = arith.addi %28, %c0_i32_27 : i32
    %c0_28 = arith.constant 0 : index
    %30 = arith.index_cast %29 : i32 to index
    %c2 = arith.constant 2 : index
    %c0_29 = arith.constant 0 : index
    %31 = vector.load %arg2[%c0_28, %30, %c2, %c0_29] : memref<1x20x18x128xbf16, #tpu.memory_space<vmem>>, vector<1x6x16x128xbf16>
    %32 = vector.shape_cast %31 : vector<1x6x16x128xbf16> to vector<6x16x128xbf16>
    %33 = vector.shape_cast %32 : vector<6x16x128xbf16> to vector<96x128xbf16>
    %c0_30 = arith.constant 0 : index
    %c2_31 = arith.constant 2 : index
    %c0_32 = arith.constant 0 : index
    %c0_33 = arith.constant 0 : index
    %34 = vector.load %arg3[%c0_30, %c2_31, %c0_32, %c0_33] : memref<3x3x128x256xbf16, #tpu.memory_space<vmem>>, vector<1x1x128x256xbf16>
    %35 = vector.shape_cast %34 : vector<1x1x128x256xbf16> to vector<128x256xbf16>
    %cst_34 = arith.constant dense<0.000000e+00> : vector<96x256xf32>
    %36 = tpu.matmul %33, %35, %cst_34 {dimension_numbers = #tpu.dot_dimension_numbers<[1], [0], [0], [1], [0, 0, 1, 1], [], []>} : vector<96x128xbf16>, vector<128x256xbf16>, vector<96x256xf32> -> vector<96x256xf32>
    %37 = arith.addf %27, %36 : vector<96x256xf32>
    %c0_i32_35 = arith.constant 0 : i32
    %38 = arith.addi %1, %c0_i32_35 : i32
    %c1_i32 = arith.constant 1 : i32
    %39 = arith.addi %38, %c1_i32 : i32
    %c0_36 = arith.constant 0 : index
    %40 = arith.index_cast %39 : i32 to index
    %c0_37 = arith.constant 0 : index
    %c0_38 = arith.constant 0 : index
    %41 = vector.load %arg2[%c0_36, %40, %c0_37, %c0_38] : memref<1x20x18x128xbf16, #tpu.memory_space<vmem>>, vector<1x6x16x128xbf16>
    %42 = vector.shape_cast %41 : vector<1x6x16x128xbf16> to vector<6x16x128xbf16>
    %43 = vector.shape_cast %42 : vector<6x16x128xbf16> to vector<96x128xbf16>
    %c1_39 = arith.constant 1 : index
    %c0_40 = arith.constant 0 : index
    %c0_41 = arith.constant 0 : index
    %c0_42 = arith.constant 0 : index
    %44 = vector.load %arg3[%c1_39, %c0_40, %c0_41, %c0_42] : memref<3x3x128x256xbf16, #tpu.memory_space<vmem>>, vector<1x1x128x256xbf16>
    %45 = vector.shape_cast %44 : vector<1x1x128x256xbf16> to vector<128x256xbf16>
    %cst_43 = arith.constant dense<0.000000e+00> : vector<96x256xf32>
    %46 = tpu.matmul %43, %45, %cst_43 {dimension_numbers = #tpu.dot_dimension_numbers<[1], [0], [0], [1], [0, 0, 1, 1], [], []>} : vector<96x128xbf16>, vector<128x256xbf16>, vector<96x256xf32> -> vector<96x256xf32>
    %47 = arith.addf %37, %46 : vector<96x256xf32>
    %c0_i32_44 = arith.constant 0 : i32
    %48 = arith.addi %1, %c0_i32_44 : i32
    %c1_i32_45 = arith.constant 1 : i32
    %49 = arith.addi %48, %c1_i32_45 : i32
    %c0_46 = arith.constant 0 : index
    %50 = arith.index_cast %49 : i32 to index
    %c1_47 = arith.constant 1 : index
    %c0_48 = arith.constant 0 : index
    %51 = vector.load %arg2[%c0_46, %50, %c1_47, %c0_48] : memref<1x20x18x128xbf16, #tpu.memory_space<vmem>>, vector<1x6x16x128xbf16>
    %52 = vector.shape_cast %51 : vector<1x6x16x128xbf16> to vector<6x16x128xbf16>
    %53 = vector.shape_cast %52 : vector<6x16x128xbf16> to vector<96x128xbf16>
    %c1_49 = arith.constant 1 : index
    %c1_50 = arith.constant 1 : index
    %c0_51 = arith.constant 0 : index
    %c0_52 = arith.constant 0 : index
    %54 = vector.load %arg3[%c1_49, %c1_50, %c0_51, %c0_52] : memref<3x3x128x256xbf16, #tpu.memory_space<vmem>>, vector<1x1x128x256xbf16>
    %55 = vector.shape_cast %54 : vector<1x1x128x256xbf16> to vector<128x256xbf16>
    %cst_53 = arith.constant dense<0.000000e+00> : vector<96x256xf32>
    %56 = tpu.matmul %53, %55, %cst_53 {dimension_numbers = #tpu.dot_dimension_numbers<[1], [0], [0], [1], [0, 0, 1, 1], [], []>} : vector<96x128xbf16>, vector<128x256xbf16>, vector<96x256xf32> -> vector<96x256xf32>
    %57 = arith.addf %47, %56 : vector<96x256xf32>
    %c0_i32_54 = arith.constant 0 : i32
    %58 = arith.addi %1, %c0_i32_54 : i32
    %c1_i32_55 = arith.constant 1 : i32
    %59 = arith.addi %58, %c1_i32_55 : i32
    %c0_56 = arith.constant 0 : index
    %60 = arith.index_cast %59 : i32 to index
    %c2_57 = arith.constant 2 : index
    %c0_58 = arith.constant 0 : index
    %61 = vector.load %arg2[%c0_56, %60, %c2_57, %c0_58] : memref<1x20x18x128xbf16, #tpu.memory_space<vmem>>, vector<1x6x16x128xbf16>
    %62 = vector.shape_cast %61 : vector<1x6x16x128xbf16> to vector<6x16x128xbf16>
    %63 = vector.shape_cast %62 : vector<6x16x128xbf16> to vector<96x128xbf16>
    %c1_59 = arith.constant 1 : index
    %c2_60 = arith.constant 2 : index
    %c0_61 = arith.constant 0 : index
    %c0_62 = arith.constant 0 : index
    %64 = vector.load %arg3[%c1_59, %c2_60, %c0_61, %c0_62] : memref<3x3x128x256xbf16, #tpu.memory_space<vmem>>, vector<1x1x128x256xbf16>
    %65 = vector.shape_cast %64 : vector<1x1x128x256xbf16> to vector<128x256xbf16>
    %cst_63 = arith.constant dense<0.000000e+00> : vector<96x256xf32>
    %66 = tpu.matmul %63, %65, %cst_63 {dimension_numbers = #tpu.dot_dimension_numbers<[1], [0], [0], [1], [0, 0, 1, 1], [], []>} : vector<96x128xbf16>, vector<128x256xbf16>, vector<96x256xf32> -> vector<96x256xf32>
    %67 = arith.addf %57, %66 : vector<96x256xf32>
    %c0_i32_64 = arith.constant 0 : i32
    %68 = arith.addi %1, %c0_i32_64 : i32
    %c2_i32 = arith.constant 2 : i32
    %69 = arith.addi %68, %c2_i32 : i32
    %c0_65 = arith.constant 0 : index
    %70 = arith.index_cast %69 : i32 to index
    %c0_66 = arith.constant 0 : index
    %c0_67 = arith.constant 0 : index
    %71 = vector.load %arg2[%c0_65, %70, %c0_66, %c0_67] : memref<1x20x18x128xbf16, #tpu.memory_space<vmem>>, vector<1x6x16x128xbf16>
    %72 = vector.shape_cast %71 : vector<1x6x16x128xbf16> to vector<6x16x128xbf16>
    %73 = vector.shape_cast %72 : vector<6x16x128xbf16> to vector<96x128xbf16>
    %c2_68 = arith.constant 2 : index
    %c0_69 = arith.constant 0 : index
    %c0_70 = arith.constant 0 : index
    %c0_71 = arith.constant 0 : index
    %74 = vector.load %arg3[%c2_68, %c0_69, %c0_70, %c0_71] : memref<3x3x128x256xbf16, #tpu.memory_space<vmem>>, vector<1x1x128x256xbf16>
    %75 = vector.shape_cast %74 : vector<1x1x128x256xbf16> to vector<128x256xbf16>
    %cst_72 = arith.constant dense<0.000000e+00> : vector<96x256xf32>
    %76 = tpu.matmul %73, %75, %cst_72 {dimension_numbers = #tpu.dot_dimension_numbers<[1], [0], [0], [1], [0, 0, 1, 1], [], []>} : vector<96x128xbf16>, vector<128x256xbf16>, vector<96x256xf32> -> vector<96x256xf32>
    %77 = arith.addf %67, %76 : vector<96x256xf32>
    %c0_i32_73 = arith.constant 0 : i32
    %78 = arith.addi %1, %c0_i32_73 : i32
    %c2_i32_74 = arith.constant 2 : i32
    %79 = arith.addi %78, %c2_i32_74 : i32
    %c0_75 = arith.constant 0 : index
    %80 = arith.index_cast %79 : i32 to index
    %c1_76 = arith.constant 1 : index
    %c0_77 = arith.constant 0 : index
    %81 = vector.load %arg2[%c0_75, %80, %c1_76, %c0_77] : memref<1x20x18x128xbf16, #tpu.memory_space<vmem>>, vector<1x6x16x128xbf16>
    %82 = vector.shape_cast %81 : vector<1x6x16x128xbf16> to vector<6x16x128xbf16>
    %83 = vector.shape_cast %82 : vector<6x16x128xbf16> to vector<96x128xbf16>
    %c2_78 = arith.constant 2 : index
    %c1_79 = arith.constant 1 : index
    %c0_80 = arith.constant 0 : index
    %c0_81 = arith.constant 0 : index
    %84 = vector.load %arg3[%c2_78, %c1_79, %c0_80, %c0_81] : memref<3x3x128x256xbf16, #tpu.memory_space<vmem>>, vector<1x1x128x256xbf16>
    %85 = vector.shape_cast %84 : vector<1x1x128x256xbf16> to vector<128x256xbf16>
    %cst_82 = arith.constant dense<0.000000e+00> : vector<96x256xf32>
    %86 = tpu.matmul %83, %85, %cst_82 {dimension_numbers = #tpu.dot_dimension_numbers<[1], [0], [0], [1], [0, 0, 1, 1], [], []>} : vector<96x128xbf16>, vector<128x256xbf16>, vector<96x256xf32> -> vector<96x256xf32>
    %87 = arith.addf %77, %86 : vector<96x256xf32>
    %c0_i32_83 = arith.constant 0 : i32
    %88 = arith.addi %1, %c0_i32_83 : i32
    %c2_i32_84 = arith.constant 2 : i32
    %89 = arith.addi %88, %c2_i32_84 : i32
    %c0_85 = arith.constant 0 : index
    %90 = arith.index_cast %89 : i32 to index
    %c2_86 = arith.constant 2 : index
    %c0_87 = arith.constant 0 : index
    %91 = vector.load %arg2[%c0_85, %90, %c2_86, %c0_87] : memref<1x20x18x128xbf16, #tpu.memory_space<vmem>>, vector<1x6x16x128xbf16>
    %92 = vector.shape_cast %91 : vector<1x6x16x128xbf16> to vector<6x16x128xbf16>
    %93 = vector.shape_cast %92 : vector<6x16x128xbf16> to vector<96x128xbf16>
    %c2_88 = arith.constant 2 : index
    %c2_89 = arith.constant 2 : index
    %c0_90 = arith.constant 0 : index
    %c0_91 = arith.constant 0 : index
    %94 = vector.load %arg3[%c2_88, %c2_89, %c0_90, %c0_91] : memref<3x3x128x256xbf16, #tpu.memory_space<vmem>>, vector<1x1x128x256xbf16>
    %95 = vector.shape_cast %94 : vector<1x1x128x256xbf16> to vector<128x256xbf16>
    %cst_92 = arith.constant dense<0.000000e+00> : vector<96x256xf32>
    %96 = tpu.matmul %93, %95, %cst_92 {dimension_numbers = #tpu.dot_dimension_numbers<[1], [0], [0], [1], [0, 0, 1, 1], [], []>} : vector<96x128xbf16>, vector<128x256xbf16>, vector<96x256xf32> -> vector<96x256xf32>
    %97 = arith.addf %87, %96 : vector<96x256xf32>
    %98 = vector.broadcast %2 : vector<1x256xf32> to vector<96x256xf32>
    %99 = arith.mulf %97, %98 : vector<96x256xf32>
    %100 = vector.broadcast %3 : vector<1x256xf32> to vector<96x256xf32>
    %101 = arith.addf %99, %100 : vector<96x256xf32>
    %cst_93 = arith.constant 0.000000e+00 : f32
    %102 = vector.broadcast %cst_93 : f32 to vector<96x256xf32>
    %103 = arith.maximumf %101, %102 : vector<96x256xf32>
    %104 = vector.shape_cast %103 : vector<96x256xf32> to vector<6x16x256xf32>
    %105 = arith.truncf %104 : vector<6x16x256xf32> to vector<6x16x256xbf16>
    %c0_94 = arith.constant 0 : index
    %c8 = arith.constant 8 : index
    %c0_95 = arith.constant 0 : index
    %106 = vector.load %arg10[%c0_94, %c8, %c0_95] : memref<10x32x256xbf16, #tpu.memory_space<vmem>>, vector<6x16x256xbf16>
    tpu.vector_store %arg10[%c0_94, %c8, %c0_95], %105 {strides = array<i32>} : memref<10x32x256xbf16, #tpu.memory_space<vmem>>, vector<6x16x256xbf16>,
    %c6_i32 = arith.constant 6 : i32
    %107 = arith.addi %1, %c6_i32 : i32
    %c0_i32_96 = arith.constant 0 : i32
    %108 = arith.addi %107, %c0_i32_96 : i32
    %c0_97 = arith.constant 0 : index
    %109 = arith.index_cast %108 : i32 to index
    %c0_98 = arith.constant 0 : index
    %c0_99 = arith.constant 0 : index
    %110 = vector.load %arg2[%c0_97, %109, %c0_98, %c0_99] : memref<1x20x18x128xbf16, #tpu.memory_space<vmem>>, vector<1x4x16x128xbf16>
    %111 = vector.shape_cast %110 : vector<1x4x16x128xbf16> to vector<4x16x128xbf16>
    %112 = vector.shape_cast %111 : vector<4x16x128xbf16> to vector<64x128xbf16>
    %c0_100 = arith.constant 0 : index
    %c0_101 = arith.constant 0 : index
    %c0_102 = arith.constant 0 : index
    %c0_103 = arith.constant 0 : index
    %113 = vector.load %arg3[%c0_100, %c0_101, %c0_102, %c0_103] : memref<3x3x128x256xbf16, #tpu.memory_space<vmem>>, vector<1x1x128x256xbf16>
    %114 = vector.shape_cast %113 : vector<1x1x128x256xbf16> to vector<128x256xbf16>
    %cst_104 = arith.constant dense<0.000000e+00> : vector<64x256xf32>
    %115 = tpu.matmul %112, %114, %cst_104 {dimension_numbers = #tpu.dot_dimension_numbers<[1], [0], [0], [1], [0, 0, 1, 1], [], []>} : vector<64x128xbf16>, vector<128x256xbf16>, vector<64x256xf32> -> vector<64x256xf32>
    %c6_i32_105 = arith.constant 6 : i32
    %116 = arith.addi %1, %c6_i32_105 : i32
    %c0_i32_106 = arith.constant 0 : i32
    %117 = arith.addi %116, %c0_i32_106 : i32
    %c0_107 = arith.constant 0 : index
    %118 = arith.index_cast %117 : i32 to index
    %c1_108 = arith.constant 1 : index
    %c0_109 = arith.constant 0 : index
    %119 = vector.load %arg2[%c0_107, %118, %c1_108, %c0_109] : memref<1x20x18x128xbf16, #tpu.memory_space<vmem>>, vector<1x4x16x128xbf16>
    %120 = vector.shape_cast %119 : vector<1x4x16x128xbf16> to vector<4x16x128xbf16>
    %121 = vector.shape_cast %120 : vector<4x16x128xbf16> to vector<64x128xbf16>
    %c0_110 = arith.constant 0 : index
    %c1_111 = arith.constant 1 : index
    %c0_112 = arith.constant 0 : index
    %c0_113 = arith.constant 0 : index
    %122 = vector.load %arg3[%c0_110, %c1_111, %c0_112, %c0_113] : memref<3x3x128x256xbf16, #tpu.memory_space<vmem>>, vector<1x1x128x256xbf16>
    %123 = vector.shape_cast %122 : vector<1x1x128x256xbf16> to vector<128x256xbf16>
    %cst_114 = arith.constant dense<0.000000e+00> : vector<64x256xf32>
    %124 = tpu.matmul %121, %123, %cst_114 {dimension_numbers = #tpu.dot_dimension_numbers<[1], [0], [0], [1], [0, 0, 1, 1], [], []>} : vector<64x128xbf16>, vector<128x256xbf16>, vector<64x256xf32> -> vector<64x256xf32>
    %125 = arith.addf %115, %124 : vector<64x256xf32>
    %c6_i32_115 = arith.constant 6 : i32
    %126 = arith.addi %1, %c6_i32_115 : i32
    %c0_i32_116 = arith.constant 0 : i32
    %127 = arith.addi %126, %c0_i32_116 : i32
    %c0_117 = arith.constant 0 : index
    %128 = arith.index_cast %127 : i32 to index
    %c2_118 = arith.constant 2 : index
    %c0_119 = arith.constant 0 : index
    %129 = vector.load %arg2[%c0_117, %128, %c2_118, %c0_119] : memref<1x20x18x128xbf16, #tpu.memory_space<vmem>>, vector<1x4x16x128xbf16>
    %130 = vector.shape_cast %129 : vector<1x4x16x128xbf16> to vector<4x16x128xbf16>
    %131 = vector.shape_cast %130 : vector<4x16x128xbf16> to vector<64x128xbf16>
    %c0_120 = arith.constant 0 : index
    %c2_121 = arith.constant 2 : index
    %c0_122 = arith.constant 0 : index
    %c0_123 = arith.constant 0 : index
    %132 = vector.load %arg3[%c0_120, %c2_121, %c0_122, %c0_123] : memref<3x3x128x256xbf16, #tpu.memory_space<vmem>>, vector<1x1x128x256xbf16>
    %133 = vector.shape_cast %132 : vector<1x1x128x256xbf16> to vector<128x256xbf16>
    %cst_124 = arith.constant dense<0.000000e+00> : vector<64x256xf32>
    %134 = tpu.matmul %131, %133, %cst_124 {dimension_numbers = #tpu.dot_dimension_numbers<[1], [0], [0], [1], [0, 0, 1, 1], [], []>} : vector<64x128xbf16>, vector<128x256xbf16>, vector<64x256xf32> -> vector<64x256xf32>
    %135 = arith.addf %125, %134 : vector<64x256xf32>
    %c6_i32_125 = arith.constant 6 : i32
    %136 = arith.addi %1, %c6_i32_125 : i32
    %c1_i32_126 = arith.constant 1 : i32
    %137 = arith.addi %136, %c1_i32_126 : i32
    %c0_127 = arith.constant 0 : index
    %138 = arith.index_cast %137 : i32 to index
    %c0_128 = arith.constant 0 : index
    %c0_129 = arith.constant 0 : index
    %139 = vector.load %arg2[%c0_127, %138, %c0_128, %c0_129] : memref<1x20x18x128xbf16, #tpu.memory_space<vmem>>, vector<1x4x16x128xbf16>
    %140 = vector.shape_cast %139 : vector<1x4x16x128xbf16> to vector<4x16x128xbf16>
    %141 = vector.shape_cast %140 : vector<4x16x128xbf16> to vector<64x128xbf16>
    %c1_130 = arith.constant 1 : index
    %c0_131 = arith.constant 0 : index
    %c0_132 = arith.constant 0 : index
    %c0_133 = arith.constant 0 : index
    %142 = vector.load %arg3[%c1_130, %c0_131, %c0_132, %c0_133] : memref<3x3x128x256xbf16, #tpu.memory_space<vmem>>, vector<1x1x128x256xbf16>
    %143 = vector.shape_cast %142 : vector<1x1x128x256xbf16> to vector<128x256xbf16>
    %cst_134 = arith.constant dense<0.000000e+00> : vector<64x256xf32>
    %144 = tpu.matmul %141, %143, %cst_134 {dimension_numbers = #tpu.dot_dimension_numbers<[1], [0], [0], [1], [0, 0, 1, 1], [], []>} : vector<64x128xbf16>, vector<128x256xbf16>, vector<64x256xf32> -> vector<64x256xf32>
    %145 = arith.addf %135, %144 : vector<64x256xf32>
    %c6_i32_135 = arith.constant 6 : i32
    %146 = arith.addi %1, %c6_i32_135 : i32
    %c1_i32_136 = arith.constant 1 : i32
    %147 = arith.addi %146, %c1_i32_136 : i32
    %c0_137 = arith.constant 0 : index
    %148 = arith.index_cast %147 : i32 to index
    %c1_138 = arith.constant 1 : index
    %c0_139 = arith.constant 0 : index
    %149 = vector.load %arg2[%c0_137, %148, %c1_138, %c0_139] : memref<1x20x18x128xbf16, #tpu.memory_space<vmem>>, vector<1x4x16x128xbf16>
    %150 = vector.shape_cast %149 : vector<1x4x16x128xbf16> to vector<4x16x128xbf16>
    %151 = vector.shape_cast %150 : vector<4x16x128xbf16> to vector<64x128xbf16>
    %c1_140 = arith.constant 1 : index
    %c1_141 = arith.constant 1 : index
    %c0_142 = arith.constant 0 : index
    %c0_143 = arith.constant 0 : index
    %152 = vector.load %arg3[%c1_140, %c1_141, %c0_142, %c0_143] : memref<3x3x128x256xbf16, #tpu.memory_space<vmem>>, vector<1x1x128x256xbf16>
    %153 = vector.shape_cast %152 : vector<1x1x128x256xbf16> to vector<128x256xbf16>
    %cst_144 = arith.constant dense<0.000000e+00> : vector<64x256xf32>
    %154 = tpu.matmul %151, %153, %cst_144 {dimension_numbers = #tpu.dot_dimension_numbers<[1], [0], [0], [1], [0, 0, 1, 1], [], []>} : vector<64x128xbf16>, vector<128x256xbf16>, vector<64x256xf32> -> vector<64x256xf32>
    %155 = arith.addf %145, %154 : vector<64x256xf32>
    %c6_i32_145 = arith.constant 6 : i32
    %156 = arith.addi %1, %c6_i32_145 : i32
    %c1_i32_146 = arith.constant 1 : i32
    %157 = arith.addi %156, %c1_i32_146 : i32
    %c0_147 = arith.constant 0 : index
    %158 = arith.index_cast %157 : i32 to index
    %c2_148 = arith.constant 2 : index
    %c0_149 = arith.constant 0 : index
    %159 = vector.load %arg2[%c0_147, %158, %c2_148, %c0_149] : memref<1x20x18x128xbf16, #tpu.memory_space<vmem>>, vector<1x4x16x128xbf16>
    %160 = vector.shape_cast %159 : vector<1x4x16x128xbf16> to vector<4x16x128xbf16>
    %161 = vector.shape_cast %160 : vector<4x16x128xbf16> to vector<64x128xbf16>
    %c1_150 = arith.constant 1 : index
    %c2_151 = arith.constant 2 : index
    %c0_152 = arith.constant 0 : index
    %c0_153 = arith.constant 0 : index
    %162 = vector.load %arg3[%c1_150, %c2_151, %c0_152, %c0_153] : memref<3x3x128x256xbf16, #tpu.memory_space<vmem>>, vector<1x1x128x256xbf16>
    %163 = vector.shape_cast %162 : vector<1x1x128x256xbf16> to vector<128x256xbf16>
    %cst_154 = arith.constant dense<0.000000e+00> : vector<64x256xf32>
    %164 = tpu.matmul %161, %163, %cst_154 {dimension_numbers = #tpu.dot_dimension_numbers<[1], [0], [0], [1], [0, 0, 1, 1], [], []>} : vector<64x128xbf16>, vector<128x256xbf16>, vector<64x256xf32> -> vector<64x256xf32>
    %165 = arith.addf %155, %164 : vector<64x256xf32>
    %c6_i32_155 = arith.constant 6 : i32
    %166 = arith.addi %1, %c6_i32_155 : i32
    %c2_i32_156 = arith.constant 2 : i32
    %167 = arith.addi %166, %c2_i32_156 : i32
    %c0_157 = arith.constant 0 : index
    %168 = arith.index_cast %167 : i32 to index
    %c0_158 = arith.constant 0 : index
    %c0_159 = arith.constant 0 : index
    %169 = vector.load %arg2[%c0_157, %168, %c0_158, %c0_159] : memref<1x20x18x128xbf16, #tpu.memory_space<vmem>>, vector<1x4x16x128xbf16>
    %170 = vector.shape_cast %169 : vector<1x4x16x128xbf16> to vector<4x16x128xbf16>
    %171 = vector.shape_cast %170 : vector<4x16x128xbf16> to vector<64x128xbf16>
    %c2_160 = arith.constant 2 : index
    %c0_161 = arith.constant 0 : index
    %c0_162 = arith.constant 0 : index
    %c0_163 = arith.constant 0 : index
    %172 = vector.load %arg3[%c2_160, %c0_161, %c0_162, %c0_163] : memref<3x3x128x256xbf16, #tpu.memory_space<vmem>>, vector<1x1x128x256xbf16>
    %173 = vector.shape_cast %172 : vector<1x1x128x256xbf16> to vector<128x256xbf16>
    %cst_164 = arith.constant dense<0.000000e+00> : vector<64x256xf32>
    %174 = tpu.matmul %171, %173, %cst_164 {dimension_numbers = #tpu.dot_dimension_numbers<[1], [0], [0], [1], [0, 0, 1, 1], [], []>} : vector<64x128xbf16>, vector<128x256xbf16>, vector<64x256xf32> -> vector<64x256xf32>
    %175 = arith.addf %165, %174 : vector<64x256xf32>
    %c6_i32_165 = arith.constant 6 : i32
    %176 = arith.addi %1, %c6_i32_165 : i32
    %c2_i32_166 = arith.constant 2 : i32
    %177 = arith.addi %176, %c2_i32_166 : i32
    %c0_167 = arith.constant 0 : index
    %178 = arith.index_cast %177 : i32 to index
    %c1_168 = arith.constant 1 : index
    %c0_169 = arith.constant 0 : index
    %179 = vector.load %arg2[%c0_167, %178, %c1_168, %c0_169] : memref<1x20x18x128xbf16, #tpu.memory_space<vmem>>, vector<1x4x16x128xbf16>
    %180 = vector.shape_cast %179 : vector<1x4x16x128xbf16> to vector<4x16x128xbf16>
    %181 = vector.shape_cast %180 : vector<4x16x128xbf16> to vector<64x128xbf16>
    %c2_170 = arith.constant 2 : index
    %c1_171 = arith.constant 1 : index
    %c0_172 = arith.constant 0 : index
    %c0_173 = arith.constant 0 : index
    %182 = vector.load %arg3[%c2_170, %c1_171, %c0_172, %c0_173] : memref<3x3x128x256xbf16, #tpu.memory_space<vmem>>, vector<1x1x128x256xbf16>
    %183 = vector.shape_cast %182 : vector<1x1x128x256xbf16> to vector<128x256xbf16>
    %cst_174 = arith.constant dense<0.000000e+00> : vector<64x256xf32>
    %184 = tpu.matmul %181, %183, %cst_174 {dimension_numbers = #tpu.dot_dimension_numbers<[1], [0], [0], [1], [0, 0, 1, 1], [], []>} : vector<64x128xbf16>, vector<128x256xbf16>, vector<64x256xf32> -> vector<64x256xf32>
    %185 = arith.addf %175, %184 : vector<64x256xf32>
    %c6_i32_175 = arith.constant 6 : i32
    %186 = arith.addi %1, %c6_i32_175 : i32
    %c2_i32_176 = arith.constant 2 : i32
    %187 = arith.addi %186, %c2_i32_176 : i32
    %c0_177 = arith.constant 0 : index
    %188 = arith.index_cast %187 : i32 to index
    %c2_178 = arith.constant 2 : index
    %c0_179 = arith.constant 0 : index
    %189 = vector.load %arg2[%c0_177, %188, %c2_178, %c0_179] : memref<1x20x18x128xbf16, #tpu.memory_space<vmem>>, vector<1x4x16x128xbf16>
    %190 = vector.shape_cast %189 : vector<1x4x16x128xbf16> to vector<4x16x128xbf16>
    %191 = vector.shape_cast %190 : vector<4x16x128xbf16> to vector<64x128xbf16>
    %c2_180 = arith.constant 2 : index
    %c2_181 = arith.constant 2 : index
    %c0_182 = arith.constant 0 : index
    %c0_183 = arith.constant 0 : index
    %192 = vector.load %arg3[%c2_180, %c2_181, %c0_182, %c0_183] : memref<3x3x128x256xbf16, #tpu.memory_space<vmem>>, vector<1x1x128x256xbf16>
    %193 = vector.shape_cast %192 : vector<1x1x128x256xbf16> to vector<128x256xbf16>
    %cst_184 = arith.constant dense<0.000000e+00> : vector<64x256xf32>
    %194 = tpu.matmul %191, %193, %cst_184 {dimension_numbers = #tpu.dot_dimension_numbers<[1], [0], [0], [1], [0, 0, 1, 1], [], []>} : vector<64x128xbf16>, vector<128x256xbf16>, vector<64x256xf32> -> vector<64x256xf32>
    %195 = arith.addf %185, %194 : vector<64x256xf32>
    %196 = vector.broadcast %2 : vector<1x256xf32> to vector<64x256xf32>
    %197 = arith.mulf %195, %196 : vector<64x256xf32>
    %198 = vector.broadcast %3 : vector<1x256xf32> to vector<64x256xf32>
    %199 = arith.addf %197, %198 : vector<64x256xf32>
    %cst_185 = arith.constant 0.000000e+00 : f32
    %200 = vector.broadcast %cst_185 : f32 to vector<64x256xf32>
    %201 = arith.maximumf %199, %200 : vector<64x256xf32>
    %202 = vector.shape_cast %201 : vector<64x256xf32> to vector<4x16x256xf32>
    %203 = arith.truncf %202 : vector<4x16x256xf32> to vector<4x16x256xbf16>
    %c6 = arith.constant 6 : index
    %c8_186 = arith.constant 8 : index
    %c0_187 = arith.constant 0 : index
    %204 = vector.load %arg10[%c6, %c8_186, %c0_187] : memref<10x32x256xbf16, #tpu.memory_space<vmem>>, vector<4x16x256xbf16>
    tpu.vector_store %arg10[%c6, %c8_186, %c0_187], %203 {strides = array<i32>} : memref<10x32x256xbf16, #tpu.memory_space<vmem>>, vector<4x16x256xbf16>,
    %cst_188 = arith.constant 0.000000e+00 : bf16
    %205 = vector.broadcast %cst_188 : bf16 to vector<1x32x256xbf16>
    %c0_i32_189 = arith.constant 0 : i32
    %206 = arith.cmpi eq, %arg1, %c0_i32_189 : i32
    %207 = arith.extui %206 : i1 to i32
    %c0_i32_190 = arith.constant 0 : i32
    %208 = arith.cmpi ne, %207, %c0_i32_190 : i32
    scf.if %208 {
      %c0_267 = arith.constant 0 : index
      %c0_268 = arith.constant 0 : index
      %c0_269 = arith.constant 0 : index
      %273 = vector.load %arg10[%c0_267, %c0_268, %c0_269] : memref<10x32x256xbf16, #tpu.memory_space<vmem>>, vector<1x32x256xbf16>
      tpu.vector_store %arg10[%c0_267, %c0_268, %c0_269], %205 {strides = array<i32>} : memref<10x32x256xbf16, #tpu.memory_space<vmem>>, vector<1x32x256xbf16>,
    } else {
    }
    %c1_i32_191 = arith.constant 1 : i32
    %209 = arith.cmpi eq, %arg1, %c1_i32_191 : i32
    %210 = arith.extui %209 : i1 to i32
    %c0_i32_192 = arith.constant 0 : i32
    %211 = arith.cmpi ne, %210, %c0_i32_192 : i32
    scf.if %211 {
      %c9_267 = arith.constant 9 : index
      %c0_268 = arith.constant 0 : index
      %c0_269 = arith.constant 0 : index
      %273 = vector.load %arg10[%c9_267, %c0_268, %c0_269] : memref<10x32x256xbf16, #tpu.memory_space<vmem>>, vector<1x32x256xbf16>
      tpu.vector_store %arg10[%c9_267, %c0_268, %c0_269], %205 {strides = array<i32>} : memref<10x32x256xbf16, #tpu.memory_space<vmem>>, vector<1x32x256xbf16>,
    } else {
    }
    %c0_193 = arith.constant 0 : index
    %c7 = arith.constant 7 : index
    %c0_194 = arith.constant 0 : index
    %212 = vector.load %arg10[%c0_193, %c7, %c0_194] : memref<10x32x256xbf16, #tpu.memory_space<vmem>>, vector<8x16x256xbf16>
    %213 = vector.shape_cast %212 : vector<8x16x256xbf16> to vector<128x256xbf16>
    %c0_195 = arith.constant 0 : index
    %c0_196 = arith.constant 0 : index
    %c0_197 = arith.constant 0 : index
    %c0_198 = arith.constant 0 : index
    %214 = vector.load %arg4[%c0_195, %c0_196, %c0_197, %c0_198] : memref<3x3x256x128xbf16, #tpu.memory_space<vmem>>, vector<1x1x256x128xbf16>
    %215 = vector.shape_cast %214 : vector<1x1x256x128xbf16> to vector<256x128xbf16>
    %cst_199 = arith.constant dense<0.000000e+00> : vector<128x128xf32>
    %216 = tpu.matmul %213, %215, %cst_199 {dimension_numbers = #tpu.dot_dimension_numbers<[1], [0], [0], [1], [0, 0, 1, 1], [], []>} : vector<128x256xbf16>, vector<256x128xbf16>, vector<128x128xf32> -> vector<128x128xf32>
    %c0_200 = arith.constant 0 : index
    %c8_201 = arith.constant 8 : index
    %c0_202 = arith.constant 0 : index
    %217 = vector.load %arg10[%c0_200, %c8_201, %c0_202] : memref<10x32x256xbf16, #tpu.memory_space<vmem>>, vector<8x16x256xbf16>
    %218 = vector.shape_cast %217 : vector<8x16x256xbf16> to vector<128x256xbf16>
    %c0_203 = arith.constant 0 : index
    %c1_204 = arith.constant 1 : index
    %c0_205 = arith.constant 0 : index
    %c0_206 = arith.constant 0 : index
    %219 = vector.load %arg4[%c0_203, %c1_204, %c0_205, %c0_206] : memref<3x3x256x128xbf16, #tpu.memory_space<vmem>>, vector<1x1x256x128xbf16>
    %220 = vector.shape_cast %219 : vector<1x1x256x128xbf16> to vector<256x128xbf16>
    %cst_207 = arith.constant dense<0.000000e+00> : vector<128x128xf32>
    %221 = tpu.matmul %218, %220, %cst_207 {dimension_numbers = #tpu.dot_dimension_numbers<[1], [0], [0], [1], [0, 0, 1, 1], [], []>} : vector<128x256xbf16>, vector<256x128xbf16>, vector<128x128xf32> -> vector<128x128xf32>
    %222 = arith.addf %216, %221 : vector<128x128xf32>
    %c0_208 = arith.constant 0 : index
    %c9 = arith.constant 9 : index
    %c0_209 = arith.constant 0 : index
    %223 = vector.load %arg10[%c0_208, %c9, %c0_209] : memref<10x32x256xbf16, #tpu.memory_space<vmem>>, vector<8x16x256xbf16>
    %224 = vector.shape_cast %223 : vector<8x16x256xbf16> to vector<128x256xbf16>
    %c0_210 = arith.constant 0 : index
    %c2_211 = arith.constant 2 : index
    %c0_212 = arith.constant 0 : index
    %c0_213 = arith.constant 0 : index
    %225 = vector.load %arg4[%c0_210, %c2_211, %c0_212, %c0_213] : memref<3x3x256x128xbf16, #tpu.memory_space<vmem>>, vector<1x1x256x128xbf16>
    %226 = vector.shape_cast %225 : vector<1x1x256x128xbf16> to vector<256x128xbf16>
    %cst_214 = arith.constant dense<0.000000e+00> : vector<128x128xf32>
    %227 = tpu.matmul %224, %226, %cst_214 {dimension_numbers = #tpu.dot_dimension_numbers<[1], [0], [0], [1], [0, 0, 1, 1], [], []>} : vector<128x256xbf16>, vector<256x128xbf16>, vector<128x128xf32> -> vector<128x128xf32>
    %228 = arith.addf %222, %227 : vector<128x128xf32>
    %c1_215 = arith.constant 1 : index
    %c7_216 = arith.constant 7 : index
    %c0_217 = arith.constant 0 : index
    %229 = vector.load %arg10[%c1_215, %c7_216, %c0_217] : memref<10x32x256xbf16, #tpu.memory_space<vmem>>, vector<8x16x256xbf16>
    %230 = vector.shape_cast %229 : vector<8x16x256xbf16> to vector<128x256xbf16>
    %c1_218 = arith.constant 1 : index
    %c0_219 = arith.constant 0 : index
    %c0_220 = arith.constant 0 : index
    %c0_221 = arith.constant 0 : index
    %231 = vector.load %arg4[%c1_218, %c0_219, %c0_220, %c0_221] : memref<3x3x256x128xbf16, #tpu.memory_space<vmem>>, vector<1x1x256x128xbf16>
    %232 = vector.shape_cast %231 : vector<1x1x256x128xbf16> to vector<256x128xbf16>
    %cst_222 = arith.constant dense<0.000000e+00> : vector<128x128xf32>
    %233 = tpu.matmul %230, %232, %cst_222 {dimension_numbers = #tpu.dot_dimension_numbers<[1], [0], [0], [1], [0, 0, 1, 1], [], []>} : vector<128x256xbf16>, vector<256x128xbf16>, vector<128x128xf32> -> vector<128x128xf32>
    %234 = arith.addf %228, %233 : vector<128x128xf32>
    %c1_223 = arith.constant 1 : index
    %c8_224 = arith.constant 8 : index
    %c0_225 = arith.constant 0 : index
    %235 = vector.load %arg10[%c1_223, %c8_224, %c0_225] : memref<10x32x256xbf16, #tpu.memory_space<vmem>>, vector<8x16x256xbf16>
    %236 = vector.shape_cast %235 : vector<8x16x256xbf16> to vector<128x256xbf16>
    %c1_226 = arith.constant 1 : index
    %c1_227 = arith.constant 1 : index
    %c0_228 = arith.constant 0 : index
    %c0_229 = arith.constant 0 : index
    %237 = vector.load %arg4[%c1_226, %c1_227, %c0_228, %c0_229] : memref<3x3x256x128xbf16, #tpu.memory_space<vmem>>, vector<1x1x256x128xbf16>
    %238 = vector.shape_cast %237 : vector<1x1x256x128xbf16> to vector<256x128xbf16>
    %cst_230 = arith.constant dense<0.000000e+00> : vector<128x128xf32>
    %239 = tpu.matmul %236, %238, %cst_230 {dimension_numbers = #tpu.dot_dimension_numbers<[1], [0], [0], [1], [0, 0, 1, 1], [], []>} : vector<128x256xbf16>, vector<256x128xbf16>, vector<128x128xf32> -> vector<128x128xf32>
    %240 = arith.addf %234, %239 : vector<128x128xf32>
    %c1_231 = arith.constant 1 : index
    %c9_232 = arith.constant 9 : index
    %c0_233 = arith.constant 0 : index
    %241 = vector.load %arg10[%c1_231, %c9_232, %c0_233] : memref<10x32x256xbf16, #tpu.memory_space<vmem>>, vector<8x16x256xbf16>
    %242 = vector.shape_cast %241 : vector<8x16x256xbf16> to vector<128x256xbf16>
    %c1_234 = arith.constant 1 : index
    %c2_235 = arith.constant 2 : index
    %c0_236 = arith.constant 0 : index
    %c0_237 = arith.constant 0 : index
    %243 = vector.load %arg4[%c1_234, %c2_235, %c0_236, %c0_237] : memref<3x3x256x128xbf16, #tpu.memory_space<vmem>>, vector<1x1x256x128xbf16>
    %244 = vector.shape_cast %243 : vector<1x1x256x128xbf16> to vector<256x128xbf16>
    %cst_238 = arith.constant dense<0.000000e+00> : vector<128x128xf32>
    %245 = tpu.matmul %242, %244, %cst_238 {dimension_numbers = #tpu.dot_dimension_numbers<[1], [0], [0], [1], [0, 0, 1, 1], [], []>} : vector<128x256xbf16>, vector<256x128xbf16>, vector<128x128xf32> -> vector<128x128xf32>
    %246 = arith.addf %240, %245 : vector<128x128xf32>
    %c2_239 = arith.constant 2 : index
    %c7_240 = arith.constant 7 : index
    %c0_241 = arith.constant 0 : index
    %247 = vector.load %arg10[%c2_239, %c7_240, %c0_241] : memref<10x32x256xbf16, #tpu.memory_space<vmem>>, vector<8x16x256xbf16>
    %248 = vector.shape_cast %247 : vector<8x16x256xbf16> to vector<128x256xbf16>
    %c2_242 = arith.constant 2 : index
    %c0_243 = arith.constant 0 : index
    %c0_244 = arith.constant 0 : index
    %c0_245 = arith.constant 0 : index
    %249 = vector.load %arg4[%c2_242, %c0_243, %c0_244, %c0_245] : memref<3x3x256x128xbf16, #tpu.memory_space<vmem>>, vector<1x1x256x128xbf16>
    %250 = vector.shape_cast %249 : vector<1x1x256x128xbf16> to vector<256x128xbf16>
    %cst_246 = arith.constant dense<0.000000e+00> : vector<128x128xf32>
    %251 = tpu.matmul %248, %250, %cst_246 {dimension_numbers = #tpu.dot_dimension_numbers<[1], [0], [0], [1], [0, 0, 1, 1], [], []>} : vector<128x256xbf16>, vector<256x128xbf16>, vector<128x128xf32> -> vector<128x128xf32>
    %252 = arith.addf %246, %251 : vector<128x128xf32>
    %c2_247 = arith.constant 2 : index
    %c8_248 = arith.constant 8 : index
    %c0_249 = arith.constant 0 : index
    %253 = vector.load %arg10[%c2_247, %c8_248, %c0_249] : memref<10x32x256xbf16, #tpu.memory_space<vmem>>, vector<8x16x256xbf16>
    %254 = vector.shape_cast %253 : vector<8x16x256xbf16> to vector<128x256xbf16>
    %c2_250 = arith.constant 2 : index
    %c1_251 = arith.constant 1 : index
    %c0_252 = arith.constant 0 : index
    %c0_253 = arith.constant 0 : index
    %255 = vector.load %arg4[%c2_250, %c1_251, %c0_252, %c0_253] : memref<3x3x256x128xbf16, #tpu.memory_space<vmem>>, vector<1x1x256x128xbf16>
    %256 = vector.shape_cast %255 : vector<1x1x256x128xbf16> to vector<256x128xbf16>
    %cst_254 = arith.constant dense<0.000000e+00> : vector<128x128xf32>
    %257 = tpu.matmul %254, %256, %cst_254 {dimension_numbers = #tpu.dot_dimension_numbers<[1], [0], [0], [1], [0, 0, 1, 1], [], []>} : vector<128x256xbf16>, vector<256x128xbf16>, vector<128x128xf32> -> vector<128x128xf32>
    %258 = arith.addf %252, %257 : vector<128x128xf32>
    %c2_255 = arith.constant 2 : index
    %c9_256 = arith.constant 9 : index
    %c0_257 = arith.constant 0 : index
    %259 = vector.load %arg10[%c2_255, %c9_256, %c0_257] : memref<10x32x256xbf16, #tpu.memory_space<vmem>>, vector<8x16x256xbf16>
    %260 = vector.shape_cast %259 : vector<8x16x256xbf16> to vector<128x256xbf16>
    %c2_258 = arith.constant 2 : index
    %c2_259 = arith.constant 2 : index
    %c0_260 = arith.constant 0 : index
    %c0_261 = arith.constant 0 : index
    %261 = vector.load %arg4[%c2_258, %c2_259, %c0_260, %c0_261] : memref<3x3x256x128xbf16, #tpu.memory_space<vmem>>, vector<1x1x256x128xbf16>
    %262 = vector.shape_cast %261 : vector<1x1x256x128xbf16> to vector<256x128xbf16>
    %cst_262 = arith.constant dense<0.000000e+00> : vector<128x128xf32>
    %263 = tpu.matmul %260, %262, %cst_262 {dimension_numbers = #tpu.dot_dimension_numbers<[1], [0], [0], [1], [0, 0, 1, 1], [], []>} : vector<128x256xbf16>, vector<256x128xbf16>, vector<128x128xf32> -> vector<128x128xf32>
    %264 = arith.addf %258, %263 : vector<128x128xf32>
    %265 = vector.broadcast %4 : vector<1x128xf32> to vector<128x128xf32>
    %266 = arith.mulf %264, %265 : vector<128x128xf32>
    %267 = vector.broadcast %5 : vector<1x128xf32> to vector<128x128xf32>
    %268 = arith.addf %266, %267 : vector<128x128xf32>
    %269 = vector.shape_cast %268 : vector<128x128xf32> to vector<8x16x128xf32>
    %c0_263 = arith.constant 0 : index
    %c0_264 = arith.constant 0 : index
    %c0_265 = arith.constant 0 : index
    %c0_266 = arith.constant 0 : index
    %270 = vector.load %arg9[%c0_263, %c0_264, %c0_265, %c0_266] : memref<1x8x16x128xf32, #tpu.memory_space<vmem>>, vector<1x8x16x128xf32>
    %271 = vector.shape_cast %270 : vector<1x8x16x128xf32> to vector<8x16x128xf32>
    %272 = vector.shape_cast %269 : vector<8x16x128xf32> to vector<1x8x16x128xf32>
    tpu.vector_store %arg9[%c0_263, %c0_264, %c0_265, %c0_266], %272 {strides = array<i32>} : memref<1x8x16x128xf32, #tpu.memory_space<vmem>>, vector<1x8x16x128xf32>,
    return
  }
  func.func @transform_0(%arg0: i32, %arg1: i32) -> (i32, i32, i32, i32) {
    %c0_i32 = arith.constant 0 : i32
    %c0_i32_0 = arith.constant 0 : i32
    %c0_i32_1 = arith.constant 0 : i32
    %c0_i32_2 = arith.constant 0 : i32
    return %arg0, %c0_i32, %c0_i32_0, %c0_i32_1 : i32, i32, i32, i32
  }
  func.func @transform_1(%arg0: i32, %arg1: i32) -> (i32, i32, i32, i32) {
    %c0_i32 = arith.constant 0 : i32
    %c0_i32_0 = arith.constant 0 : i32
    %c0_i32_1 = arith.constant 0 : i32
    %c0_i32_2 = arith.constant 0 : i32
    %c0_i32_3 = arith.constant 0 : i32
    return %c0_i32, %c0_i32_0, %c0_i32_1, %c0_i32_2 : i32, i32, i32, i32
  }
  func.func @transform_2(%arg0: i32, %arg1: i32) -> (i32, i32, i32, i32) {
    %c0_i32 = arith.constant 0 : i32
    %c0_i32_0 = arith.constant 0 : i32
    %c0_i32_1 = arith.constant 0 : i32
    %c0_i32_2 = arith.constant 0 : i32
    %c0_i32_3 = arith.constant 0 : i32
    return %c0_i32, %c0_i32_0, %c0_i32_1, %c0_i32_2 : i32, i32, i32, i32
  }
  func.func @transform_3(%arg0: i32, %arg1: i32) -> (i32, i32) {
    %c0_i32 = arith.constant 0 : i32
    %c0_i32_0 = arith.constant 0 : i32
    %c0_i32_1 = arith.constant 0 : i32
    return %c0_i32, %c0_i32_0 : i32, i32
  }
  func.func @transform_4(%arg0: i32, %arg1: i32) -> (i32, i32) {
    %c0_i32 = arith.constant 0 : i32
    %c0_i32_0 = arith.constant 0 : i32
    %c0_i32_1 = arith.constant 0 : i32
    return %c0_i32, %c0_i32_0 : i32, i32
  }
  func.func @transform_5(%arg0: i32, %arg1: i32) -> (i32, i32) {
    %c0_i32 = arith.constant 0 : i32
    %c0_i32_0 = arith.constant 0 : i32
    %c0_i32_1 = arith.constant 0 : i32
    return %c0_i32, %c0_i32_0 : i32, i32
  }
  func.func @transform_6(%arg0: i32, %arg1: i32) -> (i32, i32) {
    %c0_i32 = arith.constant 0 : i32
    %c0_i32_0 = arith.constant 0 : i32
    %c0_i32_1 = arith.constant 0 : i32
    return %c0_i32, %c0_i32_0 : i32, i32
  }
  func.func @transform_7(%arg0: i32, %arg1: i32) -> (i32, i32, i32, i32) {
    %c0_i32 = arith.constant 0 : i32
    %c0_i32_0 = arith.constant 0 : i32
    %c0_i32_1 = arith.constant 0 : i32
    return %arg0, %arg1, %c0_i32, %c0_i32_0 : i32, i32, i32, i32
  }
}

</mosaic_0001>

<llo_original>
// kernel: conv_block_forward.1
$region0: #{conv_block_forward.1}
  #allocation0 [shape = 'u32[]', space=smem, size = 0x4, offset = 0x4, fixed_abs, tag = 'smem constant byte address 0x4 - core index']
  #allocation1 [shape = 'u32[72,128]{1,0:T(1,128)}', space=vmem, size = 0x9000, scoped, tag = 'internal scratch']
  #allocation2 [shape = 'bf16[10,32,256]{2,1,0:T(8,128)(2,1)}', space=vmem, size = 0x28000, scoped, tag = 'scratch operand']
  %s0 = inlined_call_operand.vmem [shape: bf16[2,20,18,128], index: 0, kind: input, shape index: {}]
  %s1 = inlined_call_operand.vmem [shape: bf16[3,3,128,256], index: 1, kind: input, shape index: {}]
  %s2 = inlined_call_operand.vmem [shape: bf16[3,3,256,128], index: 2, kind: input, shape index: {}]
  %s3 = inlined_call_operand.vmem [shape: f32[1,256], index: 3, kind: input, shape index: {}]
  %s4 = inlined_call_operand.vmem [shape: f32[1,256], index: 4, kind: input, shape index: {}]
  %s5 = inlined_call_operand.vmem [shape: f32[1,128], index: 5, kind: input, shape index: {}]
  %s6 = inlined_call_operand.vmem [shape: f32[1,128], index: 6, kind: input, shape index: {}]
  %s7 = inlined_call_operand.hbm [shape: f32[2,16,16,128], index: 7, kind: output, shape index: {}]
  %s8 = sld [smem:[#allocation0]]
  $region73: #{conv_block_forward.1} parent=0
    _
  %s10 = ssub.s32 1, %s8
  %s11 = scalar_select 0, %s10, %s8
  $region1: #{conv_block_forward.1} parent=0
    #allocation3 [shape = 'u8[131072]{0}', space=vmem, size = 0x20000, scoped, tag = 'output window, operand 0']
    #allocation4 [shape = 's32[2]{0}', space=sflag, size = 0x8, scoped, tag = 'scoped memory for conv_block_forward.1']
    %12 = vsyncpa [#allocation4], 0
    %s13 = scalar_lea.sflag [#allocation4], 1
    %14 = vsyncpa %s13, 0
    loop: start=0, step=1, limit=6
    $region2: #{conv_block_forward.1} parent=1 // loop_pre_header
      _
    $region3: #{conv_block_forward.1} parent=1 // loop_header
      %s16 = sphi 0, %s20
      %p17 = scmp.ge.s32.totalorder %s16, 6
      %s23 = sphi 0, %s35
      %s24 = sphi 0, %s31
      %s25 = sphi 0, %s23
      %s26 = sphi 0, %s24
      %s27 = sphi 0, %s25
      %s28 = sphi 0, %s26
      %s38 = sphi 0, %s40
      %s41 = sphi 0, %s38
      %s42 = sphi 0, %s41
      %s58 = sphi 0, %s42
      %s62 = sphi 0, %s62
      %s64 = sphi 0, %s62
      %s65 = sphi 0, %s64
      %s79 = sphi 0, %s65
      %s83 = sphi 0, %s83
      %s85 = sphi 0, %s83
      %s86 = sphi 0, %s85
      %s100 = sphi 0, %s86
      %s104 = sphi 0, %s104
      %s106 = sphi 0, %s104
      %s107 = sphi 0, %s106
      %s121 = sphi 0, %s107
      %s125 = sphi 0, %s125
      %s127 = sphi 0, %s125
      %s128 = sphi 0, %s127
      %s142 = sphi 0, %s128
      %s146 = sphi 0, %s146
      %s148 = sphi 0, %s146
      %s149 = sphi 0, %s148
      %s163 = sphi 0, %s149
      %s167 = sphi 0, %s167
      %s169 = sphi 0, %s167
      %s170 = sphi 0, %s169
      %s184 = sphi 0, %s170
      %s192 = sphi 0, %s194
      %s195 = sphi 0, %s192
      %s196 = sphi 0, %s195
      %s212 = sphi 0, %s196
    $region4: #{conv_block_forward.1} parent=1 // loop_header_branch
      %19 = sbr.rel (%p17) target = $region8
    $region5: #{conv_block_forward.1} parent=1 // loop_body
      %s21 = ssub.s32 %s16, 1
      %s22 = ssub.s32 %s16, 2
      %s29 = sadd.s32 1, %s24
      %p30 = scmp.ge.s32.totalorder %s29, 2
      %s31 = scalar_select %p30, 0, %s29
      %s32 = sadd.s32 1, %s23
      %s33 = scalar_select %p30, %s32, %s23
      %p34 = scmp.ge.s32.totalorder %s33, 2
      %s35 = scalar_select %p34, 0, %s33
      %s36 = ssub.s32 %s23, %s35
      %p37 = scmp.eq.s32.totalorder %s36, 0
      %s39 = sadd.s32 %s38, 1
      %s40 = scalar_select %p37, %s38, %s39
      %p43 = pneg %p37
      %p44 = scmp.eq.s32.totalorder %s16, 3
      %p45 = por %p43, %p44
      %p46 = scmp.ne.s32.totalorder %s38, %s41
      %p47 = scmp.eq.s32.totalorder %s16, 0
      %p48 = por %p46, %p47
      %p49 = scmp.ne.s32.totalorder %s38, %s41
      %p50 = scmp.eq.s32.totalorder %s21, 3
      %p51 = por %p49, %p50
      %p52 = scmp.ne.s32.totalorder %s41, %s42
      %p53 = scmp.eq.s32.totalorder %s21, 0
      %p54 = por %p52, %p53
      %p55 = scmp.ne.s32.totalorder %s41, %s42
      %p56 = scmp.eq.s32.totalorder %s22, 3
      %p57 = por %p55, %p56
      %p59 = scmp.ne.s32.totalorder %s42, %s58
      %p60 = scmp.eq.s32.totalorder %s22, 0
      %p61 = por %p59, %p60
      %s63 = sadd.s32 %s62, 1
      %p66 = scmp.eq.s32.totalorder %s16, 3
      %p67 = scmp.ne.s32.totalorder %s62, %s64
      %p68 = scmp.eq.s32.totalorder %s16, 0
      %p69 = por %p67, %p68
      %p70 = scmp.ne.s32.totalorder %s62, %s64
      %p71 = scmp.eq.s32.totalorder %s21, 3
      %p72 = por %p70, %p71
      %p73 = scmp.ne.s32.totalorder %s64, %s65
      %p74 = scmp.eq.s32.totalorder %s21, 0
      %p75 = por %p73, %p74
      %p76 = scmp.ne.s32.totalorder %s64, %s65
      %p77 = scmp.eq.s32.totalorder %s22, 3
      %p78 = por %p76, %p77
      %p80 = scmp.ne.s32.totalorder %s65, %s79
      %p81 = scmp.eq.s32.totalorder %s22, 0
      %p82 = por %p80, %p81
      %s84 = sadd.s32 %s83, 1
      %p87 = scmp.eq.s32.totalorder %s16, 3
      %p88 = scmp.ne.s32.totalorder %s83, %s85
      %p89 = scmp.eq.s32.totalorder %s16, 0
      %p90 = por %p88, %p89
      %p91 = scmp.ne.s32.totalorder %s83, %s85
      %p92 = scmp.eq.s32.totalorder %s21, 3
      %p93 = por %p91, %p92
      %p94 = scmp.ne.s32.totalorder %s85, %s86
      %p95 = scmp.eq.s32.totalorder %s21, 0
      %p96 = por %p94, %p95
      %p97 = scmp.ne.s32.totalorder %s85, %s86
      %p98 = scmp.eq.s32.totalorder %s22, 3
      %p99 = por %p97, %p98
      %p101 = scmp.ne.s32.totalorder %s86, %s100
      %p102 = scmp.eq.s32.totalorder %s22, 0
      %p103 = por %p101, %p102
      %s105 = sadd.s32 %s104, 1
      %p108 = scmp.eq.s32.totalorder %s16, 3
      %p109 = scmp.ne.s32.totalorder %s104, %s106
      %p110 = scmp.eq.s32.totalorder %s16, 0
      %p111 = por %p109, %p110
      %p112 = scmp.ne.s32.totalorder %s104, %s106
      %p113 = scmp.eq.s32.totalorder %s21, 3
      %p114 = por %p112, %p113
      %p115 = scmp.ne.s32.totalorder %s106, %s107
      %p116 = scmp.eq.s32.totalorder %s21, 0
      %p117 = por %p115, %p116
      %p118 = scmp.ne.s32.totalorder %s106, %s107
      %p119 = scmp.eq.s32.totalorder %s22, 3
      %p120 = por %p118, %p119
      %p122 = scmp.ne.s32.totalorder %s107, %s121
      %p123 = scmp.eq.s32.totalorder %s22, 0
      %p124 = por %p122, %p123
      %s126 = sadd.s32 %s125, 1
      %p129 = scmp.eq.s32.totalorder %s16, 3
      %p130 = scmp.ne.s32.totalorder %s125, %s127
      %p131 = scmp.eq.s32.totalorder %s16, 0
      %p132 = por %p130, %p131
      %p133 = scmp.ne.s32.totalorder %s125, %s127
      %p134 = scmp.eq.s32.totalorder %s21, 3
      %p135 = por %p133, %p134
      %p136 = scmp.ne.s32.totalorder %s127, %s128
      %p137 = scmp.eq.s32.totalorder %s21, 0
      %p138 = por %p136, %p137
      %p139 = scmp.ne.s32.totalorder %s127, %s128
      %p140 = scmp.eq.s32.totalorder %s22, 3
      %p141 = por %p139, %p140
      %p143 = scmp.ne.s32.totalorder %s128, %s142
      %p144 = scmp.eq.s32.totalorder %s22, 0
      %p145 = por %p143, %p144
      %s147 = sadd.s32 %s146, 1
      %p150 = scmp.eq.s32.totalorder %s16, 3
      %p151 = scmp.ne.s32.totalorder %s146, %s148
      %p152 = scmp.eq.s32.totalorder %s16, 0
      %p153 = por %p151, %p152
      %p154 = scmp.ne.s32.totalorder %s146, %s148
      %p155 = scmp.eq.s32.totalorder %s21, 3
      %p156 = por %p154, %p155
      %p157 = scmp.ne.s32.totalorder %s148, %s149
      %p158 = scmp.eq.s32.totalorder %s21, 0
      %p159 = por %p157, %p158
      %p160 = scmp.ne.s32.totalorder %s148, %s149
      %p161 = scmp.eq.s32.totalorder %s22, 3
      %p162 = por %p160, %p161
      %p164 = scmp.ne.s32.totalorder %s149, %s163
      %p165 = scmp.eq.s32.totalorder %s22, 0
      %p166 = por %p164, %p165
      %s168 = sadd.s32 %s167, 1
      %p171 = scmp.eq.s32.totalorder %s16, 3
      %p172 = scmp.ne.s32.totalorder %s167, %s169
      %p173 = scmp.eq.s32.totalorder %s16, 0
      %p174 = por %p172, %p173
      %p175 = scmp.ne.s32.totalorder %s167, %s169
      %p176 = scmp.eq.s32.totalorder %s21, 3
      %p177 = por %p175, %p176
      %p178 = scmp.ne.s32.totalorder %s169, %s170
      %p179 = scmp.eq.s32.totalorder %s21, 0
      %p180 = por %p178, %p179
      %p181 = scmp.ne.s32.totalorder %s169, %s170
      %p182 = scmp.eq.s32.totalorder %s22, 3
      %p183 = por %p181, %p182
      %p185 = scmp.ne.s32.totalorder %s170, %s184
      %p186 = scmp.eq.s32.totalorder %s22, 0
      %p187 = por %p185, %p186
      %s188 = ssub.s32 %s23, %s35
      %s189 = ssub.s32 %s24, %s31
      %s190 = sor.u32 %s188, %s189
      %p191 = scmp.eq.s32.totalorder %s190, 0
      %s193 = sadd.s32 %s192, 1
      %s194 = scalar_select %p191, %s192, %s193
      %p197 = pneg %p191
      %p198 = scmp.eq.s32.totalorder %s16, 3
      %p199 = por %p197, %p198
      %p200 = scmp.ne.s32.totalorder %s192, %s195
      %p201 = scmp.eq.s32.totalorder %s16, 0
      %p202 = por %p200, %p201
      %p203 = scmp.ne.s32.totalorder %s192, %s195
      %p204 = scmp.eq.s32.totalorder %s21, 3
      %p205 = por %p203, %p204
      %p206 = scmp.ne.s32.totalorder %s195, %s196
      %p207 = scmp.eq.s32.totalorder %s21, 0
      %p208 = por %p206, %p207
      %p209 = scmp.ne.s32.totalorder %s195, %s196
      %p210 = scmp.eq.s32.totalorder %s22, 3
      %p211 = por %p209, %p210
      %p213 = scmp.ne.s32.totalorder %s196, %s212
      %p214 = scmp.eq.s32.totalorder %s22, 0
      %p215 = por %p213, %p214
      %p216 = scmp.le.s32.totalorder 1, %s16
      %p217 = scmp.lt.s32.totalorder %s16, 5
      %p218 = pnand %p216, %p217
      %p219 = pneg %p218
      // Predicated region
      $region9: #{conv_block_forward.1} parent=5 // pred_check
        _
      $region10: #{conv_block_forward.1} parent=5 // pred_check_branch
        %221 = sbr.rel (%p218) target = $region12
      $region11: #{conv_block_forward.1} parent=5 // pred_region
        %s222 = ssub.s32 %s16, 1
        // Predicated region
        $region13: #{conv_block_forward.1} parent=11 // pred_check
          %p223 = pneg %p75
        $region14: #{conv_block_forward.1} parent=11 // pred_check_branch
          %225 = sbr.rel (%p223) target = $region16
        $region15: #{conv_block_forward.1} parent=11 // pred_region
          _
        $region16: #{conv_block_forward.1} parent=11 // pred_fallthru
          _
        // Predicated region
        $region17: #{conv_block_forward.1} parent=11 // pred_check
          %p226 = pneg %p96
        $region18: #{conv_block_forward.1} parent=11 // pred_check_branch
          %228 = sbr.rel (%p226) target = $region20
        $region19: #{conv_block_forward.1} parent=11 // pred_region
          _
        $region20: #{conv_block_forward.1} parent=11 // pred_fallthru
          _
        // Predicated region
        $region21: #{conv_block_forward.1} parent=11 // pred_check
          %p229 = pneg %p117
        $region22: #{conv_block_forward.1} parent=11 // pred_check_branch
          %231 = sbr.rel (%p229) target = $region24
        $region23: #{conv_block_forward.1} parent=11 // pred_region
          _
        $region24: #{conv_block_forward.1} parent=11 // pred_fallthru
          _
        // Predicated region
        $region25: #{conv_block_forward.1} parent=11 // pred_check
          %p232 = pneg %p138
        $region26: #{conv_block_forward.1} parent=11 // pred_check_branch
          %234 = sbr.rel (%p232) target = $region28
        $region27: #{conv_block_forward.1} parent=11 // pred_region
          _
        $region28: #{conv_block_forward.1} parent=11 // pred_fallthru
          _
        // Predicated region
        $region29: #{conv_block_forward.1} parent=11 // pred_check
          %p235 = pneg %p159
        $region30: #{conv_block_forward.1} parent=11 // pred_check_branch
          %237 = sbr.rel (%p235) target = $region32
        $region31: #{conv_block_forward.1} parent=11 // pred_region
          _
        $region32: #{conv_block_forward.1} parent=11 // pred_fallthru
          _
        // Predicated region
        $region33: #{conv_block_forward.1} parent=11 // pred_check
          %p238 = pneg %p180
        $region34: #{conv_block_forward.1} parent=11 // pred_check_branch
          %240 = sbr.rel (%p238) target = $region36
        $region35: #{conv_block_forward.1} parent=11 // pred_region
          _
        $region36: #{conv_block_forward.1} parent=11 // pred_fallthru
          _
      $region12: #{conv_block_forward.1} parent=5 // pred_fallthru
        _
      %p241 = scmp.lt.s32.totalorder %s16, 4
      // Predicated region
      $region37: #{conv_block_forward.1} parent=5 // pred_check
        %p242 = pneg %p241
      $region38: #{conv_block_forward.1} parent=5 // pred_check_branch
        %244 = sbr.rel (%p242) target = $region40
      $region39: #{conv_block_forward.1} parent=5 // pred_region
        // Predicated region
        $region41: #{conv_block_forward.1} parent=39 // pred_check
          %p245 = pneg %p48
        $region42: #{conv_block_forward.1} parent=39 // pred_check_branch
          %247 = sbr.rel (%p245) target = $region44
        $region43: #{conv_block_forward.1} parent=39 // pred_region
          %p248 = scmp.lt.s32.totalorder %s23, 1
          %s249 = scalar_select %p248, %s23, 1
          %s250 = smul.addr %s249, 60
          %s251 = smul.addr %s250, 4
          %s252 = scalar_lea.vmem %s0, %s251
        $region44: #{conv_block_forward.1} parent=39 // pred_fallthru
          _
      $region40: #{conv_block_forward.1} parent=5 // pred_fallthru
        _
      %p253 = scmp.le.s32.totalorder 1, %s16
      %p254 = scmp.lt.s32.totalorder %s16, 5
      %p255 = pnand %p253, %p254
      %p256 = pneg %p255
      // Predicated region
      $region45: #{conv_block_forward.1} parent=5 // pred_check
        _
      $region46: #{conv_block_forward.1} parent=5 // pred_check_branch
        %258 = sbr.rel (%p255) target = $region48
      $region47: #{conv_block_forward.1} parent=5 // pred_region
        %s259 = ssub.s32 %s16, 1
        %p260 = scmp.lt.s32.totalorder %s25, 1
        %s261 = scalar_select %p260, %s25, 1
        %s262 = smul.addr %s261, 60
        %s263 = smul.addr %s262, 4
        %s264 = scalar_lea.vmem %s0, %s263
        %p265 = pneg %p54
        %p266 = pneg %p51
        %p267 = pneg %p75
        %p268 = pneg %p72
        %p269 = pneg %p96
        %p270 = pneg %p93
        %p271 = pneg %p117
        %p272 = pneg %p114
        %p273 = pneg %p138
        %p274 = pneg %p135
        %p275 = pneg %p159
        %p276 = pneg %p156
        %p277 = pneg %p180
        %p278 = pneg %p177
        %p279 = pneg %p208
        %p280 = pneg %p205
        %s281 = sand.u32 %s195, 1
        %s282 = scalar_lea.sflag [#allocation4], %s281
        %s283 = sand.u32 %s195, 1
        %s284 = smul.addr %s283, 128
        %s285 = scalar_lea.vmem [#allocation3], %s284
        %p286 = scmp.lt.s32.totalorder %s25, 1
        %s287 = scalar_select %p286, %s25, 1
        %s288 = smul.addr %s287, 60
        %s289 = smul.addr %s288, 4
        %s290 = scalar_lea.vmem %s0, %s289
        %s291 = smul.u32 8, %s26
        %s293 = smul.u32 %s26, 8
        %v294 = vld [vmem:[%s3] sm:$0x3]
        %v295 = vld [vmem:[%s4] sm:$0x3]
        %v296 = vld [vmem:[%s5] sm:$0x1]
        %v297 = vld [vmem:[%s6] sm:$0x1]
        %p298 = scmp.eq.s32.totalorder %s26, 0
        // Predicated region
        $region49: #{conv_block_forward.1} parent=47 // pred_check
          %p299 = pneg %p298
        $region50: #{conv_block_forward.1} parent=47 // pred_check_branch
          %301 = sbr.rel (%p299) target = $region52
        $region51: #{conv_block_forward.1} parent=47 // pred_region
          %302 = vst [vmem:[#allocation2] sm:$0xff] 0
          %303 = vst [vmem:[#allocation2 + $0x20] sm:$0xff] 0
          %304 = vst [vmem:[#allocation2 + $0x40] sm:$0xff] 0
          %305 = vst [vmem:[#allocation2 + $0x60] sm:$0xff] 0
          %306 = vst [vmem:[#allocation2 + $0x80] sm:$0xff] 0
          %307 = vst [vmem:[#allocation2 + $0xa0] sm:$0xff] 0
          %308 = vst [vmem:[#allocation2 + $0xc0] sm:$0xff] 0
          %309 = vst [vmem:[#allocation2 + $0xe0] sm:$0xff] 0
          %310 = vst [vmem:[#allocation2 + $0x100] sm:$0xff] 0
          %311 = vst [vmem:[#allocation2 + $0x120] sm:$0xff] 0
          %312 = vst [vmem:[#allocation2 + $0x18] sm:$0xff] 0
          %313 = vst [vmem:[#allocation2 + $0x38] sm:$0xff] 0
          %314 = vst [vmem:[#allocation2 + $0x58] sm:$0xff] 0
          %315 = vst [vmem:[#allocation2 + $0x78] sm:$0xff] 0
          %316 = vst [vmem:[#allocation2 + $0x98] sm:$0xff] 0
          %317 = vst [vmem:[#allocation2 + $0xb8] sm:$0xff] 0
          %318 = vst [vmem:[#allocation2 + $0xd8] sm:$0xff] 0
          %319 = vst [vmem:[#allocation2 + $0xf8] sm:$0xff] 0
          %320 = vst [vmem:[#allocation2 + $0x118] sm:$0xff] 0
          %321 = vst [vmem:[#allocation2 + $0x138] sm:$0xff] 0
        $region52: #{conv_block_forward.1} parent=47 // pred_fallthru
          _
        %s322 = smul.u32 %s293, 3
        %s323 = smul.addr %s322, 4
        %s324 = scalar_lea.vmem %s290, %s323
        %v325 = vld [vmem:[%s324] sm:$0xf]
        %v326 = vld [vmem:[%s324 + $0x4] sm:$0xf]
        %v327 = vld [vmem:[%s324 + $0xc] sm:$0xf]
        %v328 = vld [vmem:[%s324 + $0x10] sm:$0xf]
        %v329 = vld [vmem:[%s324 + $0x18] sm:$0xf]
        %v330 = vld [vmem:[%s324 + $0x1c] sm:$0xf]
        %v331 = vld [vmem:[%s324 + $0x24] sm:$0xf]
        %v332 = vld [vmem:[%s324 + $0x28] sm:$0xf]
        %v333 = vld [vmem:[%s324 + $0x30] sm:$0xf]
        %v334 = vld [vmem:[%s324 + $0x34] sm:$0xf]
        %v335 = vld [vmem:[%s324 + $0x3c] sm:$0xf]
        %v336 = vld [vmem:[%s324 + $0x40] sm:$0xf]
        %v337 = vld [vmem:[%s1] sm:$0xff]
        %v338 = vld [vmem:[%s1 + $0x8] sm:$0xff]
        %v339 = vld [vmem:[%s1 + $0x10] sm:$0xff]
        %v340 = vld [vmem:[%s1 + $0x18] sm:$0xff]
        %v341 = vld [vmem:[%s1 + $0x20] sm:$0xff]
        %v342 = vld [vmem:[%s1 + $0x28] sm:$0xff]
        %v343 = vld [vmem:[%s1 + $0x30] sm:$0xff]
        %v344 = vld [vmem:[%s1 + $0x38] sm:$0xff]
        %v345 = vld [vmem:[%s1 + $0x40] sm:$0xff]
        %v346 = vld [vmem:[%s1 + $0x48] sm:$0xff]
        %v347 = vld [vmem:[%s1 + $0x50] sm:$0xff]
        %v348 = vld [vmem:[%s1 + $0x58] sm:$0xff]
        %v349 = vld [vmem:[%s1 + $0x60] sm:$0xff]
        %v350 = vld [vmem:[%s1 + $0x68] sm:$0xff]
        %v351 = vld [vmem:[%s1 + $0x70] sm:$0xff]
        %v352 = vld [vmem:[%s1 + $0x78] sm:$0xff]
        %v353 = vld [vmem:[%s324 + $0x8] sm:$0x1]
        %v354 = vld [vmem:[%s324 + $0x14] sm:$0x1]
        %v355 = vld [vmem:[%s324 + $0x20] sm:$0x1]
        %v356 = vld [vmem:[%s324 + $0x2c] sm:$0x1]
        %v357 = vld [vmem:[%s324 + $0x38] sm:$0x1]
        %v358 = vld [vmem:[%s324 + $0x44] sm:$0x1]
        %vm359 = vsmask.f32 3328
        %vm360 = vsmask.f32 7440
        %vm361 = vmor %vm359, %vm360
        %v363 = vshrl.u32 %v325, 16
        %v365 = vrot.slane %v363, 4
        %v366 = vshll.u32 %v325, 16
        %v368 = vrot.slane %v366, 5
        %v369 = vor.u32 %v365, %v368
        %v370 = vrot.slane %v369, 4
        %v372 = vshll.u32 %v326, 16
        %v374 = vrot.slane %v372, 5
        %v375 = vsel %vm361, %v370, %v374
        %v376 = vshrl.u32 %v326, 16
        %v378 = vrot.slane %v376, 4
        %v379 = vor.u32 %v378, %v374
        %v380 = vrot.slane %v379, 4
        %v382 = vshll.u32 %v353, 16
        %v384 = vrot.slane %v382, 5
        %v385 = vsel %vm361, %v380, %v384
        %v387 = vshrl.u32 %v327, 16
        %v389 = vrot.slane %v387, 4
        %v390 = vshll.u32 %v327, 16
        %v392 = vrot.slane %v390, 5
        %v393 = vor.u32 %v389, %v392
        %v394 = vrot.slane %v393, 4
        %v396 = vshll.u32 %v328, 16
        %v398 = vrot.slane %v396, 5
        %v399 = vsel %vm361, %v394, %v398
        %v400 = vshrl.u32 %v328, 16
        %v402 = vrot.slane %v400, 4
        %v403 = vor.u32 %v402, %v398
        %v404 = vrot.slane %v403, 4
        %v406 = vshll.u32 %v354, 16
        %v408 = vrot.slane %v406, 5
        %v409 = vsel %vm361, %v404, %v408
        %v411 = vshrl.u32 %v329, 16
        %v413 = vrot.slane %v411, 4
        %v414 = vshll.u32 %v329, 16
        %v416 = vrot.slane %v414, 5
        %v417 = vor.u32 %v413, %v416
        %v418 = vrot.slane %v417, 4
        %v420 = vshll.u32 %v330, 16
        %v422 = vrot.slane %v420, 5
        %v423 = vsel %vm361, %v418, %v422
        %v424 = vshrl.u32 %v330, 16
        %v426 = vrot.slane %v424, 4
        %v427 = vor.u32 %v426, %v422
        %v428 = vrot.slane %v427, 4
        %v430 = vshll.u32 %v355, 16
        %v432 = vrot.slane %v430, 5
        %v433 = vsel %vm361, %v428, %v432
        %v435 = vshrl.u32 %v331, 16
        %v437 = vrot.slane %v435, 4
        %v438 = vshll.u32 %v331, 16
        %v440 = vrot.slane %v438, 5
        %v441 = vor.u32 %v437, %v440
        %v442 = vrot.slane %v441, 4
        %v444 = vshll.u32 %v332, 16
        %v446 = vrot.slane %v444, 5
        %v447 = vsel %vm361, %v442, %v446
        %v448 = vshrl.u32 %v332, 16
        %v450 = vrot.slane %v448, 4
        %v451 = vor.u32 %v450, %v446
        %v452 = vrot.slane %v451, 4
        %v454 = vshll.u32 %v356, 16
        %v456 = vrot.slane %v454, 5
        %v457 = vsel %vm361, %v452, %v456
        %v459 = vshrl.u32 %v333, 16
        %v461 = vrot.slane %v459, 4
        %v462 = vshll.u32 %v333, 16
        %v464 = vrot.slane %v462, 5
        %v465 = vor.u32 %v461, %v464
        %v466 = vrot.slane %v465, 4
        %v468 = vshll.u32 %v334, 16
        %v470 = vrot.slane %v468, 5
        %v471 = vsel %vm361, %v466, %v470
        %v472 = vshrl.u32 %v334, 16
        %v474 = vrot.slane %v472, 4
        %v475 = vor.u32 %v474, %v470
        %v476 = vrot.slane %v475, 4
        %v478 = vshll.u32 %v357, 16
        %v480 = vrot.slane %v478, 5
        %v481 = vsel %vm361, %v476, %v480
        %v483 = vshrl.u32 %v335, 16
        %v485 = vrot.slane %v483, 4
        %v486 = vshll.u32 %v335, 16
        %v488 = vrot.slane %v486, 5
        %v489 = vor.u32 %v485, %v488
        %v490 = vrot.slane %v489, 4
        %v492 = vshll.u32 %v336, 16
        %v494 = vrot.slane %v492, 5
        %v495 = vsel %vm361, %v490, %v494
        %v496 = vshrl.u32 %v336, 16
        %v498 = vrot.slane %v496, 4
        %v499 = vor.u32 %v498, %v494
        %v500 = vrot.slane %v499, 4
        %v502 = vshll.u32 %v358, 16
        %v504 = vrot.slane %v502, 5
        %v505 = vsel %vm361, %v500, %v504
        %s506 = scalar_lea.vmem %s1, 128
        %v507 = vld [vmem:[%s506] sm:$0xff]
        %v508 = vld [vmem:[%s506 + $0x8] sm:$0xff]
        %v509 = vld [vmem:[%s506 + $0x10] sm:$0xff]
        %v510 = vld [vmem:[%s506 + $0x18] sm:$0xff]
        %v511 = vld [vmem:[%s506 + $0x20] sm:$0xff]
        %v512 = vld [vmem:[%s506 + $0x28] sm:$0xff]
        %v513 = vld [vmem:[%s506 + $0x30] sm:$0xff]
        %v514 = vld [vmem:[%s506 + $0x38] sm:$0xff]
        %v515 = vld [vmem:[%s506 + $0x40] sm:$0xff]
        %v516 = vld [vmem:[%s506 + $0x48] sm:$0xff]
        %v517 = vld [vmem:[%s506 + $0x50] sm:$0xff]
        %v518 = vld [vmem:[%s506 + $0x58] sm:$0xff]
        %v519 = vld [vmem:[%s506 + $0x60] sm:$0xff]
        %v520 = vld [vmem:[%s506 + $0x68] sm:$0xff]
        %v521 = vld [vmem:[%s506 + $0x70] sm:$0xff]
        %v522 = vld [vmem:[%s506 + $0x78] sm:$0xff]
        %v523 = vunpack.c.l.b16 %v375
        %v524 = vunpack.c.l.b16 %v385
        %v525 = vunpack.c.l.b16 %v399
        %v526 = vunpack.c.l.b16 %v409
        %v527 = vunpack.c.l.b16 %v423
        %v528 = vunpack.c.l.b16 %v433
        %v529 = vunpack.c.l.b16 %v447
        %v530 = vunpack.c.l.b16 %v457
        %v531 = vunpack.c.l.b16 %v471
        %v532 = vunpack.c.l.b16 %v481
        %v533 = vunpack.c.l.b16 %v495
        %v534 = vunpack.c.l.b16 %v505
        %v535 = vpack.c.b16 %v524, %v523
        %v536 = vpack.c.b16 %v526, %v525
        %v537 = vpack.c.b16 %v528, %v527
        %v538 = vpack.c.b16 %v530, %v529
        %v539 = vpack.c.b16 %v532, %v531
        %v540 = vpack.c.b16 %v534, %v533
        %v563 = vunpack.c.l.b16 %v507
        %v564 = vunpack.c.h.b16 %v507
        %v565 = vunpack.c.l.b16 %v508
        %v566 = vunpack.c.h.b16 %v508
        %v567 = vunpack.c.l.b16 %v509
        %v568 = vunpack.c.h.b16 %v509
        %v569 = vunpack.c.l.b16 %v510
        %v570 = vunpack.c.h.b16 %v510
        %v571 = vunpack.c.l.b16 %v511
        %v572 = vunpack.c.h.b16 %v511
        %v573 = vunpack.c.l.b16 %v512
        %v574 = vunpack.c.h.b16 %v512
        %v575 = vunpack.c.l.b16 %v513
        %v576 = vunpack.c.h.b16 %v513
        %v577 = vunpack.c.l.b16 %v514
        %v578 = vunpack.c.h.b16 %v514
        %v579 = vunpack.c.l.b16 %v515
        %v580 = vunpack.c.h.b16 %v515
        %v581 = vunpack.c.l.b16 %v516
        %v582 = vunpack.c.h.b16 %v516
        %v583 = vunpack.c.l.b16 %v517
        %v584 = vunpack.c.h.b16 %v517
        %v585 = vunpack.c.l.b16 %v518
        %v586 = vunpack.c.h.b16 %v518
        %v587 = vunpack.c.l.b16 %v519
        %v588 = vunpack.c.h.b16 %v519
        %v589 = vunpack.c.l.b16 %v520
        %v590 = vunpack.c.h.b16 %v520
        %v591 = vunpack.c.l.b16 %v521
        %v592 = vunpack.c.h.b16 %v521
        %v593 = vunpack.c.l.b16 %v522
        %v594 = vunpack.c.h.b16 %v522
        %v595 = vpack.c.b16 %v565, %v563
        %v596 = vpack.c.b16 %v566, %v564
        %v597 = vpack.c.b16 %v569, %v567
        %v598 = vpack.c.b16 %v570, %v568
        %v599 = vpack.c.b16 %v573, %v571
        %v600 = vpack.c.b16 %v574, %v572
        %v601 = vpack.c.b16 %v577, %v575
        %v602 = vpack.c.b16 %v578, %v576
        %v603 = vpack.c.b16 %v581, %v579
        %v604 = vpack.c.b16 %v582, %v580
        %v605 = vpack.c.b16 %v585, %v583
        %v606 = vpack.c.b16 %v586, %v584
        %v607 = vpack.c.b16 %v589, %v587
        %v608 = vpack.c.b16 %v590, %v588
        %v609 = vpack.c.b16 %v593, %v591
        %v610 = vpack.c.b16 %v594, %v592
        %627 = vmatpush.bf16.msra.mxu0 %v609
        %628 = vmatpush.bf16.msra.mxu0 %v607
        %629 = vmatpush.bf16.msra.mxu0 %v605
        %630 = vmatpush.bf16.msra.mxu0 %v603
        %631 = vmatpush.bf16.msra.mxu0 %v601
        %632 = vmatpush.bf16.msra.mxu0 %v599
        %633 = vmatpush.bf16.msra.mxu0 %v597
        %634 = vmatpush.bf16.msra.mxu0 %v595
        %635 = vmatmul.bf16.gmra.mxu0 %v535
        %v636 = vpop.f32.mrf.mxu0
        %v637 = vadd.f32 0.0, %v636
        %v638 = vpop.f32.mrf.mxu0
        %v639 = vadd.f32 0.0, %v638
        %640 = vmatmul.bf16.gmra.mxu0 %v536
        %v641 = vpop.f32.mrf.mxu0
        %v642 = vadd.f32 0.0, %v641
        %v643 = vpop.f32.mrf.mxu0
        %v644 = vadd.f32 0.0, %v643
        %645 = vmatmul.bf16.gmra.mxu0 %v537
        %v646 = vpop.f32.mrf.mxu0
        %v647 = vadd.f32 0.0, %v646
        %v648 = vpop.f32.mrf.mxu0
        %v649 = vadd.f32 0.0, %v648
        %650 = vmatmul.bf16.gmra.mxu0 %v538
        %v651 = vpop.f32.mrf.mxu0
        %v652 = vadd.f32 0.0, %v651
        %v653 = vpop.f32.mrf.mxu0
        %v654 = vadd.f32 0.0, %v653
        %655 = vmatmul.bf16.gmra.mxu0 %v539
        %v656 = vpop.f32.mrf.mxu0
        %v657 = vadd.f32 0.0, %v656
        %v658 = vpop.f32.mrf.mxu0
        %v659 = vadd.f32 0.0, %v658
        %660 = vmatmul.bf16.gmra.mxu0 %v540
        %v661 = vpop.f32.mrf.mxu0
        %v662 = vadd.f32 0.0, %v661
        %v663 = vpop.f32.mrf.mxu0
        %v664 = vadd.f32 0.0, %v663
        %665 = vdwg.mxu0
        %666 = vmatpush.bf16.msra.mxu0 %v610
        %667 = vmatpush.bf16.msra.mxu0 %v608
        %668 = vmatpush.bf16.msra.mxu0 %v606
        %669 = vmatpush.bf16.msra.mxu0 %v604
        %670 = vmatpush.bf16.msra.mxu0 %v602
        %671 = vmatpush.bf16.msra.mxu0 %v600
        %672 = vmatpush.bf16.msra.mxu0 %v598
        %673 = vmatpush.bf16.msra.mxu0 %v596
        %674 = vmatmul.bf16.gmra.mxu0 %v535
        %v675 = vpop.f32.mrf.mxu0
        %v676 = vadd.f32 0.0, %v675
        %v677 = vpop.f32.mrf.mxu0
        %v678 = vadd.f32 0.0, %v677
        %679 = vmatmul.bf16.gmra.mxu0 %v536
        %v680 = vpop.f32.mrf.mxu0
        %v681 = vadd.f32 0.0, %v680
        %v682 = vpop.f32.mrf.mxu0
        %v683 = vadd.f32 0.0, %v682
        %684 = vmatmul.bf16.gmra.mxu0 %v537
        %v685 = vpop.f32.mrf.mxu0
        %v686 = vadd.f32 0.0, %v685
        %v687 = vpop.f32.mrf.mxu0
        %v688 = vadd.f32 0.0, %v687
        %689 = vmatmul.bf16.gmra.mxu0 %v538
        %v690 = vpop.f32.mrf.mxu0
        %v691 = vadd.f32 0.0, %v690
        %v692 = vpop.f32.mrf.mxu0
        %v693 = vadd.f32 0.0, %v692
        %694 = vmatmul.bf16.gmra.mxu0 %v539
        %v695 = vpop.f32.mrf.mxu0
        %v696 = vadd.f32 0.0, %v695
        %v697 = vpop.f32.mrf.mxu0
        %v698 = vadd.f32 0.0, %v697
        %699 = vmatmul.bf16.gmra.mxu0 %v540
        %v700 = vpop.f32.mrf.mxu0
        %v701 = vadd.f32 0.0, %v700
        %v702 = vpop.f32.mrf.mxu0
        %v703 = vadd.f32 0.0, %v702
        %704 = vdwg.mxu0
        %v717 = vunpack.c.l.b16 %v325
        %v718 = vunpack.c.l.b16 %v326
        %v719 = vunpack.c.l.b16 %v327
        %v720 = vunpack.c.l.b16 %v328
        %v721 = vunpack.c.l.b16 %v329
        %v722 = vunpack.c.l.b16 %v330
        %v723 = vunpack.c.l.b16 %v331
        %v724 = vunpack.c.l.b16 %v332
        %v725 = vunpack.c.l.b16 %v333
        %v726 = vunpack.c.l.b16 %v334
        %v727 = vunpack.c.l.b16 %v335
        %v728 = vunpack.c.l.b16 %v336
        %v729 = vpack.c.b16 %v718, %v717
        %v730 = vpack.c.b16 %v720, %v719
        %v731 = vpack.c.b16 %v722, %v721
        %v732 = vpack.c.b16 %v724, %v723
        %v733 = vpack.c.b16 %v726, %v725
        %v734 = vpack.c.b16 %v728, %v727
        %v757 = vunpack.c.l.b16 %v337
        %v758 = vunpack.c.h.b16 %v337
        %v759 = vunpack.c.l.b16 %v338
        %v760 = vunpack.c.h.b16 %v338
        %v761 = vunpack.c.l.b16 %v339
        %v762 = vunpack.c.h.b16 %v339
        %v763 = vunpack.c.l.b16 %v340
        %v764 = vunpack.c.h.b16 %v340
        %v765 = vunpack.c.l.b16 %v341
        %v766 = vunpack.c.h.b16 %v341
        %v767 = vunpack.c.l.b16 %v342
        %v768 = vunpack.c.h.b16 %v342
        %v769 = vunpack.c.l.b16 %v343
        %v770 = vunpack.c.h.b16 %v343
        %v771 = vunpack.c.l.b16 %v344
        %v772 = vunpack.c.h.b16 %v344
        %v773 = vunpack.c.l.b16 %v345
        %v774 = vunpack.c.h.b16 %v345
        %v775 = vunpack.c.l.b16 %v346
        %v776 = vunpack.c.h.b16 %v346
        %v777 = vunpack.c.l.b16 %v347
        %v778 = vunpack.c.h.b16 %v347
        %v779 = vunpack.c.l.b16 %v348
        %v780 = vunpack.c.h.b16 %v348
        %v781 = vunpack.c.l.b16 %v349
        %v782 = vunpack.c.h.b16 %v349
        %v783 = vunpack.c.l.b16 %v350
        %v784 = vunpack.c.h.b16 %v350
        %v785 = vunpack.c.l.b16 %v351
        %v786 = vunpack.c.h.b16 %v351
        %v787 = vunpack.c.l.b16 %v352
        %v788 = vunpack.c.h.b16 %v352
        %v789 = vpack.c.b16 %v759, %v757
        %v790 = vpack.c.b16 %v760, %v758
        %v791 = vpack.c.b16 %v763, %v761
        %v792 = vpack.c.b16 %v764, %v762
        %v793 = vpack.c.b16 %v767, %v765
        %v794 = vpack.c.b16 %v768, %v766
        %v795 = vpack.c.b16 %v771, %v769
        %v796 = vpack.c.b16 %v772, %v770
        %v797 = vpack.c.b16 %v775, %v773
        %v798 = vpack.c.b16 %v776, %v774
        %v799 = vpack.c.b16 %v779, %v777
        %v800 = vpack.c.b16 %v780, %v778
        %v801 = vpack.c.b16 %v783, %v781
        %v802 = vpack.c.b16 %v784, %v782
        %v803 = vpack.c.b16 %v787, %v785
        %v804 = vpack.c.b16 %v788, %v786
        %821 = vmatpush.bf16.msra.mxu0 %v803
        %822 = vmatpush.bf16.msra.mxu0 %v801
        %823 = vmatpush.bf16.msra.mxu0 %v799
        %824 = vmatpush.bf16.msra.mxu0 %v797
        %825 = vmatpush.bf16.msra.mxu0 %v795
        %826 = vmatpush.bf16.msra.mxu0 %v793
        %827 = vmatpush.bf16.msra.mxu0 %v791
        %828 = vmatpush.bf16.msra.mxu0 %v789
        %829 = vmatmul.bf16.gmra.mxu0 %v729
        %v830 = vpop.f32.mrf.mxu0
        %v831 = vadd.f32 %v637, %v830
        %v832 = vpop.f32.mrf.mxu0
        %v833 = vadd.f32 %v639, %v832
        %834 = vmatmul.bf16.gmra.mxu0 %v730
        %v835 = vpop.f32.mrf.mxu0
        %v836 = vadd.f32 %v642, %v835
        %v837 = vpop.f32.mrf.mxu0
        %v838 = vadd.f32 %v644, %v837
        %839 = vmatmul.bf16.gmra.mxu0 %v731
        %v840 = vpop.f32.mrf.mxu0
        %v841 = vadd.f32 %v647, %v840
        %v842 = vpop.f32.mrf.mxu0
        %v843 = vadd.f32 %v649, %v842
        %844 = vmatmul.bf16.gmra.mxu0 %v732
        %v845 = vpop.f32.mrf.mxu0
        %v846 = vadd.f32 %v652, %v845
        %v847 = vpop.f32.mrf.mxu0
        %v848 = vadd.f32 %v654, %v847
        %849 = vmatmul.bf16.gmra.mxu0 %v733
        %v850 = vpop.f32.mrf.mxu0
        %v851 = vadd.f32 %v657, %v850
        %v852 = vpop.f32.mrf.mxu0
        %v853 = vadd.f32 %v659, %v852
        %854 = vmatmul.bf16.gmra.mxu0 %v734
        %v855 = vpop.f32.mrf.mxu0
        %v856 = vadd.f32 %v662, %v855
        %v857 = vpop.f32.mrf.mxu0
        %v858 = vadd.f32 %v664, %v857
        %859 = vdwg.mxu0
        %860 = vmatpush.bf16.msra.mxu0 %v804
        %861 = vmatpush.bf16.msra.mxu0 %v802
        %862 = vmatpush.bf16.msra.mxu0 %v800
        %863 = vmatpush.bf16.msra.mxu0 %v798
        %864 = vmatpush.bf16.msra.mxu0 %v796
        %865 = vmatpush.bf16.msra.mxu0 %v794
        %866 = vmatpush.bf16.msra.mxu0 %v792
        %867 = vmatpush.bf16.msra.mxu0 %v790
        %868 = vmatmul.bf16.gmra.mxu0 %v729
        %v869 = vpop.f32.mrf.mxu0
        %v870 = vadd.f32 %v676, %v869
        %v871 = vpop.f32.mrf.mxu0
        %v872 = vadd.f32 %v678, %v871
        %873 = vmatmul.bf16.gmra.mxu0 %v730
        %v874 = vpop.f32.mrf.mxu0
        %v875 = vadd.f32 %v681, %v874
        %v876 = vpop.f32.mrf.mxu0
        %v877 = vadd.f32 %v683, %v876
        %878 = vmatmul.bf16.gmra.mxu0 %v731
        %v879 = vpop.f32.mrf.mxu0
        %v880 = vadd.f32 %v686, %v879
        %v881 = vpop.f32.mrf.mxu0
        %v882 = vadd.f32 %v688, %v881
        %883 = vmatmul.bf16.gmra.mxu0 %v732
        %v884 = vpop.f32.mrf.mxu0
        %v885 = vadd.f32 %v691, %v884
        %v886 = vpop.f32.mrf.mxu0
        %v887 = vadd.f32 %v693, %v886
        %888 = vmatmul.bf16.gmra.mxu0 %v733
        %v889 = vpop.f32.mrf.mxu0
        %v890 = vadd.f32 %v696, %v889
        %v891 = vpop.f32.mrf.mxu0
        %v892 = vadd.f32 %v698, %v891
        %893 = vmatmul.bf16.gmra.mxu0 %v734
        %v894 = vpop.f32.mrf.mxu0
        %v895 = vadd.f32 %v701, %v894
        %v896 = vpop.f32.mrf.mxu0
        %v897 = vadd.f32 %v703, %v896
        %898 = vdwg.mxu0
        %v899 = vld [vmem:[%s324] sm:$0xe]
        %v900 = vld [vmem:[%s324 + $0xc] sm:$0xe]
        %v901 = vld [vmem:[%s324 + $0x18] sm:$0xe]
        %v902 = vld [vmem:[%s324 + $0x24] sm:$0xe]
        %v903 = vld [vmem:[%s324 + $0x30] sm:$0xe]
        %v904 = vld [vmem:[%s324 + $0x3c] sm:$0xe]
        %vm917 = vcmask 1042432
        %vm918 = vcmask 1046532
        %vm919 = vmor %vm917, %vm918
        %v920 = vrot.slane %v899, 5
        %v921 = vrot.slane %v920, 4
        %v922 = vrot.slane %v326, 5
        %v923 = vsel %vm919, %v921, %v922
        %v924 = vrot.slane %v922, 4
        %v925 = vrot.slane %v353, 5
        %v926 = vsel %vm919, %v924, %v925
        %v927 = vrot.slane %v900, 5
        %v928 = vrot.slane %v927, 4
        %v929 = vrot.slane %v328, 5
        %v930 = vsel %vm919, %v928, %v929
        %v931 = vrot.slane %v929, 4
        %v932 = vrot.slane %v354, 5
        %v933 = vsel %vm919, %v931, %v932
        %v934 = vrot.slane %v901, 5
        %v935 = vrot.slane %v934, 4
        %v936 = vrot.slane %v330, 5
        %v937 = vsel %vm919, %v935, %v936
        %v938 = vrot.slane %v936, 4
        %v939 = vrot.slane %v355, 5
        %v940 = vsel %vm919, %v938, %v939
        %v941 = vrot.slane %v902, 5
        %v942 = vrot.slane %v941, 4
        %v943 = vrot.slane %v332, 5
        %v944 = vsel %vm919, %v942, %v943
        %v945 = vrot.slane %v943, 4
        %v946 = vrot.slane %v356, 5
        %v947 = vsel %vm919, %v945, %v946
        %v948 = vrot.slane %v903, 5
        %v949 = vrot.slane %v948, 4
        %v950 = vrot.slane %v334, 5
        %v951 = vsel %vm919, %v949, %v950
        %v952 = vrot.slane %v950, 4
        %v953 = vrot.slane %v357, 5
        %v954 = vsel %vm919, %v952, %v953
        %v955 = vrot.slane %v904, 5
        %v956 = vrot.slane %v955, 4
        %v957 = vrot.slane %v336, 5
        %v958 = vsel %vm919, %v956, %v957
        %v959 = vrot.slane %v957, 4
        %v960 = vrot.slane %v358, 5
        %v961 = vsel %vm919, %v959, %v960
        %s962 = scalar_lea.vmem %s1, 256
        %v963 = vld [vmem:[%s962] sm:$0xff]
        %v964 = vld [vmem:[%s962 + $0x8] sm:$0xff]
        %v965 = vld [vmem:[%s962 + $0x10] sm:$0xff]
        %v966 = vld [vmem:[%s962 + $0x18] sm:$0xff]
        %v967 = vld [vmem:[%s962 + $0x20] sm:$0xff]
        %v968 = vld [vmem:[%s962 + $0x28] sm:$0xff]
        %v969 = vld [vmem:[%s962 + $0x30] sm:$0xff]
        %v970 = vld [vmem:[%s962 + $0x38] sm:$0xff]
        %v971 = vld [vmem:[%s962 + $0x40] sm:$0xff]
        %v972 = vld [vmem:[%s962 + $0x48] sm:$0xff]
        %v973 = vld [vmem:[%s962 + $0x50] sm:$0xff]
        %v974 = vld [vmem:[%s962 + $0x58] sm:$0xff]
        %v975 = vld [vmem:[%s962 + $0x60] sm:$0xff]
        %v976 = vld [vmem:[%s962 + $0x68] sm:$0xff]
        %v977 = vld [vmem:[%s962 + $0x70] sm:$0xff]
        %v978 = vld [vmem:[%s962 + $0x78] sm:$0xff]
        %v979 = vunpack.c.l.b16 %v923
        %v980 = vunpack.c.l.b16 %v926
        %v981 = vunpack.c.l.b16 %v930
        %v982 = vunpack.c.l.b16 %v933
        %v983 = vunpack.c.l.b16 %v937
        %v984 = vunpack.c.l.b16 %v940
        %v985 = vunpack.c.l.b16 %v944
        %v986 = vunpack.c.l.b16 %v947
        %v987 = vunpack.c.l.b16 %v951
        %v988 = vunpack.c.l.b16 %v954
        %v989 = vunpack.c.l.b16 %v958
        %v990 = vunpack.c.l.b16 %v961
        %v991 = vpack.c.b16 %v980, %v979
        %v992 = vpack.c.b16 %v982, %v981
        %v993 = vpack.c.b16 %v984, %v983
        %v994 = vpack.c.b16 %v986, %v985
        %v995 = vpack.c.b16 %v988, %v987
        %v996 = vpack.c.b16 %v990, %v989
        %v1019 = vunpack.c.l.b16 %v963
        %v1020 = vunpack.c.h.b16 %v963
        %v1021 = vunpack.c.l.b16 %v964
        %v1022 = vunpack.c.h.b16 %v964
        %v1023 = vunpack.c.l.b16 %v965
        %v1024 = vunpack.c.h.b16 %v965
        %v1025 = vunpack.c.l.b16 %v966
        %v1026 = vunpack.c.h.b16 %v966
        %v1027 = vunpack.c.l.b16 %v967
        %v1028 = vunpack.c.h.b16 %v967
        %v1029 = vunpack.c.l.b16 %v968
        %v1030 = vunpack.c.h.b16 %v968
        %v1031 = vunpack.c.l.b16 %v969
        %v1032 = vunpack.c.h.b16 %v969
        %v1033 = vunpack.c.l.b16 %v970
        %v1034 = vunpack.c.h.b16 %v970
        %v1035 = vunpack.c.l.b16 %v971
        %v1036 = vunpack.c.h.b16 %v971
        %v1037 = vunpack.c.l.b16 %v972
        %v1038 = vunpack.c.h.b16 %v972
        %v1039 = vunpack.c.l.b16 %v973
        %v1040 = vunpack.c.h.b16 %v973
        %v1041 = vunpack.c.l.b16 %v974
        %v1042 = vunpack.c.h.b16 %v974
        %v1043 = vunpack.c.l.b16 %v975
        %v1044 = vunpack.c.h.b16 %v975
        %v1045 = vunpack.c.l.b16 %v976
        %v1046 = vunpack.c.h.b16 %v976
        %v1047 = vunpack.c.l.b16 %v977
        %v1048 = vunpack.c.h.b16 %v977
        %v1049 = vunpack.c.l.b16 %v978
        %v1050 = vunpack.c.h.b16 %v978
        %v1051 = vpack.c.b16 %v1021, %v1019
        %v1052 = vpack.c.b16 %v1022, %v1020
        %v1053 = vpack.c.b16 %v1025, %v1023
        %v1054 = vpack.c.b16 %v1026, %v1024
        %v1055 = vpack.c.b16 %v1029, %v1027
        %v1056 = vpack.c.b16 %v1030, %v1028
        %v1057 = vpack.c.b16 %v1033, %v1031
        %v1058 = vpack.c.b16 %v1034, %v1032
        %v1059 = vpack.c.b16 %v1037, %v1035
        %v1060 = vpack.c.b16 %v1038, %v1036
        %v1061 = vpack.c.b16 %v1041, %v1039
        %v1062 = vpack.c.b16 %v1042, %v1040
        %v1063 = vpack.c.b16 %v1045, %v1043
        %v1064 = vpack.c.b16 %v1046, %v1044
        %v1065 = vpack.c.b16 %v1049, %v1047
        %v1066 = vpack.c.b16 %v1050, %v1048
        %1083 = vmatpush.bf16.msra.mxu0 %v1065
        %1084 = vmatpush.bf16.msra.mxu0 %v1063
        %1085 = vmatpush.bf16.msra.mxu0 %v1061
        %1086 = vmatpush.bf16.msra.mxu0 %v1059
        %1087 = vmatpush.bf16.msra.mxu0 %v1057
        %1088 = vmatpush.bf16.msra.mxu0 %v1055
        %1089 = vmatpush.bf16.msra.mxu0 %v1053
        %1090 = vmatpush.bf16.msra.mxu0 %v1051
        %1091 = vmatmul.bf16.gmra.mxu0 %v991
        %v1092 = vpop.f32.mrf.mxu0
        %v1093 = vadd.f32 0.0, %v1092
        %v1094 = vpop.f32.mrf.mxu0
        %v1095 = vadd.f32 0.0, %v1094
        %1096 = vmatmul.bf16.gmra.mxu0 %v992
        %v1097 = vpop.f32.mrf.mxu0
        %v1098 = vadd.f32 0.0, %v1097
        %v1099 = vpop.f32.mrf.mxu0
        %v1100 = vadd.f32 0.0, %v1099
        %1101 = vmatmul.bf16.gmra.mxu0 %v993
        %v1102 = vpop.f32.mrf.mxu0
        %v1103 = vadd.f32 0.0, %v1102
        %v1104 = vpop.f32.mrf.mxu0
        %v1105 = vadd.f32 0.0, %v1104
        %1106 = vmatmul.bf16.gmra.mxu0 %v994
        %v1107 = vpop.f32.mrf.mxu0
        %v1108 = vadd.f32 0.0, %v1107
        %v1109 = vpop.f32.mrf.mxu0
        %v1110 = vadd.f32 0.0, %v1109
        %1111 = vmatmul.bf16.gmra.mxu0 %v995
        %v1112 = vpop.f32.mrf.mxu0
        %v1113 = vadd.f32 0.0, %v1112
        %v1114 = vpop.f32.mrf.mxu0
        %v1115 = vadd.f32 0.0, %v1114
        %1116 = vmatmul.bf16.gmra.mxu0 %v996
        %v1117 = vpop.f32.mrf.mxu0
        %v1118 = vadd.f32 0.0, %v1117
        %v1119 = vpop.f32.mrf.mxu0
        %v1120 = vadd.f32 0.0, %v1119
        %1121 = vdwg.mxu0
        %1122 = vmatpush.bf16.msra.mxu0 %v1066
        %1123 = vmatpush.bf16.msra.mxu0 %v1064
        %1124 = vmatpush.bf16.msra.mxu0 %v1062
        %1125 = vmatpush.bf16.msra.mxu0 %v1060
        %1126 = vmatpush.bf16.msra.mxu0 %v1058
        %1127 = vmatpush.bf16.msra.mxu0 %v1056
        %1128 = vmatpush.bf16.msra.mxu0 %v1054
        %1129 = vmatpush.bf16.msra.mxu0 %v1052
        %1130 = vmatmul.bf16.gmra.mxu0 %v991
        %v1131 = vpop.f32.mrf.mxu0
        %v1132 = vadd.f32 0.0, %v1131
        %v1133 = vpop.f32.mrf.mxu0
        %v1134 = vadd.f32 0.0, %v1133
        %1135 = vmatmul.bf16.gmra.mxu0 %v992
        %v1136 = vpop.f32.mrf.mxu0
        %v1137 = vadd.f32 0.0, %v1136
        %v1138 = vpop.f32.mrf.mxu0
        %v1139 = vadd.f32 0.0, %v1138
        %1140 = vmatmul.bf16.gmra.mxu0 %v993
        %v1141 = vpop.f32.mrf.mxu0
        %v1142 = vadd.f32 0.0, %v1141
        %v1143 = vpop.f32.mrf.mxu0
        %v1144 = vadd.f32 0.0, %v1143
        %1145 = vmatmul.bf16.gmra.mxu0 %v994
        %v1146 = vpop.f32.mrf.mxu0
        %v1147 = vadd.f32 0.0, %v1146
        %v1148 = vpop.f32.mrf.mxu0
        %v1149 = vadd.f32 0.0, %v1148
        %1150 = vmatmul.bf16.gmra.mxu0 %v995
        %v1151 = vpop.f32.mrf.mxu0
        %v1152 = vadd.f32 0.0, %v1151
        %v1153 = vpop.f32.mrf.mxu0
        %v1154 = vadd.f32 0.0, %v1153
        %1155 = vmatmul.bf16.gmra.mxu0 %v996
        %v1156 = vpop.f32.mrf.mxu0
        %v1157 = vadd.f32 0.0, %v1156
        %v1158 = vpop.f32.mrf.mxu0
        %v1159 = vadd.f32 0.0, %v1158
        %1160 = vdwg.mxu0
        %v1161 = vadd.f32 %v831, %v1093
        %v1162 = vadd.f32 %v870, %v1132
        %v1163 = vadd.f32 %v833, %v1095
        %v1164 = vadd.f32 %v872, %v1134
        %v1165 = vadd.f32 %v836, %v1098
        %v1166 = vadd.f32 %v875, %v1137
        %v1167 = vadd.f32 %v838, %v1100
        %v1168 = vadd.f32 %v877, %v1139
        %v1169 = vadd.f32 %v841, %v1103
        %v1170 = vadd.f32 %v880, %v1142
        %v1171 = vadd.f32 %v843, %v1105
        %v1172 = vadd.f32 %v882, %v1144
        %v1173 = vadd.f32 %v846, %v1108
        %v1174 = vadd.f32 %v885, %v1147
        %v1175 = vadd.f32 %v848, %v1110
        %v1176 = vadd.f32 %v887, %v1149
        %v1177 = vadd.f32 %v851, %v1113
        %v1178 = vadd.f32 %v890, %v1152
        %v1179 = vadd.f32 %v853, %v1115
        %v1180 = vadd.f32 %v892, %v1154
        %v1181 = vadd.f32 %v856, %v1118
        %v1182 = vadd.f32 %v895, %v1157
        %v1183 = vadd.f32 %v858, %v1120
        %v1184 = vadd.f32 %v897, %v1159
        %s1185 = sadd.s32 %s293, 1
        %s1186 = smul.u32 %s1185, 3
        %s1187 = smul.addr %s1186, 4
        %s1188 = scalar_lea.vmem %s290, %s1187
        %v1189 = vld [vmem:[%s1188] sm:$0xf]
        %v1190 = vld [vmem:[%s1188 + $0x4] sm:$0xf]
        %v1191 = vld [vmem:[%s1188 + $0xc] sm:$0xf]
        %v1192 = vld [vmem:[%s1188 + $0x10] sm:$0xf]
        %v1193 = vld [vmem:[%s1188 + $0x18] sm:$0xf]
        %v1194 = vld [vmem:[%s1188 + $0x1c] sm:$0xf]
        %v1195 = vld [vmem:[%s1188 + $0x24] sm:$0xf]
        %v1196 = vld [vmem:[%s1188 + $0x28] sm:$0xf]
        %v1197 = vld [vmem:[%s1188 + $0x30] sm:$0xf]
        %v1198 = vld [vmem:[%s1188 + $0x34] sm:$0xf]
        %v1199 = vld [vmem:[%s1188 + $0x3c] sm:$0xf]
        %v1200 = vld [vmem:[%s1188 + $0x40] sm:$0xf]
        %s1201 = scalar_lea.vmem %s1, 384
        %v1202 = vld [vmem:[%s1201] sm:$0xff]
        %v1203 = vld [vmem:[%s1201 + $0x8] sm:$0xff]
        %v1204 = vld [vmem:[%s1201 + $0x10] sm:$0xff]
        %v1205 = vld [vmem:[%s1201 + $0x18] sm:$0xff]
        %v1206 = vld [vmem:[%s1201 + $0x20] sm:$0xff]
        %v1207 = vld [vmem:[%s1201 + $0x28] sm:$0xff]
        %v1208 = vld [vmem:[%s1201 + $0x30] sm:$0xff]
        %v1209 = vld [vmem:[%s1201 + $0x38] sm:$0xff]
        %v1210 = vld [vmem:[%s1201 + $0x40] sm:$0xff]
        %v1211 = vld [vmem:[%s1201 + $0x48] sm:$0xff]
        %v1212 = vld [vmem:[%s1201 + $0x50] sm:$0xff]
        %v1213 = vld [vmem:[%s1201 + $0x58] sm:$0xff]
        %v1214 = vld [vmem:[%s1201 + $0x60] sm:$0xff]
        %v1215 = vld [vmem:[%s1201 + $0x68] sm:$0xff]
        %v1216 = vld [vmem:[%s1201 + $0x70] sm:$0xff]
        %v1217 = vld [vmem:[%s1201 + $0x78] sm:$0xff]
        %v1230 = vunpack.c.l.b16 %v1189
        %v1231 = vunpack.c.l.b16 %v1190
        %v1232 = vunpack.c.l.b16 %v1191
        %v1233 = vunpack.c.l.b16 %v1192
        %v1234 = vunpack.c.l.b16 %v1193
        %v1235 = vunpack.c.l.b16 %v1194
        %v1236 = vunpack.c.l.b16 %v1195
        %v1237 = vunpack.c.l.b16 %v1196
        %v1238 = vunpack.c.l.b16 %v1197
        %v1239 = vunpack.c.l.b16 %v1198
        %v1240 = vunpack.c.l.b16 %v1199
        %v1241 = vunpack.c.l.b16 %v1200
        %v1242 = vpack.c.b16 %v1231, %v1230
        %v1243 = vpack.c.b16 %v1233, %v1232
        %v1244 = vpack.c.b16 %v1235, %v1234
        %v1245 = vpack.c.b16 %v1237, %v1236
        %v1246 = vpack.c.b16 %v1239, %v1238
        %v1247 = vpack.c.b16 %v1241, %v1240
        %v1270 = vunpack.c.l.b16 %v1202
        %v1271 = vunpack.c.h.b16 %v1202
        %v1272 = vunpack.c.l.b16 %v1203
        %v1273 = vunpack.c.h.b16 %v1203
        %v1274 = vunpack.c.l.b16 %v1204
        %v1275 = vunpack.c.h.b16 %v1204
        %v1276 = vunpack.c.l.b16 %v1205
        %v1277 = vunpack.c.h.b16 %v1205
        %v1278 = vunpack.c.l.b16 %v1206
        %v1279 = vunpack.c.h.b16 %v1206
        %v1280 = vunpack.c.l.b16 %v1207
        %v1281 = vunpack.c.h.b16 %v1207
        %v1282 = vunpack.c.l.b16 %v1208
        %v1283 = vunpack.c.h.b16 %v1208
        %v1284 = vunpack.c.l.b16 %v1209
        %v1285 = vunpack.c.h.b16 %v1209
        %v1286 = vunpack.c.l.b16 %v1210
        %v1287 = vunpack.c.h.b16 %v1210
        %v1288 = vunpack.c.l.b16 %v1211
        %v1289 = vunpack.c.h.b16 %v1211
        %v1290 = vunpack.c.l.b16 %v1212
        %v1291 = vunpack.c.h.b16 %v1212
        %v1292 = vunpack.c.l.b16 %v1213
        %v1293 = vunpack.c.h.b16 %v1213
        %v1294 = vunpack.c.l.b16 %v1214
        %v1295 = vunpack.c.h.b16 %v1214
        %v1296 = vunpack.c.l.b16 %v1215
        %v1297 = vunpack.c.h.b16 %v1215
        %v1298 = vunpack.c.l.b16 %v1216
        %v1299 = vunpack.c.h.b16 %v1216
        %v1300 = vunpack.c.l.b16 %v1217
        %v1301 = vunpack.c.h.b16 %v1217
        %v1302 = vpack.c.b16 %v1272, %v1270
        %v1303 = vpack.c.b16 %v1273, %v1271
        %v1304 = vpack.c.b16 %v1276, %v1274
        %v1305 = vpack.c.b16 %v1277, %v1275
        %v1306 = vpack.c.b16 %v1280, %v1278
        %v1307 = vpack.c.b16 %v1281, %v1279
        %v1308 = vpack.c.b16 %v1284, %v1282
        %v1309 = vpack.c.b16 %v1285, %v1283
        %v1310 = vpack.c.b16 %v1288, %v1286
        %v1311 = vpack.c.b16 %v1289, %v1287
        %v1312 = vpack.c.b16 %v1292, %v1290
        %v1313 = vpack.c.b16 %v1293, %v1291
        %v1314 = vpack.c.b16 %v1296, %v1294
        %v1315 = vpack.c.b16 %v1297, %v1295
        %v1316 = vpack.c.b16 %v1300, %v1298
        %v1317 = vpack.c.b16 %v1301, %v1299
        %1334 = vmatpush.bf16.msra.mxu0 %v1316
        %1335 = vmatpush.bf16.msra.mxu0 %v1314
        %1336 = vmatpush.bf16.msra.mxu0 %v1312
        %1337 = vmatpush.bf16.msra.mxu0 %v1310
        %1338 = vmatpush.bf16.msra.mxu0 %v1308
        %1339 = vmatpush.bf16.msra.mxu0 %v1306
        %1340 = vmatpush.bf16.msra.mxu0 %v1304
        %1341 = vmatpush.bf16.msra.mxu0 %v1302
        %1342 = vmatmul.bf16.gmra.mxu0 %v1242
        %v1343 = vpop.f32.mrf.mxu0
        %v1344 = vadd.f32 0.0, %v1343
        %v1345 = vpop.f32.mrf.mxu0
        %v1346 = vadd.f32 0.0, %v1345
        %1347 = vmatmul.bf16.gmra.mxu0 %v1243
        %v1348 = vpop.f32.mrf.mxu0
        %v1349 = vadd.f32 0.0, %v1348
        %v1350 = vpop.f32.mrf.mxu0
        %v1351 = vadd.f32 0.0, %v1350
        %1352 = vmatmul.bf16.gmra.mxu0 %v1244
        %v1353 = vpop.f32.mrf.mxu0
        %v1354 = vadd.f32 0.0, %v1353
        %v1355 = vpop.f32.mrf.mxu0
        %v1356 = vadd.f32 0.0, %v1355
        %1357 = vmatmul.bf16.gmra.mxu0 %v1245
        %v1358 = vpop.f32.mrf.mxu0
        %v1359 = vadd.f32 0.0, %v1358
        %v1360 = vpop.f32.mrf.mxu0
        %v1361 = vadd.f32 0.0, %v1360
        %1362 = vmatmul.bf16.gmra.mxu0 %v1246
        %v1363 = vpop.f32.mrf.mxu0
        %v1364 = vadd.f32 0.0, %v1363
        %v1365 = vpop.f32.mrf.mxu0
        %v1366 = vadd.f32 0.0, %v1365
        %1367 = vmatmul.bf16.gmra.mxu0 %v1247
        %v1368 = vpop.f32.mrf.mxu0
        %v1369 = vadd.f32 0.0, %v1368
        %v1370 = vpop.f32.mrf.mxu0
        %v1371 = vadd.f32 0.0, %v1370
        %1372 = vdwg.mxu0
        %1373 = vmatpush.bf16.msra.mxu0 %v1317
        %1374 = vmatpush.bf16.msra.mxu0 %v1315
        %1375 = vmatpush.bf16.msra.mxu0 %v1313
        %1376 = vmatpush.bf16.msra.mxu0 %v1311
        %1377 = vmatpush.bf16.msra.mxu0 %v1309
        %1378 = vmatpush.bf16.msra.mxu0 %v1307
        %1379 = vmatpush.bf16.msra.mxu0 %v1305
        %1380 = vmatpush.bf16.msra.mxu0 %v1303
        %1381 = vmatmul.bf16.gmra.mxu0 %v1242
        %v1382 = vpop.f32.mrf.mxu0
        %v1383 = vadd.f32 0.0, %v1382
        %v1384 = vpop.f32.mrf.mxu0
        %v1385 = vadd.f32 0.0, %v1384
        %1386 = vmatmul.bf16.gmra.mxu0 %v1243
        %v1387 = vpop.f32.mrf.mxu0
        %v1388 = vadd.f32 0.0, %v1387
        %v1389 = vpop.f32.mrf.mxu0
        %v1390 = vadd.f32 0.0, %v1389
        %1391 = vmatmul.bf16.gmra.mxu0 %v1244
        %v1392 = vpop.f32.mrf.mxu0
        %v1393 = vadd.f32 0.0, %v1392
        %v1394 = vpop.f32.mrf.mxu0
        %v1395 = vadd.f32 0.0, %v1394
        %1396 = vmatmul.bf16.gmra.mxu0 %v1245
        %v1397 = vpop.f32.mrf.mxu0
        %v1398 = vadd.f32 0.0, %v1397
        %v1399 = vpop.f32.mrf.mxu0
        %v1400 = vadd.f32 0.0, %v1399
        %1401 = vmatmul.bf16.gmra.mxu0 %v1246
        %v1402 = vpop.f32.mrf.mxu0
        %v1403 = vadd.f32 0.0, %v1402
        %v1404 = vpop.f32.mrf.mxu0
        %v1405 = vadd.f32 0.0, %v1404
        %1406 = vmatmul.bf16.gmra.mxu0 %v1247
        %v1407 = vpop.f32.mrf.mxu0
        %v1408 = vadd.f32 0.0, %v1407
        %v1409 = vpop.f32.mrf.mxu0
        %v1410 = vadd.f32 0.0, %v1409
        %1411 = vdwg.mxu0
        %v1412 = vadd.f32 %v1161, %v1344
        %v1413 = vadd.f32 %v1162, %v1383
        %v1414 = vadd.f32 %v1163, %v1346
        %v1415 = vadd.f32 %v1164, %v1385
        %v1416 = vadd.f32 %v1165, %v1349
        %v1417 = vadd.f32 %v1166, %v1388
        %v1418 = vadd.f32 %v1167, %v1351
        %v1419 = vadd.f32 %v1168, %v1390
        %v1420 = vadd.f32 %v1169, %v1354
        %v1421 = vadd.f32 %v1170, %v1393
        %v1422 = vadd.f32 %v1171, %v1356
        %v1423 = vadd.f32 %v1172, %v1395
        %v1424 = vadd.f32 %v1173, %v1359
        %v1425 = vadd.f32 %v1174, %v1398
        %v1426 = vadd.f32 %v1175, %v1361
        %v1427 = vadd.f32 %v1176, %v1400
        %v1428 = vadd.f32 %v1177, %v1364
        %v1429 = vadd.f32 %v1178, %v1403
        %v1430 = vadd.f32 %v1179, %v1366
        %v1431 = vadd.f32 %v1180, %v1405
        %v1432 = vadd.f32 %v1181, %v1369
        %v1433 = vadd.f32 %v1182, %v1408
        %v1434 = vadd.f32 %v1183, %v1371
        %v1435 = vadd.f32 %v1184, %v1410
        %v1436 = vld [vmem:[%s1188] sm:$0xf]
        %v1437 = vld [vmem:[%s1188 + $0x4] sm:$0xf]
        %v1438 = vld [vmem:[%s1188 + $0x8] sm:$0x1]
        %v1439 = vld [vmem:[%s1188 + $0xc] sm:$0xf]
        %v1440 = vld [vmem:[%s1188 + $0x10] sm:$0xf]
        %v1441 = vld [vmem:[%s1188 + $0x14] sm:$0x1]
        %v1442 = vld [vmem:[%s1188 + $0x18] sm:$0xf]
        %v1443 = vld [vmem:[%s1188 + $0x1c] sm:$0xf]
        %v1444 = vld [vmem:[%s1188 + $0x20] sm:$0x1]
        %v1445 = vld [vmem:[%s1188 + $0x24] sm:$0xf]
        %v1446 = vld [vmem:[%s1188 + $0x28] sm:$0xf]
        %v1447 = vld [vmem:[%s1188 + $0x2c] sm:$0x1]
        %v1448 = vld [vmem:[%s1188 + $0x30] sm:$0xf]
        %v1449 = vld [vmem:[%s1188 + $0x34] sm:$0xf]
        %v1450 = vld [vmem:[%s1188 + $0x38] sm:$0x1]
        %v1451 = vld [vmem:[%s1188 + $0x3c] sm:$0xf]
        %v1452 = vld [vmem:[%s1188 + $0x40] sm:$0xf]
        %v1453 = vld [vmem:[%s1188 + $0x44] sm:$0x1]
        %v1455 = vshrl.u32 %v1436, 16
        %v1457 = vrot.slane %v1455, 4
        %v1458 = vshll.u32 %v1436, 16
        %v1460 = vrot.slane %v1458, 5
        %v1461 = vor.u32 %v1457, %v1460
        %v1462 = vrot.slane %v1461, 4
        %v1464 = vshll.u32 %v1437, 16
        %v1466 = vrot.slane %v1464, 5
        %v1467 = vsel %vm361, %v1462, %v1466
        %v1468 = vshrl.u32 %v1437, 16
        %v1470 = vrot.slane %v1468, 4
        %v1471 = vor.u32 %v1470, %v1466
        %v1472 = vrot.slane %v1471, 4
        %v1474 = vshll.u32 %v1438, 16
        %v1476 = vrot.slane %v1474, 5
        %v1477 = vsel %vm361, %v1472, %v1476
        %v1479 = vshrl.u32 %v1439, 16
        %v1481 = vrot.slane %v1479, 4
        %v1482 = vshll.u32 %v1439, 16
        %v1484 = vrot.slane %v1482, 5
        %v1485 = vor.u32 %v1481, %v1484
        %v1486 = vrot.slane %v1485, 4
        %v1488 = vshll.u32 %v1440, 16
        %v1490 = vrot.slane %v1488, 5
        %v1491 = vsel %vm361, %v1486, %v1490
        %v1492 = vshrl.u32 %v1440, 16
        %v1494 = vrot.slane %v1492, 4
        %v1495 = vor.u32 %v1494, %v1490
        %v1496 = vrot.slane %v1495, 4
        %v1498 = vshll.u32 %v1441, 16
        %v1500 = vrot.slane %v1498, 5
        %v1501 = vsel %vm361, %v1496, %v1500
        %v1503 = vshrl.u32 %v1442, 16
        %v1505 = vrot.slane %v1503, 4
        %v1506 = vshll.u32 %v1442, 16
        %v1508 = vrot.slane %v1506, 5
        %v1509 = vor.u32 %v1505, %v1508
        %v1510 = vrot.slane %v1509, 4
        %v1512 = vshll.u32 %v1443, 16
        %v1514 = vrot.slane %v1512, 5
        %v1515 = vsel %vm361, %v1510, %v1514
        %v1516 = vshrl.u32 %v1443, 16
        %v1518 = vrot.slane %v1516, 4
        %v1519 = vor.u32 %v1518, %v1514
        %v1520 = vrot.slane %v1519, 4
        %v1522 = vshll.u32 %v1444, 16
        %v1524 = vrot.slane %v1522, 5
        %v1525 = vsel %vm361, %v1520, %v1524
        %v1527 = vshrl.u32 %v1445, 16
        %v1529 = vrot.slane %v1527, 4
        %v1530 = vshll.u32 %v1445, 16
        %v1532 = vrot.slane %v1530, 5
        %v1533 = vor.u32 %v1529, %v1532
        %v1534 = vrot.slane %v1533, 4
        %v1536 = vshll.u32 %v1446, 16
        %v1538 = vrot.slane %v1536, 5
        %v1539 = vsel %vm361, %v1534, %v1538
        %v1540 = vshrl.u32 %v1446, 16
        %v1542 = vrot.slane %v1540, 4
        %v1543 = vor.u32 %v1542, %v1538
        %v1544 = vrot.slane %v1543, 4
        %v1546 = vshll.u32 %v1447, 16
        %v1548 = vrot.slane %v1546, 5
        %v1549 = vsel %vm361, %v1544, %v1548
        %v1551 = vshrl.u32 %v1448, 16
        %v1553 = vrot.slane %v1551, 4
        %v1554 = vshll.u32 %v1448, 16
        %v1556 = vrot.slane %v1554, 5
        %v1557 = vor.u32 %v1553, %v1556
        %v1558 = vrot.slane %v1557, 4
        %v1560 = vshll.u32 %v1449, 16
        %v1562 = vrot.slane %v1560, 5
        %v1563 = vsel %vm361, %v1558, %v1562
        %v1564 = vshrl.u32 %v1449, 16
        %v1566 = vrot.slane %v1564, 4
        %v1567 = vor.u32 %v1566, %v1562
        %v1568 = vrot.slane %v1567, 4
        %v1570 = vshll.u32 %v1450, 16
        %v1572 = vrot.slane %v1570, 5
        %v1573 = vsel %vm361, %v1568, %v1572
        %v1575 = vshrl.u32 %v1451, 16
        %v1577 = vrot.slane %v1575, 4
        %v1578 = vshll.u32 %v1451, 16
        %v1580 = vrot.slane %v1578, 5
        %v1581 = vor.u32 %v1577, %v1580
        %v1582 = vrot.slane %v1581, 4
        %v1584 = vshll.u32 %v1452, 16
        %v1586 = vrot.slane %v1584, 5
        %v1587 = vsel %vm361, %v1582, %v1586
        %v1588 = vshrl.u32 %v1452, 16
        %v1590 = vrot.slane %v1588, 4
        %v1591 = vor.u32 %v1590, %v1586
        %v1592 = vrot.slane %v1591, 4
        %v1594 = vshll.u32 %v1453, 16
        %v1596 = vrot.slane %v1594, 5
        %v1597 = vsel %vm361, %v1592, %v1596
        %s1598 = scalar_lea.vmem %s1, 512
        %v1599 = vld [vmem:[%s1598] sm:$0xff]
        %v1600 = vld [vmem:[%s1598 + $0x8] sm:$0xff]
        %v1601 = vld [vmem:[%s1598 + $0x10] sm:$0xff]
        %v1602 = vld [vmem:[%s1598 + $0x18] sm:$0xff]
        %v1603 = vld [vmem:[%s1598 + $0x20] sm:$0xff]
        %v1604 = vld [vmem:[%s1598 + $0x28] sm:$0xff]
        %v1605 = vld [vmem:[%s1598 + $0x30] sm:$0xff]
        %v1606 = vld [vmem:[%s1598 + $0x38] sm:$0xff]
        %v1607 = vld [vmem:[%s1598 + $0x40] sm:$0xff]
        %v1608 = vld [vmem:[%s1598 + $0x48] sm:$0xff]
        %v1609 = vld [vmem:[%s1598 + $0x50] sm:$0xff]
        %v1610 = vld [vmem:[%s1598 + $0x58] sm:$0xff]
        %v1611 = vld [vmem:[%s1598 + $0x60] sm:$0xff]
        %v1612 = vld [vmem:[%s1598 + $0x68] sm:$0xff]
        %v1613 = vld [vmem:[%s1598 + $0x70] sm:$0xff]
        %v1614 = vld [vmem:[%s1598 + $0x78] sm:$0xff]
        %v1615 = vunpack.c.l.b16 %v1467
        %v1616 = vunpack.c.l.b16 %v1477
        %v1617 = vunpack.c.l.b16 %v1491
        %v1618 = vunpack.c.l.b16 %v1501
        %v1619 = vunpack.c.l.b16 %v1515
        %v1620 = vunpack.c.l.b16 %v1525
        %v1621 = vunpack.c.l.b16 %v1539
        %v1622 = vunpack.c.l.b16 %v1549
        %v1623 = vunpack.c.l.b16 %v1563
        %v1624 = vunpack.c.l.b16 %v1573
        %v1625 = vunpack.c.l.b16 %v1587
        %v1626 = vunpack.c.l.b16 %v1597
        %v1627 = vpack.c.b16 %v1616, %v1615
        %v1628 = vpack.c.b16 %v1618, %v1617
        %v1629 = vpack.c.b16 %v1620, %v1619
        %v1630 = vpack.c.b16 %v1622, %v1621
        %v1631 = vpack.c.b16 %v1624, %v1623
        %v1632 = vpack.c.b16 %v1626, %v1625
        %v1655 = vunpack.c.l.b16 %v1599
        %v1656 = vunpack.c.h.b16 %v1599
        %v1657 = vunpack.c.l.b16 %v1600
        %v1658 = vunpack.c.h.b16 %v1600
        %v1659 = vunpack.c.l.b16 %v1601
        %v1660 = vunpack.c.h.b16 %v1601
        %v1661 = vunpack.c.l.b16 %v1602
        %v1662 = vunpack.c.h.b16 %v1602
        %v1663 = vunpack.c.l.b16 %v1603
        %v1664 = vunpack.c.h.b16 %v1603
        %v1665 = vunpack.c.l.b16 %v1604
        %v1666 = vunpack.c.h.b16 %v1604
        %v1667 = vunpack.c.l.b16 %v1605
        %v1668 = vunpack.c.h.b16 %v1605
        %v1669 = vunpack.c.l.b16 %v1606
        %v1670 = vunpack.c.h.b16 %v1606
        %v1671 = vunpack.c.l.b16 %v1607
        %v1672 = vunpack.c.h.b16 %v1607
        %v1673 = vunpack.c.l.b16 %v1608
        %v1674 = vunpack.c.h.b16 %v1608
        %v1675 = vunpack.c.l.b16 %v1609
        %v1676 = vunpack.c.h.b16 %v1609
        %v1677 = vunpack.c.l.b16 %v1610
        %v1678 = vunpack.c.h.b16 %v1610
        %v1679 = vunpack.c.l.b16 %v1611
        %v1680 = vunpack.c.h.b16 %v1611
        %v1681 = vunpack.c.l.b16 %v1612
        %v1682 = vunpack.c.h.b16 %v1612
        %v1683 = vunpack.c.l.b16 %v1613
        %v1684 = vunpack.c.h.b16 %v1613
        %v1685 = vunpack.c.l.b16 %v1614
        %v1686 = vunpack.c.h.b16 %v1614
        %v1687 = vpack.c.b16 %v1657, %v1655
        %v1688 = vpack.c.b16 %v1658, %v1656
        %v1689 = vpack.c.b16 %v1661, %v1659
        %v1690 = vpack.c.b16 %v1662, %v1660
        %v1691 = vpack.c.b16 %v1665, %v1663
        %v1692 = vpack.c.b16 %v1666, %v1664
        %v1693 = vpack.c.b16 %v1669, %v1667
        %v1694 = vpack.c.b16 %v1670, %v1668
        %v1695 = vpack.c.b16 %v1673, %v1671
        %v1696 = vpack.c.b16 %v1674, %v1672
        %v1697 = vpack.c.b16 %v1677, %v1675
        %v1698 = vpack.c.b16 %v1678, %v1676
        %v1699 = vpack.c.b16 %v1681, %v1679
        %v1700 = vpack.c.b16 %v1682, %v1680
        %v1701 = vpack.c.b16 %v1685, %v1683
        %v1702 = vpack.c.b16 %v1686, %v1684
        %1719 = vmatpush.bf16.msra.mxu0 %v1701
        %1720 = vmatpush.bf16.msra.mxu0 %v1699
        %1721 = vmatpush.bf16.msra.mxu0 %v1697
        %1722 = vmatpush.bf16.msra.mxu0 %v1695
        %1723 = vmatpush.bf16.msra.mxu0 %v1693
        %1724 = vmatpush.bf16.msra.mxu0 %v1691
        %1725 = vmatpush.bf16.msra.mxu0 %v1689
        %1726 = vmatpush.bf16.msra.mxu0 %v1687
        %1727 = vmatmul.bf16.gmra.mxu0 %v1627
        %v1728 = vpop.f32.mrf.mxu0
        %v1729 = vadd.f32 0.0, %v1728
        %v1730 = vpop.f32.mrf.mxu0
        %v1731 = vadd.f32 0.0, %v1730
        %1732 = vmatmul.bf16.gmra.mxu0 %v1628
        %v1733 = vpop.f32.mrf.mxu0
        %v1734 = vadd.f32 0.0, %v1733
        %v1735 = vpop.f32.mrf.mxu0
        %v1736 = vadd.f32 0.0, %v1735
        %1737 = vmatmul.bf16.gmra.mxu0 %v1629
        %v1738 = vpop.f32.mrf.mxu0
        %v1739 = vadd.f32 0.0, %v1738
        %v1740 = vpop.f32.mrf.mxu0
        %v1741 = vadd.f32 0.0, %v1740
        %1742 = vmatmul.bf16.gmra.mxu0 %v1630
        %v1743 = vpop.f32.mrf.mxu0
        %v1744 = vadd.f32 0.0, %v1743
        %v1745 = vpop.f32.mrf.mxu0
        %v1746 = vadd.f32 0.0, %v1745
        %1747 = vmatmul.bf16.gmra.mxu0 %v1631
        %v1748 = vpop.f32.mrf.mxu0
        %v1749 = vadd.f32 0.0, %v1748
        %v1750 = vpop.f32.mrf.mxu0
        %v1751 = vadd.f32 0.0, %v1750
        %1752 = vmatmul.bf16.gmra.mxu0 %v1632
        %v1753 = vpop.f32.mrf.mxu0
        %v1754 = vadd.f32 0.0, %v1753
        %v1755 = vpop.f32.mrf.mxu0
        %v1756 = vadd.f32 0.0, %v1755
        %1757 = vdwg.mxu0
        %1758 = vmatpush.bf16.msra.mxu0 %v1702
        %1759 = vmatpush.bf16.msra.mxu0 %v1700
        %1760 = vmatpush.bf16.msra.mxu0 %v1698
        %1761 = vmatpush.bf16.msra.mxu0 %v1696
        %1762 = vmatpush.bf16.msra.mxu0 %v1694
        %1763 = vmatpush.bf16.msra.mxu0 %v1692
        %1764 = vmatpush.bf16.msra.mxu0 %v1690
        %1765 = vmatpush.bf16.msra.mxu0 %v1688
        %1766 = vmatmul.bf16.gmra.mxu0 %v1627
        %v1767 = vpop.f32.mrf.mxu0
        %v1768 = vadd.f32 0.0, %v1767
        %v1769 = vpop.f32.mrf.mxu0
        %v1770 = vadd.f32 0.0, %v1769
        %1771 = vmatmul.bf16.gmra.mxu0 %v1628
        %v1772 = vpop.f32.mrf.mxu0
        %v1773 = vadd.f32 0.0, %v1772
        %v1774 = vpop.f32.mrf.mxu0
        %v1775 = vadd.f32 0.0, %v1774
        %1776 = vmatmul.bf16.gmra.mxu0 %v1629
        %v1777 = vpop.f32.mrf.mxu0
        %v1778 = vadd.f32 0.0, %v1777
        %v1779 = vpop.f32.mrf.mxu0
        %v1780 = vadd.f32 0.0, %v1779
        %1781 = vmatmul.bf16.gmra.mxu0 %v1630
        %v1782 = vpop.f32.mrf.mxu0
        %v1783 = vadd.f32 0.0, %v1782
        %v1784 = vpop.f32.mrf.mxu0
        %v1785 = vadd.f32 0.0, %v1784
        %1786 = vmatmul.bf16.gmra.mxu0 %v1631
        %v1787 = vpop.f32.mrf.mxu0
        %v1788 = vadd.f32 0.0, %v1787
        %v1789 = vpop.f32.mrf.mxu0
        %v1790 = vadd.f32 0.0, %v1789
        %1791 = vmatmul.bf16.gmra.mxu0 %v1632
        %v1792 = vpop.f32.mrf.mxu0
        %v1793 = vadd.f32 0.0, %v1792
        %v1794 = vpop.f32.mrf.mxu0
        %v1795 = vadd.f32 0.0, %v1794
        %1796 = vdwg.mxu0
        %v1797 = vadd.f32 %v1412, %v1729
        %v1798 = vadd.f32 %v1413, %v1768
        %v1799 = vadd.f32 %v1414, %v1731
        %v1800 = vadd.f32 %v1415, %v1770
        %v1801 = vadd.f32 %v1416, %v1734
        %v1802 = vadd.f32 %v1417, %v1773
        %v1803 = vadd.f32 %v1418, %v1736
        %v1804 = vadd.f32 %v1419, %v1775
        %v1805 = vadd.f32 %v1420, %v1739
        %v1806 = vadd.f32 %v1421, %v1778
        %v1807 = vadd.f32 %v1422, %v1741
        %v1808 = vadd.f32 %v1423, %v1780
        %v1809 = vadd.f32 %v1424, %v1744
        %v1810 = vadd.f32 %v1425, %v1783
        %v1811 = vadd.f32 %v1426, %v1746
        %v1812 = vadd.f32 %v1427, %v1785
        %v1813 = vadd.f32 %v1428, %v1749
        %v1814 = vadd.f32 %v1429, %v1788
        %v1815 = vadd.f32 %v1430, %v1751
        %v1816 = vadd.f32 %v1431, %v1790
        %v1817 = vadd.f32 %v1432, %v1754
        %v1818 = vadd.f32 %v1433, %v1793
        %v1819 = vadd.f32 %v1434, %v1756
        %v1820 = vadd.f32 %v1435, %v1795
        %v1821 = vld [vmem:[%s1188] sm:$0xe]
        %v1822 = vld [vmem:[%s1188 + $0xc] sm:$0xe]
        %v1823 = vld [vmem:[%s1188 + $0x18] sm:$0xe]
        %v1824 = vld [vmem:[%s1188 + $0x24] sm:$0xe]
        %v1825 = vld [vmem:[%s1188 + $0x30] sm:$0xe]
        %v1826 = vld [vmem:[%s1188 + $0x3c] sm:$0xe]
        %v1845 = vrot.slane %v1821, 5
        %v1846 = vrot.slane %v1845, 4
        %v1847 = vrot.slane %v1437, 5
        %v1848 = vsel %vm919, %v1846, %v1847
        %v1849 = vrot.slane %v1847, 4
        %v1850 = vrot.slane %v1438, 5
        %v1851 = vsel %vm919, %v1849, %v1850
        %v1852 = vrot.slane %v1822, 5
        %v1853 = vrot.slane %v1852, 4
        %v1854 = vrot.slane %v1440, 5
        %v1855 = vsel %vm919, %v1853, %v1854
        %v1856 = vrot.slane %v1854, 4
        %v1857 = vrot.slane %v1441, 5
        %v1858 = vsel %vm919, %v1856, %v1857
        %v1859 = vrot.slane %v1823, 5
        %v1860 = vrot.slane %v1859, 4
        %v1861 = vrot.slane %v1443, 5
        %v1862 = vsel %vm919, %v1860, %v1861
        %v1863 = vrot.slane %v1861, 4
        %v1864 = vrot.slane %v1444, 5
        %v1865 = vsel %vm919, %v1863, %v1864
        %v1866 = vrot.slane %v1824, 5
        %v1867 = vrot.slane %v1866, 4
        %v1868 = vrot.slane %v1446, 5
        %v1869 = vsel %vm919, %v1867, %v1868
        %v1870 = vrot.slane %v1868, 4
        %v1871 = vrot.slane %v1447, 5
        %v1872 = vsel %vm919, %v1870, %v1871
        %v1873 = vrot.slane %v1825, 5
        %v1874 = vrot.slane %v1873, 4
        %v1875 = vrot.slane %v1449, 5
        %v1876 = vsel %vm919, %v1874, %v1875
        %v1877 = vrot.slane %v1875, 4
        %v1878 = vrot.slane %v1450, 5
        %v1879 = vsel %vm919, %v1877, %v1878
        %v1880 = vrot.slane %v1826, 5
        %v1881 = vrot.slane %v1880, 4
        %v1882 = vrot.slane %v1452, 5
        %v1883 = vsel %vm919, %v1881, %v1882
        %v1884 = vrot.slane %v1882, 4
        %v1885 = vrot.slane %v1453, 5
        %v1886 = vsel %vm919, %v1884, %v1885
        %s1887 = scalar_lea.vmem %s1, 640
        %v1888 = vld [vmem:[%s1887] sm:$0xff]
        %v1889 = vld [vmem:[%s1887 + $0x8] sm:$0xff]
        %v1890 = vld [vmem:[%s1887 + $0x10] sm:$0xff]
        %v1891 = vld [vmem:[%s1887 + $0x18] sm:$0xff]
        %v1892 = vld [vmem:[%s1887 + $0x20] sm:$0xff]
        %v1893 = vld [vmem:[%s1887 + $0x28] sm:$0xff]
        %v1894 = vld [vmem:[%s1887 + $0x30] sm:$0xff]
        %v1895 = vld [vmem:[%s1887 + $0x38] sm:$0xff]
        %v1896 = vld [vmem:[%s1887 + $0x40] sm:$0xff]
        %v1897 = vld [vmem:[%s1887 + $0x48] sm:$0xff]
        %v1898 = vld [vmem:[%s1887 + $0x50] sm:$0xff]
        %v1899 = vld [vmem:[%s1887 + $0x58] sm:$0xff]
        %v1900 = vld [vmem:[%s1887 + $0x60] sm:$0xff]
        %v1901 = vld [vmem:[%s1887 + $0x68] sm:$0xff]
        %v1902 = vld [vmem:[%s1887 + $0x70] sm:$0xff]
        %v1903 = vld [vmem:[%s1887 + $0x78] sm:$0xff]
        %v1904 = vunpack.c.l.b16 %v1848
        %v1905 = vunpack.c.l.b16 %v1851
        %v1906 = vunpack.c.l.b16 %v1855
        %v1907 = vunpack.c.l.b16 %v1858
        %v1908 = vunpack.c.l.b16 %v1862
        %v1909 = vunpack.c.l.b16 %v1865
        %v1910 = vunpack.c.l.b16 %v1869
        %v1911 = vunpack.c.l.b16 %v1872
        %v1912 = vunpack.c.l.b16 %v1876
        %v1913 = vunpack.c.l.b16 %v1879
        %v1914 = vunpack.c.l.b16 %v1883
        %v1915 = vunpack.c.l.b16 %v1886
        %v1916 = vpack.c.b16 %v1905, %v1904
        %v1917 = vpack.c.b16 %v1907, %v1906
        %v1918 = vpack.c.b16 %v1909, %v1908
        %v1919 = vpack.c.b16 %v1911, %v1910
        %v1920 = vpack.c.b16 %v1913, %v1912
        %v1921 = vpack.c.b16 %v1915, %v1914
        %v1944 = vunpack.c.l.b16 %v1888
        %v1945 = vunpack.c.h.b16 %v1888
        %v1946 = vunpack.c.l.b16 %v1889
        %v1947 = vunpack.c.h.b16 %v1889
        %v1948 = vunpack.c.l.b16 %v1890
        %v1949 = vunpack.c.h.b16 %v1890
        %v1950 = vunpack.c.l.b16 %v1891
        %v1951 = vunpack.c.h.b16 %v1891
        %v1952 = vunpack.c.l.b16 %v1892
        %v1953 = vunpack.c.h.b16 %v1892
        %v1954 = vunpack.c.l.b16 %v1893
        %v1955 = vunpack.c.h.b16 %v1893
        %v1956 = vunpack.c.l.b16 %v1894
        %v1957 = vunpack.c.h.b16 %v1894
        %v1958 = vunpack.c.l.b16 %v1895
        %v1959 = vunpack.c.h.b16 %v1895
        %v1960 = vunpack.c.l.b16 %v1896
        %v1961 = vunpack.c.h.b16 %v1896
        %v1962 = vunpack.c.l.b16 %v1897
        %v1963 = vunpack.c.h.b16 %v1897
        %v1964 = vunpack.c.l.b16 %v1898
        %v1965 = vunpack.c.h.b16 %v1898
        %v1966 = vunpack.c.l.b16 %v1899
        %v1967 = vunpack.c.h.b16 %v1899
        %v1968 = vunpack.c.l.b16 %v1900
        %v1969 = vunpack.c.h.b16 %v1900
        %v1970 = vunpack.c.l.b16 %v1901
        %v1971 = vunpack.c.h.b16 %v1901
        %v1972 = vunpack.c.l.b16 %v1902
        %v1973 = vunpack.c.h.b16 %v1902
        %v1974 = vunpack.c.l.b16 %v1903
        %v1975 = vunpack.c.h.b16 %v1903
        %v1976 = vpack.c.b16 %v1946, %v1944
        %v1977 = vpack.c.b16 %v1947, %v1945
        %v1978 = vpack.c.b16 %v1950, %v1948
        %v1979 = vpack.c.b16 %v1951, %v1949
        %v1980 = vpack.c.b16 %v1954, %v1952
        %v1981 = vpack.c.b16 %v1955, %v1953
        %v1982 = vpack.c.b16 %v1958, %v1956
        %v1983 = vpack.c.b16 %v1959, %v1957
        %v1984 = vpack.c.b16 %v1962, %v1960
        %v1985 = vpack.c.b16 %v1963, %v1961
        %v1986 = vpack.c.b16 %v1966, %v1964
        %v1987 = vpack.c.b16 %v1967, %v1965
        %v1988 = vpack.c.b16 %v1970, %v1968
        %v1989 = vpack.c.b16 %v1971, %v1969
        %v1990 = vpack.c.b16 %v1974, %v1972
        %v1991 = vpack.c.b16 %v1975, %v1973
        %2008 = vmatpush.bf16.msra.mxu0 %v1990
        %2009 = vmatpush.bf16.msra.mxu0 %v1988
        %2010 = vmatpush.bf16.msra.mxu0 %v1986
        %2011 = vmatpush.bf16.msra.mxu0 %v1984
        %2012 = vmatpush.bf16.msra.mxu0 %v1982
        %2013 = vmatpush.bf16.msra.mxu0 %v1980
        %2014 = vmatpush.bf16.msra.mxu0 %v1978
        %2015 = vmatpush.bf16.msra.mxu0 %v1976
        %2016 = vmatmul.bf16.gmra.mxu0 %v1916
        %v2017 = vpop.f32.mrf.mxu0
        %v2018 = vadd.f32 0.0, %v2017
        %v2019 = vpop.f32.mrf.mxu0
        %v2020 = vadd.f32 0.0, %v2019
        %2021 = vmatmul.bf16.gmra.mxu0 %v1917
        %v2022 = vpop.f32.mrf.mxu0
        %v2023 = vadd.f32 0.0, %v2022
        %v2024 = vpop.f32.mrf.mxu0
        %v2025 = vadd.f32 0.0, %v2024
        %2026 = vmatmul.bf16.gmra.mxu0 %v1918
        %v2027 = vpop.f32.mrf.mxu0
        %v2028 = vadd.f32 0.0, %v2027
        %v2029 = vpop.f32.mrf.mxu0
        %v2030 = vadd.f32 0.0, %v2029
        %2031 = vmatmul.bf16.gmra.mxu0 %v1919
        %v2032 = vpop.f32.mrf.mxu0
        %v2033 = vadd.f32 0.0, %v2032
        %v2034 = vpop.f32.mrf.mxu0
        %v2035 = vadd.f32 0.0, %v2034
        %2036 = vmatmul.bf16.gmra.mxu0 %v1920
        %v2037 = vpop.f32.mrf.mxu0
        %v2038 = vadd.f32 0.0, %v2037
        %v2039 = vpop.f32.mrf.mxu0
        %v2040 = vadd.f32 0.0, %v2039
        %2041 = vmatmul.bf16.gmra.mxu0 %v1921
        %v2042 = vpop.f32.mrf.mxu0
        %v2043 = vadd.f32 0.0, %v2042
        %v2044 = vpop.f32.mrf.mxu0
        %v2045 = vadd.f32 0.0, %v2044
        %2046 = vdwg.mxu0
        %2047 = vmatpush.bf16.msra.mxu0 %v1991
        %2048 = vmatpush.bf16.msra.mxu0 %v1989
        %2049 = vmatpush.bf16.msra.mxu0 %v1987
        %2050 = vmatpush.bf16.msra.mxu0 %v1985
        %2051 = vmatpush.bf16.msra.mxu0 %v1983
        %2052 = vmatpush.bf16.msra.mxu0 %v1981
        %2053 = vmatpush.bf16.msra.mxu0 %v1979
        %2054 = vmatpush.bf16.msra.mxu0 %v1977
        %2055 = vmatmul.bf16.gmra.mxu0 %v1916
        %v2056 = vpop.f32.mrf.mxu0
        %v2057 = vadd.f32 0.0, %v2056
        %v2058 = vpop.f32.mrf.mxu0
        %v2059 = vadd.f32 0.0, %v2058
        %2060 = vmatmul.bf16.gmra.mxu0 %v1917
        %v2061 = vpop.f32.mrf.mxu0
        %v2062 = vadd.f32 0.0, %v2061
        %v2063 = vpop.f32.mrf.mxu0
        %v2064 = vadd.f32 0.0, %v2063
        %2065 = vmatmul.bf16.gmra.mxu0 %v1918
        %v2066 = vpop.f32.mrf.mxu0
        %v2067 = vadd.f32 0.0, %v2066
        %v2068 = vpop.f32.mrf.mxu0
        %v2069 = vadd.f32 0.0, %v2068
        %2070 = vmatmul.bf16.gmra.mxu0 %v1919
        %v2071 = vpop.f32.mrf.mxu0
        %v2072 = vadd.f32 0.0, %v2071
        %v2073 = vpop.f32.mrf.mxu0
        %v2074 = vadd.f32 0.0, %v2073
        %2075 = vmatmul.bf16.gmra.mxu0 %v1920
        %v2076 = vpop.f32.mrf.mxu0
        %v2077 = vadd.f32 0.0, %v2076
        %v2078 = vpop.f32.mrf.mxu0
        %v2079 = vadd.f32 0.0, %v2078
        %2080 = vmatmul.bf16.gmra.mxu0 %v1921
        %v2081 = vpop.f32.mrf.mxu0
        %v2082 = vadd.f32 0.0, %v2081
        %v2083 = vpop.f32.mrf.mxu0
        %v2084 = vadd.f32 0.0, %v2083
        %2085 = vdwg.mxu0
        %v2086 = vadd.f32 %v1797, %v2018
        %v2087 = vadd.f32 %v1798, %v2057
        %v2088 = vadd.f32 %v1799, %v2020
        %v2089 = vadd.f32 %v1800, %v2059
        %v2090 = vadd.f32 %v1801, %v2023
        %v2091 = vadd.f32 %v1802, %v2062
        %v2092 = vadd.f32 %v1803, %v2025
        %v2093 = vadd.f32 %v1804, %v2064
        %v2094 = vadd.f32 %v1805, %v2028
        %v2095 = vadd.f32 %v1806, %v2067
        %v2096 = vadd.f32 %v1807, %v2030
        %v2097 = vadd.f32 %v1808, %v2069
        %v2098 = vadd.f32 %v1809, %v2033
        %v2099 = vadd.f32 %v1810, %v2072
        %v2100 = vadd.f32 %v1811, %v2035
        %v2101 = vadd.f32 %v1812, %v2074
        %v2102 = vadd.f32 %v1813, %v2038
        %v2103 = vadd.f32 %v1814, %v2077
        %v2104 = vadd.f32 %v1815, %v2040
        %v2105 = vadd.f32 %v1816, %v2079
        %v2106 = vadd.f32 %v1817, %v2043
        %v2107 = vadd.f32 %v1818, %v2082
        %v2108 = vadd.f32 %v1819, %v2045
        %v2109 = vadd.f32 %v1820, %v2084
        %s2110 = sadd.s32 %s293, 2
        %s2111 = smul.u32 %s2110, 3
        %s2112 = smul.addr %s2111, 4
        %s2113 = scalar_lea.vmem %s290, %s2112
        %v2114 = vld [vmem:[%s2113] sm:$0xf]
        %v2115 = vld [vmem:[%s2113 + $0x4] sm:$0xf]
        %v2116 = vld [vmem:[%s2113 + $0xc] sm:$0xf]
        %v2117 = vld [vmem:[%s2113 + $0x10] sm:$0xf]
        %v2118 = vld [vmem:[%s2113 + $0x18] sm:$0xf]
        %v2119 = vld [vmem:[%s2113 + $0x1c] sm:$0xf]
        %v2120 = vld [vmem:[%s2113 + $0x24] sm:$0xf]
        %v2121 = vld [vmem:[%s2113 + $0x28] sm:$0xf]
        %v2122 = vld [vmem:[%s2113 + $0x30] sm:$0xf]
        %v2123 = vld [vmem:[%s2113 + $0x34] sm:$0xf]
        %v2124 = vld [vmem:[%s2113 + $0x3c] sm:$0xf]
        %v2125 = vld [vmem:[%s2113 + $0x40] sm:$0xf]
        %s2126 = scalar_lea.vmem %s1, 768
        %v2127 = vld [vmem:[%s2126] sm:$0xff]
        %v2128 = vld [vmem:[%s2126 + $0x8] sm:$0xff]
        %v2129 = vld [vmem:[%s2126 + $0x10] sm:$0xff]
        %v2130 = vld [vmem:[%s2126 + $0x18] sm:$0xff]
        %v2131 = vld [vmem:[%s2126 + $0x20] sm:$0xff]
        %v2132 = vld [vmem:[%s2126 + $0x28] sm:$0xff]
        %v2133 = vld [vmem:[%s2126 + $0x30] sm:$0xff]
        %v2134 = vld [vmem:[%s2126 + $0x38] sm:$0xff]
        %v2135 = vld [vmem:[%s2126 + $0x40] sm:$0xff]
        %v2136 = vld [vmem:[%s2126 + $0x48] sm:$0xff]
        %v2137 = vld [vmem:[%s2126 + $0x50] sm:$0xff]
        %v2138 = vld [vmem:[%s2126 + $0x58] sm:$0xff]
        %v2139 = vld [vmem:[%s2126 + $0x60] sm:$0xff]
        %v2140 = vld [vmem:[%s2126 + $0x68] sm:$0xff]
        %v2141 = vld [vmem:[%s2126 + $0x70] sm:$0xff]
        %v2142 = vld [vmem:[%s2126 + $0x78] sm:$0xff]
        %v2155 = vunpack.c.l.b16 %v2114
        %v2156 = vunpack.c.l.b16 %v2115
        %v2157 = vunpack.c.l.b16 %v2116
        %v2158 = vunpack.c.l.b16 %v2117
        %v2159 = vunpack.c.l.b16 %v2118
        %v2160 = vunpack.c.l.b16 %v2119
        %v2161 = vunpack.c.l.b16 %v2120
        %v2162 = vunpack.c.l.b16 %v2121
        %v2163 = vunpack.c.l.b16 %v2122
        %v2164 = vunpack.c.l.b16 %v2123
        %v2165 = vunpack.c.l.b16 %v2124
        %v2166 = vunpack.c.l.b16 %v2125
        %v2167 = vpack.c.b16 %v2156, %v2155
        %v2168 = vpack.c.b16 %v2158, %v2157
        %v2169 = vpack.c.b16 %v2160, %v2159
        %v2170 = vpack.c.b16 %v2162, %v2161
        %v2171 = vpack.c.b16 %v2164, %v2163
        %v2172 = vpack.c.b16 %v2166, %v2165
        %v2195 = vunpack.c.l.b16 %v2127
        %v2196 = vunpack.c.h.b16 %v2127
        %v2197 = vunpack.c.l.b16 %v2128
        %v2198 = vunpack.c.h.b16 %v2128
        %v2199 = vunpack.c.l.b16 %v2129
        %v2200 = vunpack.c.h.b16 %v2129
        %v2201 = vunpack.c.l.b16 %v2130
        %v2202 = vunpack.c.h.b16 %v2130
        %v2203 = vunpack.c.l.b16 %v2131
        %v2204 = vunpack.c.h.b16 %v2131
        %v2205 = vunpack.c.l.b16 %v2132
        %v2206 = vunpack.c.h.b16 %v2132
        %v2207 = vunpack.c.l.b16 %v2133
        %v2208 = vunpack.c.h.b16 %v2133
        %v2209 = vunpack.c.l.b16 %v2134
        %v2210 = vunpack.c.h.b16 %v2134
        %v2211 = vunpack.c.l.b16 %v2135
        %v2212 = vunpack.c.h.b16 %v2135
        %v2213 = vunpack.c.l.b16 %v2136
        %v2214 = vunpack.c.h.b16 %v2136
        %v2215 = vunpack.c.l.b16 %v2137
        %v2216 = vunpack.c.h.b16 %v2137
        %v2217 = vunpack.c.l.b16 %v2138
        %v2218 = vunpack.c.h.b16 %v2138
        %v2219 = vunpack.c.l.b16 %v2139
        %v2220 = vunpack.c.h.b16 %v2139
        %v2221 = vunpack.c.l.b16 %v2140
        %v2222 = vunpack.c.h.b16 %v2140
        %v2223 = vunpack.c.l.b16 %v2141
        %v2224 = vunpack.c.h.b16 %v2141
        %v2225 = vunpack.c.l.b16 %v2142
        %v2226 = vunpack.c.h.b16 %v2142
        %v2227 = vpack.c.b16 %v2197, %v2195
        %v2228 = vpack.c.b16 %v2198, %v2196
        %v2229 = vpack.c.b16 %v2201, %v2199
        %v2230 = vpack.c.b16 %v2202, %v2200
        %v2231 = vpack.c.b16 %v2205, %v2203
        %v2232 = vpack.c.b16 %v2206, %v2204
        %v2233 = vpack.c.b16 %v2209, %v2207
        %v2234 = vpack.c.b16 %v2210, %v2208
        %v2235 = vpack.c.b16 %v2213, %v2211
        %v2236 = vpack.c.b16 %v2214, %v2212
        %v2237 = vpack.c.b16 %v2217, %v2215
        %v2238 = vpack.c.b16 %v2218, %v2216
        %v2239 = vpack.c.b16 %v2221, %v2219
        %v2240 = vpack.c.b16 %v2222, %v2220
        %v2241 = vpack.c.b16 %v2225, %v2223
        %v2242 = vpack.c.b16 %v2226, %v2224
        %2259 = vmatpush.bf16.msra.mxu0 %v2241
        %2260 = vmatpush.bf16.msra.mxu0 %v2239
        %2261 = vmatpush.bf16.msra.mxu0 %v2237
        %2262 = vmatpush.bf16.msra.mxu0 %v2235
        %2263 = vmatpush.bf16.msra.mxu0 %v2233
        %2264 = vmatpush.bf16.msra.mxu0 %v2231
        %2265 = vmatpush.bf16.msra.mxu0 %v2229
        %2266 = vmatpush.bf16.msra.mxu0 %v2227
        %2267 = vmatmul.bf16.gmra.mxu0 %v2167
        %v2268 = vpop.f32.mrf.mxu0
        %v2269 = vadd.f32 0.0, %v2268
        %v2270 = vpop.f32.mrf.mxu0
        %v2271 = vadd.f32 0.0, %v2270
        %2272 = vmatmul.bf16.gmra.mxu0 %v2168
        %v2273 = vpop.f32.mrf.mxu0
        %v2274 = vadd.f32 0.0, %v2273
        %v2275 = vpop.f32.mrf.mxu0
        %v2276 = vadd.f32 0.0, %v2275
        %2277 = vmatmul.bf16.gmra.mxu0 %v2169
        %v2278 = vpop.f32.mrf.mxu0
        %v2279 = vadd.f32 0.0, %v2278
        %v2280 = vpop.f32.mrf.mxu0
        %v2281 = vadd.f32 0.0, %v2280
        %2282 = vmatmul.bf16.gmra.mxu0 %v2170
        %v2283 = vpop.f32.mrf.mxu0
        %v2284 = vadd.f32 0.0, %v2283
        %v2285 = vpop.f32.mrf.mxu0
        %v2286 = vadd.f32 0.0, %v2285
        %2287 = vmatmul.bf16.gmra.mxu0 %v2171
        %v2288 = vpop.f32.mrf.mxu0
        %v2289 = vadd.f32 0.0, %v2288
        %v2290 = vpop.f32.mrf.mxu0
        %v2291 = vadd.f32 0.0, %v2290
        %2292 = vmatmul.bf16.gmra.mxu0 %v2172
        %v2293 = vpop.f32.mrf.mxu0
        %v2294 = vadd.f32 0.0, %v2293
        %v2295 = vpop.f32.mrf.mxu0
        %v2296 = vadd.f32 0.0, %v2295
        %2297 = vdwg.mxu0
        %2298 = vmatpush.bf16.msra.mxu0 %v2242
        %2299 = vmatpush.bf16.msra.mxu0 %v2240
        %2300 = vmatpush.bf16.msra.mxu0 %v2238
        %2301 = vmatpush.bf16.msra.mxu0 %v2236
        %2302 = vmatpush.bf16.msra.mxu0 %v2234
        %2303 = vmatpush.bf16.msra.mxu0 %v2232
        %2304 = vmatpush.bf16.msra.mxu0 %v2230
        %2305 = vmatpush.bf16.msra.mxu0 %v2228
        %2306 = vmatmul.bf16.gmra.mxu0 %v2167
        %v2307 = vpop.f32.mrf.mxu0
        %v2308 = vadd.f32 0.0, %v2307
        %v2309 = vpop.f32.mrf.mxu0
        %v2310 = vadd.f32 0.0, %v2309
        %2311 = vmatmul.bf16.gmra.mxu0 %v2168
        %v2312 = vpop.f32.mrf.mxu0
        %v2313 = vadd.f32 0.0, %v2312
        %v2314 = vpop.f32.mrf.mxu0
        %v2315 = vadd.f32 0.0, %v2314
        %2316 = vmatmul.bf16.gmra.mxu0 %v2169
        %v2317 = vpop.f32.mrf.mxu0
        %v2318 = vadd.f32 0.0, %v2317
        %v2319 = vpop.f32.mrf.mxu0
        %v2320 = vadd.f32 0.0, %v2319
        %2321 = vmatmul.bf16.gmra.mxu0 %v2170
        %v2322 = vpop.f32.mrf.mxu0
        %v2323 = vadd.f32 0.0, %v2322
        %v2324 = vpop.f32.mrf.mxu0
        %v2325 = vadd.f32 0.0, %v2324
        %2326 = vmatmul.bf16.gmra.mxu0 %v2171
        %v2327 = vpop.f32.mrf.mxu0
        %v2328 = vadd.f32 0.0, %v2327
        %v2329 = vpop.f32.mrf.mxu0
        %v2330 = vadd.f32 0.0, %v2329
        %2331 = vmatmul.bf16.gmra.mxu0 %v2172
        %v2332 = vpop.f32.mrf.mxu0
        %v2333 = vadd.f32 0.0, %v2332
        %v2334 = vpop.f32.mrf.mxu0
        %v2335 = vadd.f32 0.0, %v2334
        %2336 = vdwg.mxu0
        %v2337 = vadd.f32 %v2086, %v2269
        %v2338 = vadd.f32 %v2087, %v2308
        %v2339 = vadd.f32 %v2088, %v2271
        %v2340 = vadd.f32 %v2089, %v2310
        %v2341 = vadd.f32 %v2090, %v2274
        %v2342 = vadd.f32 %v2091, %v2313
        %v2343 = vadd.f32 %v2092, %v2276
        %v2344 = vadd.f32 %v2093, %v2315
        %v2345 = vadd.f32 %v2094, %v2279
        %v2346 = vadd.f32 %v2095, %v2318
        %v2347 = vadd.f32 %v2096, %v2281
        %v2348 = vadd.f32 %v2097, %v2320
        %v2349 = vadd.f32 %v2098, %v2284
        %v2350 = vadd.f32 %v2099, %v2323
        %v2351 = vadd.f32 %v2100, %v2286
        %v2352 = vadd.f32 %v2101, %v2325
        %v2353 = vadd.f32 %v2102, %v2289
        %v2354 = vadd.f32 %v2103, %v2328
        %v2355 = vadd.f32 %v2104, %v2291
        %v2356 = vadd.f32 %v2105, %v2330
        %v2357 = vadd.f32 %v2106, %v2294
        %v2358 = vadd.f32 %v2107, %v2333
        %v2359 = vadd.f32 %v2108, %v2296
        %v2360 = vadd.f32 %v2109, %v2335
        %v2361 = vld [vmem:[%s2113] sm:$0xf]
        %v2362 = vld [vmem:[%s2113 + $0x4] sm:$0xf]
        %v2363 = vld [vmem:[%s2113 + $0x8] sm:$0x1]
        %v2364 = vld [vmem:[%s2113 + $0xc] sm:$0xf]
        %v2365 = vld [vmem:[%s2113 + $0x10] sm:$0xf]
        %v2366 = vld [vmem:[%s2113 + $0x14] sm:$0x1]
        %v2367 = vld [vmem:[%s2113 + $0x18] sm:$0xf]
        %v2368 = vld [vmem:[%s2113 + $0x1c] sm:$0xf]
        %v2369 = vld [vmem:[%s2113 + $0x20] sm:$0x1]
        %v2370 = vld [vmem:[%s2113 + $0x24] sm:$0xf]
        %v2371 = vld [vmem:[%s2113 + $0x28] sm:$0xf]
        %v2372 = vld [vmem:[%s2113 + $0x2c] sm:$0x1]
        %v2373 = vld [vmem:[%s2113 + $0x30] sm:$0xf]
        %v2374 = vld [vmem:[%s2113 + $0x34] sm:$0xf]
        %v2375 = vld [vmem:[%s2113 + $0x38] sm:$0x1]
        %v2376 = vld [vmem:[%s2113 + $0x3c] sm:$0xf]
        %v2377 = vld [vmem:[%s2113 + $0x40] sm:$0xf]
        %v2378 = vld [vmem:[%s2113 + $0x44] sm:$0x1]
        %v2380 = vshrl.u32 %v2361, 16
        %v2382 = vrot.slane %v2380, 4
        %v2383 = vshll.u32 %v2361, 16
        %v2385 = vrot.slane %v2383, 5
        %v2386 = vor.u32 %v2382, %v2385
        %v2387 = vrot.slane %v2386, 4
        %v2389 = vshll.u32 %v2362, 16
        %v2391 = vrot.slane %v2389, 5
        %v2392 = vsel %vm361, %v2387, %v2391
        %v2393 = vshrl.u32 %v2362, 16
        %v2395 = vrot.slane %v2393, 4
        %v2396 = vor.u32 %v2395, %v2391
        %v2397 = vrot.slane %v2396, 4
        %v2399 = vshll.u32 %v2363, 16
        %v2401 = vrot.slane %v2399, 5
        %v2402 = vsel %vm361, %v2397, %v2401
        %v2404 = vshrl.u32 %v2364, 16
        %v2406 = vrot.slane %v2404, 4
        %v2407 = vshll.u32 %v2364, 16
        %v2409 = vrot.slane %v2407, 5
        %v2410 = vor.u32 %v2406, %v2409
        %v2411 = vrot.slane %v2410, 4
        %v2413 = vshll.u32 %v2365, 16
        %v2415 = vrot.slane %v2413, 5
        %v2416 = vsel %vm361, %v2411, %v2415
        %v2417 = vshrl.u32 %v2365, 16
        %v2419 = vrot.slane %v2417, 4
        %v2420 = vor.u32 %v2419, %v2415
        %v2421 = vrot.slane %v2420, 4
        %v2423 = vshll.u32 %v2366, 16
        %v2425 = vrot.slane %v2423, 5
        %v2426 = vsel %vm361, %v2421, %v2425
        %v2428 = vshrl.u32 %v2367, 16
        %v2430 = vrot.slane %v2428, 4
        %v2431 = vshll.u32 %v2367, 16
        %v2433 = vrot.slane %v2431, 5
        %v2434 = vor.u32 %v2430, %v2433
        %v2435 = vrot.slane %v2434, 4
        %v2437 = vshll.u32 %v2368, 16
        %v2439 = vrot.slane %v2437, 5
        %v2440 = vsel %vm361, %v2435, %v2439
        %v2441 = vshrl.u32 %v2368, 16
        %v2443 = vrot.slane %v2441, 4
        %v2444 = vor.u32 %v2443, %v2439
        %v2445 = vrot.slane %v2444, 4
        %v2447 = vshll.u32 %v2369, 16
        %v2449 = vrot.slane %v2447, 5
        %v2450 = vsel %vm361, %v2445, %v2449
        %v2452 = vshrl.u32 %v2370, 16
        %v2454 = vrot.slane %v2452, 4
        %v2455 = vshll.u32 %v2370, 16
        %v2457 = vrot.slane %v2455, 5
        %v2458 = vor.u32 %v2454, %v2457
        %v2459 = vrot.slane %v2458, 4
        %v2461 = vshll.u32 %v2371, 16
        %v2463 = vrot.slane %v2461, 5
        %v2464 = vsel %vm361, %v2459, %v2463
        %v2465 = vshrl.u32 %v2371, 16
        %v2467 = vrot.slane %v2465, 4
        %v2468 = vor.u32 %v2467, %v2463
        %v2469 = vrot.slane %v2468, 4
        %v2471 = vshll.u32 %v2372, 16
        %v2473 = vrot.slane %v2471, 5
        %v2474 = vsel %vm361, %v2469, %v2473
        %v2476 = vshrl.u32 %v2373, 16
        %v2478 = vrot.slane %v2476, 4
        %v2479 = vshll.u32 %v2373, 16
        %v2481 = vrot.slane %v2479, 5
        %v2482 = vor.u32 %v2478, %v2481
        %v2483 = vrot.slane %v2482, 4
        %v2485 = vshll.u32 %v2374, 16
        %v2487 = vrot.slane %v2485, 5
        %v2488 = vsel %vm361, %v2483, %v2487
        %v2489 = vshrl.u32 %v2374, 16
        %v2491 = vrot.slane %v2489, 4
        %v2492 = vor.u32 %v2491, %v2487
        %v2493 = vrot.slane %v2492, 4
        %v2495 = vshll.u32 %v2375, 16
        %v2497 = vrot.slane %v2495, 5
        %v2498 = vsel %vm361, %v2493, %v2497
        %v2500 = vshrl.u32 %v2376, 16
        %v2502 = vrot.slane %v2500, 4
        %v2503 = vshll.u32 %v2376, 16
        %v2505 = vrot.slane %v2503, 5
        %v2506 = vor.u32 %v2502, %v2505
        %v2507 = vrot.slane %v2506, 4
        %v2509 = vshll.u32 %v2377, 16
        %v2511 = vrot.slane %v2509, 5
        %v2512 = vsel %vm361, %v2507, %v2511
        %v2513 = vshrl.u32 %v2377, 16
        %v2515 = vrot.slane %v2513, 4
        %v2516 = vor.u32 %v2515, %v2511
        %v2517 = vrot.slane %v2516, 4
        %v2519 = vshll.u32 %v2378, 16
        %v2521 = vrot.slane %v2519, 5
        %v2522 = vsel %vm361, %v2517, %v2521
        %s2523 = scalar_lea.vmem %s1, 896
        %v2524 = vld [vmem:[%s2523] sm:$0xff]
        %v2525 = vld [vmem:[%s2523 + $0x8] sm:$0xff]
        %v2526 = vld [vmem:[%s2523 + $0x10] sm:$0xff]
        %v2527 = vld [vmem:[%s2523 + $0x18] sm:$0xff]
        %v2528 = vld [vmem:[%s2523 + $0x20] sm:$0xff]
        %v2529 = vld [vmem:[%s2523 + $0x28] sm:$0xff]
        %v2530 = vld [vmem:[%s2523 + $0x30] sm:$0xff]
        %v2531 = vld [vmem:[%s2523 + $0x38] sm:$0xff]
        %v2532 = vld [vmem:[%s2523 + $0x40] sm:$0xff]
        %v2533 = vld [vmem:[%s2523 + $0x48] sm:$0xff]
        %v2534 = vld [vmem:[%s2523 + $0x50] sm:$0xff]
        %v2535 = vld [vmem:[%s2523 + $0x58] sm:$0xff]
        %v2536 = vld [vmem:[%s2523 + $0x60] sm:$0xff]
        %v2537 = vld [vmem:[%s2523 + $0x68] sm:$0xff]
        %v2538 = vld [vmem:[%s2523 + $0x70] sm:$0xff]
        %v2539 = vld [vmem:[%s2523 + $0x78] sm:$0xff]
        %v2540 = vunpack.c.l.b16 %v2392
        %v2541 = vunpack.c.l.b16 %v2402
        %v2542 = vunpack.c.l.b16 %v2416
        %v2543 = vunpack.c.l.b16 %v2426
        %v2544 = vunpack.c.l.b16 %v2440
        %v2545 = vunpack.c.l.b16 %v2450
        %v2546 = vunpack.c.l.b16 %v2464
        %v2547 = vunpack.c.l.b16 %v2474
        %v2548 = vunpack.c.l.b16 %v2488
        %v2549 = vunpack.c.l.b16 %v2498
        %v2550 = vunpack.c.l.b16 %v2512
        %v2551 = vunpack.c.l.b16 %v2522
        %v2552 = vpack.c.b16 %v2541, %v2540
        %v2553 = vpack.c.b16 %v2543, %v2542
        %v2554 = vpack.c.b16 %v2545, %v2544
        %v2555 = vpack.c.b16 %v2547, %v2546
        %v2556 = vpack.c.b16 %v2549, %v2548
        %v2557 = vpack.c.b16 %v2551, %v2550
        %v2580 = vunpack.c.l.b16 %v2524
        %v2581 = vunpack.c.h.b16 %v2524
        %v2582 = vunpack.c.l.b16 %v2525
        %v2583 = vunpack.c.h.b16 %v2525
        %v2584 = vunpack.c.l.b16 %v2526
        %v2585 = vunpack.c.h.b16 %v2526
        %v2586 = vunpack.c.l.b16 %v2527
        %v2587 = vunpack.c.h.b16 %v2527
        %v2588 = vunpack.c.l.b16 %v2528
        %v2589 = vunpack.c.h.b16 %v2528
        %v2590 = vunpack.c.l.b16 %v2529
        %v2591 = vunpack.c.h.b16 %v2529
        %v2592 = vunpack.c.l.b16 %v2530
        %v2593 = vunpack.c.h.b16 %v2530
        %v2594 = vunpack.c.l.b16 %v2531
        %v2595 = vunpack.c.h.b16 %v2531
        %v2596 = vunpack.c.l.b16 %v2532
        %v2597 = vunpack.c.h.b16 %v2532
        %v2598 = vunpack.c.l.b16 %v2533
        %v2599 = vunpack.c.h.b16 %v2533
        %v2600 = vunpack.c.l.b16 %v2534
        %v2601 = vunpack.c.h.b16 %v2534
        %v2602 = vunpack.c.l.b16 %v2535
        %v2603 = vunpack.c.h.b16 %v2535
        %v2604 = vunpack.c.l.b16 %v2536
        %v2605 = vunpack.c.h.b16 %v2536
        %v2606 = vunpack.c.l.b16 %v2537
        %v2607 = vunpack.c.h.b16 %v2537
        %v2608 = vunpack.c.l.b16 %v2538
        %v2609 = vunpack.c.h.b16 %v2538
        %v2610 = vunpack.c.l.b16 %v2539
        %v2611 = vunpack.c.h.b16 %v2539
        %v2612 = vpack.c.b16 %v2582, %v2580
        %v2613 = vpack.c.b16 %v2583, %v2581
        %v2614 = vpack.c.b16 %v2586, %v2584
        %v2615 = vpack.c.b16 %v2587, %v2585
        %v2616 = vpack.c.b16 %v2590, %v2588
        %v2617 = vpack.c.b16 %v2591, %v2589
        %v2618 = vpack.c.b16 %v2594, %v2592
        %v2619 = vpack.c.b16 %v2595, %v2593
        %v2620 = vpack.c.b16 %v2598, %v2596
        %v2621 = vpack.c.b16 %v2599, %v2597
        %v2622 = vpack.c.b16 %v2602, %v2600
        %v2623 = vpack.c.b16 %v2603, %v2601
        %v2624 = vpack.c.b16 %v2606, %v2604
        %v2625 = vpack.c.b16 %v2607, %v2605
        %v2626 = vpack.c.b16 %v2610, %v2608
        %v2627 = vpack.c.b16 %v2611, %v2609
        %2644 = vmatpush.bf16.msra.mxu0 %v2626
        %2645 = vmatpush.bf16.msra.mxu0 %v2624
        %2646 = vmatpush.bf16.msra.mxu0 %v2622
        %2647 = vmatpush.bf16.msra.mxu0 %v2620
        %2648 = vmatpush.bf16.msra.mxu0 %v2618
        %2649 = vmatpush.bf16.msra.mxu0 %v2616
        %2650 = vmatpush.bf16.msra.mxu0 %v2614
        %2651 = vmatpush.bf16.msra.mxu0 %v2612
        %2652 = vmatmul.bf16.gmra.mxu0 %v2552
        %v2653 = vpop.f32.mrf.mxu0
        %v2654 = vadd.f32 0.0, %v2653
        %v2655 = vpop.f32.mrf.mxu0
        %v2656 = vadd.f32 0.0, %v2655
        %2657 = vmatmul.bf16.gmra.mxu0 %v2553
        %v2658 = vpop.f32.mrf.mxu0
        %v2659 = vadd.f32 0.0, %v2658
        %v2660 = vpop.f32.mrf.mxu0
        %v2661 = vadd.f32 0.0, %v2660
        %2662 = vmatmul.bf16.gmra.mxu0 %v2554
        %v2663 = vpop.f32.mrf.mxu0
        %v2664 = vadd.f32 0.0, %v2663
        %v2665 = vpop.f32.mrf.mxu0
        %v2666 = vadd.f32 0.0, %v2665
        %2667 = vmatmul.bf16.gmra.mxu0 %v2555
        %v2668 = vpop.f32.mrf.mxu0
        %v2669 = vadd.f32 0.0, %v2668
        %v2670 = vpop.f32.mrf.mxu0
        %v2671 = vadd.f32 0.0, %v2670
        %2672 = vmatmul.bf16.gmra.mxu0 %v2556
        %v2673 = vpop.f32.mrf.mxu0
        %v2674 = vadd.f32 0.0, %v2673
        %v2675 = vpop.f32.mrf.mxu0
        %v2676 = vadd.f32 0.0, %v2675
        %2677 = vmatmul.bf16.gmra.mxu0 %v2557
        %v2678 = vpop.f32.mrf.mxu0
        %v2679 = vadd.f32 0.0, %v2678
        %v2680 = vpop.f32.mrf.mxu0
        %v2681 = vadd.f32 0.0, %v2680
        %2682 = vdwg.mxu0
        %2683 = vmatpush.bf16.msra.mxu0 %v2627
        %2684 = vmatpush.bf16.msra.mxu0 %v2625
        %2685 = vmatpush.bf16.msra.mxu0 %v2623
        %2686 = vmatpush.bf16.msra.mxu0 %v2621
        %2687 = vmatpush.bf16.msra.mxu0 %v2619
        %2688 = vmatpush.bf16.msra.mxu0 %v2617
        %2689 = vmatpush.bf16.msra.mxu0 %v2615
        %2690 = vmatpush.bf16.msra.mxu0 %v2613
        %2691 = vmatmul.bf16.gmra.mxu0 %v2552
        %v2692 = vpop.f32.mrf.mxu0
        %v2693 = vadd.f32 0.0, %v2692
        %v2694 = vpop.f32.mrf.mxu0
        %v2695 = vadd.f32 0.0, %v2694
        %2696 = vmatmul.bf16.gmra.mxu0 %v2553
        %v2697 = vpop.f32.mrf.mxu0
        %v2698 = vadd.f32 0.0, %v2697
        %v2699 = vpop.f32.mrf.mxu0
        %v2700 = vadd.f32 0.0, %v2699
        %2701 = vmatmul.bf16.gmra.mxu0 %v2554
        %v2702 = vpop.f32.mrf.mxu0
        %v2703 = vadd.f32 0.0, %v2702
        %v2704 = vpop.f32.mrf.mxu0
        %v2705 = vadd.f32 0.0, %v2704
        %2706 = vmatmul.bf16.gmra.mxu0 %v2555
        %v2707 = vpop.f32.mrf.mxu0
        %v2708 = vadd.f32 0.0, %v2707
        %v2709 = vpop.f32.mrf.mxu0
        %v2710 = vadd.f32 0.0, %v2709
        %2711 = vmatmul.bf16.gmra.mxu0 %v2556
        %v2712 = vpop.f32.mrf.mxu0
        %v2713 = vadd.f32 0.0, %v2712
        %v2714 = vpop.f32.mrf.mxu0
        %v2715 = vadd.f32 0.0, %v2714
        %2716 = vmatmul.bf16.gmra.mxu0 %v2557
        %v2717 = vpop.f32.mrf.mxu0
        %v2718 = vadd.f32 0.0, %v2717
        %v2719 = vpop.f32.mrf.mxu0
        %v2720 = vadd.f32 0.0, %v2719
        %2721 = vdwg.mxu0
        %v2722 = vadd.f32 %v2337, %v2654
        %v2723 = vadd.f32 %v2338, %v2693
        %v2724 = vadd.f32 %v2339, %v2656
        %v2725 = vadd.f32 %v2340, %v2695
        %v2726 = vadd.f32 %v2341, %v2659
        %v2727 = vadd.f32 %v2342, %v2698
        %v2728 = vadd.f32 %v2343, %v2661
        %v2729 = vadd.f32 %v2344, %v2700
        %v2730 = vadd.f32 %v2345, %v2664
        %v2731 = vadd.f32 %v2346, %v2703
        %v2732 = vadd.f32 %v2347, %v2666
        %v2733 = vadd.f32 %v2348, %v2705
        %v2734 = vadd.f32 %v2349, %v2669
        %v2735 = vadd.f32 %v2350, %v2708
        %v2736 = vadd.f32 %v2351, %v2671
        %v2737 = vadd.f32 %v2352, %v2710
        %v2738 = vadd.f32 %v2353, %v2674
        %v2739 = vadd.f32 %v2354, %v2713
        %v2740 = vadd.f32 %v2355, %v2676
        %v2741 = vadd.f32 %v2356, %v2715
        %v2742 = vadd.f32 %v2357, %v2679
        %v2743 = vadd.f32 %v2358, %v2718
        %v2744 = vadd.f32 %v2359, %v2681
        %v2745 = vadd.f32 %v2360, %v2720
        %v2746 = vld [vmem:[%s2113] sm:$0xe]
        %v2747 = vld [vmem:[%s2113 + $0xc] sm:$0xe]
        %v2748 = vld [vmem:[%s2113 + $0x18] sm:$0xe]
        %v2749 = vld [vmem:[%s2113 + $0x24] sm:$0xe]
        %v2750 = vld [vmem:[%s2113 + $0x30] sm:$0xe]
        %v2751 = vld [vmem:[%s2113 + $0x3c] sm:$0xe]
        %v2770 = vrot.slane %v2746, 5
        %v2771 = vrot.slane %v2770, 4
        %v2772 = vrot.slane %v2362, 5
        %v2773 = vsel %vm919, %v2771, %v2772
        %v2774 = vrot.slane %v2772, 4
        %v2775 = vrot.slane %v2363, 5
        %v2776 = vsel %vm919, %v2774, %v2775
        %v2777 = vrot.slane %v2747, 5
        %v2778 = vrot.slane %v2777, 4
        %v2779 = vrot.slane %v2365, 5
        %v2780 = vsel %vm919, %v2778, %v2779
        %v2781 = vrot.slane %v2779, 4
        %v2782 = vrot.slane %v2366, 5
        %v2783 = vsel %vm919, %v2781, %v2782
        %v2784 = vrot.slane %v2748, 5
        %v2785 = vrot.slane %v2784, 4
        %v2786 = vrot.slane %v2368, 5
        %v2787 = vsel %vm919, %v2785, %v2786
        %v2788 = vrot.slane %v2786, 4
        %v2789 = vrot.slane %v2369, 5
        %v2790 = vsel %vm919, %v2788, %v2789
        %v2791 = vrot.slane %v2749, 5
        %v2792 = vrot.slane %v2791, 4
        %v2793 = vrot.slane %v2371, 5
        %v2794 = vsel %vm919, %v2792, %v2793
        %v2795 = vrot.slane %v2793, 4
        %v2796 = vrot.slane %v2372, 5
        %v2797 = vsel %vm919, %v2795, %v2796
        %v2798 = vrot.slane %v2750, 5
        %v2799 = vrot.slane %v2798, 4
        %v2800 = vrot.slane %v2374, 5
        %v2801 = vsel %vm919, %v2799, %v2800
        %v2802 = vrot.slane %v2800, 4
        %v2803 = vrot.slane %v2375, 5
        %v2804 = vsel %vm919, %v2802, %v2803
        %v2805 = vrot.slane %v2751, 5
        %v2806 = vrot.slane %v2805, 4
        %v2807 = vrot.slane %v2377, 5
        %v2808 = vsel %vm919, %v2806, %v2807
        %v2809 = vrot.slane %v2807, 4
        %v2810 = vrot.slane %v2378, 5
        %v2811 = vsel %vm919, %v2809, %v2810
        %s2812 = scalar_lea.vmem %s1, 1024
        %v2813 = vld [vmem:[%s2812] sm:$0xff]
        %v2814 = vld [vmem:[%s2812 + $0x8] sm:$0xff]
        %v2815 = vld [vmem:[%s2812 + $0x10] sm:$0xff]
        %v2816 = vld [vmem:[%s2812 + $0x18] sm:$0xff]
        %v2817 = vld [vmem:[%s2812 + $0x20] sm:$0xff]
        %v2818 = vld [vmem:[%s2812 + $0x28] sm:$0xff]
        %v2819 = vld [vmem:[%s2812 + $0x30] sm:$0xff]
        %v2820 = vld [vmem:[%s2812 + $0x38] sm:$0xff]
        %v2821 = vld [vmem:[%s2812 + $0x40] sm:$0xff]
        %v2822 = vld [vmem:[%s2812 + $0x48] sm:$0xff]
        %v2823 = vld [vmem:[%s2812 + $0x50] sm:$0xff]
        %v2824 = vld [vmem:[%s2812 + $0x58] sm:$0xff]
        %v2825 = vld [vmem:[%s2812 + $0x60] sm:$0xff]
        %v2826 = vld [vmem:[%s2812 + $0x68] sm:$0xff]
        %v2827 = vld [vmem:[%s2812 + $0x70] sm:$0xff]
        %v2828 = vld [vmem:[%s2812 + $0x78] sm:$0xff]
        %v2829 = vunpack.c.l.b16 %v2773
        %v2830 = vunpack.c.l.b16 %v2776
        %v2831 = vunpack.c.l.b16 %v2780
        %v2832 = vunpack.c.l.b16 %v2783
        %v2833 = vunpack.c.l.b16 %v2787
        %v2834 = vunpack.c.l.b16 %v2790
        %v2835 = vunpack.c.l.b16 %v2794
        %v2836 = vunpack.c.l.b16 %v2797
        %v2837 = vunpack.c.l.b16 %v2801
        %v2838 = vunpack.c.l.b16 %v2804
        %v2839 = vunpack.c.l.b16 %v2808
        %v2840 = vunpack.c.l.b16 %v2811
        %v2841 = vpack.c.b16 %v2830, %v2829
        %v2842 = vpack.c.b16 %v2832, %v2831
        %v2843 = vpack.c.b16 %v2834, %v2833
        %v2844 = vpack.c.b16 %v2836, %v2835
        %v2845 = vpack.c.b16 %v2838, %v2837
        %v2846 = vpack.c.b16 %v2840, %v2839
        %v2869 = vunpack.c.l.b16 %v2813
        %v2870 = vunpack.c.h.b16 %v2813
        %v2871 = vunpack.c.l.b16 %v2814
        %v2872 = vunpack.c.h.b16 %v2814
        %v2873 = vunpack.c.l.b16 %v2815
        %v2874 = vunpack.c.h.b16 %v2815
        %v2875 = vunpack.c.l.b16 %v2816
        %v2876 = vunpack.c.h.b16 %v2816
        %v2877 = vunpack.c.l.b16 %v2817
        %v2878 = vunpack.c.h.b16 %v2817
        %v2879 = vunpack.c.l.b16 %v2818
        %v2880 = vunpack.c.h.b16 %v2818
        %v2881 = vunpack.c.l.b16 %v2819
        %v2882 = vunpack.c.h.b16 %v2819
        %v2883 = vunpack.c.l.b16 %v2820
        %v2884 = vunpack.c.h.b16 %v2820
        %v2885 = vunpack.c.l.b16 %v2821
        %v2886 = vunpack.c.h.b16 %v2821
        %v2887 = vunpack.c.l.b16 %v2822
        %v2888 = vunpack.c.h.b16 %v2822
        %v2889 = vunpack.c.l.b16 %v2823
        %v2890 = vunpack.c.h.b16 %v2823
        %v2891 = vunpack.c.l.b16 %v2824
        %v2892 = vunpack.c.h.b16 %v2824
        %v2893 = vunpack.c.l.b16 %v2825
        %v2894 = vunpack.c.h.b16 %v2825
        %v2895 = vunpack.c.l.b16 %v2826
        %v2896 = vunpack.c.h.b16 %v2826
        %v2897 = vunpack.c.l.b16 %v2827
        %v2898 = vunpack.c.h.b16 %v2827
        %v2899 = vunpack.c.l.b16 %v2828
        %v2900 = vunpack.c.h.b16 %v2828
        %v2901 = vpack.c.b16 %v2871, %v2869
        %v2902 = vpack.c.b16 %v2872, %v2870
        %v2903 = vpack.c.b16 %v2875, %v2873
        %v2904 = vpack.c.b16 %v2876, %v2874
        %v2905 = vpack.c.b16 %v2879, %v2877
        %v2906 = vpack.c.b16 %v2880, %v2878
        %v2907 = vpack.c.b16 %v2883, %v2881
        %v2908 = vpack.c.b16 %v2884, %v2882
        %v2909 = vpack.c.b16 %v2887, %v2885
        %v2910 = vpack.c.b16 %v2888, %v2886
        %v2911 = vpack.c.b16 %v2891, %v2889
        %v2912 = vpack.c.b16 %v2892, %v2890
        %v2913 = vpack.c.b16 %v2895, %v2893
        %v2914 = vpack.c.b16 %v2896, %v2894
        %v2915 = vpack.c.b16 %v2899, %v2897
        %v2916 = vpack.c.b16 %v2900, %v2898
        %2933 = vmatpush.bf16.msra.mxu0 %v2915
        %2934 = vmatpush.bf16.msra.mxu0 %v2913
        %2935 = vmatpush.bf16.msra.mxu0 %v2911
        %2936 = vmatpush.bf16.msra.mxu0 %v2909
        %2937 = vmatpush.bf16.msra.mxu0 %v2907
        %2938 = vmatpush.bf16.msra.mxu0 %v2905
        %2939 = vmatpush.bf16.msra.mxu0 %v2903
        %2940 = vmatpush.bf16.msra.mxu0 %v2901
        %2941 = vmatmul.bf16.gmra.mxu0 %v2841
        %v2942 = vpop.f32.mrf.mxu0
        %v2943 = vadd.f32 0.0, %v2942
        %v2944 = vpop.f32.mrf.mxu0
        %v2945 = vadd.f32 0.0, %v2944
        %2946 = vmatmul.bf16.gmra.mxu0 %v2842
        %v2947 = vpop.f32.mrf.mxu0
        %v2948 = vadd.f32 0.0, %v2947
        %v2949 = vpop.f32.mrf.mxu0
        %v2950 = vadd.f32 0.0, %v2949
        %2951 = vmatmul.bf16.gmra.mxu0 %v2843
        %v2952 = vpop.f32.mrf.mxu0
        %v2953 = vadd.f32 0.0, %v2952
        %v2954 = vpop.f32.mrf.mxu0
        %v2955 = vadd.f32 0.0, %v2954
        %2956 = vmatmul.bf16.gmra.mxu0 %v2844
        %v2957 = vpop.f32.mrf.mxu0
        %v2958 = vadd.f32 0.0, %v2957
        %v2959 = vpop.f32.mrf.mxu0
        %v2960 = vadd.f32 0.0, %v2959
        %2961 = vmatmul.bf16.gmra.mxu0 %v2845
        %v2962 = vpop.f32.mrf.mxu0
        %v2963 = vadd.f32 0.0, %v2962
        %v2964 = vpop.f32.mrf.mxu0
        %v2965 = vadd.f32 0.0, %v2964
        %2966 = vmatmul.bf16.gmra.mxu0 %v2846
        %v2967 = vpop.f32.mrf.mxu0
        %v2968 = vadd.f32 0.0, %v2967
        %v2969 = vpop.f32.mrf.mxu0
        %v2970 = vadd.f32 0.0, %v2969
        %2971 = vdwg.mxu0
        %2972 = vmatpush.bf16.msra.mxu0 %v2916
        %2973 = vmatpush.bf16.msra.mxu0 %v2914
        %2974 = vmatpush.bf16.msra.mxu0 %v2912
        %2975 = vmatpush.bf16.msra.mxu0 %v2910
        %2976 = vmatpush.bf16.msra.mxu0 %v2908
        %2977 = vmatpush.bf16.msra.mxu0 %v2906
        %2978 = vmatpush.bf16.msra.mxu0 %v2904
        %2979 = vmatpush.bf16.msra.mxu0 %v2902
        %2980 = vmatmul.bf16.gmra.mxu0 %v2841
        %v2981 = vpop.f32.mrf.mxu0
        %v2982 = vadd.f32 0.0, %v2981
        %v2983 = vpop.f32.mrf.mxu0
        %v2984 = vadd.f32 0.0, %v2983
        %2985 = vmatmul.bf16.gmra.mxu0 %v2842
        %v2986 = vpop.f32.mrf.mxu0
        %v2987 = vadd.f32 0.0, %v2986
        %v2988 = vpop.f32.mrf.mxu0
        %v2989 = vadd.f32 0.0, %v2988
        %2990 = vmatmul.bf16.gmra.mxu0 %v2843
        %v2991 = vpop.f32.mrf.mxu0
        %v2992 = vadd.f32 0.0, %v2991
        %v2993 = vpop.f32.mrf.mxu0
        %v2994 = vadd.f32 0.0, %v2993
        %2995 = vmatmul.bf16.gmra.mxu0 %v2844
        %v2996 = vpop.f32.mrf.mxu0
        %v2997 = vadd.f32 0.0, %v2996
        %v2998 = vpop.f32.mrf.mxu0
        %v2999 = vadd.f32 0.0, %v2998
        %3000 = vmatmul.bf16.gmra.mxu0 %v2845
        %v3001 = vpop.f32.mrf.mxu0
        %v3002 = vadd.f32 0.0, %v3001
        %v3003 = vpop.f32.mrf.mxu0
        %v3004 = vadd.f32 0.0, %v3003
        %3005 = vmatmul.bf16.gmra.mxu0 %v2846
        %v3006 = vpop.f32.mrf.mxu0
        %v3007 = vadd.f32 0.0, %v3006
        %v3008 = vpop.f32.mrf.mxu0
        %v3009 = vadd.f32 0.0, %v3008
        %3010 = vdwg.mxu0
        %v3011 = vadd.f32 %v2722, %v2943
        %v3012 = vadd.f32 %v2723, %v2982
        %v3013 = vadd.f32 %v2724, %v2945
        %v3014 = vadd.f32 %v2725, %v2984
        %v3015 = vadd.f32 %v2726, %v2948
        %v3016 = vadd.f32 %v2727, %v2987
        %v3017 = vadd.f32 %v2728, %v2950
        %v3018 = vadd.f32 %v2729, %v2989
        %v3019 = vadd.f32 %v2730, %v2953
        %v3020 = vadd.f32 %v2731, %v2992
        %v3021 = vadd.f32 %v2732, %v2955
        %v3022 = vadd.f32 %v2733, %v2994
        %v3023 = vadd.f32 %v2734, %v2958
        %v3024 = vadd.f32 %v2735, %v2997
        %v3025 = vadd.f32 %v2736, %v2960
        %v3026 = vadd.f32 %v2737, %v2999
        %v3027 = vadd.f32 %v2738, %v2963
        %v3028 = vadd.f32 %v2739, %v3002
        %v3029 = vadd.f32 %v2740, %v2965
        %v3030 = vadd.f32 %v2741, %v3004
        %v3031 = vadd.f32 %v2742, %v2968
        %v3032 = vadd.f32 %v2743, %v3007
        %v3033 = vadd.f32 %v2744, %v2970
        %v3034 = vadd.f32 %v2745, %v3009
        %v3036 = vperm.slane %v294, 0
        %v3037 = vperm.slane %v294, 1
        %v3040 = vmul.f32 %v3011, %v3036
        %v3041 = vmul.f32 %v3012, %v3037
        %v3042 = vmul.f32 %v3013, %v3036
        %v3043 = vmul.f32 %v3014, %v3037
        %v3044 = vmul.f32 %v3015, %v3036
        %v3045 = vmul.f32 %v3016, %v3037
        %v3046 = vmul.f32 %v3017, %v3036
        %v3047 = vmul.f32 %v3018, %v3037
        %v3048 = vmul.f32 %v3019, %v3036
        %v3049 = vmul.f32 %v3020, %v3037
        %v3050 = vmul.f32 %v3021, %v3036
        %v3051 = vmul.f32 %v3022, %v3037
        %v3052 = vmul.f32 %v3023, %v3036
        %v3053 = vmul.f32 %v3024, %v3037
        %v3054 = vmul.f32 %v3025, %v3036
        %v3055 = vmul.f32 %v3026, %v3037
        %v3056 = vmul.f32 %v3027, %v3036
        %v3057 = vmul.f32 %v3028, %v3037
        %v3058 = vmul.f32 %v3029, %v3036
        %v3059 = vmul.f32 %v3030, %v3037
        %v3060 = vmul.f32 %v3031, %v3036
        %v3061 = vmul.f32 %v3032, %v3037
        %v3062 = vmul.f32 %v3033, %v3036
        %v3063 = vmul.f32 %v3034, %v3037
        %v3065 = vperm.slane %v295, 0
        %v3066 = vperm.slane %v295, 1
        %v3069 = vadd.f32 %v3040, %v3065
        %v3070 = vadd.f32 %v3041, %v3066
        %v3071 = vadd.f32 %v3042, %v3065
        %v3072 = vadd.f32 %v3043, %v3066
        %v3073 = vadd.f32 %v3044, %v3065
        %v3074 = vadd.f32 %v3045, %v3066
        %v3075 = vadd.f32 %v3046, %v3065
        %v3076 = vadd.f32 %v3047, %v3066
        %v3077 = vadd.f32 %v3048, %v3065
        %v3078 = vadd.f32 %v3049, %v3066
        %v3079 = vadd.f32 %v3050, %v3065
        %v3080 = vadd.f32 %v3051, %v3066
        %v3081 = vadd.f32 %v3052, %v3065
        %v3082 = vadd.f32 %v3053, %v3066
        %v3083 = vadd.f32 %v3054, %v3065
        %v3084 = vadd.f32 %v3055, %v3066
        %v3085 = vadd.f32 %v3056, %v3065
        %v3086 = vadd.f32 %v3057, %v3066
        %v3087 = vadd.f32 %v3058, %v3065
        %v3088 = vadd.f32 %v3059, %v3066
        %v3089 = vadd.f32 %v3060, %v3065
        %v3090 = vadd.f32 %v3061, %v3066
        %v3091 = vadd.f32 %v3062, %v3065
        %v3092 = vadd.f32 %v3063, %v3066
        %v3093 = vmax.f32 %v3069, 0.0
        %v3094 = vmax.f32 %v3070, 0.0
        %v3095 = vmax.f32 %v3071, 0.0
        %v3096 = vmax.f32 %v3072, 0.0
        %v3097 = vmax.f32 %v3073, 0.0
        %v3098 = vmax.f32 %v3074, 0.0
        %v3099 = vmax.f32 %v3075, 0.0
        %v3100 = vmax.f32 %v3076, 0.0
        %v3101 = vmax.f32 %v3077, 0.0
        %v3102 = vmax.f32 %v3078, 0.0
        %v3103 = vmax.f32 %v3079, 0.0
        %v3104 = vmax.f32 %v3080, 0.0
        %v3105 = vmax.f32 %v3081, 0.0
        %v3106 = vmax.f32 %v3082, 0.0
        %v3107 = vmax.f32 %v3083, 0.0
        %v3108 = vmax.f32 %v3084, 0.0
        %v3109 = vmax.f32 %v3085, 0.0
        %v3110 = vmax.f32 %v3086, 0.0
        %v3111 = vmax.f32 %v3087, 0.0
        %v3112 = vmax.f32 %v3088, 0.0
        %v3113 = vmax.f32 %v3089, 0.0
        %v3114 = vmax.f32 %v3090, 0.0
        %v3115 = vmax.f32 %v3091, 0.0
        %v3116 = vmax.f32 %v3092, 0.0
        %v3117 = vpack.c.bf16 %v3094, %v3093
        %v3118 = vpack.c.bf16 %v3096, %v3095
        %v3119 = vpack.c.bf16 %v3098, %v3097
        %v3120 = vpack.c.bf16 %v3100, %v3099
        %v3121 = vpack.c.bf16 %v3102, %v3101
        %v3122 = vpack.c.bf16 %v3104, %v3103
        %v3123 = vpack.c.bf16 %v3106, %v3105
        %v3124 = vpack.c.bf16 %v3108, %v3107
        %v3125 = vpack.c.bf16 %v3110, %v3109
        %v3126 = vpack.c.bf16 %v3112, %v3111
        %v3127 = vpack.c.bf16 %v3114, %v3113
        %v3128 = vpack.c.bf16 %v3116, %v3115
        %3129 = vst [vmem:[#allocation2 + $0x8] sm:$0xff] %v3117
        %3130 = vst [vmem:[#allocation2 + $0x10] sm:$0xff] %v3118
        %3131 = vst [vmem:[#allocation2 + $0x28] sm:$0xff] %v3119
        %3132 = vst [vmem:[#allocation2 + $0x30] sm:$0xff] %v3120
        %3133 = vst [vmem:[#allocation2 + $0x48] sm:$0xff] %v3121
        %3134 = vst [vmem:[#allocation2 + $0x50] sm:$0xff] %v3122
        %3135 = vst [vmem:[#allocation2 + $0x68] sm:$0xff] %v3123
        %3136 = vst [vmem:[#allocation2 + $0x70] sm:$0xff] %v3124
        %3137 = vst [vmem:[#allocation2 + $0x88] sm:$0xff] %v3125
        %3138 = vst [vmem:[#allocation2 + $0x90] sm:$0xff] %v3126
        %3139 = vst [vmem:[#allocation2 + $0xa8] sm:$0xff] %v3127
        %3140 = vst [vmem:[#allocation2 + $0xb0] sm:$0xff] %v3128
        %s3141 = sadd.s32 %s293, 6
        %s3142 = smul.u32 %s3141, 3
        %s3143 = smul.addr %s3142, 4
        %s3144 = scalar_lea.vmem %s290, %s3143
        %v3145 = vld [vmem:[%s3144] sm:$0xf]
        %v3146 = vld [vmem:[%s3144 + $0x4] sm:$0xf]
        %v3147 = vld [vmem:[%s3144 + $0xc] sm:$0xf]
        %v3148 = vld [vmem:[%s3144 + $0x10] sm:$0xf]
        %v3149 = vld [vmem:[%s3144 + $0x18] sm:$0xf]
        %v3150 = vld [vmem:[%s3144 + $0x1c] sm:$0xf]
        %v3151 = vld [vmem:[%s3144 + $0x24] sm:$0xf]
        %v3152 = vld [vmem:[%s3144 + $0x28] sm:$0xf]
        %v3153 = vld [vmem:[%s1] sm:$0xff]
        %v3154 = vld [vmem:[%s1 + $0x8] sm:$0xff]
        %v3155 = vld [vmem:[%s1 + $0x10] sm:$0xff]
        %v3156 = vld [vmem:[%s1 + $0x18] sm:$0xff]
        %v3157 = vld [vmem:[%s1 + $0x20] sm:$0xff]
        %v3158 = vld [vmem:[%s1 + $0x28] sm:$0xff]
        %v3159 = vld [vmem:[%s1 + $0x30] sm:$0xff]
        %v3160 = vld [vmem:[%s1 + $0x38] sm:$0xff]
        %v3161 = vld [vmem:[%s1 + $0x40] sm:$0xff]
        %v3162 = vld [vmem:[%s1 + $0x48] sm:$0xff]
        %v3163 = vld [vmem:[%s1 + $0x50] sm:$0xff]
        %v3164 = vld [vmem:[%s1 + $0x58] sm:$0xff]
        %v3165 = vld [vmem:[%s1 + $0x60] sm:$0xff]
        %v3166 = vld [vmem:[%s1 + $0x68] sm:$0xff]
        %v3167 = vld [vmem:[%s1 + $0x70] sm:$0xff]
        %v3168 = vld [vmem:[%s1 + $0x78] sm:$0xff]
        %v3169 = vld [vmem:[%s3144 + $0x8] sm:$0x1]
        %v3170 = vld [vmem:[%s3144 + $0x14] sm:$0x1]
        %v3171 = vld [vmem:[%s3144 + $0x20] sm:$0x1]
        %v3172 = vld [vmem:[%s3144 + $0x2c] sm:$0x1]
        %v3174 = vshrl.u32 %v3145, 16
        %v3176 = vrot.slane %v3174, 4
        %v3177 = vshll.u32 %v3145, 16
        %v3179 = vrot.slane %v3177, 5
        %v3180 = vor.u32 %v3176, %v3179
        %v3181 = vrot.slane %v3180, 4
        %v3183 = vshll.u32 %v3146, 16
        %v3185 = vrot.slane %v3183, 5
        %v3186 = vsel %vm361, %v3181, %v3185
        %v3187 = vshrl.u32 %v3146, 16
        %v3189 = vrot.slane %v3187, 4
        %v3190 = vor.u32 %v3189, %v3185
        %v3191 = vrot.slane %v3190, 4
        %v3193 = vshll.u32 %v3169, 16
        %v3195 = vrot.slane %v3193, 5
        %v3196 = vsel %vm361, %v3191, %v3195
        %v3198 = vshrl.u32 %v3147, 16
        %v3200 = vrot.slane %v3198, 4
        %v3201 = vshll.u32 %v3147, 16
        %v3203 = vrot.slane %v3201, 5
        %v3204 = vor.u32 %v3200, %v3203
        %v3205 = vrot.slane %v3204, 4
        %v3207 = vshll.u32 %v3148, 16
        %v3209 = vrot.slane %v3207, 5
        %v3210 = vsel %vm361, %v3205, %v3209
        %v3211 = vshrl.u32 %v3148, 16
        %v3213 = vrot.slane %v3211, 4
        %v3214 = vor.u32 %v3213, %v3209
        %v3215 = vrot.slane %v3214, 4
        %v3217 = vshll.u32 %v3170, 16
        %v3219 = vrot.slane %v3217, 5
        %v3220 = vsel %vm361, %v3215, %v3219
        %v3222 = vshrl.u32 %v3149, 16
        %v3224 = vrot.slane %v3222, 4
        %v3225 = vshll.u32 %v3149, 16
        %v3227 = vrot.slane %v3225, 5
        %v3228 = vor.u32 %v3224, %v3227
        %v3229 = vrot.slane %v3228, 4
        %v3231 = vshll.u32 %v3150, 16
        %v3233 = vrot.slane %v3231, 5
        %v3234 = vsel %vm361, %v3229, %v3233
        %v3235 = vshrl.u32 %v3150, 16
        %v3237 = vrot.slane %v3235, 4
        %v3238 = vor.u32 %v3237, %v3233
        %v3239 = vrot.slane %v3238, 4
        %v3241 = vshll.u32 %v3171, 16
        %v3243 = vrot.slane %v3241, 5
        %v3244 = vsel %vm361, %v3239, %v3243
        %v3246 = vshrl.u32 %v3151, 16
        %v3248 = vrot.slane %v3246, 4
        %v3249 = vshll.u32 %v3151, 16
        %v3251 = vrot.slane %v3249, 5
        %v3252 = vor.u32 %v3248, %v3251
        %v3253 = vrot.slane %v3252, 4
        %v3255 = vshll.u32 %v3152, 16
        %v3257 = vrot.slane %v3255, 5
        %v3258 = vsel %vm361, %v3253, %v3257
        %v3259 = vshrl.u32 %v3152, 16
        %v3261 = vrot.slane %v3259, 4
        %v3262 = vor.u32 %v3261, %v3257
        %v3263 = vrot.slane %v3262, 4
        %v3265 = vshll.u32 %v3172, 16
        %v3267 = vrot.slane %v3265, 5
        %v3268 = vsel %vm361, %v3263, %v3267
        %v3269 = vld [vmem:[%s506] sm:$0xff]
        %v3270 = vld [vmem:[%s506 + $0x8] sm:$0xff]
        %v3271 = vld [vmem:[%s506 + $0x10] sm:$0xff]
        %v3272 = vld [vmem:[%s506 + $0x18] sm:$0xff]
        %v3273 = vld [vmem:[%s506 + $0x20] sm:$0xff]
        %v3274 = vld [vmem:[%s506 + $0x28] sm:$0xff]
        %v3275 = vld [vmem:[%s506 + $0x30] sm:$0xff]
        %v3276 = vld [vmem:[%s506 + $0x38] sm:$0xff]
        %v3277 = vld [vmem:[%s506 + $0x40] sm:$0xff]
        %v3278 = vld [vmem:[%s506 + $0x48] sm:$0xff]
        %v3279 = vld [vmem:[%s506 + $0x50] sm:$0xff]
        %v3280 = vld [vmem:[%s506 + $0x58] sm:$0xff]
        %v3281 = vld [vmem:[%s506 + $0x60] sm:$0xff]
        %v3282 = vld [vmem:[%s506 + $0x68] sm:$0xff]
        %v3283 = vld [vmem:[%s506 + $0x70] sm:$0xff]
        %v3284 = vld [vmem:[%s506 + $0x78] sm:$0xff]
        %v3285 = vunpack.c.l.b16 %v3186
        %v3286 = vunpack.c.l.b16 %v3196
        %v3287 = vunpack.c.l.b16 %v3210
        %v3288 = vunpack.c.l.b16 %v3220
        %v3289 = vunpack.c.l.b16 %v3234
        %v3290 = vunpack.c.l.b16 %v3244
        %v3291 = vunpack.c.l.b16 %v3258
        %v3292 = vunpack.c.l.b16 %v3268
        %v3293 = vpack.c.b16 %v3286, %v3285
        %v3294 = vpack.c.b16 %v3288, %v3287
        %v3295 = vpack.c.b16 %v3290, %v3289
        %v3296 = vpack.c.b16 %v3292, %v3291
        %v3317 = vunpack.c.l.b16 %v3269
        %v3318 = vunpack.c.h.b16 %v3269
        %v3319 = vunpack.c.l.b16 %v3270
        %v3320 = vunpack.c.h.b16 %v3270
        %v3321 = vunpack.c.l.b16 %v3271
        %v3322 = vunpack.c.h.b16 %v3271
        %v3323 = vunpack.c.l.b16 %v3272
        %v3324 = vunpack.c.h.b16 %v3272
        %v3325 = vunpack.c.l.b16 %v3273
        %v3326 = vunpack.c.h.b16 %v3273
        %v3327 = vunpack.c.l.b16 %v3274
        %v3328 = vunpack.c.h.b16 %v3274
        %v3329 = vunpack.c.l.b16 %v3275
        %v3330 = vunpack.c.h.b16 %v3275
        %v3331 = vunpack.c.l.b16 %v3276
        %v3332 = vunpack.c.h.b16 %v3276
        %v3333 = vunpack.c.l.b16 %v3277
        %v3334 = vunpack.c.h.b16 %v3277
        %v3335 = vunpack.c.l.b16 %v3278
        %v3336 = vunpack.c.h.b16 %v3278
        %v3337 = vunpack.c.l.b16 %v3279
        %v3338 = vunpack.c.h.b16 %v3279
        %v3339 = vunpack.c.l.b16 %v3280
        %v3340 = vunpack.c.h.b16 %v3280
        %v3341 = vunpack.c.l.b16 %v3281
        %v3342 = vunpack.c.h.b16 %v3281
        %v3343 = vunpack.c.l.b16 %v3282
        %v3344 = vunpack.c.h.b16 %v3282
        %v3345 = vunpack.c.l.b16 %v3283
        %v3346 = vunpack.c.h.b16 %v3283
        %v3347 = vunpack.c.l.b16 %v3284
        %v3348 = vunpack.c.h.b16 %v3284
        %v3349 = vpack.c.b16 %v3319, %v3317
        %v3350 = vpack.c.b16 %v3320, %v3318
        %v3351 = vpack.c.b16 %v3323, %v3321
        %v3352 = vpack.c.b16 %v3324, %v3322
        %v3353 = vpack.c.b16 %v3327, %v3325
        %v3354 = vpack.c.b16 %v3328, %v3326
        %v3355 = vpack.c.b16 %v3331, %v3329
        %v3356 = vpack.c.b16 %v3332, %v3330
        %v3357 = vpack.c.b16 %v3335, %v3333
        %v3358 = vpack.c.b16 %v3336, %v3334
        %v3359 = vpack.c.b16 %v3339, %v3337
        %v3360 = vpack.c.b16 %v3340, %v3338
        %v3361 = vpack.c.b16 %v3343, %v3341
        %v3362 = vpack.c.b16 %v3344, %v3342
        %v3363 = vpack.c.b16 %v3347, %v3345
        %v3364 = vpack.c.b16 %v3348, %v3346
        %3381 = vmatpush.bf16.msra.mxu0 %v3363
        %3382 = vmatpush.bf16.msra.mxu0 %v3361
        %3383 = vmatpush.bf16.msra.mxu0 %v3359
        %3384 = vmatpush.bf16.msra.mxu0 %v3357
        %3385 = vmatpush.bf16.msra.mxu0 %v3355
        %3386 = vmatpush.bf16.msra.mxu0 %v3353
        %3387 = vmatpush.bf16.msra.mxu0 %v3351
        %3388 = vmatpush.bf16.msra.mxu0 %v3349
        %3389 = vmatmul.bf16.gmra.mxu0 %v3293
        %v3390 = vpop.f32.mrf.mxu0
        %v3391 = vadd.f32 0.0, %v3390
        %v3392 = vpop.f32.mrf.mxu0
        %v3393 = vadd.f32 0.0, %v3392
        %3394 = vmatmul.bf16.gmra.mxu0 %v3294
        %v3395 = vpop.f32.mrf.mxu0
        %v3396 = vadd.f32 0.0, %v3395
        %v3397 = vpop.f32.mrf.mxu0
        %v3398 = vadd.f32 0.0, %v3397
        %3399 = vmatmul.bf16.gmra.mxu0 %v3295
        %v3400 = vpop.f32.mrf.mxu0
        %v3401 = vadd.f32 0.0, %v3400
        %v3402 = vpop.f32.mrf.mxu0
        %v3403 = vadd.f32 0.0, %v3402
        %3404 = vmatmul.bf16.gmra.mxu0 %v3296
        %v3405 = vpop.f32.mrf.mxu0
        %v3406 = vadd.f32 0.0, %v3405
        %v3407 = vpop.f32.mrf.mxu0
        %v3408 = vadd.f32 0.0, %v3407
        %3409 = vdwg.mxu0
        %3410 = vmatpush.bf16.msra.mxu0 %v3364
        %3411 = vmatpush.bf16.msra.mxu0 %v3362
        %3412 = vmatpush.bf16.msra.mxu0 %v3360
        %3413 = vmatpush.bf16.msra.mxu0 %v3358
        %3414 = vmatpush.bf16.msra.mxu0 %v3356
        %3415 = vmatpush.bf16.msra.mxu0 %v3354
        %3416 = vmatpush.bf16.msra.mxu0 %v3352
        %3417 = vmatpush.bf16.msra.mxu0 %v3350
        %3418 = vmatmul.bf16.gmra.mxu0 %v3293
        %v3419 = vpop.f32.mrf.mxu0
        %v3420 = vadd.f32 0.0, %v3419
        %v3421 = vpop.f32.mrf.mxu0
        %v3422 = vadd.f32 0.0, %v3421
        %3423 = vmatmul.bf16.gmra.mxu0 %v3294
        %v3424 = vpop.f32.mrf.mxu0
        %v3425 = vadd.f32 0.0, %v3424
        %v3426 = vpop.f32.mrf.mxu0
        %v3427 = vadd.f32 0.0, %v3426
        %3428 = vmatmul.bf16.gmra.mxu0 %v3295
        %v3429 = vpop.f32.mrf.mxu0
        %v3430 = vadd.f32 0.0, %v3429
        %v3431 = vpop.f32.mrf.mxu0
        %v3432 = vadd.f32 0.0, %v3431
        %3433 = vmatmul.bf16.gmra.mxu0 %v3296
        %v3434 = vpop.f32.mrf.mxu0
        %v3435 = vadd.f32 0.0, %v3434
        %v3436 = vpop.f32.mrf.mxu0
        %v3437 = vadd.f32 0.0, %v3436
        %3438 = vdwg.mxu0
        %v3447 = vunpack.c.l.b16 %v3145
        %v3448 = vunpack.c.l.b16 %v3146
        %v3449 = vunpack.c.l.b16 %v3147
        %v3450 = vunpack.c.l.b16 %v3148
        %v3451 = vunpack.c.l.b16 %v3149
        %v3452 = vunpack.c.l.b16 %v3150
        %v3453 = vunpack.c.l.b16 %v3151
        %v3454 = vunpack.c.l.b16 %v3152
        %v3455 = vpack.c.b16 %v3448, %v3447
        %v3456 = vpack.c.b16 %v3450, %v3449
        %v3457 = vpack.c.b16 %v3452, %v3451
        %v3458 = vpack.c.b16 %v3454, %v3453
        %v3479 = vunpack.c.l.b16 %v3153
        %v3480 = vunpack.c.h.b16 %v3153
        %v3481 = vunpack.c.l.b16 %v3154
        %v3482 = vunpack.c.h.b16 %v3154
        %v3483 = vunpack.c.l.b16 %v3155
        %v3484 = vunpack.c.h.b16 %v3155
        %v3485 = vunpack.c.l.b16 %v3156
        %v3486 = vunpack.c.h.b16 %v3156
        %v3487 = vunpack.c.l.b16 %v3157
        %v3488 = vunpack.c.h.b16 %v3157
        %v3489 = vunpack.c.l.b16 %v3158
        %v3490 = vunpack.c.h.b16 %v3158
        %v3491 = vunpack.c.l.b16 %v3159
        %v3492 = vunpack.c.h.b16 %v3159
        %v3493 = vunpack.c.l.b16 %v3160
        %v3494 = vunpack.c.h.b16 %v3160
        %v3495 = vunpack.c.l.b16 %v3161
        %v3496 = vunpack.c.h.b16 %v3161
        %v3497 = vunpack.c.l.b16 %v3162
        %v3498 = vunpack.c.h.b16 %v3162
        %v3499 = vunpack.c.l.b16 %v3163
        %v3500 = vunpack.c.h.b16 %v3163
        %v3501 = vunpack.c.l.b16 %v3164
        %v3502 = vunpack.c.h.b16 %v3164
        %v3503 = vunpack.c.l.b16 %v3165
        %v3504 = vunpack.c.h.b16 %v3165
        %v3505 = vunpack.c.l.b16 %v3166
        %v3506 = vunpack.c.h.b16 %v3166
        %v3507 = vunpack.c.l.b16 %v3167
        %v3508 = vunpack.c.h.b16 %v3167
        %v3509 = vunpack.c.l.b16 %v3168
        %v3510 = vunpack.c.h.b16 %v3168
        %v3511 = vpack.c.b16 %v3481, %v3479
        %v3512 = vpack.c.b16 %v3482, %v3480
        %v3513 = vpack.c.b16 %v3485, %v3483
        %v3514 = vpack.c.b16 %v3486, %v3484
        %v3515 = vpack.c.b16 %v3489, %v3487
        %v3516 = vpack.c.b16 %v3490, %v3488
        %v3517 = vpack.c.b16 %v3493, %v3491
        %v3518 = vpack.c.b16 %v3494, %v3492
        %v3519 = vpack.c.b16 %v3497, %v3495
        %v3520 = vpack.c.b16 %v3498, %v3496
        %v3521 = vpack.c.b16 %v3501, %v3499
        %v3522 = vpack.c.b16 %v3502, %v3500
        %v3523 = vpack.c.b16 %v3505, %v3503
        %v3524 = vpack.c.b16 %v3506, %v3504
        %v3525 = vpack.c.b16 %v3509, %v3507
        %v3526 = vpack.c.b16 %v3510, %v3508
        %3543 = vmatpush.bf16.msra.mxu0 %v3525
        %3544 = vmatpush.bf16.msra.mxu0 %v3523
        %3545 = vmatpush.bf16.msra.mxu0 %v3521
        %3546 = vmatpush.bf16.msra.mxu0 %v3519
        %3547 = vmatpush.bf16.msra.mxu0 %v3517
        %3548 = vmatpush.bf16.msra.mxu0 %v3515
        %3549 = vmatpush.bf16.msra.mxu0 %v3513
        %3550 = vmatpush.bf16.msra.mxu0 %v3511
        %3551 = vmatmul.bf16.gmra.mxu0 %v3455
        %v3552 = vpop.f32.mrf.mxu0
        %v3553 = vadd.f32 %v3391, %v3552
        %v3554 = vpop.f32.mrf.mxu0
        %v3555 = vadd.f32 %v3393, %v3554
        %3556 = vmatmul.bf16.gmra.mxu0 %v3456
        %v3557 = vpop.f32.mrf.mxu0
        %v3558 = vadd.f32 %v3396, %v3557
        %v3559 = vpop.f32.mrf.mxu0
        %v3560 = vadd.f32 %v3398, %v3559
        %3561 = vmatmul.bf16.gmra.mxu0 %v3457
        %v3562 = vpop.f32.mrf.mxu0
        %v3563 = vadd.f32 %v3401, %v3562
        %v3564 = vpop.f32.mrf.mxu0
        %v3565 = vadd.f32 %v3403, %v3564
        %3566 = vmatmul.bf16.gmra.mxu0 %v3458
        %v3567 = vpop.f32.mrf.mxu0
        %v3568 = vadd.f32 %v3406, %v3567
        %v3569 = vpop.f32.mrf.mxu0
        %v3570 = vadd.f32 %v3408, %v3569
        %3571 = vdwg.mxu0
        %3572 = vmatpush.bf16.msra.mxu0 %v3526
        %3573 = vmatpush.bf16.msra.mxu0 %v3524
        %3574 = vmatpush.bf16.msra.mxu0 %v3522
        %3575 = vmatpush.bf16.msra.mxu0 %v3520
        %3576 = vmatpush.bf16.msra.mxu0 %v3518
        %3577 = vmatpush.bf16.msra.mxu0 %v3516
        %3578 = vmatpush.bf16.msra.mxu0 %v3514
        %3579 = vmatpush.bf16.msra.mxu0 %v3512
        %3580 = vmatmul.bf16.gmra.mxu0 %v3455
        %v3581 = vpop.f32.mrf.mxu0
        %v3582 = vadd.f32 %v3420, %v3581
        %v3583 = vpop.f32.mrf.mxu0
        %v3584 = vadd.f32 %v3422, %v3583
        %3585 = vmatmul.bf16.gmra.mxu0 %v3456
        %v3586 = vpop.f32.mrf.mxu0
        %v3587 = vadd.f32 %v3425, %v3586
        %v3588 = vpop.f32.mrf.mxu0
        %v3589 = vadd.f32 %v3427, %v3588
        %3590 = vmatmul.bf16.gmra.mxu0 %v3457
        %v3591 = vpop.f32.mrf.mxu0
        %v3592 = vadd.f32 %v3430, %v3591
        %v3593 = vpop.f32.mrf.mxu0
        %v3594 = vadd.f32 %v3432, %v3593
        %3595 = vmatmul.bf16.gmra.mxu0 %v3458
        %v3596 = vpop.f32.mrf.mxu0
        %v3597 = vadd.f32 %v3435, %v3596
        %v3598 = vpop.f32.mrf.mxu0
        %v3599 = vadd.f32 %v3437, %v3598
        %3600 = vdwg.mxu0
        %v3601 = vld [vmem:[%s3144] sm:$0xe]
        %v3602 = vld [vmem:[%s3144 + $0xc] sm:$0xe]
        %v3603 = vld [vmem:[%s3144 + $0x18] sm:$0xe]
        %v3604 = vld [vmem:[%s3144 + $0x24] sm:$0xe]
        %v3613 = vrot.slane %v3601, 5
        %v3614 = vrot.slane %v3613, 4
        %v3615 = vrot.slane %v3146, 5
        %v3616 = vsel %vm919, %v3614, %v3615
        %v3617 = vrot.slane %v3615, 4
        %v3618 = vrot.slane %v3169, 5
        %v3619 = vsel %vm919, %v3617, %v3618
        %v3620 = vrot.slane %v3602, 5
        %v3621 = vrot.slane %v3620, 4
        %v3622 = vrot.slane %v3148, 5
        %v3623 = vsel %vm919, %v3621, %v3622
        %v3624 = vrot.slane %v3622, 4
        %v3625 = vrot.slane %v3170, 5
        %v3626 = vsel %vm919, %v3624, %v3625
        %v3627 = vrot.slane %v3603, 5
        %v3628 = vrot.slane %v3627, 4
        %v3629 = vrot.slane %v3150, 5
        %v3630 = vsel %vm919, %v3628, %v3629
        %v3631 = vrot.slane %v3629, 4
        %v3632 = vrot.slane %v3171, 5
        %v3633 = vsel %vm919, %v3631, %v3632
        %v3634 = vrot.slane %v3604, 5
        %v3635 = vrot.slane %v3634, 4
        %v3636 = vrot.slane %v3152, 5
        %v3637 = vsel %vm919, %v3635, %v3636
        %v3638 = vrot.slane %v3636, 4
        %v3639 = vrot.slane %v3172, 5
        %v3640 = vsel %vm919, %v3638, %v3639
        %v3641 = vld [vmem:[%s962] sm:$0xff]
        %v3642 = vld [vmem:[%s962 + $0x8] sm:$0xff]
        %v3643 = vld [vmem:[%s962 + $0x10] sm:$0xff]
        %v3644 = vld [vmem:[%s962 + $0x18] sm:$0xff]
        %v3645 = vld [vmem:[%s962 + $0x20] sm:$0xff]
        %v3646 = vld [vmem:[%s962 + $0x28] sm:$0xff]
        %v3647 = vld [vmem:[%s962 + $0x30] sm:$0xff]
        %v3648 = vld [vmem:[%s962 + $0x38] sm:$0xff]
        %v3649 = vld [vmem:[%s962 + $0x40] sm:$0xff]
        %v3650 = vld [vmem:[%s962 + $0x48] sm:$0xff]
        %v3651 = vld [vmem:[%s962 + $0x50] sm:$0xff]
        %v3652 = vld [vmem:[%s962 + $0x58] sm:$0xff]
        %v3653 = vld [vmem:[%s962 + $0x60] sm:$0xff]
        %v3654 = vld [vmem:[%s962 + $0x68] sm:$0xff]
        %v3655 = vld [vmem:[%s962 + $0x70] sm:$0xff]
        %v3656 = vld [vmem:[%s962 + $0x78] sm:$0xff]
        %v3657 = vunpack.c.l.b16 %v3616
        %v3658 = vunpack.c.l.b16 %v3619
        %v3659 = vunpack.c.l.b16 %v3623
        %v3660 = vunpack.c.l.b16 %v3626
        %v3661 = vunpack.c.l.b16 %v3630
        %v3662 = vunpack.c.l.b16 %v3633
        %v3663 = vunpack.c.l.b16 %v3637
        %v3664 = vunpack.c.l.b16 %v3640
        %v3665 = vpack.c.b16 %v3658, %v3657
        %v3666 = vpack.c.b16 %v3660, %v3659
        %v3667 = vpack.c.b16 %v3662, %v3661
        %v3668 = vpack.c.b16 %v3664, %v3663
        %v3689 = vunpack.c.l.b16 %v3641
        %v3690 = vunpack.c.h.b16 %v3641
        %v3691 = vunpack.c.l.b16 %v3642
        %v3692 = vunpack.c.h.b16 %v3642
        %v3693 = vunpack.c.l.b16 %v3643
        %v3694 = vunpack.c.h.b16 %v3643
        %v3695 = vunpack.c.l.b16 %v3644
        %v3696 = vunpack.c.h.b16 %v3644
        %v3697 = vunpack.c.l.b16 %v3645
        %v3698 = vunpack.c.h.b16 %v3645
        %v3699 = vunpack.c.l.b16 %v3646
        %v3700 = vunpack.c.h.b16 %v3646
        %v3701 = vunpack.c.l.b16 %v3647
        %v3702 = vunpack.c.h.b16 %v3647
        %v3703 = vunpack.c.l.b16 %v3648
        %v3704 = vunpack.c.h.b16 %v3648
        %v3705 = vunpack.c.l.b16 %v3649
        %v3706 = vunpack.c.h.b16 %v3649
        %v3707 = vunpack.c.l.b16 %v3650
        %v3708 = vunpack.c.h.b16 %v3650
        %v3709 = vunpack.c.l.b16 %v3651
        %v3710 = vunpack.c.h.b16 %v3651
        %v3711 = vunpack.c.l.b16 %v3652
        %v3712 = vunpack.c.h.b16 %v3652
        %v3713 = vunpack.c.l.b16 %v3653
        %v3714 = vunpack.c.h.b16 %v3653
        %v3715 = vunpack.c.l.b16 %v3654
        %v3716 = vunpack.c.h.b16 %v3654
        %v3717 = vunpack.c.l.b16 %v3655
        %v3718 = vunpack.c.h.b16 %v3655
        %v3719 = vunpack.c.l.b16 %v3656
        %v3720 = vunpack.c.h.b16 %v3656
        %v3721 = vpack.c.b16 %v3691, %v3689
        %v3722 = vpack.c.b16 %v3692, %v3690
        %v3723 = vpack.c.b16 %v3695, %v3693
        %v3724 = vpack.c.b16 %v3696, %v3694
        %v3725 = vpack.c.b16 %v3699, %v3697
        %v3726 = vpack.c.b16 %v3700, %v3698
        %v3727 = vpack.c.b16 %v3703, %v3701
        %v3728 = vpack.c.b16 %v3704, %v3702
        %v3729 = vpack.c.b16 %v3707, %v3705
        %v3730 = vpack.c.b16 %v3708, %v3706
        %v3731 = vpack.c.b16 %v3711, %v3709
        %v3732 = vpack.c.b16 %v3712, %v3710
        %v3733 = vpack.c.b16 %v3715, %v3713
        %v3734 = vpack.c.b16 %v3716, %v3714
        %v3735 = vpack.c.b16 %v3719, %v3717
        %v3736 = vpack.c.b16 %v3720, %v3718
        %3753 = vmatpush.bf16.msra.mxu0 %v3735
        %3754 = vmatpush.bf16.msra.mxu0 %v3733
        %3755 = vmatpush.bf16.msra.mxu0 %v3731
        %3756 = vmatpush.bf16.msra.mxu0 %v3729
        %3757 = vmatpush.bf16.msra.mxu0 %v3727
        %3758 = vmatpush.bf16.msra.mxu0 %v3725
        %3759 = vmatpush.bf16.msra.mxu0 %v3723
        %3760 = vmatpush.bf16.msra.mxu0 %v3721
        %3761 = vmatmul.bf16.gmra.mxu0 %v3665
        %v3762 = vpop.f32.mrf.mxu0
        %v3763 = vadd.f32 0.0, %v3762
        %v3764 = vpop.f32.mrf.mxu0
        %v3765 = vadd.f32 0.0, %v3764
        %3766 = vmatmul.bf16.gmra.mxu0 %v3666
        %v3767 = vpop.f32.mrf.mxu0
        %v3768 = vadd.f32 0.0, %v3767
        %v3769 = vpop.f32.mrf.mxu0
        %v3770 = vadd.f32 0.0, %v3769
        %3771 = vmatmul.bf16.gmra.mxu0 %v3667
        %v3772 = vpop.f32.mrf.mxu0
        %v3773 = vadd.f32 0.0, %v3772
        %v3774 = vpop.f32.mrf.mxu0
        %v3775 = vadd.f32 0.0, %v3774
        %3776 = vmatmul.bf16.gmra.mxu0 %v3668
        %v3777 = vpop.f32.mrf.mxu0
        %v3778 = vadd.f32 0.0, %v3777
        %v3779 = vpop.f32.mrf.mxu0
        %v3780 = vadd.f32 0.0, %v3779
        %3781 = vdwg.mxu0
        %3782 = vmatpush.bf16.msra.mxu0 %v3736
        %3783 = vmatpush.bf16.msra.mxu0 %v3734
        %3784 = vmatpush.bf16.msra.mxu0 %v3732
        %3785 = vmatpush.bf16.msra.mxu0 %v3730
        %3786 = vmatpush.bf16.msra.mxu0 %v3728
        %3787 = vmatpush.bf16.msra.mxu0 %v3726
        %3788 = vmatpush.bf16.msra.mxu0 %v3724
        %3789 = vmatpush.bf16.msra.mxu0 %v3722
        %3790 = vmatmul.bf16.gmra.mxu0 %v3665
        %v3791 = vpop.f32.mrf.mxu0
        %v3792 = vadd.f32 0.0, %v3791
        %v3793 = vpop.f32.mrf.mxu0
        %v3794 = vadd.f32 0.0, %v3793
        %3795 = vmatmul.bf16.gmra.mxu0 %v3666
        %v3796 = vpop.f32.mrf.mxu0
        %v3797 = vadd.f32 0.0, %v3796
        %v3798 = vpop.f32.mrf.mxu0
        %v3799 = vadd.f32 0.0, %v3798
        %3800 = vmatmul.bf16.gmra.mxu0 %v3667
        %v3801 = vpop.f32.mrf.mxu0
        %v3802 = vadd.f32 0.0, %v3801
        %v3803 = vpop.f32.mrf.mxu0
        %v3804 = vadd.f32 0.0, %v3803
        %3805 = vmatmul.bf16.gmra.mxu0 %v3668
        %v3806 = vpop.f32.mrf.mxu0
        %v3807 = vadd.f32 0.0, %v3806
        %v3808 = vpop.f32.mrf.mxu0
        %v3809 = vadd.f32 0.0, %v3808
        %3810 = vdwg.mxu0
        %v3811 = vadd.f32 %v3553, %v3763
        %v3812 = vadd.f32 %v3582, %v3792
        %v3813 = vadd.f32 %v3555, %v3765
        %v3814 = vadd.f32 %v3584, %v3794
        %v3815 = vadd.f32 %v3558, %v3768
        %v3816 = vadd.f32 %v3587, %v3797
        %v3817 = vadd.f32 %v3560, %v3770
        %v3818 = vadd.f32 %v3589, %v3799
        %v3819 = vadd.f32 %v3563, %v3773
        %v3820 = vadd.f32 %v3592, %v3802
        %v3821 = vadd.f32 %v3565, %v3775
        %v3822 = vadd.f32 %v3594, %v3804
        %v3823 = vadd.f32 %v3568, %v3778
        %v3824 = vadd.f32 %v3597, %v3807
        %v3825 = vadd.f32 %v3570, %v3780
        %v3826 = vadd.f32 %v3599, %v3809
        %s3827 = sadd.s32 %s293, 7
        %s3828 = smul.u32 %s3827, 3
        %s3829 = smul.addr %s3828, 4
        %s3830 = scalar_lea.vmem %s290, %s3829
        %v3831 = vld [vmem:[%s3830] sm:$0xf]
        %v3832 = vld [vmem:[%s3830 + $0x4] sm:$0xf]
        %v3833 = vld [vmem:[%s3830 + $0xc] sm:$0xf]
        %v3834 = vld [vmem:[%s3830 + $0x10] sm:$0xf]
        %v3835 = vld [vmem:[%s3830 + $0x18] sm:$0xf]
        %v3836 = vld [vmem:[%s3830 + $0x1c] sm:$0xf]
        %v3837 = vld [vmem:[%s3830 + $0x24] sm:$0xf]
        %v3838 = vld [vmem:[%s3830 + $0x28] sm:$0xf]
        %v3839 = vld [vmem:[%s1201] sm:$0xff]
        %v3840 = vld [vmem:[%s1201 + $0x8] sm:$0xff]
        %v3841 = vld [vmem:[%s1201 + $0x10] sm:$0xff]
        %v3842 = vld [vmem:[%s1201 + $0x18] sm:$0xff]
        %v3843 = vld [vmem:[%s1201 + $0x20] sm:$0xff]
        %v3844 = vld [vmem:[%s1201 + $0x28] sm:$0xff]
        %v3845 = vld [vmem:[%s1201 + $0x30] sm:$0xff]
        %v3846 = vld [vmem:[%s1201 + $0x38] sm:$0xff]
        %v3847 = vld [vmem:[%s1201 + $0x40] sm:$0xff]
        %v3848 = vld [vmem:[%s1201 + $0x48] sm:$0xff]
        %v3849 = vld [vmem:[%s1201 + $0x50] sm:$0xff]
        %v3850 = vld [vmem:[%s1201 + $0x58] sm:$0xff]
        %v3851 = vld [vmem:[%s1201 + $0x60] sm:$0xff]
        %v3852 = vld [vmem:[%s1201 + $0x68] sm:$0xff]
        %v3853 = vld [vmem:[%s1201 + $0x70] sm:$0xff]
        %v3854 = vld [vmem:[%s1201 + $0x78] sm:$0xff]
        %v3863 = vunpack.c.l.b16 %v3831
        %v3864 = vunpack.c.l.b16 %v3832
        %v3865 = vunpack.c.l.b16 %v3833
        %v3866 = vunpack.c.l.b16 %v3834
        %v3867 = vunpack.c.l.b16 %v3835
        %v3868 = vunpack.c.l.b16 %v3836
        %v3869 = vunpack.c.l.b16 %v3837
        %v3870 = vunpack.c.l.b16 %v3838
        %v3871 = vpack.c.b16 %v3864, %v3863
        %v3872 = vpack.c.b16 %v3866, %v3865
        %v3873 = vpack.c.b16 %v3868, %v3867
        %v3874 = vpack.c.b16 %v3870, %v3869
        %v3895 = vunpack.c.l.b16 %v3839
        %v3896 = vunpack.c.h.b16 %v3839
        %v3897 = vunpack.c.l.b16 %v3840
        %v3898 = vunpack.c.h.b16 %v3840
        %v3899 = vunpack.c.l.b16 %v3841
        %v3900 = vunpack.c.h.b16 %v3841
        %v3901 = vunpack.c.l.b16 %v3842
        %v3902 = vunpack.c.h.b16 %v3842
        %v3903 = vunpack.c.l.b16 %v3843
        %v3904 = vunpack.c.h.b16 %v3843
        %v3905 = vunpack.c.l.b16 %v3844
        %v3906 = vunpack.c.h.b16 %v3844
        %v3907 = vunpack.c.l.b16 %v3845
        %v3908 = vunpack.c.h.b16 %v3845
        %v3909 = vunpack.c.l.b16 %v3846
        %v3910 = vunpack.c.h.b16 %v3846
        %v3911 = vunpack.c.l.b16 %v3847
        %v3912 = vunpack.c.h.b16 %v3847
        %v3913 = vunpack.c.l.b16 %v3848
        %v3914 = vunpack.c.h.b16 %v3848
        %v3915 = vunpack.c.l.b16 %v3849
        %v3916 = vunpack.c.h.b16 %v3849
        %v3917 = vunpack.c.l.b16 %v3850
        %v3918 = vunpack.c.h.b16 %v3850
        %v3919 = vunpack.c.l.b16 %v3851
        %v3920 = vunpack.c.h.b16 %v3851
        %v3921 = vunpack.c.l.b16 %v3852
        %v3922 = vunpack.c.h.b16 %v3852
        %v3923 = vunpack.c.l.b16 %v3853
        %v3924 = vunpack.c.h.b16 %v3853
        %v3925 = vunpack.c.l.b16 %v3854
        %v3926 = vunpack.c.h.b16 %v3854
        %v3927 = vpack.c.b16 %v3897, %v3895
        %v3928 = vpack.c.b16 %v3898, %v3896
        %v3929 = vpack.c.b16 %v3901, %v3899
        %v3930 = vpack.c.b16 %v3902, %v3900
        %v3931 = vpack.c.b16 %v3905, %v3903
        %v3932 = vpack.c.b16 %v3906, %v3904
        %v3933 = vpack.c.b16 %v3909, %v3907
        %v3934 = vpack.c.b16 %v3910, %v3908
        %v3935 = vpack.c.b16 %v3913, %v3911
        %v3936 = vpack.c.b16 %v3914, %v3912
        %v3937 = vpack.c.b16 %v3917, %v3915
        %v3938 = vpack.c.b16 %v3918, %v3916
        %v3939 = vpack.c.b16 %v3921, %v3919
        %v3940 = vpack.c.b16 %v3922, %v3920
        %v3941 = vpack.c.b16 %v3925, %v3923
        %v3942 = vpack.c.b16 %v3926, %v3924
        %3959 = vmatpush.bf16.msra.mxu0 %v3941
        %3960 = vmatpush.bf16.msra.mxu0 %v3939
        %3961 = vmatpush.bf16.msra.mxu0 %v3937
        %3962 = vmatpush.bf16.msra.mxu0 %v3935
        %3963 = vmatpush.bf16.msra.mxu0 %v3933
        %3964 = vmatpush.bf16.msra.mxu0 %v3931
        %3965 = vmatpush.bf16.msra.mxu0 %v3929
        %3966 = vmatpush.bf16.msra.mxu0 %v3927
        %3967 = vmatmul.bf16.gmra.mxu0 %v3871
        %v3968 = vpop.f32.mrf.mxu0
        %v3969 = vadd.f32 0.0, %v3968
        %v3970 = vpop.f32.mrf.mxu0
        %v3971 = vadd.f32 0.0, %v3970
        %3972 = vmatmul.bf16.gmra.mxu0 %v3872
        %v3973 = vpop.f32.mrf.mxu0
        %v3974 = vadd.f32 0.0, %v3973
        %v3975 = vpop.f32.mrf.mxu0
        %v3976 = vadd.f32 0.0, %v3975
        %3977 = vmatmul.bf16.gmra.mxu0 %v3873
        %v3978 = vpop.f32.mrf.mxu0
        %v3979 = vadd.f32 0.0, %v3978
        %v3980 = vpop.f32.mrf.mxu0
        %v3981 = vadd.f32 0.0, %v3980
        %3982 = vmatmul.bf16.gmra.mxu0 %v3874
        %v3983 = vpop.f32.mrf.mxu0
        %v3984 = vadd.f32 0.0, %v3983
        %v3985 = vpop.f32.mrf.mxu0
        %v3986 = vadd.f32 0.0, %v3985
        %3987 = vdwg.mxu0
        %3988 = vmatpush.bf16.msra.mxu0 %v3942
        %3989 = vmatpush.bf16.msra.mxu0 %v3940
        %3990 = vmatpush.bf16.msra.mxu0 %v3938
        %3991 = vmatpush.bf16.msra.mxu0 %v3936
        %3992 = vmatpush.bf16.msra.mxu0 %v3934
        %3993 = vmatpush.bf16.msra.mxu0 %v3932
        %3994 = vmatpush.bf16.msra.mxu0 %v3930
        %3995 = vmatpush.bf16.msra.mxu0 %v3928
        %3996 = vmatmul.bf16.gmra.mxu0 %v3871
        %v3997 = vpop.f32.mrf.mxu0
        %v3998 = vadd.f32 0.0, %v3997
        %v3999 = vpop.f32.mrf.mxu0
        %v4000 = vadd.f32 0.0, %v3999
        %4001 = vmatmul.bf16.gmra.mxu0 %v3872
        %v4002 = vpop.f32.mrf.mxu0
        %v4003 = vadd.f32 0.0, %v4002
        %v4004 = vpop.f32.mrf.mxu0
        %v4005 = vadd.f32 0.0, %v4004
        %4006 = vmatmul.bf16.gmra.mxu0 %v3873
        %v4007 = vpop.f32.mrf.mxu0
        %v4008 = vadd.f32 0.0, %v4007
        %v4009 = vpop.f32.mrf.mxu0
        %v4010 = vadd.f32 0.0, %v4009
        %4011 = vmatmul.bf16.gmra.mxu0 %v3874
        %v4012 = vpop.f32.mrf.mxu0
        %v4013 = vadd.f32 0.0, %v4012
        %v4014 = vpop.f32.mrf.mxu0
        %v4015 = vadd.f32 0.0, %v4014
        %4016 = vdwg.mxu0
        %v4017 = vadd.f32 %v3811, %v3969
        %v4018 = vadd.f32 %v3812, %v3998
        %v4019 = vadd.f32 %v3813, %v3971
        %v4020 = vadd.f32 %v3814, %v4000
        %v4021 = vadd.f32 %v3815, %v3974
        %v4022 = vadd.f32 %v3816, %v4003
        %v4023 = vadd.f32 %v3817, %v3976
        %v4024 = vadd.f32 %v3818, %v4005
        %v4025 = vadd.f32 %v3819, %v3979
        %v4026 = vadd.f32 %v3820, %v4008
        %v4027 = vadd.f32 %v3821, %v3981
        %v4028 = vadd.f32 %v3822, %v4010
        %v4029 = vadd.f32 %v3823, %v3984
        %v4030 = vadd.f32 %v3824, %v4013
        %v4031 = vadd.f32 %v3825, %v3986
        %v4032 = vadd.f32 %v3826, %v4015
        %v4033 = vld [vmem:[%s3830] sm:$0xf]
        %v4034 = vld [vmem:[%s3830 + $0x4] sm:$0xf]
        %v4035 = vld [vmem:[%s3830 + $0x8] sm:$0x1]
        %v4036 = vld [vmem:[%s3830 + $0xc] sm:$0xf]
        %v4037 = vld [vmem:[%s3830 + $0x10] sm:$0xf]
        %v4038 = vld [vmem:[%s3830 + $0x14] sm:$0x1]
        %v4039 = vld [vmem:[%s3830 + $0x18] sm:$0xf]
        %v4040 = vld [vmem:[%s3830 + $0x1c] sm:$0xf]
        %v4041 = vld [vmem:[%s3830 + $0x20] sm:$0x1]
        %v4042 = vld [vmem:[%s3830 + $0x24] sm:$0xf]
        %v4043 = vld [vmem:[%s3830 + $0x28] sm:$0xf]
        %v4044 = vld [vmem:[%s3830 + $0x2c] sm:$0x1]
        %v4046 = vshrl.u32 %v4033, 16
        %v4048 = vrot.slane %v4046, 4
        %v4049 = vshll.u32 %v4033, 16
        %v4051 = vrot.slane %v4049, 5
        %v4052 = vor.u32 %v4048, %v4051
        %v4053 = vrot.slane %v4052, 4
        %v4055 = vshll.u32 %v4034, 16
        %v4057 = vrot.slane %v4055, 5
        %v4058 = vsel %vm361, %v4053, %v4057
        %v4059 = vshrl.u32 %v4034, 16
        %v4061 = vrot.slane %v4059, 4
        %v4062 = vor.u32 %v4061, %v4057
        %v4063 = vrot.slane %v4062, 4
        %v4065 = vshll.u32 %v4035, 16
        %v4067 = vrot.slane %v4065, 5
        %v4068 = vsel %vm361, %v4063, %v4067
        %v4070 = vshrl.u32 %v4036, 16
        %v4072 = vrot.slane %v4070, 4
        %v4073 = vshll.u32 %v4036, 16
        %v4075 = vrot.slane %v4073, 5
        %v4076 = vor.u32 %v4072, %v4075
        %v4077 = vrot.slane %v4076, 4
        %v4079 = vshll.u32 %v4037, 16
        %v4081 = vrot.slane %v4079, 5
        %v4082 = vsel %vm361, %v4077, %v4081
        %v4083 = vshrl.u32 %v4037, 16
        %v4085 = vrot.slane %v4083, 4
        %v4086 = vor.u32 %v4085, %v4081
        %v4087 = vrot.slane %v4086, 4
        %v4089 = vshll.u32 %v4038, 16
        %v4091 = vrot.slane %v4089, 5
        %v4092 = vsel %vm361, %v4087, %v4091
        %v4094 = vshrl.u32 %v4039, 16
        %v4096 = vrot.slane %v4094, 4
        %v4097 = vshll.u32 %v4039, 16
        %v4099 = vrot.slane %v4097, 5
        %v4100 = vor.u32 %v4096, %v4099
        %v4101 = vrot.slane %v4100, 4
        %v4103 = vshll.u32 %v4040, 16
        %v4105 = vrot.slane %v4103, 5
        %v4106 = vsel %vm361, %v4101, %v4105
        %v4107 = vshrl.u32 %v4040, 16
        %v4109 = vrot.slane %v4107, 4
        %v4110 = vor.u32 %v4109, %v4105
        %v4111 = vrot.slane %v4110, 4
        %v4113 = vshll.u32 %v4041, 16
        %v4115 = vrot.slane %v4113, 5
        %v4116 = vsel %vm361, %v4111, %v4115
        %v4118 = vshrl.u32 %v4042, 16
        %v4120 = vrot.slane %v4118, 4
        %v4121 = vshll.u32 %v4042, 16
        %v4123 = vrot.slane %v4121, 5
        %v4124 = vor.u32 %v4120, %v4123
        %v4125 = vrot.slane %v4124, 4
        %v4127 = vshll.u32 %v4043, 16
        %v4129 = vrot.slane %v4127, 5
        %v4130 = vsel %vm361, %v4125, %v4129
        %v4131 = vshrl.u32 %v4043, 16
        %v4133 = vrot.slane %v4131, 4
        %v4134 = vor.u32 %v4133, %v4129
        %v4135 = vrot.slane %v4134, 4
        %v4137 = vshll.u32 %v4044, 16
        %v4139 = vrot.slane %v4137, 5
        %v4140 = vsel %vm361, %v4135, %v4139
        %v4141 = vld [vmem:[%s1598] sm:$0xff]
        %v4142 = vld [vmem:[%s1598 + $0x8] sm:$0xff]
        %v4143 = vld [vmem:[%s1598 + $0x10] sm:$0xff]
        %v4144 = vld [vmem:[%s1598 + $0x18] sm:$0xff]
        %v4145 = vld [vmem:[%s1598 + $0x20] sm:$0xff]
        %v4146 = vld [vmem:[%s1598 + $0x28] sm:$0xff]
        %v4147 = vld [vmem:[%s1598 + $0x30] sm:$0xff]
        %v4148 = vld [vmem:[%s1598 + $0x38] sm:$0xff]
        %v4149 = vld [vmem:[%s1598 + $0x40] sm:$0xff]
        %v4150 = vld [vmem:[%s1598 + $0x48] sm:$0xff]
        %v4151 = vld [vmem:[%s1598 + $0x50] sm:$0xff]
        %v4152 = vld [vmem:[%s1598 + $0x58] sm:$0xff]
        %v4153 = vld [vmem:[%s1598 + $0x60] sm:$0xff]
        %v4154 = vld [vmem:[%s1598 + $0x68] sm:$0xff]
        %v4155 = vld [vmem:[%s1598 + $0x70] sm:$0xff]
        %v4156 = vld [vmem:[%s1598 + $0x78] sm:$0xff]
        %v4157 = vunpack.c.l.b16 %v4058
        %v4158 = vunpack.c.l.b16 %v4068
        %v4159 = vunpack.c.l.b16 %v4082
        %v4160 = vunpack.c.l.b16 %v4092
        %v4161 = vunpack.c.l.b16 %v4106
        %v4162 = vunpack.c.l.b16 %v4116
        %v4163 = vunpack.c.l.b16 %v4130
        %v4164 = vunpack.c.l.b16 %v4140
        %v4165 = vpack.c.b16 %v4158, %v4157
        %v4166 = vpack.c.b16 %v4160, %v4159
        %v4167 = vpack.c.b16 %v4162, %v4161
        %v4168 = vpack.c.b16 %v4164, %v4163
        %v4189 = vunpack.c.l.b16 %v4141
        %v4190 = vunpack.c.h.b16 %v4141
        %v4191 = vunpack.c.l.b16 %v4142
        %v4192 = vunpack.c.h.b16 %v4142
        %v4193 = vunpack.c.l.b16 %v4143
        %v4194 = vunpack.c.h.b16 %v4143
        %v4195 = vunpack.c.l.b16 %v4144
        %v4196 = vunpack.c.h.b16 %v4144
        %v4197 = vunpack.c.l.b16 %v4145
        %v4198 = vunpack.c.h.b16 %v4145
        %v4199 = vunpack.c.l.b16 %v4146
        %v4200 = vunpack.c.h.b16 %v4146
        %v4201 = vunpack.c.l.b16 %v4147
        %v4202 = vunpack.c.h.b16 %v4147
        %v4203 = vunpack.c.l.b16 %v4148
        %v4204 = vunpack.c.h.b16 %v4148
        %v4205 = vunpack.c.l.b16 %v4149
        %v4206 = vunpack.c.h.b16 %v4149
        %v4207 = vunpack.c.l.b16 %v4150
        %v4208 = vunpack.c.h.b16 %v4150
        %v4209 = vunpack.c.l.b16 %v4151
        %v4210 = vunpack.c.h.b16 %v4151
        %v4211 = vunpack.c.l.b16 %v4152
        %v4212 = vunpack.c.h.b16 %v4152
        %v4213 = vunpack.c.l.b16 %v4153
        %v4214 = vunpack.c.h.b16 %v4153
        %v4215 = vunpack.c.l.b16 %v4154
        %v4216 = vunpack.c.h.b16 %v4154
        %v4217 = vunpack.c.l.b16 %v4155
        %v4218 = vunpack.c.h.b16 %v4155
        %v4219 = vunpack.c.l.b16 %v4156
        %v4220 = vunpack.c.h.b16 %v4156
        %v4221 = vpack.c.b16 %v4191, %v4189
        %v4222 = vpack.c.b16 %v4192, %v4190
        %v4223 = vpack.c.b16 %v4195, %v4193
        %v4224 = vpack.c.b16 %v4196, %v4194
        %v4225 = vpack.c.b16 %v4199, %v4197
        %v4226 = vpack.c.b16 %v4200, %v4198
        %v4227 = vpack.c.b16 %v4203, %v4201
        %v4228 = vpack.c.b16 %v4204, %v4202
        %v4229 = vpack.c.b16 %v4207, %v4205
        %v4230 = vpack.c.b16 %v4208, %v4206
        %v4231 = vpack.c.b16 %v4211, %v4209
        %v4232 = vpack.c.b16 %v4212, %v4210
        %v4233 = vpack.c.b16 %v4215, %v4213
        %v4234 = vpack.c.b16 %v4216, %v4214
        %v4235 = vpack.c.b16 %v4219, %v4217
        %v4236 = vpack.c.b16 %v4220, %v4218
        %4253 = vmatpush.bf16.msra.mxu0 %v4235
        %4254 = vmatpush.bf16.msra.mxu0 %v4233
        %4255 = vmatpush.bf16.msra.mxu0 %v4231
        %4256 = vmatpush.bf16.msra.mxu0 %v4229
        %4257 = vmatpush.bf16.msra.mxu0 %v4227
        %4258 = vmatpush.bf16.msra.mxu0 %v4225
        %4259 = vmatpush.bf16.msra.mxu0 %v4223
        %4260 = vmatpush.bf16.msra.mxu0 %v4221
        %4261 = vmatmul.bf16.gmra.mxu0 %v4165
        %v4262 = vpop.f32.mrf.mxu0
        %v4263 = vadd.f32 0.0, %v4262
        %v4264 = vpop.f32.mrf.mxu0
        %v4265 = vadd.f32 0.0, %v4264
        %4266 = vmatmul.bf16.gmra.mxu0 %v4166
        %v4267 = vpop.f32.mrf.mxu0
        %v4268 = vadd.f32 0.0, %v4267
        %v4269 = vpop.f32.mrf.mxu0
        %v4270 = vadd.f32 0.0, %v4269
        %4271 = vmatmul.bf16.gmra.mxu0 %v4167
        %v4272 = vpop.f32.mrf.mxu0
        %v4273 = vadd.f32 0.0, %v4272
        %v4274 = vpop.f32.mrf.mxu0
        %v4275 = vadd.f32 0.0, %v4274
        %4276 = vmatmul.bf16.gmra.mxu0 %v4168
        %v4277 = vpop.f32.mrf.mxu0
        %v4278 = vadd.f32 0.0, %v4277
        %v4279 = vpop.f32.mrf.mxu0
        %v4280 = vadd.f32 0.0, %v4279
        %4281 = vdwg.mxu0
        %4282 = vmatpush.bf16.msra.mxu0 %v4236
        %4283 = vmatpush.bf16.msra.mxu0 %v4234
        %4284 = vmatpush.bf16.msra.mxu0 %v4232
        %4285 = vmatpush.bf16.msra.mxu0 %v4230
        %4286 = vmatpush.bf16.msra.mxu0 %v4228
        %4287 = vmatpush.bf16.msra.mxu0 %v4226
        %4288 = vmatpush.bf16.msra.mxu0 %v4224
        %4289 = vmatpush.bf16.msra.mxu0 %v4222
        %4290 = vmatmul.bf16.gmra.mxu0 %v4165
        %v4291 = vpop.f32.mrf.mxu0
        %v4292 = vadd.f32 0.0, %v4291
        %v4293 = vpop.f32.mrf.mxu0
        %v4294 = vadd.f32 0.0, %v4293
        %4295 = vmatmul.bf16.gmra.mxu0 %v4166
        %v4296 = vpop.f32.mrf.mxu0
        %v4297 = vadd.f32 0.0, %v4296
        %v4298 = vpop.f32.mrf.mxu0
        %v4299 = vadd.f32 0.0, %v4298
        %4300 = vmatmul.bf16.gmra.mxu0 %v4167
        %v4301 = vpop.f32.mrf.mxu0
        %v4302 = vadd.f32 0.0, %v4301
        %v4303 = vpop.f32.mrf.mxu0
        %v4304 = vadd.f32 0.0, %v4303
        %4305 = vmatmul.bf16.gmra.mxu0 %v4168
        %v4306 = vpop.f32.mrf.mxu0
        %v4307 = vadd.f32 0.0, %v4306
        %v4308 = vpop.f32.mrf.mxu0
        %v4309 = vadd.f32 0.0, %v4308
        %4310 = vdwg.mxu0
        %v4311 = vadd.f32 %v4017, %v4263
        %v4312 = vadd.f32 %v4018, %v4292
        %v4313 = vadd.f32 %v4019, %v4265
        %v4314 = vadd.f32 %v4020, %v4294
        %v4315 = vadd.f32 %v4021, %v4268
        %v4316 = vadd.f32 %v4022, %v4297
        %v4317 = vadd.f32 %v4023, %v4270
        %v4318 = vadd.f32 %v4024, %v4299
        %v4319 = vadd.f32 %v4025, %v4273
        %v4320 = vadd.f32 %v4026, %v4302
        %v4321 = vadd.f32 %v4027, %v4275
        %v4322 = vadd.f32 %v4028, %v4304
        %v4323 = vadd.f32 %v4029, %v4278
        %v4324 = vadd.f32 %v4030, %v4307
        %v4325 = vadd.f32 %v4031, %v4280
        %v4326 = vadd.f32 %v4032, %v4309
        %v4327 = vld [vmem:[%s3830] sm:$0xe]
        %v4328 = vld [vmem:[%s3830 + $0xc] sm:$0xe]
        %v4329 = vld [vmem:[%s3830 + $0x18] sm:$0xe]
        %v4330 = vld [vmem:[%s3830 + $0x24] sm:$0xe]
        %v4343 = vrot.slane %v4327, 5
        %v4344 = vrot.slane %v4343, 4
        %v4345 = vrot.slane %v4034, 5
        %v4346 = vsel %vm919, %v4344, %v4345
        %v4347 = vrot.slane %v4345, 4
        %v4348 = vrot.slane %v4035, 5
        %v4349 = vsel %vm919, %v4347, %v4348
        %v4350 = vrot.slane %v4328, 5
        %v4351 = vrot.slane %v4350, 4
        %v4352 = vrot.slane %v4037, 5
        %v4353 = vsel %vm919, %v4351, %v4352
        %v4354 = vrot.slane %v4352, 4
        %v4355 = vrot.slane %v4038, 5
        %v4356 = vsel %vm919, %v4354, %v4355
        %v4357 = vrot.slane %v4329, 5
        %v4358 = vrot.slane %v4357, 4
        %v4359 = vrot.slane %v4040, 5
        %v4360 = vsel %vm919, %v4358, %v4359
        %v4361 = vrot.slane %v4359, 4
        %v4362 = vrot.slane %v4041, 5
        %v4363 = vsel %vm919, %v4361, %v4362
        %v4364 = vrot.slane %v4330, 5
        %v4365 = vrot.slane %v4364, 4
        %v4366 = vrot.slane %v4043, 5
        %v4367 = vsel %vm919, %v4365, %v4366
        %v4368 = vrot.slane %v4366, 4
        %v4369 = vrot.slane %v4044, 5
        %v4370 = vsel %vm919, %v4368, %v4369
        %v4371 = vld [vmem:[%s1887] sm:$0xff]
        %v4372 = vld [vmem:[%s1887 + $0x8] sm:$0xff]
        %v4373 = vld [vmem:[%s1887 + $0x10] sm:$0xff]
        %v4374 = vld [vmem:[%s1887 + $0x18] sm:$0xff]
        %v4375 = vld [vmem:[%s1887 + $0x20] sm:$0xff]
        %v4376 = vld [vmem:[%s1887 + $0x28] sm:$0xff]
        %v4377 = vld [vmem:[%s1887 + $0x30] sm:$0xff]
        %v4378 = vld [vmem:[%s1887 + $0x38] sm:$0xff]
        %v4379 = vld [vmem:[%s1887 + $0x40] sm:$0xff]
        %v4380 = vld [vmem:[%s1887 + $0x48] sm:$0xff]
        %v4381 = vld [vmem:[%s1887 + $0x50] sm:$0xff]
        %v4382 = vld [vmem:[%s1887 + $0x58] sm:$0xff]
        %v4383 = vld [vmem:[%s1887 + $0x60] sm:$0xff]
        %v4384 = vld [vmem:[%s1887 + $0x68] sm:$0xff]
        %v4385 = vld [vmem:[%s1887 + $0x70] sm:$0xff]
        %v4386 = vld [vmem:[%s1887 + $0x78] sm:$0xff]
        %v4387 = vunpack.c.l.b16 %v4346
        %v4388 = vunpack.c.l.b16 %v4349
        %v4389 = vunpack.c.l.b16 %v4353
        %v4390 = vunpack.c.l.b16 %v4356
        %v4391 = vunpack.c.l.b16 %v4360
        %v4392 = vunpack.c.l.b16 %v4363
        %v4393 = vunpack.c.l.b16 %v4367
        %v4394 = vunpack.c.l.b16 %v4370
        %v4395 = vpack.c.b16 %v4388, %v4387
        %v4396 = vpack.c.b16 %v4390, %v4389
        %v4397 = vpack.c.b16 %v4392, %v4391
        %v4398 = vpack.c.b16 %v4394, %v4393
        %v4419 = vunpack.c.l.b16 %v4371
        %v4420 = vunpack.c.h.b16 %v4371
        %v4421 = vunpack.c.l.b16 %v4372
        %v4422 = vunpack.c.h.b16 %v4372
        %v4423 = vunpack.c.l.b16 %v4373
        %v4424 = vunpack.c.h.b16 %v4373
        %v4425 = vunpack.c.l.b16 %v4374
        %v4426 = vunpack.c.h.b16 %v4374
        %v4427 = vunpack.c.l.b16 %v4375
        %v4428 = vunpack.c.h.b16 %v4375
        %v4429 = vunpack.c.l.b16 %v4376
        %v4430 = vunpack.c.h.b16 %v4376
        %v4431 = vunpack.c.l.b16 %v4377
        %v4432 = vunpack.c.h.b16 %v4377
        %v4433 = vunpack.c.l.b16 %v4378
        %v4434 = vunpack.c.h.b16 %v4378
        %v4435 = vunpack.c.l.b16 %v4379
        %v4436 = vunpack.c.h.b16 %v4379
        %v4437 = vunpack.c.l.b16 %v4380
        %v4438 = vunpack.c.h.b16 %v4380
        %v4439 = vunpack.c.l.b16 %v4381
        %v4440 = vunpack.c.h.b16 %v4381
        %v4441 = vunpack.c.l.b16 %v4382
        %v4442 = vunpack.c.h.b16 %v4382
        %v4443 = vunpack.c.l.b16 %v4383
        %v4444 = vunpack.c.h.b16 %v4383
        %v4445 = vunpack.c.l.b16 %v4384
        %v4446 = vunpack.c.h.b16 %v4384
        %v4447 = vunpack.c.l.b16 %v4385
        %v4448 = vunpack.c.h.b16 %v4385
        %v4449 = vunpack.c.l.b16 %v4386
        %v4450 = vunpack.c.h.b16 %v4386
        %v4451 = vpack.c.b16 %v4421, %v4419
        %v4452 = vpack.c.b16 %v4422, %v4420
        %v4453 = vpack.c.b16 %v4425, %v4423
        %v4454 = vpack.c.b16 %v4426, %v4424
        %v4455 = vpack.c.b16 %v4429, %v4427
        %v4456 = vpack.c.b16 %v4430, %v4428
        %v4457 = vpack.c.b16 %v4433, %v4431
        %v4458 = vpack.c.b16 %v4434, %v4432
        %v4459 = vpack.c.b16 %v4437, %v4435
        %v4460 = vpack.c.b16 %v4438, %v4436
        %v4461 = vpack.c.b16 %v4441, %v4439
        %v4462 = vpack.c.b16 %v4442, %v4440
        %v4463 = vpack.c.b16 %v4445, %v4443
        %v4464 = vpack.c.b16 %v4446, %v4444
        %v4465 = vpack.c.b16 %v4449, %v4447
        %v4466 = vpack.c.b16 %v4450, %v4448
        %4483 = vmatpush.bf16.msra.mxu0 %v4465
        %4484 = vmatpush.bf16.msra.mxu0 %v4463
        %4485 = vmatpush.bf16.msra.mxu0 %v4461
        %4486 = vmatpush.bf16.msra.mxu0 %v4459
        %4487 = vmatpush.bf16.msra.mxu0 %v4457
        %4488 = vmatpush.bf16.msra.mxu0 %v4455
        %4489 = vmatpush.bf16.msra.mxu0 %v4453
        %4490 = vmatpush.bf16.msra.mxu0 %v4451
        %4491 = vmatmul.bf16.gmra.mxu0 %v4395
        %v4492 = vpop.f32.mrf.mxu0
        %v4493 = vadd.f32 0.0, %v4492
        %v4494 = vpop.f32.mrf.mxu0
        %v4495 = vadd.f32 0.0, %v4494
        %4496 = vmatmul.bf16.gmra.mxu0 %v4396
        %v4497 = vpop.f32.mrf.mxu0
        %v4498 = vadd.f32 0.0, %v4497
        %v4499 = vpop.f32.mrf.mxu0
        %v4500 = vadd.f32 0.0, %v4499
        %4501 = vmatmul.bf16.gmra.mxu0 %v4397
        %v4502 = vpop.f32.mrf.mxu0
        %v4503 = vadd.f32 0.0, %v4502
        %v4504 = vpop.f32.mrf.mxu0
        %v4505 = vadd.f32 0.0, %v4504
        %4506 = vmatmul.bf16.gmra.mxu0 %v4398
        %v4507 = vpop.f32.mrf.mxu0
        %v4508 = vadd.f32 0.0, %v4507
        %v4509 = vpop.f32.mrf.mxu0
        %v4510 = vadd.f32 0.0, %v4509
        %4511 = vdwg.mxu0
        %4512 = vmatpush.bf16.msra.mxu0 %v4466
        %4513 = vmatpush.bf16.msra.mxu0 %v4464
        %4514 = vmatpush.bf16.msra.mxu0 %v4462
        %4515 = vmatpush.bf16.msra.mxu0 %v4460
        %4516 = vmatpush.bf16.msra.mxu0 %v4458
        %4517 = vmatpush.bf16.msra.mxu0 %v4456
        %4518 = vmatpush.bf16.msra.mxu0 %v4454
        %4519 = vmatpush.bf16.msra.mxu0 %v4452
        %4520 = vmatmul.bf16.gmra.mxu0 %v4395
        %v4521 = vpop.f32.mrf.mxu0
        %v4522 = vadd.f32 0.0, %v4521
        %v4523 = vpop.f32.mrf.mxu0
        %v4524 = vadd.f32 0.0, %v4523
        %4525 = vmatmul.bf16.gmra.mxu0 %v4396
        %v4526 = vpop.f32.mrf.mxu0
        %v4527 = vadd.f32 0.0, %v4526
        %v4528 = vpop.f32.mrf.mxu0
        %v4529 = vadd.f32 0.0, %v4528
        %4530 = vmatmul.bf16.gmra.mxu0 %v4397
        %v4531 = vpop.f32.mrf.mxu0
        %v4532 = vadd.f32 0.0, %v4531
        %v4533 = vpop.f32.mrf.mxu0
        %v4534 = vadd.f32 0.0, %v4533
        %4535 = vmatmul.bf16.gmra.mxu0 %v4398
        %v4536 = vpop.f32.mrf.mxu0
        %v4537 = vadd.f32 0.0, %v4536
        %v4538 = vpop.f32.mrf.mxu0
        %v4539 = vadd.f32 0.0, %v4538
        %4540 = vdwg.mxu0
        %v4541 = vadd.f32 %v4311, %v4493
        %v4542 = vadd.f32 %v4312, %v4522
        %v4543 = vadd.f32 %v4313, %v4495
        %v4544 = vadd.f32 %v4314, %v4524
        %v4545 = vadd.f32 %v4315, %v4498
        %v4546 = vadd.f32 %v4316, %v4527
        %v4547 = vadd.f32 %v4317, %v4500
        %v4548 = vadd.f32 %v4318, %v4529
        %v4549 = vadd.f32 %v4319, %v4503
        %v4550 = vadd.f32 %v4320, %v4532
        %v4551 = vadd.f32 %v4321, %v4505
        %v4552 = vadd.f32 %v4322, %v4534
        %v4553 = vadd.f32 %v4323, %v4508
        %v4554 = vadd.f32 %v4324, %v4537
        %v4555 = vadd.f32 %v4325, %v4510
        %v4556 = vadd.f32 %v4326, %v4539
        %s4557 = sadd.s32 %s293, 8
        %s4558 = smul.u32 %s4557, 3
        %s4559 = smul.addr %s4558, 4
        %s4560 = scalar_lea.vmem %s290, %s4559
        %v4561 = vld [vmem:[%s4560] sm:$0xf]
        %v4562 = vld [vmem:[%s4560 + $0x4] sm:$0xf]
        %v4563 = vld [vmem:[%s4560 + $0xc] sm:$0xf]
        %v4564 = vld [vmem:[%s4560 + $0x10] sm:$0xf]
        %v4565 = vld [vmem:[%s4560 + $0x18] sm:$0xf]
        %v4566 = vld [vmem:[%s4560 + $0x1c] sm:$0xf]
        %v4567 = vld [vmem:[%s4560 + $0x24] sm:$0xf]
        %v4568 = vld [vmem:[%s4560 + $0x28] sm:$0xf]
        %v4569 = vld [vmem:[%s2126] sm:$0xff]
        %v4570 = vld [vmem:[%s2126 + $0x8] sm:$0xff]
        %v4571 = vld [vmem:[%s2126 + $0x10] sm:$0xff]
        %v4572 = vld [vmem:[%s2126 + $0x18] sm:$0xff]
        %v4573 = vld [vmem:[%s2126 + $0x20] sm:$0xff]
        %v4574 = vld [vmem:[%s2126 + $0x28] sm:$0xff]
        %v4575 = vld [vmem:[%s2126 + $0x30] sm:$0xff]
        %v4576 = vld [vmem:[%s2126 + $0x38] sm:$0xff]
        %v4577 = vld [vmem:[%s2126 + $0x40] sm:$0xff]
        %v4578 = vld [vmem:[%s2126 + $0x48] sm:$0xff]
        %v4579 = vld [vmem:[%s2126 + $0x50] sm:$0xff]
        %v4580 = vld [vmem:[%s2126 + $0x58] sm:$0xff]
        %v4581 = vld [vmem:[%s2126 + $0x60] sm:$0xff]
        %v4582 = vld [vmem:[%s2126 + $0x68] sm:$0xff]
        %v4583 = vld [vmem:[%s2126 + $0x70] sm:$0xff]
        %v4584 = vld [vmem:[%s2126 + $0x78] sm:$0xff]
        %v4593 = vunpack.c.l.b16 %v4561
        %v4594 = vunpack.c.l.b16 %v4562
        %v4595 = vunpack.c.l.b16 %v4563
        %v4596 = vunpack.c.l.b16 %v4564
        %v4597 = vunpack.c.l.b16 %v4565
        %v4598 = vunpack.c.l.b16 %v4566
        %v4599 = vunpack.c.l.b16 %v4567
        %v4600 = vunpack.c.l.b16 %v4568
        %v4601 = vpack.c.b16 %v4594, %v4593
        %v4602 = vpack.c.b16 %v4596, %v4595
        %v4603 = vpack.c.b16 %v4598, %v4597
        %v4604 = vpack.c.b16 %v4600, %v4599
        %v4625 = vunpack.c.l.b16 %v4569
        %v4626 = vunpack.c.h.b16 %v4569
        %v4627 = vunpack.c.l.b16 %v4570
        %v4628 = vunpack.c.h.b16 %v4570
        %v4629 = vunpack.c.l.b16 %v4571
        %v4630 = vunpack.c.h.b16 %v4571
        %v4631 = vunpack.c.l.b16 %v4572
        %v4632 = vunpack.c.h.b16 %v4572
        %v4633 = vunpack.c.l.b16 %v4573
        %v4634 = vunpack.c.h.b16 %v4573
        %v4635 = vunpack.c.l.b16 %v4574
        %v4636 = vunpack.c.h.b16 %v4574
        %v4637 = vunpack.c.l.b16 %v4575
        %v4638 = vunpack.c.h.b16 %v4575
        %v4639 = vunpack.c.l.b16 %v4576
        %v4640 = vunpack.c.h.b16 %v4576
        %v4641 = vunpack.c.l.b16 %v4577
        %v4642 = vunpack.c.h.b16 %v4577
        %v4643 = vunpack.c.l.b16 %v4578
        %v4644 = vunpack.c.h.b16 %v4578
        %v4645 = vunpack.c.l.b16 %v4579
        %v4646 = vunpack.c.h.b16 %v4579
        %v4647 = vunpack.c.l.b16 %v4580
        %v4648 = vunpack.c.h.b16 %v4580
        %v4649 = vunpack.c.l.b16 %v4581
        %v4650 = vunpack.c.h.b16 %v4581
        %v4651 = vunpack.c.l.b16 %v4582
        %v4652 = vunpack.c.h.b16 %v4582
        %v4653 = vunpack.c.l.b16 %v4583
        %v4654 = vunpack.c.h.b16 %v4583
        %v4655 = vunpack.c.l.b16 %v4584
        %v4656 = vunpack.c.h.b16 %v4584
        %v4657 = vpack.c.b16 %v4627, %v4625
        %v4658 = vpack.c.b16 %v4628, %v4626
        %v4659 = vpack.c.b16 %v4631, %v4629
        %v4660 = vpack.c.b16 %v4632, %v4630
        %v4661 = vpack.c.b16 %v4635, %v4633
        %v4662 = vpack.c.b16 %v4636, %v4634
        %v4663 = vpack.c.b16 %v4639, %v4637
        %v4664 = vpack.c.b16 %v4640, %v4638
        %v4665 = vpack.c.b16 %v4643, %v4641
        %v4666 = vpack.c.b16 %v4644, %v4642
        %v4667 = vpack.c.b16 %v4647, %v4645
        %v4668 = vpack.c.b16 %v4648, %v4646
        %v4669 = vpack.c.b16 %v4651, %v4649
        %v4670 = vpack.c.b16 %v4652, %v4650
        %v4671 = vpack.c.b16 %v4655, %v4653
        %v4672 = vpack.c.b16 %v4656, %v4654
        %4689 = vmatpush.bf16.msra.mxu0 %v4671
        %4690 = vmatpush.bf16.msra.mxu0 %v4669
        %4691 = vmatpush.bf16.msra.mxu0 %v4667
        %4692 = vmatpush.bf16.msra.mxu0 %v4665
        %4693 = vmatpush.bf16.msra.mxu0 %v4663
        %4694 = vmatpush.bf16.msra.mxu0 %v4661
        %4695 = vmatpush.bf16.msra.mxu0 %v4659
        %4696 = vmatpush.bf16.msra.mxu0 %v4657
        %4697 = vmatmul.bf16.gmra.mxu0 %v4601
        %v4698 = vpop.f32.mrf.mxu0
        %v4699 = vadd.f32 0.0, %v4698
        %v4700 = vpop.f32.mrf.mxu0
        %v4701 = vadd.f32 0.0, %v4700
        %4702 = vmatmul.bf16.gmra.mxu0 %v4602
        %v4703 = vpop.f32.mrf.mxu0
        %v4704 = vadd.f32 0.0, %v4703
        %v4705 = vpop.f32.mrf.mxu0
        %v4706 = vadd.f32 0.0, %v4705
        %4707 = vmatmul.bf16.gmra.mxu0 %v4603
        %v4708 = vpop.f32.mrf.mxu0
        %v4709 = vadd.f32 0.0, %v4708
        %v4710 = vpop.f32.mrf.mxu0
        %v4711 = vadd.f32 0.0, %v4710
        %4712 = vmatmul.bf16.gmra.mxu0 %v4604
        %v4713 = vpop.f32.mrf.mxu0
        %v4714 = vadd.f32 0.0, %v4713
        %v4715 = vpop.f32.mrf.mxu0
        %v4716 = vadd.f32 0.0, %v4715
        %4717 = vdwg.mxu0
        %4718 = vmatpush.bf16.msra.mxu0 %v4672
        %4719 = vmatpush.bf16.msra.mxu0 %v4670
        %4720 = vmatpush.bf16.msra.mxu0 %v4668
        %4721 = vmatpush.bf16.msra.mxu0 %v4666
        %4722 = vmatpush.bf16.msra.mxu0 %v4664
        %4723 = vmatpush.bf16.msra.mxu0 %v4662
        %4724 = vmatpush.bf16.msra.mxu0 %v4660
        %4725 = vmatpush.bf16.msra.mxu0 %v4658
        %4726 = vmatmul.bf16.gmra.mxu0 %v4601
        %v4727 = vpop.f32.mrf.mxu0
        %v4728 = vadd.f32 0.0, %v4727
        %v4729 = vpop.f32.mrf.mxu0
        %v4730 = vadd.f32 0.0, %v4729
        %4731 = vmatmul.bf16.gmra.mxu0 %v4602
        %v4732 = vpop.f32.mrf.mxu0
        %v4733 = vadd.f32 0.0, %v4732
        %v4734 = vpop.f32.mrf.mxu0
        %v4735 = vadd.f32 0.0, %v4734
        %4736 = vmatmul.bf16.gmra.mxu0 %v4603
        %v4737 = vpop.f32.mrf.mxu0
        %v4738 = vadd.f32 0.0, %v4737
        %v4739 = vpop.f32.mrf.mxu0
        %v4740 = vadd.f32 0.0, %v4739
        %4741 = vmatmul.bf16.gmra.mxu0 %v4604
        %v4742 = vpop.f32.mrf.mxu0
        %v4743 = vadd.f32 0.0, %v4742
        %v4744 = vpop.f32.mrf.mxu0
        %v4745 = vadd.f32 0.0, %v4744
        %4746 = vdwg.mxu0
        %v4747 = vadd.f32 %v4541, %v4699
        %v4748 = vadd.f32 %v4542, %v4728
        %v4749 = vadd.f32 %v4543, %v4701
        %v4750 = vadd.f32 %v4544, %v4730
        %v4751 = vadd.f32 %v4545, %v4704
        %v4752 = vadd.f32 %v4546, %v4733
        %v4753 = vadd.f32 %v4547, %v4706
        %v4754 = vadd.f32 %v4548, %v4735
        %v4755 = vadd.f32 %v4549, %v4709
        %v4756 = vadd.f32 %v4550, %v4738
        %v4757 = vadd.f32 %v4551, %v4711
        %v4758 = vadd.f32 %v4552, %v4740
        %v4759 = vadd.f32 %v4553, %v4714
        %v4760 = vadd.f32 %v4554, %v4743
        %v4761 = vadd.f32 %v4555, %v4716
        %v4762 = vadd.f32 %v4556, %v4745
        %v4763 = vld [vmem:[%s4560] sm:$0xf]
        %v4764 = vld [vmem:[%s4560 + $0x4] sm:$0xf]
        %v4765 = vld [vmem:[%s4560 + $0x8] sm:$0x1]
        %v4766 = vld [vmem:[%s4560 + $0xc] sm:$0xf]
        %v4767 = vld [vmem:[%s4560 + $0x10] sm:$0xf]
        %v4768 = vld [vmem:[%s4560 + $0x14] sm:$0x1]
        %v4769 = vld [vmem:[%s4560 + $0x18] sm:$0xf]
        %v4770 = vld [vmem:[%s4560 + $0x1c] sm:$0xf]
        %v4771 = vld [vmem:[%s4560 + $0x20] sm:$0x1]
        %v4772 = vld [vmem:[%s4560 + $0x24] sm:$0xf]
        %v4773 = vld [vmem:[%s4560 + $0x28] sm:$0xf]
        %v4774 = vld [vmem:[%s4560 + $0x2c] sm:$0x1]
        %v4776 = vshrl.u32 %v4763, 16
        %v4778 = vrot.slane %v4776, 4
        %v4779 = vshll.u32 %v4763, 16
        %v4781 = vrot.slane %v4779, 5
        %v4782 = vor.u32 %v4778, %v4781
        %v4783 = vrot.slane %v4782, 4
        %v4785 = vshll.u32 %v4764, 16
        %v4787 = vrot.slane %v4785, 5
        %v4788 = vsel %vm361, %v4783, %v4787
        %v4789 = vshrl.u32 %v4764, 16
        %v4791 = vrot.slane %v4789, 4
        %v4792 = vor.u32 %v4791, %v4787
        %v4793 = vrot.slane %v4792, 4
        %v4795 = vshll.u32 %v4765, 16
        %v4797 = vrot.slane %v4795, 5
        %v4798 = vsel %vm361, %v4793, %v4797
        %v4800 = vshrl.u32 %v4766, 16
        %v4802 = vrot.slane %v4800, 4
        %v4803 = vshll.u32 %v4766, 16
        %v4805 = vrot.slane %v4803, 5
        %v4806 = vor.u32 %v4802, %v4805
        %v4807 = vrot.slane %v4806, 4
        %v4809 = vshll.u32 %v4767, 16
        %v4811 = vrot.slane %v4809, 5
        %v4812 = vsel %vm361, %v4807, %v4811
        %v4813 = vshrl.u32 %v4767, 16
        %v4815 = vrot.slane %v4813, 4
        %v4816 = vor.u32 %v4815, %v4811
        %v4817 = vrot.slane %v4816, 4
        %v4819 = vshll.u32 %v4768, 16
        %v4821 = vrot.slane %v4819, 5
        %v4822 = vsel %vm361, %v4817, %v4821
        %v4824 = vshrl.u32 %v4769, 16
        %v4826 = vrot.slane %v4824, 4
        %v4827 = vshll.u32 %v4769, 16
        %v4829 = vrot.slane %v4827, 5
        %v4830 = vor.u32 %v4826, %v4829
        %v4831 = vrot.slane %v4830, 4
        %v4833 = vshll.u32 %v4770, 16
        %v4835 = vrot.slane %v4833, 5
        %v4836 = vsel %vm361, %v4831, %v4835
        %v4837 = vshrl.u32 %v4770, 16
        %v4839 = vrot.slane %v4837, 4
        %v4840 = vor.u32 %v4839, %v4835
        %v4841 = vrot.slane %v4840, 4
        %v4843 = vshll.u32 %v4771, 16
        %v4845 = vrot.slane %v4843, 5
        %v4846 = vsel %vm361, %v4841, %v4845
        %v4848 = vshrl.u32 %v4772, 16
        %v4850 = vrot.slane %v4848, 4
        %v4851 = vshll.u32 %v4772, 16
        %v4853 = vrot.slane %v4851, 5
        %v4854 = vor.u32 %v4850, %v4853
        %v4855 = vrot.slane %v4854, 4
        %v4857 = vshll.u32 %v4773, 16
        %v4859 = vrot.slane %v4857, 5
        %v4860 = vsel %vm361, %v4855, %v4859
        %v4861 = vshrl.u32 %v4773, 16
        %v4863 = vrot.slane %v4861, 4
        %v4864 = vor.u32 %v4863, %v4859
        %v4865 = vrot.slane %v4864, 4
        %v4867 = vshll.u32 %v4774, 16
        %v4869 = vrot.slane %v4867, 5
        %v4870 = vsel %vm361, %v4865, %v4869
        %v4871 = vld [vmem:[%s2523] sm:$0xff]
        %v4872 = vld [vmem:[%s2523 + $0x8] sm:$0xff]
        %v4873 = vld [vmem:[%s2523 + $0x10] sm:$0xff]
        %v4874 = vld [vmem:[%s2523 + $0x18] sm:$0xff]
        %v4875 = vld [vmem:[%s2523 + $0x20] sm:$0xff]
        %v4876 = vld [vmem:[%s2523 + $0x28] sm:$0xff]
        %v4877 = vld [vmem:[%s2523 + $0x30] sm:$0xff]
        %v4878 = vld [vmem:[%s2523 + $0x38] sm:$0xff]
        %v4879 = vld [vmem:[%s2523 + $0x40] sm:$0xff]
        %v4880 = vld [vmem:[%s2523 + $0x48] sm:$0xff]
        %v4881 = vld [vmem:[%s2523 + $0x50] sm:$0xff]
        %v4882 = vld [vmem:[%s2523 + $0x58] sm:$0xff]
        %v4883 = vld [vmem:[%s2523 + $0x60] sm:$0xff]
        %v4884 = vld [vmem:[%s2523 + $0x68] sm:$0xff]
        %v4885 = vld [vmem:[%s2523 + $0x70] sm:$0xff]
        %v4886 = vld [vmem:[%s2523 + $0x78] sm:$0xff]
        %v4887 = vunpack.c.l.b16 %v4788
        %v4888 = vunpack.c.l.b16 %v4798
        %v4889 = vunpack.c.l.b16 %v4812
        %v4890 = vunpack.c.l.b16 %v4822
        %v4891 = vunpack.c.l.b16 %v4836
        %v4892 = vunpack.c.l.b16 %v4846
        %v4893 = vunpack.c.l.b16 %v4860
        %v4894 = vunpack.c.l.b16 %v4870
        %v4895 = vpack.c.b16 %v4888, %v4887
        %v4896 = vpack.c.b16 %v4890, %v4889
        %v4897 = vpack.c.b16 %v4892, %v4891
        %v4898 = vpack.c.b16 %v4894, %v4893
        %v4919 = vunpack.c.l.b16 %v4871
        %v4920 = vunpack.c.h.b16 %v4871
        %v4921 = vunpack.c.l.b16 %v4872
        %v4922 = vunpack.c.h.b16 %v4872
        %v4923 = vunpack.c.l.b16 %v4873
        %v4924 = vunpack.c.h.b16 %v4873
        %v4925 = vunpack.c.l.b16 %v4874
        %v4926 = vunpack.c.h.b16 %v4874
        %v4927 = vunpack.c.l.b16 %v4875
        %v4928 = vunpack.c.h.b16 %v4875
        %v4929 = vunpack.c.l.b16 %v4876
        %v4930 = vunpack.c.h.b16 %v4876
        %v4931 = vunpack.c.l.b16 %v4877
        %v4932 = vunpack.c.h.b16 %v4877
        %v4933 = vunpack.c.l.b16 %v4878
        %v4934 = vunpack.c.h.b16 %v4878
        %v4935 = vunpack.c.l.b16 %v4879
        %v4936 = vunpack.c.h.b16 %v4879
        %v4937 = vunpack.c.l.b16 %v4880
        %v4938 = vunpack.c.h.b16 %v4880
        %v4939 = vunpack.c.l.b16 %v4881
        %v4940 = vunpack.c.h.b16 %v4881
        %v4941 = vunpack.c.l.b16 %v4882
        %v4942 = vunpack.c.h.b16 %v4882
        %v4943 = vunpack.c.l.b16 %v4883
        %v4944 = vunpack.c.h.b16 %v4883
        %v4945 = vunpack.c.l.b16 %v4884
        %v4946 = vunpack.c.h.b16 %v4884
        %v4947 = vunpack.c.l.b16 %v4885
        %v4948 = vunpack.c.h.b16 %v4885
        %v4949 = vunpack.c.l.b16 %v4886
        %v4950 = vunpack.c.h.b16 %v4886
        %v4951 = vpack.c.b16 %v4921, %v4919
        %v4952 = vpack.c.b16 %v4922, %v4920
        %v4953 = vpack.c.b16 %v4925, %v4923
        %v4954 = vpack.c.b16 %v4926, %v4924
        %v4955 = vpack.c.b16 %v4929, %v4927
        %v4956 = vpack.c.b16 %v4930, %v4928
        %v4957 = vpack.c.b16 %v4933, %v4931
        %v4958 = vpack.c.b16 %v4934, %v4932
        %v4959 = vpack.c.b16 %v4937, %v4935
        %v4960 = vpack.c.b16 %v4938, %v4936
        %v4961 = vpack.c.b16 %v4941, %v4939
        %v4962 = vpack.c.b16 %v4942, %v4940
        %v4963 = vpack.c.b16 %v4945, %v4943
        %v4964 = vpack.c.b16 %v4946, %v4944
        %v4965 = vpack.c.b16 %v4949, %v4947
        %v4966 = vpack.c.b16 %v4950, %v4948
        %4983 = vmatpush.bf16.msra.mxu0 %v4965
        %4984 = vmatpush.bf16.msra.mxu0 %v4963
        %4985 = vmatpush.bf16.msra.mxu0 %v4961
        %4986 = vmatpush.bf16.msra.mxu0 %v4959
        %4987 = vmatpush.bf16.msra.mxu0 %v4957
        %4988 = vmatpush.bf16.msra.mxu0 %v4955
        %4989 = vmatpush.bf16.msra.mxu0 %v4953
        %4990 = vmatpush.bf16.msra.mxu0 %v4951
        %4991 = vmatmul.bf16.gmra.mxu0 %v4895
        %v4992 = vpop.f32.mrf.mxu0
        %v4993 = vadd.f32 0.0, %v4992
        %v4994 = vpop.f32.mrf.mxu0
        %v4995 = vadd.f32 0.0, %v4994
        %4996 = vmatmul.bf16.gmra.mxu0 %v4896
        %v4997 = vpop.f32.mrf.mxu0
        %v4998 = vadd.f32 0.0, %v4997
        %v4999 = vpop.f32.mrf.mxu0
        %v5000 = vadd.f32 0.0, %v4999
        %5001 = vmatmul.bf16.gmra.mxu0 %v4897
        %v5002 = vpop.f32.mrf.mxu0
        %v5003 = vadd.f32 0.0, %v5002
        %v5004 = vpop.f32.mrf.mxu0
        %v5005 = vadd.f32 0.0, %v5004
        %5006 = vmatmul.bf16.gmra.mxu0 %v4898
        %v5007 = vpop.f32.mrf.mxu0
        %v5008 = vadd.f32 0.0, %v5007
        %v5009 = vpop.f32.mrf.mxu0
        %v5010 = vadd.f32 0.0, %v5009
        %5011 = vdwg.mxu0
        %5012 = vmatpush.bf16.msra.mxu0 %v4966
        %5013 = vmatpush.bf16.msra.mxu0 %v4964
        %5014 = vmatpush.bf16.msra.mxu0 %v4962
        %5015 = vmatpush.bf16.msra.mxu0 %v4960
        %5016 = vmatpush.bf16.msra.mxu0 %v4958
        %5017 = vmatpush.bf16.msra.mxu0 %v4956
        %5018 = vmatpush.bf16.msra.mxu0 %v4954
        %5019 = vmatpush.bf16.msra.mxu0 %v4952
        %5020 = vmatmul.bf16.gmra.mxu0 %v4895
        %v5021 = vpop.f32.mrf.mxu0
        %v5022 = vadd.f32 0.0, %v5021
        %v5023 = vpop.f32.mrf.mxu0
        %v5024 = vadd.f32 0.0, %v5023
        %5025 = vmatmul.bf16.gmra.mxu0 %v4896
        %v5026 = vpop.f32.mrf.mxu0
        %v5027 = vadd.f32 0.0, %v5026
        %v5028 = vpop.f32.mrf.mxu0
        %v5029 = vadd.f32 0.0, %v5028
        %5030 = vmatmul.bf16.gmra.mxu0 %v4897
        %v5031 = vpop.f32.mrf.mxu0
        %v5032 = vadd.f32 0.0, %v5031
        %v5033 = vpop.f32.mrf.mxu0
        %v5034 = vadd.f32 0.0, %v5033
        %5035 = vmatmul.bf16.gmra.mxu0 %v4898
        %v5036 = vpop.f32.mrf.mxu0
        %v5037 = vadd.f32 0.0, %v5036
        %v5038 = vpop.f32.mrf.mxu0
        %v5039 = vadd.f32 0.0, %v5038
        %5040 = vdwg.mxu0
        %v5041 = vadd.f32 %v4747, %v4993
        %v5042 = vadd.f32 %v4748, %v5022
        %v5043 = vadd.f32 %v4749, %v4995
        %v5044 = vadd.f32 %v4750, %v5024
        %v5045 = vadd.f32 %v4751, %v4998
        %v5046 = vadd.f32 %v4752, %v5027
        %v5047 = vadd.f32 %v4753, %v5000
        %v5048 = vadd.f32 %v4754, %v5029
        %v5049 = vadd.f32 %v4755, %v5003
        %v5050 = vadd.f32 %v4756, %v5032
        %v5051 = vadd.f32 %v4757, %v5005
        %v5052 = vadd.f32 %v4758, %v5034
        %v5053 = vadd.f32 %v4759, %v5008
        %v5054 = vadd.f32 %v4760, %v5037
        %v5055 = vadd.f32 %v4761, %v5010
        %v5056 = vadd.f32 %v4762, %v5039
        %v5057 = vld [vmem:[%s4560] sm:$0xe]
        %v5058 = vld [vmem:[%s4560 + $0xc] sm:$0xe]
        %v5059 = vld [vmem:[%s4560 + $0x18] sm:$0xe]
        %v5060 = vld [vmem:[%s4560 + $0x24] sm:$0xe]
        %v5073 = vrot.slane %v5057, 5
        %v5074 = vrot.slane %v5073, 4
        %v5075 = vrot.slane %v4764, 5
        %v5076 = vsel %vm919, %v5074, %v5075
        %v5077 = vrot.slane %v5075, 4
        %v5078 = vrot.slane %v4765, 5
        %v5079 = vsel %vm919, %v5077, %v5078
        %v5080 = vrot.slane %v5058, 5
        %v5081 = vrot.slane %v5080, 4
        %v5082 = vrot.slane %v4767, 5
        %v5083 = vsel %vm919, %v5081, %v5082
        %v5084 = vrot.slane %v5082, 4
        %v5085 = vrot.slane %v4768, 5
        %v5086 = vsel %vm919, %v5084, %v5085
        %v5087 = vrot.slane %v5059, 5
        %v5088 = vrot.slane %v5087, 4
        %v5089 = vrot.slane %v4770, 5
        %v5090 = vsel %vm919, %v5088, %v5089
        %v5091 = vrot.slane %v5089, 4
        %v5092 = vrot.slane %v4771, 5
        %v5093 = vsel %vm919, %v5091, %v5092
        %v5094 = vrot.slane %v5060, 5
        %v5095 = vrot.slane %v5094, 4
        %v5096 = vrot.slane %v4773, 5
        %v5097 = vsel %vm919, %v5095, %v5096
        %v5098 = vrot.slane %v5096, 4
        %v5099 = vrot.slane %v4774, 5
        %v5100 = vsel %vm919, %v5098, %v5099
        %v5101 = vld [vmem:[%s2812] sm:$0xff]
        %v5102 = vld [vmem:[%s2812 + $0x8] sm:$0xff]
        %v5103 = vld [vmem:[%s2812 + $0x10] sm:$0xff]
        %v5104 = vld [vmem:[%s2812 + $0x18] sm:$0xff]
        %v5105 = vld [vmem:[%s2812 + $0x20] sm:$0xff]
        %v5106 = vld [vmem:[%s2812 + $0x28] sm:$0xff]
        %v5107 = vld [vmem:[%s2812 + $0x30] sm:$0xff]
        %v5108 = vld [vmem:[%s2812 + $0x38] sm:$0xff]
        %v5109 = vld [vmem:[%s2812 + $0x40] sm:$0xff]
        %v5110 = vld [vmem:[%s2812 + $0x48] sm:$0xff]
        %v5111 = vld [vmem:[%s2812 + $0x50] sm:$0xff]
        %v5112 = vld [vmem:[%s2812 + $0x58] sm:$0xff]
        %v5113 = vld [vmem:[%s2812 + $0x60] sm:$0xff]
        %v5114 = vld [vmem:[%s2812 + $0x68] sm:$0xff]
        %v5115 = vld [vmem:[%s2812 + $0x70] sm:$0xff]
        %v5116 = vld [vmem:[%s2812 + $0x78] sm:$0xff]
        %v5117 = vunpack.c.l.b16 %v5076
        %v5118 = vunpack.c.l.b16 %v5079
        %v5119 = vunpack.c.l.b16 %v5083
        %v5120 = vunpack.c.l.b16 %v5086
        %v5121 = vunpack.c.l.b16 %v5090
        %v5122 = vunpack.c.l.b16 %v5093
        %v5123 = vunpack.c.l.b16 %v5097
        %v5124 = vunpack.c.l.b16 %v5100
        %v5125 = vpack.c.b16 %v5118, %v5117
        %v5126 = vpack.c.b16 %v5120, %v5119
        %v5127 = vpack.c.b16 %v5122, %v5121
        %v5128 = vpack.c.b16 %v5124, %v5123
        %v5149 = vunpack.c.l.b16 %v5101
        %v5150 = vunpack.c.h.b16 %v5101
        %v5151 = vunpack.c.l.b16 %v5102
        %v5152 = vunpack.c.h.b16 %v5102
        %v5153 = vunpack.c.l.b16 %v5103
        %v5154 = vunpack.c.h.b16 %v5103
        %v5155 = vunpack.c.l.b16 %v5104
        %v5156 = vunpack.c.h.b16 %v5104
        %v5157 = vunpack.c.l.b16 %v5105
        %v5158 = vunpack.c.h.b16 %v5105
        %v5159 = vunpack.c.l.b16 %v5106
        %v5160 = vunpack.c.h.b16 %v5106
        %v5161 = vunpack.c.l.b16 %v5107
        %v5162 = vunpack.c.h.b16 %v5107
        %v5163 = vunpack.c.l.b16 %v5108
        %v5164 = vunpack.c.h.b16 %v5108
        %v5165 = vunpack.c.l.b16 %v5109
        %v5166 = vunpack.c.h.b16 %v5109
        %v5167 = vunpack.c.l.b16 %v5110
        %v5168 = vunpack.c.h.b16 %v5110
        %v5169 = vunpack.c.l.b16 %v5111
        %v5170 = vunpack.c.h.b16 %v5111
        %v5171 = vunpack.c.l.b16 %v5112
        %v5172 = vunpack.c.h.b16 %v5112
        %v5173 = vunpack.c.l.b16 %v5113
        %v5174 = vunpack.c.h.b16 %v5113
        %v5175 = vunpack.c.l.b16 %v5114
        %v5176 = vunpack.c.h.b16 %v5114
        %v5177 = vunpack.c.l.b16 %v5115
        %v5178 = vunpack.c.h.b16 %v5115
        %v5179 = vunpack.c.l.b16 %v5116
        %v5180 = vunpack.c.h.b16 %v5116
        %v5181 = vpack.c.b16 %v5151, %v5149
        %v5182 = vpack.c.b16 %v5152, %v5150
        %v5183 = vpack.c.b16 %v5155, %v5153
        %v5184 = vpack.c.b16 %v5156, %v5154
        %v5185 = vpack.c.b16 %v5159, %v5157
        %v5186 = vpack.c.b16 %v5160, %v5158
        %v5187 = vpack.c.b16 %v5163, %v5161
        %v5188 = vpack.c.b16 %v5164, %v5162
        %v5189 = vpack.c.b16 %v5167, %v5165
        %v5190 = vpack.c.b16 %v5168, %v5166
        %v5191 = vpack.c.b16 %v5171, %v5169
        %v5192 = vpack.c.b16 %v5172, %v5170
        %v5193 = vpack.c.b16 %v5175, %v5173
        %v5194 = vpack.c.b16 %v5176, %v5174
        %v5195 = vpack.c.b16 %v5179, %v5177
        %v5196 = vpack.c.b16 %v5180, %v5178
        %5213 = vmatpush.bf16.msra.mxu0 %v5195
        %5214 = vmatpush.bf16.msra.mxu0 %v5193
        %5215 = vmatpush.bf16.msra.mxu0 %v5191
        %5216 = vmatpush.bf16.msra.mxu0 %v5189
        %5217 = vmatpush.bf16.msra.mxu0 %v5187
        %5218 = vmatpush.bf16.msra.mxu0 %v5185
        %5219 = vmatpush.bf16.msra.mxu0 %v5183
        %5220 = vmatpush.bf16.msra.mxu0 %v5181
        %5221 = vmatmul.bf16.gmra.mxu0 %v5125
        %v5222 = vpop.f32.mrf.mxu0
        %v5223 = vadd.f32 0.0, %v5222
        %v5224 = vpop.f32.mrf.mxu0
        %v5225 = vadd.f32 0.0, %v5224
        %5226 = vmatmul.bf16.gmra.mxu0 %v5126
        %v5227 = vpop.f32.mrf.mxu0
        %v5228 = vadd.f32 0.0, %v5227
        %v5229 = vpop.f32.mrf.mxu0
        %v5230 = vadd.f32 0.0, %v5229
        %5231 = vmatmul.bf16.gmra.mxu0 %v5127
        %v5232 = vpop.f32.mrf.mxu0
        %v5233 = vadd.f32 0.0, %v5232
        %v5234 = vpop.f32.mrf.mxu0
        %v5235 = vadd.f32 0.0, %v5234
        %5236 = vmatmul.bf16.gmra.mxu0 %v5128
        %v5237 = vpop.f32.mrf.mxu0
        %v5238 = vadd.f32 0.0, %v5237
        %v5239 = vpop.f32.mrf.mxu0
        %v5240 = vadd.f32 0.0, %v5239
        %5241 = vdwg.mxu0
        %5242 = vmatpush.bf16.msra.mxu0 %v5196
        %5243 = vmatpush.bf16.msra.mxu0 %v5194
        %5244 = vmatpush.bf16.msra.mxu0 %v5192
        %5245 = vmatpush.bf16.msra.mxu0 %v5190
        %5246 = vmatpush.bf16.msra.mxu0 %v5188
        %5247 = vmatpush.bf16.msra.mxu0 %v5186
        %5248 = vmatpush.bf16.msra.mxu0 %v5184
        %5249 = vmatpush.bf16.msra.mxu0 %v5182
        %5250 = vmatmul.bf16.gmra.mxu0 %v5125
        %v5251 = vpop.f32.mrf.mxu0
        %v5252 = vadd.f32 0.0, %v5251
        %v5253 = vpop.f32.mrf.mxu0
        %v5254 = vadd.f32 0.0, %v5253
        %5255 = vmatmul.bf16.gmra.mxu0 %v5126
        %v5256 = vpop.f32.mrf.mxu0
        %v5257 = vadd.f32 0.0, %v5256
        %v5258 = vpop.f32.mrf.mxu0
        %v5259 = vadd.f32 0.0, %v5258
        %5260 = vmatmul.bf16.gmra.mxu0 %v5127
        %v5261 = vpop.f32.mrf.mxu0
        %v5262 = vadd.f32 0.0, %v5261
        %v5263 = vpop.f32.mrf.mxu0
        %v5264 = vadd.f32 0.0, %v5263
        %5265 = vmatmul.bf16.gmra.mxu0 %v5128
        %v5266 = vpop.f32.mrf.mxu0
        %v5267 = vadd.f32 0.0, %v5266
        %v5268 = vpop.f32.mrf.mxu0
        %v5269 = vadd.f32 0.0, %v5268
        %5270 = vdwg.mxu0
        %v5271 = vadd.f32 %v5041, %v5223
        %v5272 = vadd.f32 %v5042, %v5252
        %v5273 = vadd.f32 %v5043, %v5225
        %v5274 = vadd.f32 %v5044, %v5254
        %v5275 = vadd.f32 %v5045, %v5228
        %v5276 = vadd.f32 %v5046, %v5257
        %v5277 = vadd.f32 %v5047, %v5230
        %v5278 = vadd.f32 %v5048, %v5259
        %v5279 = vadd.f32 %v5049, %v5233
        %v5280 = vadd.f32 %v5050, %v5262
        %v5281 = vadd.f32 %v5051, %v5235
        %v5282 = vadd.f32 %v5052, %v5264
        %v5283 = vadd.f32 %v5053, %v5238
        %v5284 = vadd.f32 %v5054, %v5267
        %v5285 = vadd.f32 %v5055, %v5240
        %v5286 = vadd.f32 %v5056, %v5269
        %v5287 = vmul.f32 %v5271, %v3036
        %v5288 = vmul.f32 %v5272, %v3037
        %v5289 = vmul.f32 %v5273, %v3036
        %v5290 = vmul.f32 %v5274, %v3037
        %v5291 = vmul.f32 %v5275, %v3036
        %v5292 = vmul.f32 %v5276, %v3037
        %v5293 = vmul.f32 %v5277, %v3036
        %v5294 = vmul.f32 %v5278, %v3037
        %v5295 = vmul.f32 %v5279, %v3036
        %v5296 = vmul.f32 %v5280, %v3037
        %v5297 = vmul.f32 %v5281, %v3036
        %v5298 = vmul.f32 %v5282, %v3037
        %v5299 = vmul.f32 %v5283, %v3036
        %v5300 = vmul.f32 %v5284, %v3037
        %v5301 = vmul.f32 %v5285, %v3036
        %v5302 = vmul.f32 %v5286, %v3037
        %v5303 = vadd.f32 %v5287, %v3065
        %v5304 = vadd.f32 %v5288, %v3066
        %v5305 = vadd.f32 %v5289, %v3065
        %v5306 = vadd.f32 %v5290, %v3066
        %v5307 = vadd.f32 %v5291, %v3065
        %v5308 = vadd.f32 %v5292, %v3066
        %v5309 = vadd.f32 %v5293, %v3065
        %v5310 = vadd.f32 %v5294, %v3066
        %v5311 = vadd.f32 %v5295, %v3065
        %v5312 = vadd.f32 %v5296, %v3066
        %v5313 = vadd.f32 %v5297, %v3065
        %v5314 = vadd.f32 %v5298, %v3066
        %v5315 = vadd.f32 %v5299, %v3065
        %v5316 = vadd.f32 %v5300, %v3066
        %v5317 = vadd.f32 %v5301, %v3065
        %v5318 = vadd.f32 %v5302, %v3066
        %v5319 = vmax.f32 %v5303, 0.0
        %v5320 = vmax.f32 %v5304, 0.0
        %v5321 = vmax.f32 %v5305, 0.0
        %v5322 = vmax.f32 %v5306, 0.0
        %v5323 = vmax.f32 %v5307, 0.0
        %v5324 = vmax.f32 %v5308, 0.0
        %v5325 = vmax.f32 %v5309, 0.0
        %v5326 = vmax.f32 %v5310, 0.0
        %v5327 = vmax.f32 %v5311, 0.0
        %v5328 = vmax.f32 %v5312, 0.0
        %v5329 = vmax.f32 %v5313, 0.0
        %v5330 = vmax.f32 %v5314, 0.0
        %v5331 = vmax.f32 %v5315, 0.0
        %v5332 = vmax.f32 %v5316, 0.0
        %v5333 = vmax.f32 %v5317, 0.0
        %v5334 = vmax.f32 %v5318, 0.0
        %v5335 = vpack.c.bf16 %v5320, %v5319
        %v5336 = vpack.c.bf16 %v5322, %v5321
        %v5337 = vpack.c.bf16 %v5324, %v5323
        %v5338 = vpack.c.bf16 %v5326, %v5325
        %v5339 = vpack.c.bf16 %v5328, %v5327
        %v5340 = vpack.c.bf16 %v5330, %v5329
        %v5341 = vpack.c.bf16 %v5332, %v5331
        %v5342 = vpack.c.bf16 %v5334, %v5333
        %s5343 = scalar_lea.vmem [#allocation2], 192
        %5344 = vst [vmem:[%s5343 + $0x8] sm:$0xff] %v5335
        %5345 = vst [vmem:[%s5343 + $0x10] sm:$0xff] %v5336
        %5346 = vst [vmem:[%s5343 + $0x28] sm:$0xff] %v5337
        %5347 = vst [vmem:[%s5343 + $0x30] sm:$0xff] %v5338
        %5348 = vst [vmem:[%s5343 + $0x48] sm:$0xff] %v5339
        %5349 = vst [vmem:[%s5343 + $0x50] sm:$0xff] %v5340
        %5350 = vst [vmem:[%s5343 + $0x68] sm:$0xff] %v5341
        %5351 = vst [vmem:[%s5343 + $0x70] sm:$0xff] %v5342
        // Predicated region
        $region53: #{conv_block_forward.1} parent=47 // pred_check
          %p5352 = pneg %p298
        $region54: #{conv_block_forward.1} parent=47 // pred_check_branch
          %5354 = sbr.rel (%p5352) target = $region56
        $region55: #{conv_block_forward.1} parent=47 // pred_region
          %5355 = vst [vmem:[#allocation2] sm:$0xff] 0
          %5356 = vst [vmem:[#allocation2 + $0x8] sm:$0xff] 0
          %5357 = vst [vmem:[#allocation2 + $0x10] sm:$0xff] 0
          %5358 = vst [vmem:[#allocation2 + $0x18] sm:$0xff] 0
        $region56: #{conv_block_forward.1} parent=47 // pred_fallthru
          _
        %p5359 = scmp.eq.s32.totalorder %s26, 1
        // Predicated region
        $region57: #{conv_block_forward.1} parent=47 // pred_check
          %p5360 = pneg %p5359
        $region58: #{conv_block_forward.1} parent=47 // pred_check_branch
          %5362 = sbr.rel (%p5360) target = $region60
        $region59: #{conv_block_forward.1} parent=47 // pred_region
          %s5363 = scalar_lea.vmem [#allocation2], 288
          %5364 = vst [vmem:[%s5363] sm:$0xff] 0
          %5365 = vst [vmem:[%s5363 + $0x8] sm:$0xff] 0
          %5366 = vst [vmem:[%s5363 + $0x10] sm:$0xff] 0
          %5367 = vst [vmem:[%s5363 + $0x18] sm:$0xff] 0
        $region60: #{conv_block_forward.1} parent=47 // pred_fallthru
          _
        %v5368 = vld [vmem:[#allocation2] sm:$0x88]
        %v5369 = vld [vmem:[#allocation2 + $0x8] sm:$0xff]
        %v5370 = vld [vmem:[#allocation2 + $0x10] sm:$0xff]
        %v5371 = vld [vmem:[#allocation2 + $0x20] sm:$0x88]
        %v5372 = vld [vmem:[#allocation2 + $0x28] sm:$0xff]
        %v5373 = vld [vmem:[#allocation2 + $0x30] sm:$0xff]
        %v5374 = vld [vmem:[#allocation2 + $0x40] sm:$0x88]
        %v5375 = vld [vmem:[#allocation2 + $0x48] sm:$0xff]
        %v5376 = vld [vmem:[#allocation2 + $0x50] sm:$0xff]
        %v5377 = vld [vmem:[#allocation2 + $0x60] sm:$0x88]
        %v5378 = vld [vmem:[#allocation2 + $0x68] sm:$0xff]
        %v5379 = vld [vmem:[#allocation2 + $0x70] sm:$0xff]
        %v5380 = vld [vmem:[#allocation2 + $0x80] sm:$0x88]
        %v5381 = vld [vmem:[#allocation2 + $0x88] sm:$0xff]
        %v5382 = vld [vmem:[#allocation2 + $0x90] sm:$0xff]
        %v5383 = vld [vmem:[#allocation2 + $0xa0] sm:$0x88]
        %v5384 = vld [vmem:[#allocation2 + $0xa8] sm:$0xff]
        %v5385 = vld [vmem:[#allocation2 + $0xb0] sm:$0xff]
        %v5386 = vld [vmem:[#allocation2 + $0xc0] sm:$0x88]
        %v5387 = vld [vmem:[#allocation2 + $0xc8] sm:$0xff]
        %v5388 = vld [vmem:[#allocation2 + $0xd0] sm:$0xff]
        %v5389 = vld [vmem:[#allocation2 + $0xe0] sm:$0x88]
        %v5390 = vld [vmem:[#allocation2 + $0xe8] sm:$0xff]
        %v5391 = vld [vmem:[#allocation2 + $0xf0] sm:$0xff]
        %vm5392 = vsmask.f32 256
        %vm5393 = vsmask.f32 4368
        %vm5394 = vmor %vm5392, %vm5393
        %v5396 = vshrl.u32 %v5368, 16
        %v5398 = vrot.slane %v5396, 7
        %v5399 = vrot.slane %v5398, 4
        %v5401 = vshrl.u32 %v5369, 16
        %v5403 = vrot.slane %v5401, 7
        %v5404 = vshll.u32 %v5369, 16
        %v5406 = vor.u32 %v5403, %v5404
        %v5407 = vsel %vm5394, %v5399, %v5406
        %v5408 = vrot.slane %v5403, 4
        %v5410 = vshrl.u32 %v5370, 16
        %v5412 = vrot.slane %v5410, 7
        %v5413 = vshll.u32 %v5370, 16
        %v5415 = vor.u32 %v5412, %v5413
        %v5416 = vsel %vm5394, %v5408, %v5415
        %v5418 = vshrl.u32 %v5371, 16
        %v5420 = vrot.slane %v5418, 7
        %v5421 = vrot.slane %v5420, 4
        %v5423 = vshrl.u32 %v5372, 16
        %v5425 = vrot.slane %v5423, 7
        %v5426 = vshll.u32 %v5372, 16
        %v5428 = vor.u32 %v5425, %v5426
        %v5429 = vsel %vm5394, %v5421, %v5428
        %v5430 = vrot.slane %v5425, 4
        %v5432 = vshrl.u32 %v5373, 16
        %v5434 = vrot.slane %v5432, 7
        %v5435 = vshll.u32 %v5373, 16
        %v5437 = vor.u32 %v5434, %v5435
        %v5438 = vsel %vm5394, %v5430, %v5437
        %v5440 = vshrl.u32 %v5374, 16
        %v5442 = vrot.slane %v5440, 7
        %v5443 = vrot.slane %v5442, 4
        %v5445 = vshrl.u32 %v5375, 16
        %v5447 = vrot.slane %v5445, 7
        %v5448 = vshll.u32 %v5375, 16
        %v5450 = vor.u32 %v5447, %v5448
        %v5451 = vsel %vm5394, %v5443, %v5450
        %v5452 = vrot.slane %v5447, 4
        %v5454 = vshrl.u32 %v5376, 16
        %v5456 = vrot.slane %v5454, 7
        %v5457 = vshll.u32 %v5376, 16
        %v5459 = vor.u32 %v5456, %v5457
        %v5460 = vsel %vm5394, %v5452, %v5459
        %v5462 = vshrl.u32 %v5377, 16
        %v5464 = vrot.slane %v5462, 7
        %v5465 = vrot.slane %v5464, 4
        %v5467 = vshrl.u32 %v5378, 16
        %v5469 = vrot.slane %v5467, 7
        %v5470 = vshll.u32 %v5378, 16
        %v5472 = vor.u32 %v5469, %v5470
        %v5473 = vsel %vm5394, %v5465, %v5472
        %v5474 = vrot.slane %v5469, 4
        %v5476 = vshrl.u32 %v5379, 16
        %v5478 = vrot.slane %v5476, 7
        %v5479 = vshll.u32 %v5379, 16
        %v5481 = vor.u32 %v5478, %v5479
        %v5482 = vsel %vm5394, %v5474, %v5481
        %v5484 = vshrl.u32 %v5380, 16
        %v5486 = vrot.slane %v5484, 7
        %v5487 = vrot.slane %v5486, 4
        %v5489 = vshrl.u32 %v5381, 16
        %v5491 = vrot.slane %v5489, 7
        %v5492 = vshll.u32 %v5381, 16
        %v5494 = vor.u32 %v5491, %v5492
        %v5495 = vsel %vm5394, %v5487, %v5494
        %v5496 = vrot.slane %v5491, 4
        %v5498 = vshrl.u32 %v5382, 16
        %v5500 = vrot.slane %v5498, 7
        %v5501 = vshll.u32 %v5382, 16
        %v5503 = vor.u32 %v5500, %v5501
        %v5504 = vsel %vm5394, %v5496, %v5503
        %v5506 = vshrl.u32 %v5383, 16
        %v5508 = vrot.slane %v5506, 7
        %v5509 = vrot.slane %v5508, 4
        %v5511 = vshrl.u32 %v5384, 16
        %v5513 = vrot.slane %v5511, 7
        %v5514 = vshll.u32 %v5384, 16
        %v5516 = vor.u32 %v5513, %v5514
        %v5517 = vsel %vm5394, %v5509, %v5516
        %v5518 = vrot.slane %v5513, 4
        %v5520 = vshrl.u32 %v5385, 16
        %v5522 = vrot.slane %v5520, 7
        %v5523 = vshll.u32 %v5385, 16
        %v5525 = vor.u32 %v5522, %v5523
        %v5526 = vsel %vm5394, %v5518, %v5525
        %v5528 = vshrl.u32 %v5386, 16
        %v5530 = vrot.slane %v5528, 7
        %v5531 = vrot.slane %v5530, 4
        %v5533 = vshrl.u32 %v5387, 16
        %v5535 = vrot.slane %v5533, 7
        %v5536 = vshll.u32 %v5387, 16
        %v5538 = vor.u32 %v5535, %v5536
        %v5539 = vsel %vm5394, %v5531, %v5538
        %v5540 = vrot.slane %v5535, 4
        %v5542 = vshrl.u32 %v5388, 16
        %v5544 = vrot.slane %v5542, 7
        %v5545 = vshll.u32 %v5388, 16
        %v5547 = vor.u32 %v5544, %v5545
        %v5548 = vsel %vm5394, %v5540, %v5547
        %v5550 = vshrl.u32 %v5389, 16
        %v5552 = vrot.slane %v5550, 7
        %v5553 = vrot.slane %v5552, 4
        %v5555 = vshrl.u32 %v5390, 16
        %v5557 = vrot.slane %v5555, 7
        %v5558 = vshll.u32 %v5390, 16
        %v5560 = vor.u32 %v5557, %v5558
        %v5561 = vsel %vm5394, %v5553, %v5560
        %v5562 = vrot.slane %v5557, 4
        %v5564 = vshrl.u32 %v5391, 16
        %v5566 = vrot.slane %v5564, 7
        %v5567 = vshll.u32 %v5391, 16
        %v5569 = vor.u32 %v5566, %v5567
        %v5570 = vsel %vm5394, %v5562, %v5569
        %v5571 = vld [vmem:[%s2] sm:$0xf]
        %v5572 = vld [vmem:[%s2 + $0x4] sm:$0xf]
        %v5573 = vld [vmem:[%s2 + $0x8] sm:$0xf]
        %v5574 = vld [vmem:[%s2 + $0xc] sm:$0xf]
        %v5575 = vld [vmem:[%s2 + $0x10] sm:$0xf]
        %v5576 = vld [vmem:[%s2 + $0x14] sm:$0xf]
        %v5577 = vld [vmem:[%s2 + $0x18] sm:$0xf]
        %v5578 = vld [vmem:[%s2 + $0x1c] sm:$0xf]
        %v5579 = vld [vmem:[%s2 + $0x20] sm:$0xf]
        %v5580 = vld [vmem:[%s2 + $0x24] sm:$0xf]
        %v5581 = vld [vmem:[%s2 + $0x28] sm:$0xf]
        %v5582 = vld [vmem:[%s2 + $0x2c] sm:$0xf]
        %v5583 = vld [vmem:[%s2 + $0x30] sm:$0xf]
        %v5584 = vld [vmem:[%s2 + $0x34] sm:$0xf]
        %v5585 = vld [vmem:[%s2 + $0x38] sm:$0xf]
        %v5586 = vld [vmem:[%s2 + $0x3c] sm:$0xf]
        %v5587 = vld [vmem:[%s2 + $0x40] sm:$0xf]
        %v5588 = vld [vmem:[%s2 + $0x44] sm:$0xf]
        %v5589 = vld [vmem:[%s2 + $0x48] sm:$0xf]
        %v5590 = vld [vmem:[%s2 + $0x4c] sm:$0xf]
        %v5591 = vld [vmem:[%s2 + $0x50] sm:$0xf]
        %v5592 = vld [vmem:[%s2 + $0x54] sm:$0xf]
        %v5593 = vld [vmem:[%s2 + $0x58] sm:$0xf]
        %v5594 = vld [vmem:[%s2 + $0x5c] sm:$0xf]
        %v5595 = vld [vmem:[%s2 + $0x60] sm:$0xf]
        %v5596 = vld [vmem:[%s2 + $0x64] sm:$0xf]
        %v5597 = vld [vmem:[%s2 + $0x68] sm:$0xf]
        %v5598 = vld [vmem:[%s2 + $0x6c] sm:$0xf]
        %v5599 = vld [vmem:[%s2 + $0x70] sm:$0xf]
        %v5600 = vld [vmem:[%s2 + $0x74] sm:$0xf]
        %v5601 = vld [vmem:[%s2 + $0x78] sm:$0xf]
        %v5602 = vld [vmem:[%s2 + $0x7c] sm:$0xf]
        %s5603 = scalar_lea.vmem %s2, 128
        %v5604 = vld [vmem:[%s5603] sm:$0xf]
        %v5605 = vld [vmem:[%s5603 + $0x4] sm:$0xf]
        %v5606 = vld [vmem:[%s5603 + $0x8] sm:$0xf]
        %v5607 = vld [vmem:[%s5603 + $0xc] sm:$0xf]
        %v5608 = vld [vmem:[%s5603 + $0x10] sm:$0xf]
        %v5609 = vld [vmem:[%s5603 + $0x14] sm:$0xf]
        %v5610 = vld [vmem:[%s5603 + $0x18] sm:$0xf]
        %v5611 = vld [vmem:[%s5603 + $0x1c] sm:$0xf]
        %v5612 = vld [vmem:[%s5603 + $0x20] sm:$0xf]
        %v5613 = vld [vmem:[%s5603 + $0x24] sm:$0xf]
        %v5614 = vld [vmem:[%s5603 + $0x28] sm:$0xf]
        %v5615 = vld [vmem:[%s5603 + $0x2c] sm:$0xf]
        %v5616 = vld [vmem:[%s5603 + $0x30] sm:$0xf]
        %v5617 = vld [vmem:[%s5603 + $0x34] sm:$0xf]
        %v5618 = vld [vmem:[%s5603 + $0x38] sm:$0xf]
        %v5619 = vld [vmem:[%s5603 + $0x3c] sm:$0xf]
        %v5620 = vld [vmem:[%s5603 + $0x40] sm:$0xf]
        %v5621 = vld [vmem:[%s5603 + $0x44] sm:$0xf]
        %v5622 = vld [vmem:[%s5603 + $0x48] sm:$0xf]
        %v5623 = vld [vmem:[%s5603 + $0x4c] sm:$0xf]
        %v5624 = vld [vmem:[%s5603 + $0x50] sm:$0xf]
        %v5625 = vld [vmem:[%s5603 + $0x54] sm:$0xf]
        %v5626 = vld [vmem:[%s5603 + $0x58] sm:$0xf]
        %v5627 = vld [vmem:[%s5603 + $0x5c] sm:$0xf]
        %v5628 = vld [vmem:[%s5603 + $0x60] sm:$0xf]
        %v5629 = vld [vmem:[%s5603 + $0x64] sm:$0xf]
        %v5630 = vld [vmem:[%s5603 + $0x68] sm:$0xf]
        %v5631 = vld [vmem:[%s5603 + $0x6c] sm:$0xf]
        %v5632 = vld [vmem:[%s5603 + $0x70] sm:$0xf]
        %v5633 = vld [vmem:[%s5603 + $0x74] sm:$0xf]
        %v5634 = vld [vmem:[%s5603 + $0x78] sm:$0xf]
        %v5635 = vld [vmem:[%s5603 + $0x7c] sm:$0xf]
        %v5652 = vunpack.c.l.b16 %v5369
        %v5653 = vunpack.c.h.b16 %v5369
        %v5654 = vunpack.c.l.b16 %v5370
        %v5655 = vunpack.c.h.b16 %v5370
        %v5656 = vunpack.c.l.b16 %v5372
        %v5657 = vunpack.c.h.b16 %v5372
        %v5658 = vunpack.c.l.b16 %v5373
        %v5659 = vunpack.c.h.b16 %v5373
        %v5660 = vunpack.c.l.b16 %v5375
        %v5661 = vunpack.c.h.b16 %v5375
        %v5662 = vunpack.c.l.b16 %v5376
        %v5663 = vunpack.c.h.b16 %v5376
        %v5664 = vunpack.c.l.b16 %v5378
        %v5665 = vunpack.c.h.b16 %v5378
        %v5666 = vunpack.c.l.b16 %v5379
        %v5667 = vunpack.c.h.b16 %v5379
        %v5668 = vunpack.c.l.b16 %v5381
        %v5669 = vunpack.c.h.b16 %v5381
        %v5670 = vunpack.c.l.b16 %v5382
        %v5671 = vunpack.c.h.b16 %v5382
        %v5672 = vunpack.c.l.b16 %v5384
        %v5673 = vunpack.c.h.b16 %v5384
        %v5674 = vunpack.c.l.b16 %v5385
        %v5675 = vunpack.c.h.b16 %v5385
        %v5676 = vunpack.c.l.b16 %v5387
        %v5677 = vunpack.c.h.b16 %v5387
        %v5678 = vunpack.c.l.b16 %v5388
        %v5679 = vunpack.c.h.b16 %v5388
        %v5680 = vunpack.c.l.b16 %v5390
        %v5681 = vunpack.c.h.b16 %v5390
        %v5682 = vunpack.c.l.b16 %v5391
        %v5683 = vunpack.c.h.b16 %v5391
        %v5684 = vpack.c.b16 %v5654, %v5652
        %v5685 = vpack.c.b16 %v5655, %v5653
        %v5686 = vpack.c.b16 %v5658, %v5656
        %v5687 = vpack.c.b16 %v5659, %v5657
        %v5688 = vpack.c.b16 %v5662, %v5660
        %v5689 = vpack.c.b16 %v5663, %v5661
        %v5690 = vpack.c.b16 %v5666, %v5664
        %v5691 = vpack.c.b16 %v5667, %v5665
        %v5692 = vpack.c.b16 %v5670, %v5668
        %v5693 = vpack.c.b16 %v5671, %v5669
        %v5694 = vpack.c.b16 %v5674, %v5672
        %v5695 = vpack.c.b16 %v5675, %v5673
        %v5696 = vpack.c.b16 %v5678, %v5676
        %v5697 = vpack.c.b16 %v5679, %v5677
        %v5698 = vpack.c.b16 %v5682, %v5680
        %v5699 = vpack.c.b16 %v5683, %v5681
        %v5748 = vunpack.c.l.b16 %v5604
        %v5749 = vunpack.c.l.b16 %v5605
        %v5750 = vunpack.c.l.b16 %v5606
        %v5751 = vunpack.c.l.b16 %v5607
        %v5752 = vunpack.c.l.b16 %v5608
        %v5753 = vunpack.c.l.b16 %v5609
        %v5754 = vunpack.c.l.b16 %v5610
        %v5755 = vunpack.c.l.b16 %v5611
        %v5756 = vunpack.c.l.b16 %v5612
        %v5757 = vunpack.c.l.b16 %v5613
        %v5758 = vunpack.c.l.b16 %v5614
        %v5759 = vunpack.c.l.b16 %v5615
        %v5760 = vunpack.c.l.b16 %v5616
        %v5761 = vunpack.c.l.b16 %v5617
        %v5762 = vunpack.c.l.b16 %v5618
        %v5763 = vunpack.c.l.b16 %v5619
        %v5764 = vunpack.c.l.b16 %v5620
        %v5765 = vunpack.c.l.b16 %v5621
        %v5766 = vunpack.c.l.b16 %v5622
        %v5767 = vunpack.c.l.b16 %v5623
        %v5768 = vunpack.c.l.b16 %v5624
        %v5769 = vunpack.c.l.b16 %v5625
        %v5770 = vunpack.c.l.b16 %v5626
        %v5771 = vunpack.c.l.b16 %v5627
        %v5772 = vunpack.c.l.b16 %v5628
        %v5773 = vunpack.c.l.b16 %v5629
        %v5774 = vunpack.c.l.b16 %v5630
        %v5775 = vunpack.c.l.b16 %v5631
        %v5776 = vunpack.c.l.b16 %v5632
        %v5777 = vunpack.c.l.b16 %v5633
        %v5778 = vunpack.c.l.b16 %v5634
        %v5779 = vunpack.c.l.b16 %v5635
        %v5780 = vpack.c.b16 %v5749, %v5748
        %v5781 = vpack.c.b16 %v5751, %v5750
        %v5782 = vpack.c.b16 %v5753, %v5752
        %v5783 = vpack.c.b16 %v5755, %v5754
        %v5784 = vpack.c.b16 %v5757, %v5756
        %v5785 = vpack.c.b16 %v5759, %v5758
        %v5786 = vpack.c.b16 %v5761, %v5760
        %v5787 = vpack.c.b16 %v5763, %v5762
        %v5788 = vpack.c.b16 %v5765, %v5764
        %v5789 = vpack.c.b16 %v5767, %v5766
        %v5790 = vpack.c.b16 %v5769, %v5768
        %v5791 = vpack.c.b16 %v5771, %v5770
        %v5792 = vpack.c.b16 %v5773, %v5772
        %v5793 = vpack.c.b16 %v5775, %v5774
        %v5794 = vpack.c.b16 %v5777, %v5776
        %v5795 = vpack.c.b16 %v5779, %v5778
        %5812 = vmatpush.bf16.msra.mxu0 %v5787
        %5813 = vmatpush.bf16.msra.mxu0 %v5786
        %5814 = vmatpush.bf16.msra.mxu0 %v5785
        %5815 = vmatpush.bf16.msra.mxu0 %v5784
        %5816 = vmatpush.bf16.msra.mxu0 %v5783
        %5817 = vmatpush.bf16.msra.mxu0 %v5782
        %5818 = vmatpush.bf16.msra.mxu0 %v5781
        %5819 = vmatpush.bf16.msra.mxu0 %v5780
        %5820 = vmatmul.bf16.gmra.mxu0 %v5684
        %v5821 = vpop.f32.mrf.mxu0
        %v5822 = vadd.f32 0.0, %v5821
        %v5823 = vpop.f32.mrf.mxu0
        %v5824 = vadd.f32 0.0, %v5823
        %5825 = vmatmul.bf16.gmra.mxu0 %v5686
        %v5826 = vpop.f32.mrf.mxu0
        %v5827 = vadd.f32 0.0, %v5826
        %v5828 = vpop.f32.mrf.mxu0
        %v5829 = vadd.f32 0.0, %v5828
        %5830 = vmatmul.bf16.gmra.mxu0 %v5688
        %v5831 = vpop.f32.mrf.mxu0
        %v5832 = vadd.f32 0.0, %v5831
        %v5833 = vpop.f32.mrf.mxu0
        %v5834 = vadd.f32 0.0, %v5833
        %5835 = vmatmul.bf16.gmra.mxu0 %v5690
        %v5836 = vpop.f32.mrf.mxu0
        %v5837 = vadd.f32 0.0, %v5836
        %v5838 = vpop.f32.mrf.mxu0
        %v5839 = vadd.f32 0.0, %v5838
        %5840 = vmatmul.bf16.gmra.mxu0 %v5692
        %v5841 = vpop.f32.mrf.mxu0
        %v5842 = vadd.f32 0.0, %v5841
        %v5843 = vpop.f32.mrf.mxu0
        %v5844 = vadd.f32 0.0, %v5843
        %5845 = vmatmul.bf16.gmra.mxu0 %v5694
        %v5846 = vpop.f32.mrf.mxu0
        %v5847 = vadd.f32 0.0, %v5846
        %v5848 = vpop.f32.mrf.mxu0
        %v5849 = vadd.f32 0.0, %v5848
        %5850 = vmatmul.bf16.gmra.mxu0 %v5696
        %v5851 = vpop.f32.mrf.mxu0
        %v5852 = vadd.f32 0.0, %v5851
        %v5853 = vpop.f32.mrf.mxu0
        %v5854 = vadd.f32 0.0, %v5853
        %5855 = vmatmul.bf16.gmra.mxu0 %v5698
        %v5856 = vpop.f32.mrf.mxu0
        %v5857 = vadd.f32 0.0, %v5856
        %v5858 = vpop.f32.mrf.mxu0
        %v5859 = vadd.f32 0.0, %v5858
        %5860 = vdwg.mxu0
        %5861 = vmatpush.bf16.msra.mxu0 %v5795
        %5862 = vmatpush.bf16.msra.mxu0 %v5794
        %5863 = vmatpush.bf16.msra.mxu0 %v5793
        %5864 = vmatpush.bf16.msra.mxu0 %v5792
        %5865 = vmatpush.bf16.msra.mxu0 %v5791
        %5866 = vmatpush.bf16.msra.mxu0 %v5790
        %5867 = vmatpush.bf16.msra.mxu0 %v5789
        %5868 = vmatpush.bf16.msra.mxu0 %v5788
        %5869 = vmatmul.bf16.gmra.mxu0 %v5685
        %v5870 = vpop.f32.mrf.mxu0
        %v5871 = vadd.f32 %v5822, %v5870
        %v5872 = vpop.f32.mrf.mxu0
        %v5873 = vadd.f32 %v5824, %v5872
        %5874 = vmatmul.bf16.gmra.mxu0 %v5687
        %v5875 = vpop.f32.mrf.mxu0
        %v5876 = vadd.f32 %v5827, %v5875
        %v5877 = vpop.f32.mrf.mxu0
        %v5878 = vadd.f32 %v5829, %v5877
        %5879 = vmatmul.bf16.gmra.mxu0 %v5689
        %v5880 = vpop.f32.mrf.mxu0
        %v5881 = vadd.f32 %v5832, %v5880
        %v5882 = vpop.f32.mrf.mxu0
        %v5883 = vadd.f32 %v5834, %v5882
        %5884 = vmatmul.bf16.gmra.mxu0 %v5691
        %v5885 = vpop.f32.mrf.mxu0
        %v5886 = vadd.f32 %v5837, %v5885
        %v5887 = vpop.f32.mrf.mxu0
        %v5888 = vadd.f32 %v5839, %v5887
        %5889 = vmatmul.bf16.gmra.mxu0 %v5693
        %v5890 = vpop.f32.mrf.mxu0
        %v5891 = vadd.f32 %v5842, %v5890
        %v5892 = vpop.f32.mrf.mxu0
        %v5893 = vadd.f32 %v5844, %v5892
        %5894 = vmatmul.bf16.gmra.mxu0 %v5695
        %v5895 = vpop.f32.mrf.mxu0
        %v5896 = vadd.f32 %v5847, %v5895
        %v5897 = vpop.f32.mrf.mxu0
        %v5898 = vadd.f32 %v5849, %v5897
        %5899 = vmatmul.bf16.gmra.mxu0 %v5697
        %v5900 = vpop.f32.mrf.mxu0
        %v5901 = vadd.f32 %v5852, %v5900
        %v5902 = vpop.f32.mrf.mxu0
        %v5903 = vadd.f32 %v5854, %v5902
        %5904 = vmatmul.bf16.gmra.mxu0 %v5699
        %v5905 = vpop.f32.mrf.mxu0
        %v5906 = vadd.f32 %v5857, %v5905
        %v5907 = vpop.f32.mrf.mxu0
        %v5908 = vadd.f32 %v5859, %v5907
        %5909 = vdwg.mxu0
        %v5910 = vunpack.c.l.b16 %v5407
        %v5911 = vunpack.c.h.b16 %v5407
        %v5912 = vunpack.c.l.b16 %v5416
        %v5913 = vunpack.c.h.b16 %v5416
        %v5914 = vunpack.c.l.b16 %v5429
        %v5915 = vunpack.c.h.b16 %v5429
        %v5916 = vunpack.c.l.b16 %v5438
        %v5917 = vunpack.c.h.b16 %v5438
        %v5918 = vunpack.c.l.b16 %v5451
        %v5919 = vunpack.c.h.b16 %v5451
        %v5920 = vunpack.c.l.b16 %v5460
        %v5921 = vunpack.c.h.b16 %v5460
        %v5922 = vunpack.c.l.b16 %v5473
        %v5923 = vunpack.c.h.b16 %v5473
        %v5924 = vunpack.c.l.b16 %v5482
        %v5925 = vunpack.c.h.b16 %v5482
        %v5926 = vunpack.c.l.b16 %v5495
        %v5927 = vunpack.c.h.b16 %v5495
        %v5928 = vunpack.c.l.b16 %v5504
        %v5929 = vunpack.c.h.b16 %v5504
        %v5930 = vunpack.c.l.b16 %v5517
        %v5931 = vunpack.c.h.b16 %v5517
        %v5932 = vunpack.c.l.b16 %v5526
        %v5933 = vunpack.c.h.b16 %v5526
        %v5934 = vunpack.c.l.b16 %v5539
        %v5935 = vunpack.c.h.b16 %v5539
        %v5936 = vunpack.c.l.b16 %v5548
        %v5937 = vunpack.c.h.b16 %v5548
        %v5938 = vunpack.c.l.b16 %v5561
        %v5939 = vunpack.c.h.b16 %v5561
        %v5940 = vunpack.c.l.b16 %v5570
        %v5941 = vunpack.c.h.b16 %v5570
        %v5942 = vpack.c.b16 %v5912, %v5910
        %v5943 = vpack.c.b16 %v5913, %v5911
        %v5944 = vpack.c.b16 %v5916, %v5914
        %v5945 = vpack.c.b16 %v5917, %v5915
        %v5946 = vpack.c.b16 %v5920, %v5918
        %v5947 = vpack.c.b16 %v5921, %v5919
        %v5948 = vpack.c.b16 %v5924, %v5922
        %v5949 = vpack.c.b16 %v5925, %v5923
        %v5950 = vpack.c.b16 %v5928, %v5926
        %v5951 = vpack.c.b16 %v5929, %v5927
        %v5952 = vpack.c.b16 %v5932, %v5930
        %v5953 = vpack.c.b16 %v5933, %v5931
        %v5954 = vpack.c.b16 %v5936, %v5934
        %v5955 = vpack.c.b16 %v5937, %v5935
        %v5956 = vpack.c.b16 %v5940, %v5938
        %v5957 = vpack.c.b16 %v5941, %v5939
        %v6006 = vunpack.c.l.b16 %v5571
        %v6007 = vunpack.c.l.b16 %v5572
        %v6008 = vunpack.c.l.b16 %v5573
        %v6009 = vunpack.c.l.b16 %v5574
        %v6010 = vunpack.c.l.b16 %v5575
        %v6011 = vunpack.c.l.b16 %v5576
        %v6012 = vunpack.c.l.b16 %v5577
        %v6013 = vunpack.c.l.b16 %v5578
        %v6014 = vunpack.c.l.b16 %v5579
        %v6015 = vunpack.c.l.b16 %v5580
        %v6016 = vunpack.c.l.b16 %v5581
        %v6017 = vunpack.c.l.b16 %v5582
        %v6018 = vunpack.c.l.b16 %v5583
        %v6019 = vunpack.c.l.b16 %v5584
        %v6020 = vunpack.c.l.b16 %v5585
        %v6021 = vunpack.c.l.b16 %v5586
        %v6022 = vunpack.c.l.b16 %v5587
        %v6023 = vunpack.c.l.b16 %v5588
        %v6024 = vunpack.c.l.b16 %v5589
        %v6025 = vunpack.c.l.b16 %v5590
        %v6026 = vunpack.c.l.b16 %v5591
        %v6027 = vunpack.c.l.b16 %v5592
        %v6028 = vunpack.c.l.b16 %v5593
        %v6029 = vunpack.c.l.b16 %v5594
        %v6030 = vunpack.c.l.b16 %v5595
        %v6031 = vunpack.c.l.b16 %v5596
        %v6032 = vunpack.c.l.b16 %v5597
        %v6033 = vunpack.c.l.b16 %v5598
        %v6034 = vunpack.c.l.b16 %v5599
        %v6035 = vunpack.c.l.b16 %v5600
        %v6036 = vunpack.c.l.b16 %v5601
        %v6037 = vunpack.c.l.b16 %v5602
        %v6038 = vpack.c.b16 %v6007, %v6006
        %v6039 = vpack.c.b16 %v6009, %v6008
        %v6040 = vpack.c.b16 %v6011, %v6010
        %v6041 = vpack.c.b16 %v6013, %v6012
        %v6042 = vpack.c.b16 %v6015, %v6014
        %v6043 = vpack.c.b16 %v6017, %v6016
        %v6044 = vpack.c.b16 %v6019, %v6018
        %v6045 = vpack.c.b16 %v6021, %v6020
        %v6046 = vpack.c.b16 %v6023, %v6022
        %v6047 = vpack.c.b16 %v6025, %v6024
        %v6048 = vpack.c.b16 %v6027, %v6026
        %v6049 = vpack.c.b16 %v6029, %v6028
        %v6050 = vpack.c.b16 %v6031, %v6030
        %v6051 = vpack.c.b16 %v6033, %v6032
        %v6052 = vpack.c.b16 %v6035, %v6034
        %v6053 = vpack.c.b16 %v6037, %v6036
        %6070 = vmatpush.bf16.msra.mxu0 %v6045
        %6071 = vmatpush.bf16.msra.mxu0 %v6044
        %6072 = vmatpush.bf16.msra.mxu0 %v6043
        %6073 = vmatpush.bf16.msra.mxu0 %v6042
        %6074 = vmatpush.bf16.msra.mxu0 %v6041
        %6075 = vmatpush.bf16.msra.mxu0 %v6040
        %6076 = vmatpush.bf16.msra.mxu0 %v6039
        %6077 = vmatpush.bf16.msra.mxu0 %v6038
        %6078 = vmatmul.bf16.gmra.mxu0 %v5942
        %v6079 = vpop.f32.mrf.mxu0
        %v6080 = vadd.f32 %v5871, %v6079
        %v6081 = vpop.f32.mrf.mxu0
        %v6082 = vadd.f32 %v5873, %v6081
        %6083 = vmatmul.bf16.gmra.mxu0 %v5944
        %v6084 = vpop.f32.mrf.mxu0
        %v6085 = vadd.f32 %v5876, %v6084
        %v6086 = vpop.f32.mrf.mxu0
        %v6087 = vadd.f32 %v5878, %v6086
        %6088 = vmatmul.bf16.gmra.mxu0 %v5946
        %v6089 = vpop.f32.mrf.mxu0
        %v6090 = vadd.f32 %v5881, %v6089
        %v6091 = vpop.f32.mrf.mxu0
        %v6092 = vadd.f32 %v5883, %v6091
        %6093 = vmatmul.bf16.gmra.mxu0 %v5948
        %v6094 = vpop.f32.mrf.mxu0
        %v6095 = vadd.f32 %v5886, %v6094
        %v6096 = vpop.f32.mrf.mxu0
        %v6097 = vadd.f32 %v5888, %v6096
        %6098 = vmatmul.bf16.gmra.mxu0 %v5950
        %v6099 = vpop.f32.mrf.mxu0
        %v6100 = vadd.f32 %v5891, %v6099
        %v6101 = vpop.f32.mrf.mxu0
        %v6102 = vadd.f32 %v5893, %v6101
        %6103 = vmatmul.bf16.gmra.mxu0 %v5952
        %v6104 = vpop.f32.mrf.mxu0
        %v6105 = vadd.f32 %v5896, %v6104
        %v6106 = vpop.f32.mrf.mxu0
        %v6107 = vadd.f32 %v5898, %v6106
        %6108 = vmatmul.bf16.gmra.mxu0 %v5954
        %v6109 = vpop.f32.mrf.mxu0
        %v6110 = vadd.f32 %v5901, %v6109
        %v6111 = vpop.f32.mrf.mxu0
        %v6112 = vadd.f32 %v5903, %v6111
        %6113 = vmatmul.bf16.gmra.mxu0 %v5956
        %v6114 = vpop.f32.mrf.mxu0
        %v6115 = vadd.f32 %v5906, %v6114
        %v6116 = vpop.f32.mrf.mxu0
        %v6117 = vadd.f32 %v5908, %v6116
        %6118 = vdwg.mxu0
        %6119 = vmatpush.bf16.msra.mxu0 %v6053
        %6120 = vmatpush.bf16.msra.mxu0 %v6052
        %6121 = vmatpush.bf16.msra.mxu0 %v6051
        %6122 = vmatpush.bf16.msra.mxu0 %v6050
        %6123 = vmatpush.bf16.msra.mxu0 %v6049
        %6124 = vmatpush.bf16.msra.mxu0 %v6048
        %6125 = vmatpush.bf16.msra.mxu0 %v6047
        %6126 = vmatpush.bf16.msra.mxu0 %v6046
        %6127 = vmatmul.bf16.gmra.mxu0 %v5943
        %v6128 = vpop.f32.mrf.mxu0
        %v6129 = vadd.f32 %v6080, %v6128
        %v6130 = vpop.f32.mrf.mxu0
        %v6131 = vadd.f32 %v6082, %v6130
        %6132 = vmatmul.bf16.gmra.mxu0 %v5945
        %v6133 = vpop.f32.mrf.mxu0
        %v6134 = vadd.f32 %v6085, %v6133
        %v6135 = vpop.f32.mrf.mxu0
        %v6136 = vadd.f32 %v6087, %v6135
        %6137 = vmatmul.bf16.gmra.mxu0 %v5947
        %v6138 = vpop.f32.mrf.mxu0
        %v6139 = vadd.f32 %v6090, %v6138
        %v6140 = vpop.f32.mrf.mxu0
        %v6141 = vadd.f32 %v6092, %v6140
        %6142 = vmatmul.bf16.gmra.mxu0 %v5949
        %v6143 = vpop.f32.mrf.mxu0
        %v6144 = vadd.f32 %v6095, %v6143
        %v6145 = vpop.f32.mrf.mxu0
        %v6146 = vadd.f32 %v6097, %v6145
        %6147 = vmatmul.bf16.gmra.mxu0 %v5951
        %v6148 = vpop.f32.mrf.mxu0
        %v6149 = vadd.f32 %v6100, %v6148
        %v6150 = vpop.f32.mrf.mxu0
        %v6151 = vadd.f32 %v6102, %v6150
        %6152 = vmatmul.bf16.gmra.mxu0 %v5953
        %v6153 = vpop.f32.mrf.mxu0
        %v6154 = vadd.f32 %v6105, %v6153
        %v6155 = vpop.f32.mrf.mxu0
        %v6156 = vadd.f32 %v6107, %v6155
        %6157 = vmatmul.bf16.gmra.mxu0 %v5955
        %v6158 = vpop.f32.mrf.mxu0
        %v6159 = vadd.f32 %v6110, %v6158
        %v6160 = vpop.f32.mrf.mxu0
        %v6161 = vadd.f32 %v6112, %v6160
        %6162 = vmatmul.bf16.gmra.mxu0 %v5957
        %v6163 = vpop.f32.mrf.mxu0
        %v6164 = vadd.f32 %v6115, %v6163
        %v6165 = vpop.f32.mrf.mxu0
        %v6166 = vadd.f32 %v6117, %v6165
        %6167 = vdwg.mxu0
        %v6168 = vld [vmem:[#allocation2 + $0x8] sm:$0xff]
        %v6169 = vld [vmem:[#allocation2 + $0x10] sm:$0xff]
        %v6170 = vld [vmem:[#allocation2 + $0x18] sm:$0x11]
        %v6171 = vld [vmem:[#allocation2 + $0x28] sm:$0xff]
        %v6172 = vld [vmem:[#allocation2 + $0x30] sm:$0xff]
        %v6173 = vld [vmem:[#allocation2 + $0x38] sm:$0x11]
        %v6174 = vld [vmem:[#allocation2 + $0x48] sm:$0xff]
        %v6175 = vld [vmem:[#allocation2 + $0x50] sm:$0xff]
        %v6176 = vld [vmem:[#allocation2 + $0x58] sm:$0x11]
        %v6177 = vld [vmem:[#allocation2 + $0x68] sm:$0xff]
        %v6178 = vld [vmem:[#allocation2 + $0x70] sm:$0xff]
        %v6179 = vld [vmem:[#allocation2 + $0x78] sm:$0x11]
        %v6180 = vld [vmem:[#allocation2 + $0x88] sm:$0xff]
        %v6181 = vld [vmem:[#allocation2 + $0x90] sm:$0xff]
        %v6182 = vld [vmem:[#allocation2 + $0x98] sm:$0x11]
        %v6183 = vld [vmem:[#allocation2 + $0xa8] sm:$0xff]
        %v6184 = vld [vmem:[#allocation2 + $0xb0] sm:$0xff]
        %v6185 = vld [vmem:[#allocation2 + $0xb8] sm:$0x11]
        %v6186 = vld [vmem:[#allocation2 + $0xc8] sm:$0xff]
        %v6187 = vld [vmem:[#allocation2 + $0xd0] sm:$0xff]
        %v6188 = vld [vmem:[#allocation2 + $0xd8] sm:$0x11]
        %v6189 = vld [vmem:[#allocation2 + $0xe8] sm:$0xff]
        %v6190 = vld [vmem:[#allocation2 + $0xf0] sm:$0xff]
        %v6191 = vld [vmem:[#allocation2 + $0xf8] sm:$0x11]
        %v6193 = vshrl.u32 %v6168, 16
        %v6195 = vrot.slane %v6193, 4
        %v6196 = vshll.u32 %v6168, 16
        %v6198 = vrot.slane %v6196, 5
        %v6199 = vor.u32 %v6195, %v6198
        %v6200 = vrot.slane %v6199, 4
        %v6202 = vshll.u32 %v6169, 16
        %v6204 = vrot.slane %v6202, 5
        %v6205 = vsel %vm361, %v6200, %v6204
        %v6206 = vshrl.u32 %v6169, 16
        %v6208 = vrot.slane %v6206, 4
        %v6209 = vor.u32 %v6208, %v6204
        %v6210 = vrot.slane %v6209, 4
        %v6212 = vshll.u32 %v6170, 16
        %v6214 = vrot.slane %v6212, 5
        %v6215 = vsel %vm361, %v6210, %v6214
        %v6217 = vshrl.u32 %v6171, 16
        %v6219 = vrot.slane %v6217, 4
        %v6220 = vshll.u32 %v6171, 16
        %v6222 = vrot.slane %v6220, 5
        %v6223 = vor.u32 %v6219, %v6222
        %v6224 = vrot.slane %v6223, 4
        %v6226 = vshll.u32 %v6172, 16
        %v6228 = vrot.slane %v6226, 5
        %v6229 = vsel %vm361, %v6224, %v6228
        %v6230 = vshrl.u32 %v6172, 16
        %v6232 = vrot.slane %v6230, 4
        %v6233 = vor.u32 %v6232, %v6228
        %v6234 = vrot.slane %v6233, 4
        %v6236 = vshll.u32 %v6173, 16
        %v6238 = vrot.slane %v6236, 5
        %v6239 = vsel %vm361, %v6234, %v6238
        %v6241 = vshrl.u32 %v6174, 16
        %v6243 = vrot.slane %v6241, 4
        %v6244 = vshll.u32 %v6174, 16
        %v6246 = vrot.slane %v6244, 5
        %v6247 = vor.u32 %v6243, %v6246
        %v6248 = vrot.slane %v6247, 4
        %v6250 = vshll.u32 %v6175, 16
        %v6252 = vrot.slane %v6250, 5
        %v6253 = vsel %vm361, %v6248, %v6252
        %v6254 = vshrl.u32 %v6175, 16
        %v6256 = vrot.slane %v6254, 4
        %v6257 = vor.u32 %v6256, %v6252
        %v6258 = vrot.slane %v6257, 4
        %v6260 = vshll.u32 %v6176, 16
        %v6262 = vrot.slane %v6260, 5
        %v6263 = vsel %vm361, %v6258, %v6262
        %v6265 = vshrl.u32 %v6177, 16
        %v6267 = vrot.slane %v6265, 4
        %v6268 = vshll.u32 %v6177, 16
        %v6270 = vrot.slane %v6268, 5
        %v6271 = vor.u32 %v6267, %v6270
        %v6272 = vrot.slane %v6271, 4
        %v6274 = vshll.u32 %v6178, 16
        %v6276 = vrot.slane %v6274, 5
        %v6277 = vsel %vm361, %v6272, %v6276
        %v6278 = vshrl.u32 %v6178, 16
        %v6280 = vrot.slane %v6278, 4
        %v6281 = vor.u32 %v6280, %v6276
        %v6282 = vrot.slane %v6281, 4
        %v6284 = vshll.u32 %v6179, 16
        %v6286 = vrot.slane %v6284, 5
        %v6287 = vsel %vm361, %v6282, %v6286
        %v6289 = vshrl.u32 %v6180, 16
        %v6291 = vrot.slane %v6289, 4
        %v6292 = vshll.u32 %v6180, 16
        %v6294 = vrot.slane %v6292, 5
        %v6295 = vor.u32 %v6291, %v6294
        %v6296 = vrot.slane %v6295, 4
        %v6298 = vshll.u32 %v6181, 16
        %v6300 = vrot.slane %v6298, 5
        %v6301 = vsel %vm361, %v6296, %v6300
        %v6302 = vshrl.u32 %v6181, 16
        %v6304 = vrot.slane %v6302, 4
        %v6305 = vor.u32 %v6304, %v6300
        %v6306 = vrot.slane %v6305, 4
        %v6308 = vshll.u32 %v6182, 16
        %v6310 = vrot.slane %v6308, 5
        %v6311 = vsel %vm361, %v6306, %v6310
        %v6313 = vshrl.u32 %v6183, 16
        %v6315 = vrot.slane %v6313, 4
        %v6316 = vshll.u32 %v6183, 16
        %v6318 = vrot.slane %v6316, 5
        %v6319 = vor.u32 %v6315, %v6318
        %v6320 = vrot.slane %v6319, 4
        %v6322 = vshll.u32 %v6184, 16
        %v6324 = vrot.slane %v6322, 5
        %v6325 = vsel %vm361, %v6320, %v6324
        %v6326 = vshrl.u32 %v6184, 16
        %v6328 = vrot.slane %v6326, 4
        %v6329 = vor.u32 %v6328, %v6324
        %v6330 = vrot.slane %v6329, 4
        %v6332 = vshll.u32 %v6185, 16
        %v6334 = vrot.slane %v6332, 5
        %v6335 = vsel %vm361, %v6330, %v6334
        %v6337 = vshrl.u32 %v6186, 16
        %v6339 = vrot.slane %v6337, 4
        %v6340 = vshll.u32 %v6186, 16
        %v6342 = vrot.slane %v6340, 5
        %v6343 = vor.u32 %v6339, %v6342
        %v6344 = vrot.slane %v6343, 4
        %v6346 = vshll.u32 %v6187, 16
        %v6348 = vrot.slane %v6346, 5
        %v6349 = vsel %vm361, %v6344, %v6348
        %v6350 = vshrl.u32 %v6187, 16
        %v6352 = vrot.slane %v6350, 4
        %v6353 = vor.u32 %v6352, %v6348
        %v6354 = vrot.slane %v6353, 4
        %v6356 = vshll.u32 %v6188, 16
        %v6358 = vrot.slane %v6356, 5
        %v6359 = vsel %vm361, %v6354, %v6358
        %v6361 = vshrl.u32 %v6189, 16
        %v6363 = vrot.slane %v6361, 4
        %v6364 = vshll.u32 %v6189, 16
        %v6366 = vrot.slane %v6364, 5
        %v6367 = vor.u32 %v6363, %v6366
        %v6368 = vrot.slane %v6367, 4
        %v6370 = vshll.u32 %v6190, 16
        %v6372 = vrot.slane %v6370, 5
        %v6373 = vsel %vm361, %v6368, %v6372
        %v6374 = vshrl.u32 %v6190, 16
        %v6376 = vrot.slane %v6374, 4
        %v6377 = vor.u32 %v6376, %v6372
        %v6378 = vrot.slane %v6377, 4
        %v6380 = vshll.u32 %v6191, 16
        %v6382 = vrot.slane %v6380, 5
        %v6383 = vsel %vm361, %v6378, %v6382
        %s6384 = scalar_lea.vmem %s2, 256
        %v6385 = vld [vmem:[%s6384] sm:$0xf]
        %v6386 = vld [vmem:[%s6384 + $0x4] sm:$0xf]
        %v6387 = vld [vmem:[%s6384 + $0x8] sm:$0xf]
        %v6388 = vld [vmem:[%s6384 + $0xc] sm:$0xf]
        %v6389 = vld [vmem:[%s6384 + $0x10] sm:$0xf]
        %v6390 = vld [vmem:[%s6384 + $0x14] sm:$0xf]
        %v6391 = vld [vmem:[%s6384 + $0x18] sm:$0xf]
        %v6392 = vld [vmem:[%s6384 + $0x1c] sm:$0xf]
        %v6393 = vld [vmem:[%s6384 + $0x20] sm:$0xf]
        %v6394 = vld [vmem:[%s6384 + $0x24] sm:$0xf]
        %v6395 = vld [vmem:[%s6384 + $0x28] sm:$0xf]
        %v6396 = vld [vmem:[%s6384 + $0x2c] sm:$0xf]
        %v6397 = vld [vmem:[%s6384 + $0x30] sm:$0xf]
        %v6398 = vld [vmem:[%s6384 + $0x34] sm:$0xf]
        %v6399 = vld [vmem:[%s6384 + $0x38] sm:$0xf]
        %v6400 = vld [vmem:[%s6384 + $0x3c] sm:$0xf]
        %v6401 = vld [vmem:[%s6384 + $0x40] sm:$0xf]
        %v6402 = vld [vmem:[%s6384 + $0x44] sm:$0xf]
        %v6403 = vld [vmem:[%s6384 + $0x48] sm:$0xf]
        %v6404 = vld [vmem:[%s6384 + $0x4c] sm:$0xf]
        %v6405 = vld [vmem:[%s6384 + $0x50] sm:$0xf]
        %v6406 = vld [vmem:[%s6384 + $0x54] sm:$0xf]
        %v6407 = vld [vmem:[%s6384 + $0x58] sm:$0xf]
        %v6408 = vld [vmem:[%s6384 + $0x5c] sm:$0xf]
        %v6409 = vld [vmem:[%s6384 + $0x60] sm:$0xf]
        %v6410 = vld [vmem:[%s6384 + $0x64] sm:$0xf]
        %v6411 = vld [vmem:[%s6384 + $0x68] sm:$0xf]
        %v6412 = vld [vmem:[%s6384 + $0x6c] sm:$0xf]
        %v6413 = vld [vmem:[%s6384 + $0x70] sm:$0xf]
        %v6414 = vld [vmem:[%s6384 + $0x74] sm:$0xf]
        %v6415 = vld [vmem:[%s6384 + $0x78] sm:$0xf]
        %v6416 = vld [vmem:[%s6384 + $0x7c] sm:$0xf]
        %v6417 = vunpack.c.l.b16 %v6205
        %v6418 = vunpack.c.h.b16 %v6205
        %v6419 = vunpack.c.l.b16 %v6215
        %v6420 = vunpack.c.h.b16 %v6215
        %v6421 = vunpack.c.l.b16 %v6229
        %v6422 = vunpack.c.h.b16 %v6229
        %v6423 = vunpack.c.l.b16 %v6239
        %v6424 = vunpack.c.h.b16 %v6239
        %v6425 = vunpack.c.l.b16 %v6253
        %v6426 = vunpack.c.h.b16 %v6253
        %v6427 = vunpack.c.l.b16 %v6263
        %v6428 = vunpack.c.h.b16 %v6263
        %v6429 = vunpack.c.l.b16 %v6277
        %v6430 = vunpack.c.h.b16 %v6277
        %v6431 = vunpack.c.l.b16 %v6287
        %v6432 = vunpack.c.h.b16 %v6287
        %v6433 = vunpack.c.l.b16 %v6301
        %v6434 = vunpack.c.h.b16 %v6301
        %v6435 = vunpack.c.l.b16 %v6311
        %v6436 = vunpack.c.h.b16 %v6311
        %v6437 = vunpack.c.l.b16 %v6325
        %v6438 = vunpack.c.h.b16 %v6325
        %v6439 = vunpack.c.l.b16 %v6335
        %v6440 = vunpack.c.h.b16 %v6335
        %v6441 = vunpack.c.l.b16 %v6349
        %v6442 = vunpack.c.h.b16 %v6349
        %v6443 = vunpack.c.l.b16 %v6359
        %v6444 = vunpack.c.h.b16 %v6359
        %v6445 = vunpack.c.l.b16 %v6373
        %v6446 = vunpack.c.h.b16 %v6373
        %v6447 = vunpack.c.l.b16 %v6383
        %v6448 = vunpack.c.h.b16 %v6383
        %v6449 = vpack.c.b16 %v6419, %v6417
        %v6450 = vpack.c.b16 %v6420, %v6418
        %v6451 = vpack.c.b16 %v6423, %v6421
        %v6452 = vpack.c.b16 %v6424, %v6422
        %v6453 = vpack.c.b16 %v6427, %v6425
        %v6454 = vpack.c.b16 %v6428, %v6426
        %v6455 = vpack.c.b16 %v6431, %v6429
        %v6456 = vpack.c.b16 %v6432, %v6430
        %v6457 = vpack.c.b16 %v6435, %v6433
        %v6458 = vpack.c.b16 %v6436, %v6434
        %v6459 = vpack.c.b16 %v6439, %v6437
        %v6460 = vpack.c.b16 %v6440, %v6438
        %v6461 = vpack.c.b16 %v6443, %v6441
        %v6462 = vpack.c.b16 %v6444, %v6442
        %v6463 = vpack.c.b16 %v6447, %v6445
        %v6464 = vpack.c.b16 %v6448, %v6446
        %v6513 = vunpack.c.l.b16 %v6385
        %v6514 = vunpack.c.l.b16 %v6386
        %v6515 = vunpack.c.l.b16 %v6387
        %v6516 = vunpack.c.l.b16 %v6388
        %v6517 = vunpack.c.l.b16 %v6389
        %v6518 = vunpack.c.l.b16 %v6390
        %v6519 = vunpack.c.l.b16 %v6391
        %v6520 = vunpack.c.l.b16 %v6392
        %v6521 = vunpack.c.l.b16 %v6393
        %v6522 = vunpack.c.l.b16 %v6394
        %v6523 = vunpack.c.l.b16 %v6395
        %v6524 = vunpack.c.l.b16 %v6396
        %v6525 = vunpack.c.l.b16 %v6397
        %v6526 = vunpack.c.l.b16 %v6398
        %v6527 = vunpack.c.l.b16 %v6399
        %v6528 = vunpack.c.l.b16 %v6400
        %v6529 = vunpack.c.l.b16 %v6401
        %v6530 = vunpack.c.l.b16 %v6402
        %v6531 = vunpack.c.l.b16 %v6403
        %v6532 = vunpack.c.l.b16 %v6404
        %v6533 = vunpack.c.l.b16 %v6405
        %v6534 = vunpack.c.l.b16 %v6406
        %v6535 = vunpack.c.l.b16 %v6407
        %v6536 = vunpack.c.l.b16 %v6408
        %v6537 = vunpack.c.l.b16 %v6409
        %v6538 = vunpack.c.l.b16 %v6410
        %v6539 = vunpack.c.l.b16 %v6411
        %v6540 = vunpack.c.l.b16 %v6412
        %v6541 = vunpack.c.l.b16 %v6413
        %v6542 = vunpack.c.l.b16 %v6414
        %v6543 = vunpack.c.l.b16 %v6415
        %v6544 = vunpack.c.l.b16 %v6416
        %v6545 = vpack.c.b16 %v6514, %v6513
        %v6546 = vpack.c.b16 %v6516, %v6515
        %v6547 = vpack.c.b16 %v6518, %v6517
        %v6548 = vpack.c.b16 %v6520, %v6519
        %v6549 = vpack.c.b16 %v6522, %v6521
        %v6550 = vpack.c.b16 %v6524, %v6523
        %v6551 = vpack.c.b16 %v6526, %v6525
        %v6552 = vpack.c.b16 %v6528, %v6527
        %v6553 = vpack.c.b16 %v6530, %v6529
        %v6554 = vpack.c.b16 %v6532, %v6531
        %v6555 = vpack.c.b16 %v6534, %v6533
        %v6556 = vpack.c.b16 %v6536, %v6535
        %v6557 = vpack.c.b16 %v6538, %v6537
        %v6558 = vpack.c.b16 %v6540, %v6539
        %v6559 = vpack.c.b16 %v6542, %v6541
        %v6560 = vpack.c.b16 %v6544, %v6543
        %6577 = vmatpush.bf16.msra.mxu0 %v6552
        %6578 = vmatpush.bf16.msra.mxu0 %v6551
        %6579 = vmatpush.bf16.msra.mxu0 %v6550
        %6580 = vmatpush.bf16.msra.mxu0 %v6549
        %6581 = vmatpush.bf16.msra.mxu0 %v6548
        %6582 = vmatpush.bf16.msra.mxu0 %v6547
        %6583 = vmatpush.bf16.msra.mxu0 %v6546
        %6584 = vmatpush.bf16.msra.mxu0 %v6545
        %6585 = vmatmul.bf16.gmra.mxu0 %v6449
        %v6586 = vpop.f32.mrf.mxu0
        %v6587 = vadd.f32 0.0, %v6586
        %v6588 = vpop.f32.mrf.mxu0
        %v6589 = vadd.f32 0.0, %v6588
        %6590 = vmatmul.bf16.gmra.mxu0 %v6451
        %v6591 = vpop.f32.mrf.mxu0
        %v6592 = vadd.f32 0.0, %v6591
        %v6593 = vpop.f32.mrf.mxu0
        %v6594 = vadd.f32 0.0, %v6593
        %6595 = vmatmul.bf16.gmra.mxu0 %v6453
        %v6596 = vpop.f32.mrf.mxu0
        %v6597 = vadd.f32 0.0, %v6596
        %v6598 = vpop.f32.mrf.mxu0
        %v6599 = vadd.f32 0.0, %v6598
        %6600 = vmatmul.bf16.gmra.mxu0 %v6455
        %v6601 = vpop.f32.mrf.mxu0
        %v6602 = vadd.f32 0.0, %v6601
        %v6603 = vpop.f32.mrf.mxu0
        %v6604 = vadd.f32 0.0, %v6603
        %6605 = vmatmul.bf16.gmra.mxu0 %v6457
        %v6606 = vpop.f32.mrf.mxu0
        %v6607 = vadd.f32 0.0, %v6606
        %v6608 = vpop.f32.mrf.mxu0
        %v6609 = vadd.f32 0.0, %v6608
        %6610 = vmatmul.bf16.gmra.mxu0 %v6459
        %v6611 = vpop.f32.mrf.mxu0
        %v6612 = vadd.f32 0.0, %v6611
        %v6613 = vpop.f32.mrf.mxu0
        %v6614 = vadd.f32 0.0, %v6613
        %6615 = vmatmul.bf16.gmra.mxu0 %v6461
        %v6616 = vpop.f32.mrf.mxu0
        %v6617 = vadd.f32 0.0, %v6616
        %v6618 = vpop.f32.mrf.mxu0
        %v6619 = vadd.f32 0.0, %v6618
        %6620 = vmatmul.bf16.gmra.mxu0 %v6463
        %v6621 = vpop.f32.mrf.mxu0
        %v6622 = vadd.f32 0.0, %v6621
        %v6623 = vpop.f32.mrf.mxu0
        %v6624 = vadd.f32 0.0, %v6623
        %6625 = vdwg.mxu0
        %6626 = vmatpush.bf16.msra.mxu0 %v6560
        %6627 = vmatpush.bf16.msra.mxu0 %v6559
        %6628 = vmatpush.bf16.msra.mxu0 %v6558
        %6629 = vmatpush.bf16.msra.mxu0 %v6557
        %6630 = vmatpush.bf16.msra.mxu0 %v6556
        %6631 = vmatpush.bf16.msra.mxu0 %v6555
        %6632 = vmatpush.bf16.msra.mxu0 %v6554
        %6633 = vmatpush.bf16.msra.mxu0 %v6553
        %6634 = vmatmul.bf16.gmra.mxu0 %v6450
        %v6635 = vpop.f32.mrf.mxu0
        %v6636 = vadd.f32 %v6587, %v6635
        %v6637 = vpop.f32.mrf.mxu0
        %v6638 = vadd.f32 %v6589, %v6637
        %6639 = vmatmul.bf16.gmra.mxu0 %v6452
        %v6640 = vpop.f32.mrf.mxu0
        %v6641 = vadd.f32 %v6592, %v6640
        %v6642 = vpop.f32.mrf.mxu0
        %v6643 = vadd.f32 %v6594, %v6642
        %6644 = vmatmul.bf16.gmra.mxu0 %v6454
        %v6645 = vpop.f32.mrf.mxu0
        %v6646 = vadd.f32 %v6597, %v6645
        %v6647 = vpop.f32.mrf.mxu0
        %v6648 = vadd.f32 %v6599, %v6647
        %6649 = vmatmul.bf16.gmra.mxu0 %v6456
        %v6650 = vpop.f32.mrf.mxu0
        %v6651 = vadd.f32 %v6602, %v6650
        %v6652 = vpop.f32.mrf.mxu0
        %v6653 = vadd.f32 %v6604, %v6652
        %6654 = vmatmul.bf16.gmra.mxu0 %v6458
        %v6655 = vpop.f32.mrf.mxu0
        %v6656 = vadd.f32 %v6607, %v6655
        %v6657 = vpop.f32.mrf.mxu0
        %v6658 = vadd.f32 %v6609, %v6657
        %6659 = vmatmul.bf16.gmra.mxu0 %v6460
        %v6660 = vpop.f32.mrf.mxu0
        %v6661 = vadd.f32 %v6612, %v6660
        %v6662 = vpop.f32.mrf.mxu0
        %v6663 = vadd.f32 %v6614, %v6662
        %6664 = vmatmul.bf16.gmra.mxu0 %v6462
        %v6665 = vpop.f32.mrf.mxu0
        %v6666 = vadd.f32 %v6617, %v6665
        %v6667 = vpop.f32.mrf.mxu0
        %v6668 = vadd.f32 %v6619, %v6667
        %6669 = vmatmul.bf16.gmra.mxu0 %v6464
        %v6670 = vpop.f32.mrf.mxu0
        %v6671 = vadd.f32 %v6622, %v6670
        %v6672 = vpop.f32.mrf.mxu0
        %v6673 = vadd.f32 %v6624, %v6672
        %6674 = vdwg.mxu0
        %v6675 = vadd.f32 %v6129, %v6636
        %v6676 = vadd.f32 %v6131, %v6638
        %v6677 = vadd.f32 %v6134, %v6641
        %v6678 = vadd.f32 %v6136, %v6643
        %v6679 = vadd.f32 %v6139, %v6646
        %v6680 = vadd.f32 %v6141, %v6648
        %v6681 = vadd.f32 %v6144, %v6651
        %v6682 = vadd.f32 %v6146, %v6653
        %v6683 = vadd.f32 %v6149, %v6656
        %v6684 = vadd.f32 %v6151, %v6658
        %v6685 = vadd.f32 %v6154, %v6661
        %v6686 = vadd.f32 %v6156, %v6663
        %v6687 = vadd.f32 %v6159, %v6666
        %v6688 = vadd.f32 %v6161, %v6668
        %v6689 = vadd.f32 %v6164, %v6671
        %v6690 = vadd.f32 %v6166, %v6673
        %s6691 = scalar_lea.vmem [#allocation2], 32
        %v6692 = vld [vmem:[%s6691] sm:$0x88]
        %v6693 = vld [vmem:[%s6691 + $0x8] sm:$0xff]
        %v6694 = vld [vmem:[%s6691 + $0x10] sm:$0xff]
        %v6695 = vld [vmem:[%s6691 + $0x20] sm:$0x88]
        %v6696 = vld [vmem:[%s6691 + $0x28] sm:$0xff]
        %v6697 = vld [vmem:[%s6691 + $0x30] sm:$0xff]
        %v6698 = vld [vmem:[%s6691 + $0x40] sm:$0x88]
        %v6699 = vld [vmem:[%s6691 + $0x48] sm:$0xff]
        %v6700 = vld [vmem:[%s6691 + $0x50] sm:$0xff]
        %v6701 = vld [vmem:[%s6691 + $0x60] sm:$0x88]
        %v6702 = vld [vmem:[%s6691 + $0x68] sm:$0xff]
        %v6703 = vld [vmem:[%s6691 + $0x70] sm:$0xff]
        %v6704 = vld [vmem:[%s6691 + $0x80] sm:$0x88]
        %v6705 = vld [vmem:[%s6691 + $0x88] sm:$0xff]
        %v6706 = vld [vmem:[%s6691 + $0x90] sm:$0xff]
        %v6707 = vld [vmem:[%s6691 + $0xa0] sm:$0x88]
        %v6708 = vld [vmem:[%s6691 + $0xa8] sm:$0xff]
        %v6709 = vld [vmem:[%s6691 + $0xb0] sm:$0xff]
        %v6710 = vld [vmem:[%s6691 + $0xc0] sm:$0x88]
        %v6711 = vld [vmem:[%s6691 + $0xc8] sm:$0xff]
        %v6712 = vld [vmem:[%s6691 + $0xd0] sm:$0xff]
        %v6713 = vld [vmem:[%s6691 + $0xe0] sm:$0x88]
        %v6714 = vld [vmem:[%s6691 + $0xe8] sm:$0xff]
        %v6715 = vld [vmem:[%s6691 + $0xf0] sm:$0xff]
        %v6717 = vshrl.u32 %v6692, 16
        %v6719 = vrot.slane %v6717, 7
        %v6720 = vrot.slane %v6719, 4
        %v6722 = vshrl.u32 %v6693, 16
        %v6724 = vrot.slane %v6722, 7
        %v6725 = vshll.u32 %v6693, 16
        %v6727 = vor.u32 %v6724, %v6725
        %v6728 = vsel %vm5394, %v6720, %v6727
        %v6729 = vrot.slane %v6724, 4
        %v6731 = vshrl.u32 %v6694, 16
        %v6733 = vrot.slane %v6731, 7
        %v6734 = vshll.u32 %v6694, 16
        %v6736 = vor.u32 %v6733, %v6734
        %v6737 = vsel %vm5394, %v6729, %v6736
        %v6739 = vshrl.u32 %v6695, 16
        %v6741 = vrot.slane %v6739, 7
        %v6742 = vrot.slane %v6741, 4
        %v6744 = vshrl.u32 %v6696, 16
        %v6746 = vrot.slane %v6744, 7
        %v6747 = vshll.u32 %v6696, 16
        %v6749 = vor.u32 %v6746, %v6747
        %v6750 = vsel %vm5394, %v6742, %v6749
        %v6751 = vrot.slane %v6746, 4
        %v6753 = vshrl.u32 %v6697, 16
        %v6755 = vrot.slane %v6753, 7
        %v6756 = vshll.u32 %v6697, 16
        %v6758 = vor.u32 %v6755, %v6756
        %v6759 = vsel %vm5394, %v6751, %v6758
        %v6761 = vshrl.u32 %v6698, 16
        %v6763 = vrot.slane %v6761, 7
        %v6764 = vrot.slane %v6763, 4
        %v6766 = vshrl.u32 %v6699, 16
        %v6768 = vrot.slane %v6766, 7
        %v6769 = vshll.u32 %v6699, 16
        %v6771 = vor.u32 %v6768, %v6769
        %v6772 = vsel %vm5394, %v6764, %v6771
        %v6773 = vrot.slane %v6768, 4
        %v6775 = vshrl.u32 %v6700, 16
        %v6777 = vrot.slane %v6775, 7
        %v6778 = vshll.u32 %v6700, 16
        %v6780 = vor.u32 %v6777, %v6778
        %v6781 = vsel %vm5394, %v6773, %v6780
        %v6783 = vshrl.u32 %v6701, 16
        %v6785 = vrot.slane %v6783, 7
        %v6786 = vrot.slane %v6785, 4
        %v6788 = vshrl.u32 %v6702, 16
        %v6790 = vrot.slane %v6788, 7
        %v6791 = vshll.u32 %v6702, 16
        %v6793 = vor.u32 %v6790, %v6791
        %v6794 = vsel %vm5394, %v6786, %v6793
        %v6795 = vrot.slane %v6790, 4
        %v6797 = vshrl.u32 %v6703, 16
        %v6799 = vrot.slane %v6797, 7
        %v6800 = vshll.u32 %v6703, 16
        %v6802 = vor.u32 %v6799, %v6800
        %v6803 = vsel %vm5394, %v6795, %v6802
        %v6805 = vshrl.u32 %v6704, 16
        %v6807 = vrot.slane %v6805, 7
        %v6808 = vrot.slane %v6807, 4
        %v6810 = vshrl.u32 %v6705, 16
        %v6812 = vrot.slane %v6810, 7
        %v6813 = vshll.u32 %v6705, 16
        %v6815 = vor.u32 %v6812, %v6813
        %v6816 = vsel %vm5394, %v6808, %v6815
        %v6817 = vrot.slane %v6812, 4
        %v6819 = vshrl.u32 %v6706, 16
        %v6821 = vrot.slane %v6819, 7
        %v6822 = vshll.u32 %v6706, 16
        %v6824 = vor.u32 %v6821, %v6822
        %v6825 = vsel %vm5394, %v6817, %v6824
        %v6827 = vshrl.u32 %v6707, 16
        %v6829 = vrot.slane %v6827, 7
        %v6830 = vrot.slane %v6829, 4
        %v6832 = vshrl.u32 %v6708, 16
        %v6834 = vrot.slane %v6832, 7
        %v6835 = vshll.u32 %v6708, 16
        %v6837 = vor.u32 %v6834, %v6835
        %v6838 = vsel %vm5394, %v6830, %v6837
        %v6839 = vrot.slane %v6834, 4
        %v6841 = vshrl.u32 %v6709, 16
        %v6843 = vrot.slane %v6841, 7
        %v6844 = vshll.u32 %v6709, 16
        %v6846 = vor.u32 %v6843, %v6844
        %v6847 = vsel %vm5394, %v6839, %v6846
        %v6849 = vshrl.u32 %v6710, 16
        %v6851 = vrot.slane %v6849, 7
        %v6852 = vrot.slane %v6851, 4
        %v6854 = vshrl.u32 %v6711, 16
        %v6856 = vrot.slane %v6854, 7
        %v6857 = vshll.u32 %v6711, 16
        %v6859 = vor.u32 %v6856, %v6857
        %v6860 = vsel %vm5394, %v6852, %v6859
        %v6861 = vrot.slane %v6856, 4
        %v6863 = vshrl.u32 %v6712, 16
        %v6865 = vrot.slane %v6863, 7
        %v6866 = vshll.u32 %v6712, 16
        %v6868 = vor.u32 %v6865, %v6866
        %v6869 = vsel %vm5394, %v6861, %v6868
        %v6871 = vshrl.u32 %v6713, 16
        %v6873 = vrot.slane %v6871, 7
        %v6874 = vrot.slane %v6873, 4
        %v6876 = vshrl.u32 %v6714, 16
        %v6878 = vrot.slane %v6876, 7
        %v6879 = vshll.u32 %v6714, 16
        %v6881 = vor.u32 %v6878, %v6879
        %v6882 = vsel %vm5394, %v6874, %v6881
        %v6883 = vrot.slane %v6878, 4
        %v6885 = vshrl.u32 %v6715, 16
        %v6887 = vrot.slane %v6885, 7
        %v6888 = vshll.u32 %v6715, 16
        %v6890 = vor.u32 %v6887, %v6888
        %v6891 = vsel %vm5394, %v6883, %v6890
        %s6892 = scalar_lea.vmem %s2, 384
        %v6893 = vld [vmem:[%s6892] sm:$0xf]
        %v6894 = vld [vmem:[%s6892 + $0x4] sm:$0xf]
        %v6895 = vld [vmem:[%s6892 + $0x8] sm:$0xf]
        %v6896 = vld [vmem:[%s6892 + $0xc] sm:$0xf]
        %v6897 = vld [vmem:[%s6892 + $0x10] sm:$0xf]
        %v6898 = vld [vmem:[%s6892 + $0x14] sm:$0xf]
        %v6899 = vld [vmem:[%s6892 + $0x18] sm:$0xf]
        %v6900 = vld [vmem:[%s6892 + $0x1c] sm:$0xf]
        %v6901 = vld [vmem:[%s6892 + $0x20] sm:$0xf]
        %v6902 = vld [vmem:[%s6892 + $0x24] sm:$0xf]
        %v6903 = vld [vmem:[%s6892 + $0x28] sm:$0xf]
        %v6904 = vld [vmem:[%s6892 + $0x2c] sm:$0xf]
        %v6905 = vld [vmem:[%s6892 + $0x30] sm:$0xf]
        %v6906 = vld [vmem:[%s6892 + $0x34] sm:$0xf]
        %v6907 = vld [vmem:[%s6892 + $0x38] sm:$0xf]
        %v6908 = vld [vmem:[%s6892 + $0x3c] sm:$0xf]
        %v6909 = vld [vmem:[%s6892 + $0x40] sm:$0xf]
        %v6910 = vld [vmem:[%s6892 + $0x44] sm:$0xf]
        %v6911 = vld [vmem:[%s6892 + $0x48] sm:$0xf]
        %v6912 = vld [vmem:[%s6892 + $0x4c] sm:$0xf]
        %v6913 = vld [vmem:[%s6892 + $0x50] sm:$0xf]
        %v6914 = vld [vmem:[%s6892 + $0x54] sm:$0xf]
        %v6915 = vld [vmem:[%s6892 + $0x58] sm:$0xf]
        %v6916 = vld [vmem:[%s6892 + $0x5c] sm:$0xf]
        %v6917 = vld [vmem:[%s6892 + $0x60] sm:$0xf]
        %v6918 = vld [vmem:[%s6892 + $0x64] sm:$0xf]
        %v6919 = vld [vmem:[%s6892 + $0x68] sm:$0xf]
        %v6920 = vld [vmem:[%s6892 + $0x6c] sm:$0xf]
        %v6921 = vld [vmem:[%s6892 + $0x70] sm:$0xf]
        %v6922 = vld [vmem:[%s6892 + $0x74] sm:$0xf]
        %v6923 = vld [vmem:[%s6892 + $0x78] sm:$0xf]
        %v6924 = vld [vmem:[%s6892 + $0x7c] sm:$0xf]
        %v6925 = vunpack.c.l.b16 %v6728
        %v6926 = vunpack.c.h.b16 %v6728
        %v6927 = vunpack.c.l.b16 %v6737
        %v6928 = vunpack.c.h.b16 %v6737
        %v6929 = vunpack.c.l.b16 %v6750
        %v6930 = vunpack.c.h.b16 %v6750
        %v6931 = vunpack.c.l.b16 %v6759
        %v6932 = vunpack.c.h.b16 %v6759
        %v6933 = vunpack.c.l.b16 %v6772
        %v6934 = vunpack.c.h.b16 %v6772
        %v6935 = vunpack.c.l.b16 %v6781
        %v6936 = vunpack.c.h.b16 %v6781
        %v6937 = vunpack.c.l.b16 %v6794
        %v6938 = vunpack.c.h.b16 %v6794
        %v6939 = vunpack.c.l.b16 %v6803
        %v6940 = vunpack.c.h.b16 %v6803
        %v6941 = vunpack.c.l.b16 %v6816
        %v6942 = vunpack.c.h.b16 %v6816
        %v6943 = vunpack.c.l.b16 %v6825
        %v6944 = vunpack.c.h.b16 %v6825
        %v6945 = vunpack.c.l.b16 %v6838
        %v6946 = vunpack.c.h.b16 %v6838
        %v6947 = vunpack.c.l.b16 %v6847
        %v6948 = vunpack.c.h.b16 %v6847
        %v6949 = vunpack.c.l.b16 %v6860
        %v6950 = vunpack.c.h.b16 %v6860
        %v6951 = vunpack.c.l.b16 %v6869
        %v6952 = vunpack.c.h.b16 %v6869
        %v6953 = vunpack.c.l.b16 %v6882
        %v6954 = vunpack.c.h.b16 %v6882
        %v6955 = vunpack.c.l.b16 %v6891
        %v6956 = vunpack.c.h.b16 %v6891
        %v6957 = vpack.c.b16 %v6927, %v6925
        %v6958 = vpack.c.b16 %v6928, %v6926
        %v6959 = vpack.c.b16 %v6931, %v6929
        %v6960 = vpack.c.b16 %v6932, %v6930
        %v6961 = vpack.c.b16 %v6935, %v6933
        %v6962 = vpack.c.b16 %v6936, %v6934
        %v6963 = vpack.c.b16 %v6939, %v6937
        %v6964 = vpack.c.b16 %v6940, %v6938
        %v6965 = vpack.c.b16 %v6943, %v6941
        %v6966 = vpack.c.b16 %v6944, %v6942
        %v6967 = vpack.c.b16 %v6947, %v6945
        %v6968 = vpack.c.b16 %v6948, %v6946
        %v6969 = vpack.c.b16 %v6951, %v6949
        %v6970 = vpack.c.b16 %v6952, %v6950
        %v6971 = vpack.c.b16 %v6955, %v6953
        %v6972 = vpack.c.b16 %v6956, %v6954
        %v7021 = vunpack.c.l.b16 %v6893
        %v7022 = vunpack.c.l.b16 %v6894
        %v7023 = vunpack.c.l.b16 %v6895
        %v7024 = vunpack.c.l.b16 %v6896
        %v7025 = vunpack.c.l.b16 %v6897
        %v7026 = vunpack.c.l.b16 %v6898
        %v7027 = vunpack.c.l.b16 %v6899
        %v7028 = vunpack.c.l.b16 %v6900
        %v7029 = vunpack.c.l.b16 %v6901
        %v7030 = vunpack.c.l.b16 %v6902
        %v7031 = vunpack.c.l.b16 %v6903
        %v7032 = vunpack.c.l.b16 %v6904
        %v7033 = vunpack.c.l.b16 %v6905
        %v7034 = vunpack.c.l.b16 %v6906
        %v7035 = vunpack.c.l.b16 %v6907
        %v7036 = vunpack.c.l.b16 %v6908
        %v7037 = vunpack.c.l.b16 %v6909
        %v7038 = vunpack.c.l.b16 %v6910
        %v7039 = vunpack.c.l.b16 %v6911
        %v7040 = vunpack.c.l.b16 %v6912
        %v7041 = vunpack.c.l.b16 %v6913
        %v7042 = vunpack.c.l.b16 %v6914
        %v7043 = vunpack.c.l.b16 %v6915
        %v7044 = vunpack.c.l.b16 %v6916
        %v7045 = vunpack.c.l.b16 %v6917
        %v7046 = vunpack.c.l.b16 %v6918
        %v7047 = vunpack.c.l.b16 %v6919
        %v7048 = vunpack.c.l.b16 %v6920
        %v7049 = vunpack.c.l.b16 %v6921
        %v7050 = vunpack.c.l.b16 %v6922
        %v7051 = vunpack.c.l.b16 %v6923
        %v7052 = vunpack.c.l.b16 %v6924
        %v7053 = vpack.c.b16 %v7022, %v7021
        %v7054 = vpack.c.b16 %v7024, %v7023
        %v7055 = vpack.c.b16 %v7026, %v7025
        %v7056 = vpack.c.b16 %v7028, %v7027
        %v7057 = vpack.c.b16 %v7030, %v7029
        %v7058 = vpack.c.b16 %v7032, %v7031
        %v7059 = vpack.c.b16 %v7034, %v7033
        %v7060 = vpack.c.b16 %v7036, %v7035
        %v7061 = vpack.c.b16 %v7038, %v7037
        %v7062 = vpack.c.b16 %v7040, %v7039
        %v7063 = vpack.c.b16 %v7042, %v7041
        %v7064 = vpack.c.b16 %v7044, %v7043
        %v7065 = vpack.c.b16 %v7046, %v7045
        %v7066 = vpack.c.b16 %v7048, %v7047
        %v7067 = vpack.c.b16 %v7050, %v7049
        %v7068 = vpack.c.b16 %v7052, %v7051
        %7085 = vmatpush.bf16.msra.mxu0 %v7060
        %7086 = vmatpush.bf16.msra.mxu0 %v7059
        %7087 = vmatpush.bf16.msra.mxu0 %v7058
        %7088 = vmatpush.bf16.msra.mxu0 %v7057
        %7089 = vmatpush.bf16.msra.mxu0 %v7056
        %7090 = vmatpush.bf16.msra.mxu0 %v7055
        %7091 = vmatpush.bf16.msra.mxu0 %v7054
        %7092 = vmatpush.bf16.msra.mxu0 %v7053
        %7093 = vmatmul.bf16.gmra.mxu0 %v6957
        %v7094 = vpop.f32.mrf.mxu0
        %v7095 = vadd.f32 0.0, %v7094
        %v7096 = vpop.f32.mrf.mxu0
        %v7097 = vadd.f32 0.0, %v7096
        %7098 = vmatmul.bf16.gmra.mxu0 %v6959
        %v7099 = vpop.f32.mrf.mxu0
        %v7100 = vadd.f32 0.0, %v7099
        %v7101 = vpop.f32.mrf.mxu0
        %v7102 = vadd.f32 0.0, %v7101
        %7103 = vmatmul.bf16.gmra.mxu0 %v6961
        %v7104 = vpop.f32.mrf.mxu0
        %v7105 = vadd.f32 0.0, %v7104
        %v7106 = vpop.f32.mrf.mxu0
        %v7107 = vadd.f32 0.0, %v7106
        %7108 = vmatmul.bf16.gmra.mxu0 %v6963
        %v7109 = vpop.f32.mrf.mxu0
        %v7110 = vadd.f32 0.0, %v7109
        %v7111 = vpop.f32.mrf.mxu0
        %v7112 = vadd.f32 0.0, %v7111
        %7113 = vmatmul.bf16.gmra.mxu0 %v6965
        %v7114 = vpop.f32.mrf.mxu0
        %v7115 = vadd.f32 0.0, %v7114
        %v7116 = vpop.f32.mrf.mxu0
        %v7117 = vadd.f32 0.0, %v7116
        %7118 = vmatmul.bf16.gmra.mxu0 %v6967
        %v7119 = vpop.f32.mrf.mxu0
        %v7120 = vadd.f32 0.0, %v7119
        %v7121 = vpop.f32.mrf.mxu0
        %v7122 = vadd.f32 0.0, %v7121
        %7123 = vmatmul.bf16.gmra.mxu0 %v6969
        %v7124 = vpop.f32.mrf.mxu0
        %v7125 = vadd.f32 0.0, %v7124
        %v7126 = vpop.f32.mrf.mxu0
        %v7127 = vadd.f32 0.0, %v7126
        %7128 = vmatmul.bf16.gmra.mxu0 %v6971
        %v7129 = vpop.f32.mrf.mxu0
        %v7130 = vadd.f32 0.0, %v7129
        %v7131 = vpop.f32.mrf.mxu0
        %v7132 = vadd.f32 0.0, %v7131
        %7133 = vdwg.mxu0
        %7134 = vmatpush.bf16.msra.mxu0 %v7068
        %7135 = vmatpush.bf16.msra.mxu0 %v7067
        %7136 = vmatpush.bf16.msra.mxu0 %v7066
        %7137 = vmatpush.bf16.msra.mxu0 %v7065
        %7138 = vmatpush.bf16.msra.mxu0 %v7064
        %7139 = vmatpush.bf16.msra.mxu0 %v7063
        %7140 = vmatpush.bf16.msra.mxu0 %v7062
        %7141 = vmatpush.bf16.msra.mxu0 %v7061
        %7142 = vmatmul.bf16.gmra.mxu0 %v6958
        %v7143 = vpop.f32.mrf.mxu0
        %v7144 = vadd.f32 %v7095, %v7143
        %v7145 = vpop.f32.mrf.mxu0
        %v7146 = vadd.f32 %v7097, %v7145
        %7147 = vmatmul.bf16.gmra.mxu0 %v6960
        %v7148 = vpop.f32.mrf.mxu0
        %v7149 = vadd.f32 %v7100, %v7148
        %v7150 = vpop.f32.mrf.mxu0
        %v7151 = vadd.f32 %v7102, %v7150
        %7152 = vmatmul.bf16.gmra.mxu0 %v6962
        %v7153 = vpop.f32.mrf.mxu0
        %v7154 = vadd.f32 %v7105, %v7153
        %v7155 = vpop.f32.mrf.mxu0
        %v7156 = vadd.f32 %v7107, %v7155
        %7157 = vmatmul.bf16.gmra.mxu0 %v6964
        %v7158 = vpop.f32.mrf.mxu0
        %v7159 = vadd.f32 %v7110, %v7158
        %v7160 = vpop.f32.mrf.mxu0
        %v7161 = vadd.f32 %v7112, %v7160
        %7162 = vmatmul.bf16.gmra.mxu0 %v6966
        %v7163 = vpop.f32.mrf.mxu0
        %v7164 = vadd.f32 %v7115, %v7163
        %v7165 = vpop.f32.mrf.mxu0
        %v7166 = vadd.f32 %v7117, %v7165
        %7167 = vmatmul.bf16.gmra.mxu0 %v6968
        %v7168 = vpop.f32.mrf.mxu0
        %v7169 = vadd.f32 %v7120, %v7168
        %v7170 = vpop.f32.mrf.mxu0
        %v7171 = vadd.f32 %v7122, %v7170
        %7172 = vmatmul.bf16.gmra.mxu0 %v6970
        %v7173 = vpop.f32.mrf.mxu0
        %v7174 = vadd.f32 %v7125, %v7173
        %v7175 = vpop.f32.mrf.mxu0
        %v7176 = vadd.f32 %v7127, %v7175
        %7177 = vmatmul.bf16.gmra.mxu0 %v6972
        %v7178 = vpop.f32.mrf.mxu0
        %v7179 = vadd.f32 %v7130, %v7178
        %v7180 = vpop.f32.mrf.mxu0
        %v7181 = vadd.f32 %v7132, %v7180
        %7182 = vdwg.mxu0
        %v7183 = vadd.f32 %v6675, %v7144
        %v7184 = vadd.f32 %v6676, %v7146
        %v7185 = vadd.f32 %v6677, %v7149
        %v7186 = vadd.f32 %v6678, %v7151
        %v7187 = vadd.f32 %v6679, %v7154
        %v7188 = vadd.f32 %v6680, %v7156
        %v7189 = vadd.f32 %v6681, %v7159
        %v7190 = vadd.f32 %v6682, %v7161
        %v7191 = vadd.f32 %v6683, %v7164
        %v7192 = vadd.f32 %v6684, %v7166
        %v7193 = vadd.f32 %v6685, %v7169
        %v7194 = vadd.f32 %v6686, %v7171
        %v7195 = vadd.f32 %v6687, %v7174
        %v7196 = vadd.f32 %v6688, %v7176
        %v7197 = vadd.f32 %v6689, %v7179
        %v7198 = vadd.f32 %v6690, %v7181
        %s7199 = scalar_lea.vmem %s2, 512
        %v7200 = vld [vmem:[%s7199] sm:$0xf]
        %v7201 = vld [vmem:[%s7199 + $0x4] sm:$0xf]
        %v7202 = vld [vmem:[%s7199 + $0x8] sm:$0xf]
        %v7203 = vld [vmem:[%s7199 + $0xc] sm:$0xf]
        %v7204 = vld [vmem:[%s7199 + $0x10] sm:$0xf]
        %v7205 = vld [vmem:[%s7199 + $0x14] sm:$0xf]
        %v7206 = vld [vmem:[%s7199 + $0x18] sm:$0xf]
        %v7207 = vld [vmem:[%s7199 + $0x1c] sm:$0xf]
        %v7208 = vld [vmem:[%s7199 + $0x20] sm:$0xf]
        %v7209 = vld [vmem:[%s7199 + $0x24] sm:$0xf]
        %v7210 = vld [vmem:[%s7199 + $0x28] sm:$0xf]
        %v7211 = vld [vmem:[%s7199 + $0x2c] sm:$0xf]
        %v7212 = vld [vmem:[%s7199 + $0x30] sm:$0xf]
        %v7213 = vld [vmem:[%s7199 + $0x34] sm:$0xf]
        %v7214 = vld [vmem:[%s7199 + $0x38] sm:$0xf]
        %v7215 = vld [vmem:[%s7199 + $0x3c] sm:$0xf]
        %v7216 = vld [vmem:[%s7199 + $0x40] sm:$0xf]
        %v7217 = vld [vmem:[%s7199 + $0x44] sm:$0xf]
        %v7218 = vld [vmem:[%s7199 + $0x48] sm:$0xf]
        %v7219 = vld [vmem:[%s7199 + $0x4c] sm:$0xf]
        %v7220 = vld [vmem:[%s7199 + $0x50] sm:$0xf]
        %v7221 = vld [vmem:[%s7199 + $0x54] sm:$0xf]
        %v7222 = vld [vmem:[%s7199 + $0x58] sm:$0xf]
        %v7223 = vld [vmem:[%s7199 + $0x5c] sm:$0xf]
        %v7224 = vld [vmem:[%s7199 + $0x60] sm:$0xf]
        %v7225 = vld [vmem:[%s7199 + $0x64] sm:$0xf]
        %v7226 = vld [vmem:[%s7199 + $0x68] sm:$0xf]
        %v7227 = vld [vmem:[%s7199 + $0x6c] sm:$0xf]
        %v7228 = vld [vmem:[%s7199 + $0x70] sm:$0xf]
        %v7229 = vld [vmem:[%s7199 + $0x74] sm:$0xf]
        %v7230 = vld [vmem:[%s7199 + $0x78] sm:$0xf]
        %v7231 = vld [vmem:[%s7199 + $0x7c] sm:$0xf]
        %v7248 = vunpack.c.l.b16 %v6693
        %v7249 = vunpack.c.h.b16 %v6693
        %v7250 = vunpack.c.l.b16 %v6694
        %v7251 = vunpack.c.h.b16 %v6694
        %v7252 = vunpack.c.l.b16 %v6696
        %v7253 = vunpack.c.h.b16 %v6696
        %v7254 = vunpack.c.l.b16 %v6697
        %v7255 = vunpack.c.h.b16 %v6697
        %v7256 = vunpack.c.l.b16 %v6699
        %v7257 = vunpack.c.h.b16 %v6699
        %v7258 = vunpack.c.l.b16 %v6700
        %v7259 = vunpack.c.h.b16 %v6700
        %v7260 = vunpack.c.l.b16 %v6702
        %v7261 = vunpack.c.h.b16 %v6702
        %v7262 = vunpack.c.l.b16 %v6703
        %v7263 = vunpack.c.h.b16 %v6703
        %v7264 = vunpack.c.l.b16 %v6705
        %v7265 = vunpack.c.h.b16 %v6705
        %v7266 = vunpack.c.l.b16 %v6706
        %v7267 = vunpack.c.h.b16 %v6706
        %v7268 = vunpack.c.l.b16 %v6708
        %v7269 = vunpack.c.h.b16 %v6708
        %v7270 = vunpack.c.l.b16 %v6709
        %v7271 = vunpack.c.h.b16 %v6709
        %v7272 = vunpack.c.l.b16 %v6711
        %v7273 = vunpack.c.h.b16 %v6711
        %v7274 = vunpack.c.l.b16 %v6712
        %v7275 = vunpack.c.h.b16 %v6712
        %v7276 = vunpack.c.l.b16 %v6714
        %v7277 = vunpack.c.h.b16 %v6714
        %v7278 = vunpack.c.l.b16 %v6715
        %v7279 = vunpack.c.h.b16 %v6715
        %v7280 = vpack.c.b16 %v7250, %v7248
        %v7281 = vpack.c.b16 %v7251, %v7249
        %v7282 = vpack.c.b16 %v7254, %v7252
        %v7283 = vpack.c.b16 %v7255, %v7253
        %v7284 = vpack.c.b16 %v7258, %v7256
        %v7285 = vpack.c.b16 %v7259, %v7257
        %v7286 = vpack.c.b16 %v7262, %v7260
        %v7287 = vpack.c.b16 %v7263, %v7261
        %v7288 = vpack.c.b16 %v7266, %v7264
        %v7289 = vpack.c.b16 %v7267, %v7265
        %v7290 = vpack.c.b16 %v7270, %v7268
        %v7291 = vpack.c.b16 %v7271, %v7269
        %v7292 = vpack.c.b16 %v7274, %v7272
        %v7293 = vpack.c.b16 %v7275, %v7273
        %v7294 = vpack.c.b16 %v7278, %v7276
        %v7295 = vpack.c.b16 %v7279, %v7277
        %v7344 = vunpack.c.l.b16 %v7200
        %v7345 = vunpack.c.l.b16 %v7201
        %v7346 = vunpack.c.l.b16 %v7202
        %v7347 = vunpack.c.l.b16 %v7203
        %v7348 = vunpack.c.l.b16 %v7204
        %v7349 = vunpack.c.l.b16 %v7205
        %v7350 = vunpack.c.l.b16 %v7206
        %v7351 = vunpack.c.l.b16 %v7207
        %v7352 = vunpack.c.l.b16 %v7208
        %v7353 = vunpack.c.l.b16 %v7209
        %v7354 = vunpack.c.l.b16 %v7210
        %v7355 = vunpack.c.l.b16 %v7211
        %v7356 = vunpack.c.l.b16 %v7212
        %v7357 = vunpack.c.l.b16 %v7213
        %v7358 = vunpack.c.l.b16 %v7214
        %v7359 = vunpack.c.l.b16 %v7215
        %v7360 = vunpack.c.l.b16 %v7216
        %v7361 = vunpack.c.l.b16 %v7217
        %v7362 = vunpack.c.l.b16 %v7218
        %v7363 = vunpack.c.l.b16 %v7219
        %v7364 = vunpack.c.l.b16 %v7220
        %v7365 = vunpack.c.l.b16 %v7221
        %v7366 = vunpack.c.l.b16 %v7222
        %v7367 = vunpack.c.l.b16 %v7223
        %v7368 = vunpack.c.l.b16 %v7224
        %v7369 = vunpack.c.l.b16 %v7225
        %v7370 = vunpack.c.l.b16 %v7226
        %v7371 = vunpack.c.l.b16 %v7227
        %v7372 = vunpack.c.l.b16 %v7228
        %v7373 = vunpack.c.l.b16 %v7229
        %v7374 = vunpack.c.l.b16 %v7230
        %v7375 = vunpack.c.l.b16 %v7231
        %v7376 = vpack.c.b16 %v7345, %v7344
        %v7377 = vpack.c.b16 %v7347, %v7346
        %v7378 = vpack.c.b16 %v7349, %v7348
        %v7379 = vpack.c.b16 %v7351, %v7350
        %v7380 = vpack.c.b16 %v7353, %v7352
        %v7381 = vpack.c.b16 %v7355, %v7354
        %v7382 = vpack.c.b16 %v7357, %v7356
        %v7383 = vpack.c.b16 %v7359, %v7358
        %v7384 = vpack.c.b16 %v7361, %v7360
        %v7385 = vpack.c.b16 %v7363, %v7362
        %v7386 = vpack.c.b16 %v7365, %v7364
        %v7387 = vpack.c.b16 %v7367, %v7366
        %v7388 = vpack.c.b16 %v7369, %v7368
        %v7389 = vpack.c.b16 %v7371, %v7370
        %v7390 = vpack.c.b16 %v7373, %v7372
        %v7391 = vpack.c.b16 %v7375, %v7374
        %7408 = vmatpush.bf16.msra.mxu0 %v7383
        %7409 = vmatpush.bf16.msra.mxu0 %v7382
        %7410 = vmatpush.bf16.msra.mxu0 %v7381
        %7411 = vmatpush.bf16.msra.mxu0 %v7380
        %7412 = vmatpush.bf16.msra.mxu0 %v7379
        %7413 = vmatpush.bf16.msra.mxu0 %v7378
        %7414 = vmatpush.bf16.msra.mxu0 %v7377
        %7415 = vmatpush.bf16.msra.mxu0 %v7376
        %7416 = vmatmul.bf16.gmra.mxu0 %v7280
        %v7417 = vpop.f32.mrf.mxu0
        %v7418 = vadd.f32 0.0, %v7417
        %v7419 = vpop.f32.mrf.mxu0
        %v7420 = vadd.f32 0.0, %v7419
        %7421 = vmatmul.bf16.gmra.mxu0 %v7282
        %v7422 = vpop.f32.mrf.mxu0
        %v7423 = vadd.f32 0.0, %v7422
        %v7424 = vpop.f32.mrf.mxu0
        %v7425 = vadd.f32 0.0, %v7424
        %7426 = vmatmul.bf16.gmra.mxu0 %v7284
        %v7427 = vpop.f32.mrf.mxu0
        %v7428 = vadd.f32 0.0, %v7427
        %v7429 = vpop.f32.mrf.mxu0
        %v7430 = vadd.f32 0.0, %v7429
        %7431 = vmatmul.bf16.gmra.mxu0 %v7286
        %v7432 = vpop.f32.mrf.mxu0
        %v7433 = vadd.f32 0.0, %v7432
        %v7434 = vpop.f32.mrf.mxu0
        %v7435 = vadd.f32 0.0, %v7434
        %7436 = vmatmul.bf16.gmra.mxu0 %v7288
        %v7437 = vpop.f32.mrf.mxu0
        %v7438 = vadd.f32 0.0, %v7437
        %v7439 = vpop.f32.mrf.mxu0
        %v7440 = vadd.f32 0.0, %v7439
        %7441 = vmatmul.bf16.gmra.mxu0 %v7290
        %v7442 = vpop.f32.mrf.mxu0
        %v7443 = vadd.f32 0.0, %v7442
        %v7444 = vpop.f32.mrf.mxu0
        %v7445 = vadd.f32 0.0, %v7444
        %7446 = vmatmul.bf16.gmra.mxu0 %v7292
        %v7447 = vpop.f32.mrf.mxu0
        %v7448 = vadd.f32 0.0, %v7447
        %v7449 = vpop.f32.mrf.mxu0
        %v7450 = vadd.f32 0.0, %v7449
        %7451 = vmatmul.bf16.gmra.mxu0 %v7294
        %v7452 = vpop.f32.mrf.mxu0
        %v7453 = vadd.f32 0.0, %v7452
        %v7454 = vpop.f32.mrf.mxu0
        %v7455 = vadd.f32 0.0, %v7454
        %7456 = vdwg.mxu0
        %7457 = vmatpush.bf16.msra.mxu0 %v7391
        %7458 = vmatpush.bf16.msra.mxu0 %v7390
        %7459 = vmatpush.bf16.msra.mxu0 %v7389
        %7460 = vmatpush.bf16.msra.mxu0 %v7388
        %7461 = vmatpush.bf16.msra.mxu0 %v7387
        %7462 = vmatpush.bf16.msra.mxu0 %v7386
        %7463 = vmatpush.bf16.msra.mxu0 %v7385
        %7464 = vmatpush.bf16.msra.mxu0 %v7384
        %7465 = vmatmul.bf16.gmra.mxu0 %v7281
        %v7466 = vpop.f32.mrf.mxu0
        %v7467 = vadd.f32 %v7418, %v7466
        %v7468 = vpop.f32.mrf.mxu0
        %v7469 = vadd.f32 %v7420, %v7468
        %7470 = vmatmul.bf16.gmra.mxu0 %v7283
        %v7471 = vpop.f32.mrf.mxu0
        %v7472 = vadd.f32 %v7423, %v7471
        %v7473 = vpop.f32.mrf.mxu0
        %v7474 = vadd.f32 %v7425, %v7473
        %7475 = vmatmul.bf16.gmra.mxu0 %v7285
        %v7476 = vpop.f32.mrf.mxu0
        %v7477 = vadd.f32 %v7428, %v7476
        %v7478 = vpop.f32.mrf.mxu0
        %v7479 = vadd.f32 %v7430, %v7478
        %7480 = vmatmul.bf16.gmra.mxu0 %v7287
        %v7481 = vpop.f32.mrf.mxu0
        %v7482 = vadd.f32 %v7433, %v7481
        %v7483 = vpop.f32.mrf.mxu0
        %v7484 = vadd.f32 %v7435, %v7483
        %7485 = vmatmul.bf16.gmra.mxu0 %v7289
        %v7486 = vpop.f32.mrf.mxu0
        %v7487 = vadd.f32 %v7438, %v7486
        %v7488 = vpop.f32.mrf.mxu0
        %v7489 = vadd.f32 %v7440, %v7488
        %7490 = vmatmul.bf16.gmra.mxu0 %v7291
        %v7491 = vpop.f32.mrf.mxu0
        %v7492 = vadd.f32 %v7443, %v7491
        %v7493 = vpop.f32.mrf.mxu0
        %v7494 = vadd.f32 %v7445, %v7493
        %7495 = vmatmul.bf16.gmra.mxu0 %v7293
        %v7496 = vpop.f32.mrf.mxu0
        %v7497 = vadd.f32 %v7448, %v7496
        %v7498 = vpop.f32.mrf.mxu0
        %v7499 = vadd.f32 %v7450, %v7498
        %7500 = vmatmul.bf16.gmra.mxu0 %v7295
        %v7501 = vpop.f32.mrf.mxu0
        %v7502 = vadd.f32 %v7453, %v7501
        %v7503 = vpop.f32.mrf.mxu0
        %v7504 = vadd.f32 %v7455, %v7503
        %7505 = vdwg.mxu0
        %v7506 = vadd.f32 %v7183, %v7467
        %v7507 = vadd.f32 %v7184, %v7469
        %v7508 = vadd.f32 %v7185, %v7472
        %v7509 = vadd.f32 %v7186, %v7474
        %v7510 = vadd.f32 %v7187, %v7477
        %v7511 = vadd.f32 %v7188, %v7479
        %v7512 = vadd.f32 %v7189, %v7482
        %v7513 = vadd.f32 %v7190, %v7484
        %v7514 = vadd.f32 %v7191, %v7487
        %v7515 = vadd.f32 %v7192, %v7489
        %v7516 = vadd.f32 %v7193, %v7492
        %v7517 = vadd.f32 %v7194, %v7494
        %v7518 = vadd.f32 %v7195, %v7497
        %v7519 = vadd.f32 %v7196, %v7499
        %v7520 = vadd.f32 %v7197, %v7502
        %v7521 = vadd.f32 %v7198, %v7504
        %v7522 = vld [vmem:[%s6691 + $0x8] sm:$0xff]
        %v7523 = vld [vmem:[%s6691 + $0x10] sm:$0xff]
        %v7524 = vld [vmem:[%s6691 + $0x18] sm:$0x11]
        %v7525 = vld [vmem:[%s6691 + $0x28] sm:$0xff]
        %v7526 = vld [vmem:[%s6691 + $0x30] sm:$0xff]
        %v7527 = vld [vmem:[%s6691 + $0x38] sm:$0x11]
        %v7528 = vld [vmem:[%s6691 + $0x48] sm:$0xff]
        %v7529 = vld [vmem:[%s6691 + $0x50] sm:$0xff]
        %v7530 = vld [vmem:[%s6691 + $0x58] sm:$0x11]
        %v7531 = vld [vmem:[%s6691 + $0x68] sm:$0xff]
        %v7532 = vld [vmem:[%s6691 + $0x70] sm:$0xff]
        %v7533 = vld [vmem:[%s6691 + $0x78] sm:$0x11]
        %v7534 = vld [vmem:[%s6691 + $0x88] sm:$0xff]
        %v7535 = vld [vmem:[%s6691 + $0x90] sm:$0xff]
        %v7536 = vld [vmem:[%s6691 + $0x98] sm:$0x11]
        %v7537 = vld [vmem:[%s6691 + $0xa8] sm:$0xff]
        %v7538 = vld [vmem:[%s6691 + $0xb0] sm:$0xff]
        %v7539 = vld [vmem:[%s6691 + $0xb8] sm:$0x11]
        %v7540 = vld [vmem:[%s6691 + $0xc8] sm:$0xff]
        %v7541 = vld [vmem:[%s6691 + $0xd0] sm:$0xff]
        %v7542 = vld [vmem:[%s6691 + $0xd8] sm:$0x11]
        %v7543 = vld [vmem:[%s6691 + $0xe8] sm:$0xff]
        %v7544 = vld [vmem:[%s6691 + $0xf0] sm:$0xff]
        %v7545 = vld [vmem:[%s6691 + $0xf8] sm:$0x11]
        %v7547 = vshrl.u32 %v7522, 16
        %v7549 = vrot.slane %v7547, 4
        %v7550 = vshll.u32 %v7522, 16
        %v7552 = vrot.slane %v7550, 5
        %v7553 = vor.u32 %v7549, %v7552
        %v7554 = vrot.slane %v7553, 4
        %v7556 = vshll.u32 %v7523, 16
        %v7558 = vrot.slane %v7556, 5
        %v7559 = vsel %vm361, %v7554, %v7558
        %v7560 = vshrl.u32 %v7523, 16
        %v7562 = vrot.slane %v7560, 4
        %v7563 = vor.u32 %v7562, %v7558
        %v7564 = vrot.slane %v7563, 4
        %v7566 = vshll.u32 %v7524, 16
        %v7568 = vrot.slane %v7566, 5
        %v7569 = vsel %vm361, %v7564, %v7568
        %v7571 = vshrl.u32 %v7525, 16
        %v7573 = vrot.slane %v7571, 4
        %v7574 = vshll.u32 %v7525, 16
        %v7576 = vrot.slane %v7574, 5
        %v7577 = vor.u32 %v7573, %v7576
        %v7578 = vrot.slane %v7577, 4
        %v7580 = vshll.u32 %v7526, 16
        %v7582 = vrot.slane %v7580, 5
        %v7583 = vsel %vm361, %v7578, %v7582
        %v7584 = vshrl.u32 %v7526, 16
        %v7586 = vrot.slane %v7584, 4
        %v7587 = vor.u32 %v7586, %v7582
        %v7588 = vrot.slane %v7587, 4
        %v7590 = vshll.u32 %v7527, 16
        %v7592 = vrot.slane %v7590, 5
        %v7593 = vsel %vm361, %v7588, %v7592
        %v7595 = vshrl.u32 %v7528, 16
        %v7597 = vrot.slane %v7595, 4
        %v7598 = vshll.u32 %v7528, 16
        %v7600 = vrot.slane %v7598, 5
        %v7601 = vor.u32 %v7597, %v7600
        %v7602 = vrot.slane %v7601, 4
        %v7604 = vshll.u32 %v7529, 16
        %v7606 = vrot.slane %v7604, 5
        %v7607 = vsel %vm361, %v7602, %v7606
        %v7608 = vshrl.u32 %v7529, 16
        %v7610 = vrot.slane %v7608, 4
        %v7611 = vor.u32 %v7610, %v7606
        %v7612 = vrot.slane %v7611, 4
        %v7614 = vshll.u32 %v7530, 16
        %v7616 = vrot.slane %v7614, 5
        %v7617 = vsel %vm361, %v7612, %v7616
        %v7619 = vshrl.u32 %v7531, 16
        %v7621 = vrot.slane %v7619, 4
        %v7622 = vshll.u32 %v7531, 16
        %v7624 = vrot.slane %v7622, 5
        %v7625 = vor.u32 %v7621, %v7624
        %v7626 = vrot.slane %v7625, 4
        %v7628 = vshll.u32 %v7532, 16
        %v7630 = vrot.slane %v7628, 5
        %v7631 = vsel %vm361, %v7626, %v7630
        %v7632 = vshrl.u32 %v7532, 16
        %v7634 = vrot.slane %v7632, 4
        %v7635 = vor.u32 %v7634, %v7630
        %v7636 = vrot.slane %v7635, 4
        %v7638 = vshll.u32 %v7533, 16
        %v7640 = vrot.slane %v7638, 5
        %v7641 = vsel %vm361, %v7636, %v7640
        %v7643 = vshrl.u32 %v7534, 16
        %v7645 = vrot.slane %v7643, 4
        %v7646 = vshll.u32 %v7534, 16
        %v7648 = vrot.slane %v7646, 5
        %v7649 = vor.u32 %v7645, %v7648
        %v7650 = vrot.slane %v7649, 4
        %v7652 = vshll.u32 %v7535, 16
        %v7654 = vrot.slane %v7652, 5
        %v7655 = vsel %vm361, %v7650, %v7654
        %v7656 = vshrl.u32 %v7535, 16
        %v7658 = vrot.slane %v7656, 4
        %v7659 = vor.u32 %v7658, %v7654
        %v7660 = vrot.slane %v7659, 4
        %v7662 = vshll.u32 %v7536, 16
        %v7664 = vrot.slane %v7662, 5
        %v7665 = vsel %vm361, %v7660, %v7664
        %v7667 = vshrl.u32 %v7537, 16
        %v7669 = vrot.slane %v7667, 4
        %v7670 = vshll.u32 %v7537, 16
        %v7672 = vrot.slane %v7670, 5
        %v7673 = vor.u32 %v7669, %v7672
        %v7674 = vrot.slane %v7673, 4
        %v7676 = vshll.u32 %v7538, 16
        %v7678 = vrot.slane %v7676, 5
        %v7679 = vsel %vm361, %v7674, %v7678
        %v7680 = vshrl.u32 %v7538, 16
        %v7682 = vrot.slane %v7680, 4
        %v7683 = vor.u32 %v7682, %v7678
        %v7684 = vrot.slane %v7683, 4
        %v7686 = vshll.u32 %v7539, 16
        %v7688 = vrot.slane %v7686, 5
        %v7689 = vsel %vm361, %v7684, %v7688
        %v7691 = vshrl.u32 %v7540, 16
        %v7693 = vrot.slane %v7691, 4
        %v7694 = vshll.u32 %v7540, 16
        %v7696 = vrot.slane %v7694, 5
        %v7697 = vor.u32 %v7693, %v7696
        %v7698 = vrot.slane %v7697, 4
        %v7700 = vshll.u32 %v7541, 16
        %v7702 = vrot.slane %v7700, 5
        %v7703 = vsel %vm361, %v7698, %v7702
        %v7704 = vshrl.u32 %v7541, 16
        %v7706 = vrot.slane %v7704, 4
        %v7707 = vor.u32 %v7706, %v7702
        %v7708 = vrot.slane %v7707, 4
        %v7710 = vshll.u32 %v7542, 16
        %v7712 = vrot.slane %v7710, 5
        %v7713 = vsel %vm361, %v7708, %v7712
        %v7715 = vshrl.u32 %v7543, 16
        %v7717 = vrot.slane %v7715, 4
        %v7718 = vshll.u32 %v7543, 16
        %v7720 = vrot.slane %v7718, 5
        %v7721 = vor.u32 %v7717, %v7720
        %v7722 = vrot.slane %v7721, 4
        %v7724 = vshll.u32 %v7544, 16
        %v7726 = vrot.slane %v7724, 5
        %v7727 = vsel %vm361, %v7722, %v7726
        %v7728 = vshrl.u32 %v7544, 16
        %v7730 = vrot.slane %v7728, 4
        %v7731 = vor.u32 %v7730, %v7726
        %v7732 = vrot.slane %v7731, 4
        %v7734 = vshll.u32 %v7545, 16
        %v7736 = vrot.slane %v7734, 5
        %v7737 = vsel %vm361, %v7732, %v7736
        %s7738 = scalar_lea.vmem %s2, 640
        %v7739 = vld [vmem:[%s7738] sm:$0xf]
        %v7740 = vld [vmem:[%s7738 + $0x4] sm:$0xf]
        %v7741 = vld [vmem:[%s7738 + $0x8] sm:$0xf]
        %v7742 = vld [vmem:[%s7738 + $0xc] sm:$0xf]
        %v7743 = vld [vmem:[%s7738 + $0x10] sm:$0xf]
        %v7744 = vld [vmem:[%s7738 + $0x14] sm:$0xf]
        %v7745 = vld [vmem:[%s7738 + $0x18] sm:$0xf]
        %v7746 = vld [vmem:[%s7738 + $0x1c] sm:$0xf]
        %v7747 = vld [vmem:[%s7738 + $0x20] sm:$0xf]
        %v7748 = vld [vmem:[%s7738 + $0x24] sm:$0xf]
        %v7749 = vld [vmem:[%s7738 + $0x28] sm:$0xf]
        %v7750 = vld [vmem:[%s7738 + $0x2c] sm:$0xf]
        %v7751 = vld [vmem:[%s7738 + $0x30] sm:$0xf]
        %v7752 = vld [vmem:[%s7738 + $0x34] sm:$0xf]
        %v7753 = vld [vmem:[%s7738 + $0x38] sm:$0xf]
        %v7754 = vld [vmem:[%s7738 + $0x3c] sm:$0xf]
        %v7755 = vld [vmem:[%s7738 + $0x40] sm:$0xf]
        %v7756 = vld [vmem:[%s7738 + $0x44] sm:$0xf]
        %v7757 = vld [vmem:[%s7738 + $0x48] sm:$0xf]
        %v7758 = vld [vmem:[%s7738 + $0x4c] sm:$0xf]
        %v7759 = vld [vmem:[%s7738 + $0x50] sm:$0xf]
        %v7760 = vld [vmem:[%s7738 + $0x54] sm:$0xf]
        %v7761 = vld [vmem:[%s7738 + $0x58] sm:$0xf]
        %v7762 = vld [vmem:[%s7738 + $0x5c] sm:$0xf]
        %v7763 = vld [vmem:[%s7738 + $0x60] sm:$0xf]
        %v7764 = vld [vmem:[%s7738 + $0x64] sm:$0xf]
        %v7765 = vld [vmem:[%s7738 + $0x68] sm:$0xf]
        %v7766 = vld [vmem:[%s7738 + $0x6c] sm:$0xf]
        %v7767 = vld [vmem:[%s7738 + $0x70] sm:$0xf]
        %v7768 = vld [vmem:[%s7738 + $0x74] sm:$0xf]
        %v7769 = vld [vmem:[%s7738 + $0x78] sm:$0xf]
        %v7770 = vld [vmem:[%s7738 + $0x7c] sm:$0xf]
        %v7771 = vunpack.c.l.b16 %v7559
        %v7772 = vunpack.c.h.b16 %v7559
        %v7773 = vunpack.c.l.b16 %v7569
        %v7774 = vunpack.c.h.b16 %v7569
        %v7775 = vunpack.c.l.b16 %v7583
        %v7776 = vunpack.c.h.b16 %v7583
        %v7777 = vunpack.c.l.b16 %v7593
        %v7778 = vunpack.c.h.b16 %v7593
        %v7779 = vunpack.c.l.b16 %v7607
        %v7780 = vunpack.c.h.b16 %v7607
        %v7781 = vunpack.c.l.b16 %v7617
        %v7782 = vunpack.c.h.b16 %v7617
        %v7783 = vunpack.c.l.b16 %v7631
        %v7784 = vunpack.c.h.b16 %v7631
        %v7785 = vunpack.c.l.b16 %v7641
        %v7786 = vunpack.c.h.b16 %v7641
        %v7787 = vunpack.c.l.b16 %v7655
        %v7788 = vunpack.c.h.b16 %v7655
        %v7789 = vunpack.c.l.b16 %v7665
        %v7790 = vunpack.c.h.b16 %v7665
        %v7791 = vunpack.c.l.b16 %v7679
        %v7792 = vunpack.c.h.b16 %v7679
        %v7793 = vunpack.c.l.b16 %v7689
        %v7794 = vunpack.c.h.b16 %v7689
        %v7795 = vunpack.c.l.b16 %v7703
        %v7796 = vunpack.c.h.b16 %v7703
        %v7797 = vunpack.c.l.b16 %v7713
        %v7798 = vunpack.c.h.b16 %v7713
        %v7799 = vunpack.c.l.b16 %v7727
        %v7800 = vunpack.c.h.b16 %v7727
        %v7801 = vunpack.c.l.b16 %v7737
        %v7802 = vunpack.c.h.b16 %v7737
        %v7803 = vpack.c.b16 %v7773, %v7771
        %v7804 = vpack.c.b16 %v7774, %v7772
        %v7805 = vpack.c.b16 %v7777, %v7775
        %v7806 = vpack.c.b16 %v7778, %v7776
        %v7807 = vpack.c.b16 %v7781, %v7779
        %v7808 = vpack.c.b16 %v7782, %v7780
        %v7809 = vpack.c.b16 %v7785, %v7783
        %v7810 = vpack.c.b16 %v7786, %v7784
        %v7811 = vpack.c.b16 %v7789, %v7787
        %v7812 = vpack.c.b16 %v7790, %v7788
        %v7813 = vpack.c.b16 %v7793, %v7791
        %v7814 = vpack.c.b16 %v7794, %v7792
        %v7815 = vpack.c.b16 %v7797, %v7795
        %v7816 = vpack.c.b16 %v7798, %v7796
        %v7817 = vpack.c.b16 %v7801, %v7799
        %v7818 = vpack.c.b16 %v7802, %v7800
        %v7867 = vunpack.c.l.b16 %v7739
        %v7868 = vunpack.c.l.b16 %v7740
        %v7869 = vunpack.c.l.b16 %v7741
        %v7870 = vunpack.c.l.b16 %v7742
        %v7871 = vunpack.c.l.b16 %v7743
        %v7872 = vunpack.c.l.b16 %v7744
        %v7873 = vunpack.c.l.b16 %v7745
        %v7874 = vunpack.c.l.b16 %v7746
        %v7875 = vunpack.c.l.b16 %v7747
        %v7876 = vunpack.c.l.b16 %v7748
        %v7877 = vunpack.c.l.b16 %v7749
        %v7878 = vunpack.c.l.b16 %v7750
        %v7879 = vunpack.c.l.b16 %v7751
        %v7880 = vunpack.c.l.b16 %v7752
        %v7881 = vunpack.c.l.b16 %v7753
        %v7882 = vunpack.c.l.b16 %v7754
        %v7883 = vunpack.c.l.b16 %v7755
        %v7884 = vunpack.c.l.b16 %v7756
        %v7885 = vunpack.c.l.b16 %v7757
        %v7886 = vunpack.c.l.b16 %v7758
        %v7887 = vunpack.c.l.b16 %v7759
        %v7888 = vunpack.c.l.b16 %v7760
        %v7889 = vunpack.c.l.b16 %v7761
        %v7890 = vunpack.c.l.b16 %v7762
        %v7891 = vunpack.c.l.b16 %v7763
        %v7892 = vunpack.c.l.b16 %v7764
        %v7893 = vunpack.c.l.b16 %v7765
        %v7894 = vunpack.c.l.b16 %v7766
        %v7895 = vunpack.c.l.b16 %v7767
        %v7896 = vunpack.c.l.b16 %v7768
        %v7897 = vunpack.c.l.b16 %v7769
        %v7898 = vunpack.c.l.b16 %v7770
        %v7899 = vpack.c.b16 %v7868, %v7867
        %v7900 = vpack.c.b16 %v7870, %v7869
        %v7901 = vpack.c.b16 %v7872, %v7871
        %v7902 = vpack.c.b16 %v7874, %v7873
        %v7903 = vpack.c.b16 %v7876, %v7875
        %v7904 = vpack.c.b16 %v7878, %v7877
        %v7905 = vpack.c.b16 %v7880, %v7879
        %v7906 = vpack.c.b16 %v7882, %v7881
        %v7907 = vpack.c.b16 %v7884, %v7883
        %v7908 = vpack.c.b16 %v7886, %v7885
        %v7909 = vpack.c.b16 %v7888, %v7887
        %v7910 = vpack.c.b16 %v7890, %v7889
        %v7911 = vpack.c.b16 %v7892, %v7891
        %v7912 = vpack.c.b16 %v7894, %v7893
        %v7913 = vpack.c.b16 %v7896, %v7895
        %v7914 = vpack.c.b16 %v7898, %v7897
        %7931 = vmatpush.bf16.msra.mxu0 %v7906
        %7932 = vmatpush.bf16.msra.mxu0 %v7905
        %7933 = vmatpush.bf16.msra.mxu0 %v7904
        %7934 = vmatpush.bf16.msra.mxu0 %v7903
        %7935 = vmatpush.bf16.msra.mxu0 %v7902
        %7936 = vmatpush.bf16.msra.mxu0 %v7901
        %7937 = vmatpush.bf16.msra.mxu0 %v7900
        %7938 = vmatpush.bf16.msra.mxu0 %v7899
        %7939 = vmatmul.bf16.gmra.mxu0 %v7803
        %v7940 = vpop.f32.mrf.mxu0
        %v7941 = vadd.f32 0.0, %v7940
        %v7942 = vpop.f32.mrf.mxu0
        %v7943 = vadd.f32 0.0, %v7942
        %7944 = vmatmul.bf16.gmra.mxu0 %v7805
        %v7945 = vpop.f32.mrf.mxu0
        %v7946 = vadd.f32 0.0, %v7945
        %v7947 = vpop.f32.mrf.mxu0
        %v7948 = vadd.f32 0.0, %v7947
        %7949 = vmatmul.bf16.gmra.mxu0 %v7807
        %v7950 = vpop.f32.mrf.mxu0
        %v7951 = vadd.f32 0.0, %v7950
        %v7952 = vpop.f32.mrf.mxu0
        %v7953 = vadd.f32 0.0, %v7952
        %7954 = vmatmul.bf16.gmra.mxu0 %v7809
        %v7955 = vpop.f32.mrf.mxu0
        %v7956 = vadd.f32 0.0, %v7955
        %v7957 = vpop.f32.mrf.mxu0
        %v7958 = vadd.f32 0.0, %v7957
        %7959 = vmatmul.bf16.gmra.mxu0 %v7811
        %v7960 = vpop.f32.mrf.mxu0
        %v7961 = vadd.f32 0.0, %v7960
        %v7962 = vpop.f32.mrf.mxu0
        %v7963 = vadd.f32 0.0, %v7962
        %7964 = vmatmul.bf16.gmra.mxu0 %v7813
        %v7965 = vpop.f32.mrf.mxu0
        %v7966 = vadd.f32 0.0, %v7965
        %v7967 = vpop.f32.mrf.mxu0
        %v7968 = vadd.f32 0.0, %v7967
        %7969 = vmatmul.bf16.gmra.mxu0 %v7815
        %v7970 = vpop.f32.mrf.mxu0
        %v7971 = vadd.f32 0.0, %v7970
        %v7972 = vpop.f32.mrf.mxu0
        %v7973 = vadd.f32 0.0, %v7972
        %7974 = vmatmul.bf16.gmra.mxu0 %v7817
        %v7975 = vpop.f32.mrf.mxu0
        %v7976 = vadd.f32 0.0, %v7975
        %v7977 = vpop.f32.mrf.mxu0
        %v7978 = vadd.f32 0.0, %v7977
        %7979 = vdwg.mxu0
        %7980 = vmatpush.bf16.msra.mxu0 %v7914
        %7981 = vmatpush.bf16.msra.mxu0 %v7913
        %7982 = vmatpush.bf16.msra.mxu0 %v7912
        %7983 = vmatpush.bf16.msra.mxu0 %v7911
        %7984 = vmatpush.bf16.msra.mxu0 %v7910
        %7985 = vmatpush.bf16.msra.mxu0 %v7909
        %7986 = vmatpush.bf16.msra.mxu0 %v7908
        %7987 = vmatpush.bf16.msra.mxu0 %v7907
        %7988 = vmatmul.bf16.gmra.mxu0 %v7804
        %v7989 = vpop.f32.mrf.mxu0
        %v7990 = vadd.f32 %v7941, %v7989
        %v7991 = vpop.f32.mrf.mxu0
        %v7992 = vadd.f32 %v7943, %v7991
        %7993 = vmatmul.bf16.gmra.mxu0 %v7806
        %v7994 = vpop.f32.mrf.mxu0
        %v7995 = vadd.f32 %v7946, %v7994
        %v7996 = vpop.f32.mrf.mxu0
        %v7997 = vadd.f32 %v7948, %v7996
        %7998 = vmatmul.bf16.gmra.mxu0 %v7808
        %v7999 = vpop.f32.mrf.mxu0
        %v8000 = vadd.f32 %v7951, %v7999
        %v8001 = vpop.f32.mrf.mxu0
        %v8002 = vadd.f32 %v7953, %v8001
        %8003 = vmatmul.bf16.gmra.mxu0 %v7810
        %v8004 = vpop.f32.mrf.mxu0
        %v8005 = vadd.f32 %v7956, %v8004
        %v8006 = vpop.f32.mrf.mxu0
        %v8007 = vadd.f32 %v7958, %v8006
        %8008 = vmatmul.bf16.gmra.mxu0 %v7812
        %v8009 = vpop.f32.mrf.mxu0
        %v8010 = vadd.f32 %v7961, %v8009
        %v8011 = vpop.f32.mrf.mxu0
        %v8012 = vadd.f32 %v7963, %v8011
        %8013 = vmatmul.bf16.gmra.mxu0 %v7814
        %v8014 = vpop.f32.mrf.mxu0
        %v8015 = vadd.f32 %v7966, %v8014
        %v8016 = vpop.f32.mrf.mxu0
        %v8017 = vadd.f32 %v7968, %v8016
        %8018 = vmatmul.bf16.gmra.mxu0 %v7816
        %v8019 = vpop.f32.mrf.mxu0
        %v8020 = vadd.f32 %v7971, %v8019
        %v8021 = vpop.f32.mrf.mxu0
        %v8022 = vadd.f32 %v7973, %v8021
        %8023 = vmatmul.bf16.gmra.mxu0 %v7818
        %v8024 = vpop.f32.mrf.mxu0
        %v8025 = vadd.f32 %v7976, %v8024
        %v8026 = vpop.f32.mrf.mxu0
        %v8027 = vadd.f32 %v7978, %v8026
        %8028 = vdwg.mxu0
        %v8029 = vadd.f32 %v7506, %v7990
        %v8030 = vadd.f32 %v7507, %v7992
        %v8031 = vadd.f32 %v7508, %v7995
        %v8032 = vadd.f32 %v7509, %v7997
        %v8033 = vadd.f32 %v7510, %v8000
        %v8034 = vadd.f32 %v7511, %v8002
        %v8035 = vadd.f32 %v7512, %v8005
        %v8036 = vadd.f32 %v7513, %v8007
        %v8037 = vadd.f32 %v7514, %v8010
        %v8038 = vadd.f32 %v7515, %v8012
        %v8039 = vadd.f32 %v7516, %v8015
        %v8040 = vadd.f32 %v7517, %v8017
        %v8041 = vadd.f32 %v7518, %v8020
        %v8042 = vadd.f32 %v7519, %v8022
        %v8043 = vadd.f32 %v7520, %v8025
        %v8044 = vadd.f32 %v7521, %v8027
        %s8045 = scalar_lea.vmem [#allocation2], 64
        %v8046 = vld [vmem:[%s8045] sm:$0x88]
        %v8047 = vld [vmem:[%s8045 + $0x8] sm:$0xff]
        %v8048 = vld [vmem:[%s8045 + $0x10] sm:$0xff]
        %v8049 = vld [vmem:[%s8045 + $0x20] sm:$0x88]
        %v8050 = vld [vmem:[%s8045 + $0x28] sm:$0xff]
        %v8051 = vld [vmem:[%s8045 + $0x30] sm:$0xff]
        %v8052 = vld [vmem:[%s8045 + $0x40] sm:$0x88]
        %v8053 = vld [vmem:[%s8045 + $0x48] sm:$0xff]
        %v8054 = vld [vmem:[%s8045 + $0x50] sm:$0xff]
        %v8055 = vld [vmem:[%s8045 + $0x60] sm:$0x88]
        %v8056 = vld [vmem:[%s8045 + $0x68] sm:$0xff]
        %v8057 = vld [vmem:[%s8045 + $0x70] sm:$0xff]
        %v8058 = vld [vmem:[%s8045 + $0x80] sm:$0x88]
        %v8059 = vld [vmem:[%s8045 + $0x88] sm:$0xff]
        %v8060 = vld [vmem:[%s8045 + $0x90] sm:$0xff]
        %v8061 = vld [vmem:[%s8045 + $0xa0] sm:$0x88]
        %v8062 = vld [vmem:[%s8045 + $0xa8] sm:$0xff]
        %v8063 = vld [vmem:[%s8045 + $0xb0] sm:$0xff]
        %v8064 = vld [vmem:[%s8045 + $0xc0] sm:$0x88]
        %v8065 = vld [vmem:[%s8045 + $0xc8] sm:$0xff]
        %v8066 = vld [vmem:[%s8045 + $0xd0] sm:$0xff]
        %v8067 = vld [vmem:[%s8045 + $0xe0] sm:$0x88]
        %v8068 = vld [vmem:[%s8045 + $0xe8] sm:$0xff]
        %v8069 = vld [vmem:[%s8045 + $0xf0] sm:$0xff]
        %v8071 = vshrl.u32 %v8046, 16
        %v8073 = vrot.slane %v8071, 7
        %v8074 = vrot.slane %v8073, 4
        %v8076 = vshrl.u32 %v8047, 16
        %v8078 = vrot.slane %v8076, 7
        %v8079 = vshll.u32 %v8047, 16
        %v8081 = vor.u32 %v8078, %v8079
        %v8082 = vsel %vm5394, %v8074, %v8081
        %v8083 = vrot.slane %v8078, 4
        %v8085 = vshrl.u32 %v8048, 16
        %v8087 = vrot.slane %v8085, 7
        %v8088 = vshll.u32 %v8048, 16
        %v8090 = vor.u32 %v8087, %v8088
        %v8091 = vsel %vm5394, %v8083, %v8090
        %v8093 = vshrl.u32 %v8049, 16
        %v8095 = vrot.slane %v8093, 7
        %v8096 = vrot.slane %v8095, 4
        %v8098 = vshrl.u32 %v8050, 16
        %v8100 = vrot.slane %v8098, 7
        %v8101 = vshll.u32 %v8050, 16
        %v8103 = vor.u32 %v8100, %v8101
        %v8104 = vsel %vm5394, %v8096, %v8103
        %v8105 = vrot.slane %v8100, 4
        %v8107 = vshrl.u32 %v8051, 16
        %v8109 = vrot.slane %v8107, 7
        %v8110 = vshll.u32 %v8051, 16
        %v8112 = vor.u32 %v8109, %v8110
        %v8113 = vsel %vm5394, %v8105, %v8112
        %v8115 = vshrl.u32 %v8052, 16
        %v8117 = vrot.slane %v8115, 7
        %v8118 = vrot.slane %v8117, 4
        %v8120 = vshrl.u32 %v8053, 16
        %v8122 = vrot.slane %v8120, 7
        %v8123 = vshll.u32 %v8053, 16
        %v8125 = vor.u32 %v8122, %v8123
        %v8126 = vsel %vm5394, %v8118, %v8125
        %v8127 = vrot.slane %v8122, 4
        %v8129 = vshrl.u32 %v8054, 16
        %v8131 = vrot.slane %v8129, 7
        %v8132 = vshll.u32 %v8054, 16
        %v8134 = vor.u32 %v8131, %v8132
        %v8135 = vsel %vm5394, %v8127, %v8134
        %v8137 = vshrl.u32 %v8055, 16
        %v8139 = vrot.slane %v8137, 7
        %v8140 = vrot.slane %v8139, 4
        %v8142 = vshrl.u32 %v8056, 16
        %v8144 = vrot.slane %v8142, 7
        %v8145 = vshll.u32 %v8056, 16
        %v8147 = vor.u32 %v8144, %v8145
        %v8148 = vsel %vm5394, %v8140, %v8147
        %v8149 = vrot.slane %v8144, 4
        %v8151 = vshrl.u32 %v8057, 16
        %v8153 = vrot.slane %v8151, 7
        %v8154 = vshll.u32 %v8057, 16
        %v8156 = vor.u32 %v8153, %v8154
        %v8157 = vsel %vm5394, %v8149, %v8156
        %v8159 = vshrl.u32 %v8058, 16
        %v8161 = vrot.slane %v8159, 7
        %v8162 = vrot.slane %v8161, 4
        %v8164 = vshrl.u32 %v8059, 16
        %v8166 = vrot.slane %v8164, 7
        %v8167 = vshll.u32 %v8059, 16
        %v8169 = vor.u32 %v8166, %v8167
        %v8170 = vsel %vm5394, %v8162, %v8169
        %v8171 = vrot.slane %v8166, 4
        %v8173 = vshrl.u32 %v8060, 16
        %v8175 = vrot.slane %v8173, 7
        %v8176 = vshll.u32 %v8060, 16
        %v8178 = vor.u32 %v8175, %v8176
        %v8179 = vsel %vm5394, %v8171, %v8178
        %v8181 = vshrl.u32 %v8061, 16
        %v8183 = vrot.slane %v8181, 7
        %v8184 = vrot.slane %v8183, 4
        %v8186 = vshrl.u32 %v8062, 16
        %v8188 = vrot.slane %v8186, 7
        %v8189 = vshll.u32 %v8062, 16
        %v8191 = vor.u32 %v8188, %v8189
        %v8192 = vsel %vm5394, %v8184, %v8191
        %v8193 = vrot.slane %v8188, 4
        %v8195 = vshrl.u32 %v8063, 16
        %v8197 = vrot.slane %v8195, 7
        %v8198 = vshll.u32 %v8063, 16
        %v8200 = vor.u32 %v8197, %v8198
        %v8201 = vsel %vm5394, %v8193, %v8200
        %v8203 = vshrl.u32 %v8064, 16
        %v8205 = vrot.slane %v8203, 7
        %v8206 = vrot.slane %v8205, 4
        %v8208 = vshrl.u32 %v8065, 16
        %v8210 = vrot.slane %v8208, 7
        %v8211 = vshll.u32 %v8065, 16
        %v8213 = vor.u32 %v8210, %v8211
        %v8214 = vsel %vm5394, %v8206, %v8213
        %v8215 = vrot.slane %v8210, 4
        %v8217 = vshrl.u32 %v8066, 16
        %v8219 = vrot.slane %v8217, 7
        %v8220 = vshll.u32 %v8066, 16
        %v8222 = vor.u32 %v8219, %v8220
        %v8223 = vsel %vm5394, %v8215, %v8222
        %v8225 = vshrl.u32 %v8067, 16
        %v8227 = vrot.slane %v8225, 7
        %v8228 = vrot.slane %v8227, 4
        %v8230 = vshrl.u32 %v8068, 16
        %v8232 = vrot.slane %v8230, 7
        %v8233 = vshll.u32 %v8068, 16
        %v8235 = vor.u32 %v8232, %v8233
        %v8236 = vsel %vm5394, %v8228, %v8235
        %v8237 = vrot.slane %v8232, 4
        %v8239 = vshrl.u32 %v8069, 16
        %v8241 = vrot.slane %v8239, 7
        %v8242 = vshll.u32 %v8069, 16
        %v8244 = vor.u32 %v8241, %v8242
        %v8245 = vsel %vm5394, %v8237, %v8244
        %s8246 = scalar_lea.vmem %s2, 768
        %v8247 = vld [vmem:[%s8246] sm:$0xf]
        %v8248 = vld [vmem:[%s8246 + $0x4] sm:$0xf]
        %v8249 = vld [vmem:[%s8246 + $0x8] sm:$0xf]
        %v8250 = vld [vmem:[%s8246 + $0xc] sm:$0xf]
        %v8251 = vld [vmem:[%s8246 + $0x10] sm:$0xf]
        %v8252 = vld [vmem:[%s8246 + $0x14] sm:$0xf]
        %v8253 = vld [vmem:[%s8246 + $0x18] sm:$0xf]
        %v8254 = vld [vmem:[%s8246 + $0x1c] sm:$0xf]
        %v8255 = vld [vmem:[%s8246 + $0x20] sm:$0xf]
        %v8256 = vld [vmem:[%s8246 + $0x24] sm:$0xf]
        %v8257 = vld [vmem:[%s8246 + $0x28] sm:$0xf]
        %v8258 = vld [vmem:[%s8246 + $0x2c] sm:$0xf]
        %v8259 = vld [vmem:[%s8246 + $0x30] sm:$0xf]
        %v8260 = vld [vmem:[%s8246 + $0x34] sm:$0xf]
        %v8261 = vld [vmem:[%s8246 + $0x38] sm:$0xf]
        %v8262 = vld [vmem:[%s8246 + $0x3c] sm:$0xf]
        %v8263 = vld [vmem:[%s8246 + $0x40] sm:$0xf]
        %v8264 = vld [vmem:[%s8246 + $0x44] sm:$0xf]
        %v8265 = vld [vmem:[%s8246 + $0x48] sm:$0xf]
        %v8266 = vld [vmem:[%s8246 + $0x4c] sm:$0xf]
        %v8267 = vld [vmem:[%s8246 + $0x50] sm:$0xf]
        %v8268 = vld [vmem:[%s8246 + $0x54] sm:$0xf]
        %v8269 = vld [vmem:[%s8246 + $0x58] sm:$0xf]
        %v8270 = vld [vmem:[%s8246 + $0x5c] sm:$0xf]
        %v8271 = vld [vmem:[%s8246 + $0x60] sm:$0xf]
        %v8272 = vld [vmem:[%s8246 + $0x64] sm:$0xf]
        %v8273 = vld [vmem:[%s8246 + $0x68] sm:$0xf]
        %v8274 = vld [vmem:[%s8246 + $0x6c] sm:$0xf]
        %v8275 = vld [vmem:[%s8246 + $0x70] sm:$0xf]
        %v8276 = vld [vmem:[%s8246 + $0x74] sm:$0xf]
        %v8277 = vld [vmem:[%s8246 + $0x78] sm:$0xf]
        %v8278 = vld [vmem:[%s8246 + $0x7c] sm:$0xf]
        %v8279 = vunpack.c.l.b16 %v8082
        %v8280 = vunpack.c.h.b16 %v8082
        %v8281 = vunpack.c.l.b16 %v8091
        %v8282 = vunpack.c.h.b16 %v8091
        %v8283 = vunpack.c.l.b16 %v8104
        %v8284 = vunpack.c.h.b16 %v8104
        %v8285 = vunpack.c.l.b16 %v8113
        %v8286 = vunpack.c.h.b16 %v8113
        %v8287 = vunpack.c.l.b16 %v8126
        %v8288 = vunpack.c.h.b16 %v8126
        %v8289 = vunpack.c.l.b16 %v8135
        %v8290 = vunpack.c.h.b16 %v8135
        %v8291 = vunpack.c.l.b16 %v8148
        %v8292 = vunpack.c.h.b16 %v8148
        %v8293 = vunpack.c.l.b16 %v8157
        %v8294 = vunpack.c.h.b16 %v8157
        %v8295 = vunpack.c.l.b16 %v8170
        %v8296 = vunpack.c.h.b16 %v8170
        %v8297 = vunpack.c.l.b16 %v8179
        %v8298 = vunpack.c.h.b16 %v8179
        %v8299 = vunpack.c.l.b16 %v8192
        %v8300 = vunpack.c.h.b16 %v8192
        %v8301 = vunpack.c.l.b16 %v8201
        %v8302 = vunpack.c.h.b16 %v8201
        %v8303 = vunpack.c.l.b16 %v8214
        %v8304 = vunpack.c.h.b16 %v8214
        %v8305 = vunpack.c.l.b16 %v8223
        %v8306 = vunpack.c.h.b16 %v8223
        %v8307 = vunpack.c.l.b16 %v8236
        %v8308 = vunpack.c.h.b16 %v8236
        %v8309 = vunpack.c.l.b16 %v8245
        %v8310 = vunpack.c.h.b16 %v8245
        %v8311 = vpack.c.b16 %v8281, %v8279
        %v8312 = vpack.c.b16 %v8282, %v8280
        %v8313 = vpack.c.b16 %v8285, %v8283
        %v8314 = vpack.c.b16 %v8286, %v8284
        %v8315 = vpack.c.b16 %v8289, %v8287
        %v8316 = vpack.c.b16 %v8290, %v8288
        %v8317 = vpack.c.b16 %v8293, %v8291
        %v8318 = vpack.c.b16 %v8294, %v8292
        %v8319 = vpack.c.b16 %v8297, %v8295
        %v8320 = vpack.c.b16 %v8298, %v8296
        %v8321 = vpack.c.b16 %v8301, %v8299
        %v8322 = vpack.c.b16 %v8302, %v8300
        %v8323 = vpack.c.b16 %v8305, %v8303
        %v8324 = vpack.c.b16 %v8306, %v8304
        %v8325 = vpack.c.b16 %v8309, %v8307
        %v8326 = vpack.c.b16 %v8310, %v8308
        %v8375 = vunpack.c.l.b16 %v8247
        %v8376 = vunpack.c.l.b16 %v8248
        %v8377 = vunpack.c.l.b16 %v8249
        %v8378 = vunpack.c.l.b16 %v8250
        %v8379 = vunpack.c.l.b16 %v8251
        %v8380 = vunpack.c.l.b16 %v8252
        %v8381 = vunpack.c.l.b16 %v8253
        %v8382 = vunpack.c.l.b16 %v8254
        %v8383 = vunpack.c.l.b16 %v8255
        %v8384 = vunpack.c.l.b16 %v8256
        %v8385 = vunpack.c.l.b16 %v8257
        %v8386 = vunpack.c.l.b16 %v8258
        %v8387 = vunpack.c.l.b16 %v8259
        %v8388 = vunpack.c.l.b16 %v8260
        %v8389 = vunpack.c.l.b16 %v8261
        %v8390 = vunpack.c.l.b16 %v8262
        %v8391 = vunpack.c.l.b16 %v8263
        %v8392 = vunpack.c.l.b16 %v8264
        %v8393 = vunpack.c.l.b16 %v8265
        %v8394 = vunpack.c.l.b16 %v8266
        %v8395 = vunpack.c.l.b16 %v8267
        %v8396 = vunpack.c.l.b16 %v8268
        %v8397 = vunpack.c.l.b16 %v8269
        %v8398 = vunpack.c.l.b16 %v8270
        %v8399 = vunpack.c.l.b16 %v8271
        %v8400 = vunpack.c.l.b16 %v8272
        %v8401 = vunpack.c.l.b16 %v8273
        %v8402 = vunpack.c.l.b16 %v8274
        %v8403 = vunpack.c.l.b16 %v8275
        %v8404 = vunpack.c.l.b16 %v8276
        %v8405 = vunpack.c.l.b16 %v8277
        %v8406 = vunpack.c.l.b16 %v8278
        %v8407 = vpack.c.b16 %v8376, %v8375
        %v8408 = vpack.c.b16 %v8378, %v8377
        %v8409 = vpack.c.b16 %v8380, %v8379
        %v8410 = vpack.c.b16 %v8382, %v8381
        %v8411 = vpack.c.b16 %v8384, %v8383
        %v8412 = vpack.c.b16 %v8386, %v8385
        %v8413 = vpack.c.b16 %v8388, %v8387
        %v8414 = vpack.c.b16 %v8390, %v8389
        %v8415 = vpack.c.b16 %v8392, %v8391
        %v8416 = vpack.c.b16 %v8394, %v8393
        %v8417 = vpack.c.b16 %v8396, %v8395
        %v8418 = vpack.c.b16 %v8398, %v8397
        %v8419 = vpack.c.b16 %v8400, %v8399
        %v8420 = vpack.c.b16 %v8402, %v8401
        %v8421 = vpack.c.b16 %v8404, %v8403
        %v8422 = vpack.c.b16 %v8406, %v8405
        %8439 = vmatpush.bf16.msra.mxu0 %v8414
        %8440 = vmatpush.bf16.msra.mxu0 %v8413
        %8441 = vmatpush.bf16.msra.mxu0 %v8412
        %8442 = vmatpush.bf16.msra.mxu0 %v8411
        %8443 = vmatpush.bf16.msra.mxu0 %v8410
        %8444 = vmatpush.bf16.msra.mxu0 %v8409
        %8445 = vmatpush.bf16.msra.mxu0 %v8408
        %8446 = vmatpush.bf16.msra.mxu0 %v8407
        %8447 = vmatmul.bf16.gmra.mxu0 %v8311
        %v8448 = vpop.f32.mrf.mxu0
        %v8449 = vadd.f32 0.0, %v8448
        %v8450 = vpop.f32.mrf.mxu0
        %v8451 = vadd.f32 0.0, %v8450
        %8452 = vmatmul.bf16.gmra.mxu0 %v8313
        %v8453 = vpop.f32.mrf.mxu0
        %v8454 = vadd.f32 0.0, %v8453
        %v8455 = vpop.f32.mrf.mxu0
        %v8456 = vadd.f32 0.0, %v8455
        %8457 = vmatmul.bf16.gmra.mxu0 %v8315
        %v8458 = vpop.f32.mrf.mxu0
        %v8459 = vadd.f32 0.0, %v8458
        %v8460 = vpop.f32.mrf.mxu0
        %v8461 = vadd.f32 0.0, %v8460
        %8462 = vmatmul.bf16.gmra.mxu0 %v8317
        %v8463 = vpop.f32.mrf.mxu0
        %v8464 = vadd.f32 0.0, %v8463
        %v8465 = vpop.f32.mrf.mxu0
        %v8466 = vadd.f32 0.0, %v8465
        %8467 = vmatmul.bf16.gmra.mxu0 %v8319
        %v8468 = vpop.f32.mrf.mxu0
        %v8469 = vadd.f32 0.0, %v8468
        %v8470 = vpop.f32.mrf.mxu0
        %v8471 = vadd.f32 0.0, %v8470
        %8472 = vmatmul.bf16.gmra.mxu0 %v8321
        %v8473 = vpop.f32.mrf.mxu0
        %v8474 = vadd.f32 0.0, %v8473
        %v8475 = vpop.f32.mrf.mxu0
        %v8476 = vadd.f32 0.0, %v8475
        %8477 = vmatmul.bf16.gmra.mxu0 %v8323
        %v8478 = vpop.f32.mrf.mxu0
        %v8479 = vadd.f32 0.0, %v8478
        %v8480 = vpop.f32.mrf.mxu0
        %v8481 = vadd.f32 0.0, %v8480
        %8482 = vmatmul.bf16.gmra.mxu0 %v8325
        %v8483 = vpop.f32.mrf.mxu0
        %v8484 = vadd.f32 0.0, %v8483
        %v8485 = vpop.f32.mrf.mxu0
        %v8486 = vadd.f32 0.0, %v8485
        %8487 = vdwg.mxu0
        %8488 = vmatpush.bf16.msra.mxu0 %v8422
        %8489 = vmatpush.bf16.msra.mxu0 %v8421
        %8490 = vmatpush.bf16.msra.mxu0 %v8420
        %8491 = vmatpush.bf16.msra.mxu0 %v8419
        %8492 = vmatpush.bf16.msra.mxu0 %v8418
        %8493 = vmatpush.bf16.msra.mxu0 %v8417
        %8494 = vmatpush.bf16.msra.mxu0 %v8416
        %8495 = vmatpush.bf16.msra.mxu0 %v8415
        %8496 = vmatmul.bf16.gmra.mxu0 %v8312
        %v8497 = vpop.f32.mrf.mxu0
        %v8498 = vadd.f32 %v8449, %v8497
        %v8499 = vpop.f32.mrf.mxu0
        %v8500 = vadd.f32 %v8451, %v8499
        %8501 = vmatmul.bf16.gmra.mxu0 %v8314
        %v8502 = vpop.f32.mrf.mxu0
        %v8503 = vadd.f32 %v8454, %v8502
        %v8504 = vpop.f32.mrf.mxu0
        %v8505 = vadd.f32 %v8456, %v8504
        %8506 = vmatmul.bf16.gmra.mxu0 %v8316
        %v8507 = vpop.f32.mrf.mxu0
        %v8508 = vadd.f32 %v8459, %v8507
        %v8509 = vpop.f32.mrf.mxu0
        %v8510 = vadd.f32 %v8461, %v8509
        %8511 = vmatmul.bf16.gmra.mxu0 %v8318
        %v8512 = vpop.f32.mrf.mxu0
        %v8513 = vadd.f32 %v8464, %v8512
        %v8514 = vpop.f32.mrf.mxu0
        %v8515 = vadd.f32 %v8466, %v8514
        %8516 = vmatmul.bf16.gmra.mxu0 %v8320
        %v8517 = vpop.f32.mrf.mxu0
        %v8518 = vadd.f32 %v8469, %v8517
        %v8519 = vpop.f32.mrf.mxu0
        %v8520 = vadd.f32 %v8471, %v8519
        %8521 = vmatmul.bf16.gmra.mxu0 %v8322
        %v8522 = vpop.f32.mrf.mxu0
        %v8523 = vadd.f32 %v8474, %v8522
        %v8524 = vpop.f32.mrf.mxu0
        %v8525 = vadd.f32 %v8476, %v8524
        %8526 = vmatmul.bf16.gmra.mxu0 %v8324
        %v8527 = vpop.f32.mrf.mxu0
        %v8528 = vadd.f32 %v8479, %v8527
        %v8529 = vpop.f32.mrf.mxu0
        %v8530 = vadd.f32 %v8481, %v8529
        %8531 = vmatmul.bf16.gmra.mxu0 %v8326
        %v8532 = vpop.f32.mrf.mxu0
        %v8533 = vadd.f32 %v8484, %v8532
        %v8534 = vpop.f32.mrf.mxu0
        %v8535 = vadd.f32 %v8486, %v8534
        %8536 = vdwg.mxu0
        %v8537 = vadd.f32 %v8029, %v8498
        %v8538 = vadd.f32 %v8030, %v8500
        %v8539 = vadd.f32 %v8031, %v8503
        %v8540 = vadd.f32 %v8032, %v8505
        %v8541 = vadd.f32 %v8033, %v8508
        %v8542 = vadd.f32 %v8034, %v8510
        %v8543 = vadd.f32 %v8035, %v8513
        %v8544 = vadd.f32 %v8036, %v8515
        %v8545 = vadd.f32 %v8037, %v8518
        %v8546 = vadd.f32 %v8038, %v8520
        %v8547 = vadd.f32 %v8039, %v8523
        %v8548 = vadd.f32 %v8040, %v8525
        %v8549 = vadd.f32 %v8041, %v8528
        %v8550 = vadd.f32 %v8042, %v8530
        %v8551 = vadd.f32 %v8043, %v8533
        %v8552 = vadd.f32 %v8044, %v8535
        %s8553 = scalar_lea.vmem %s2, 896
        %v8554 = vld [vmem:[%s8553] sm:$0xf]
        %v8555 = vld [vmem:[%s8553 + $0x4] sm:$0xf]
        %v8556 = vld [vmem:[%s8553 + $0x8] sm:$0xf]
        %v8557 = vld [vmem:[%s8553 + $0xc] sm:$0xf]
        %v8558 = vld [vmem:[%s8553 + $0x10] sm:$0xf]
        %v8559 = vld [vmem:[%s8553 + $0x14] sm:$0xf]
        %v8560 = vld [vmem:[%s8553 + $0x18] sm:$0xf]
        %v8561 = vld [vmem:[%s8553 + $0x1c] sm:$0xf]
        %v8562 = vld [vmem:[%s8553 + $0x20] sm:$0xf]
        %v8563 = vld [vmem:[%s8553 + $0x24] sm:$0xf]
        %v8564 = vld [vmem:[%s8553 + $0x28] sm:$0xf]
        %v8565 = vld [vmem:[%s8553 + $0x2c] sm:$0xf]
        %v8566 = vld [vmem:[%s8553 + $0x30] sm:$0xf]
        %v8567 = vld [vmem:[%s8553 + $0x34] sm:$0xf]
        %v8568 = vld [vmem:[%s8553 + $0x38] sm:$0xf]
        %v8569 = vld [vmem:[%s8553 + $0x3c] sm:$0xf]
        %v8570 = vld [vmem:[%s8553 + $0x40] sm:$0xf]
        %v8571 = vld [vmem:[%s8553 + $0x44] sm:$0xf]
        %v8572 = vld [vmem:[%s8553 + $0x48] sm:$0xf]
        %v8573 = vld [vmem:[%s8553 + $0x4c] sm:$0xf]
        %v8574 = vld [vmem:[%s8553 + $0x50] sm:$0xf]
        %v8575 = vld [vmem:[%s8553 + $0x54] sm:$0xf]
        %v8576 = vld [vmem:[%s8553 + $0x58] sm:$0xf]
        %v8577 = vld [vmem:[%s8553 + $0x5c] sm:$0xf]
        %v8578 = vld [vmem:[%s8553 + $0x60] sm:$0xf]
        %v8579 = vld [vmem:[%s8553 + $0x64] sm:$0xf]
        %v8580 = vld [vmem:[%s8553 + $0x68] sm:$0xf]
        %v8581 = vld [vmem:[%s8553 + $0x6c] sm:$0xf]
        %v8582 = vld [vmem:[%s8553 + $0x70] sm:$0xf]
        %v8583 = vld [vmem:[%s8553 + $0x74] sm:$0xf]
        %v8584 = vld [vmem:[%s8553 + $0x78] sm:$0xf]
        %v8585 = vld [vmem:[%s8553 + $0x7c] sm:$0xf]
        %v8602 = vunpack.c.l.b16 %v8047
        %v8603 = vunpack.c.h.b16 %v8047
        %v8604 = vunpack.c.l.b16 %v8048
        %v8605 = vunpack.c.h.b16 %v8048
        %v8606 = vunpack.c.l.b16 %v8050
        %v8607 = vunpack.c.h.b16 %v8050
        %v8608 = vunpack.c.l.b16 %v8051
        %v8609 = vunpack.c.h.b16 %v8051
        %v8610 = vunpack.c.l.b16 %v8053
        %v8611 = vunpack.c.h.b16 %v8053
        %v8612 = vunpack.c.l.b16 %v8054
        %v8613 = vunpack.c.h.b16 %v8054
        %v8614 = vunpack.c.l.b16 %v8056
        %v8615 = vunpack.c.h.b16 %v8056
        %v8616 = vunpack.c.l.b16 %v8057
        %v8617 = vunpack.c.h.b16 %v8057
        %v8618 = vunpack.c.l.b16 %v8059
        %v8619 = vunpack.c.h.b16 %v8059
        %v8620 = vunpack.c.l.b16 %v8060
        %v8621 = vunpack.c.h.b16 %v8060
        %v8622 = vunpack.c.l.b16 %v8062
        %v8623 = vunpack.c.h.b16 %v8062
        %v8624 = vunpack.c.l.b16 %v8063
        %v8625 = vunpack.c.h.b16 %v8063
        %v8626 = vunpack.c.l.b16 %v8065
        %v8627 = vunpack.c.h.b16 %v8065
        %v8628 = vunpack.c.l.b16 %v8066
        %v8629 = vunpack.c.h.b16 %v8066
        %v8630 = vunpack.c.l.b16 %v8068
        %v8631 = vunpack.c.h.b16 %v8068
        %v8632 = vunpack.c.l.b16 %v8069
        %v8633 = vunpack.c.h.b16 %v8069
        %v8634 = vpack.c.b16 %v8604, %v8602
        %v8635 = vpack.c.b16 %v8605, %v8603
        %v8636 = vpack.c.b16 %v8608, %v8606
        %v8637 = vpack.c.b16 %v8609, %v8607
        %v8638 = vpack.c.b16 %v8612, %v8610
        %v8639 = vpack.c.b16 %v8613, %v8611
        %v8640 = vpack.c.b16 %v8616, %v8614
        %v8641 = vpack.c.b16 %v8617, %v8615
        %v8642 = vpack.c.b16 %v8620, %v8618
        %v8643 = vpack.c.b16 %v8621, %v8619
        %v8644 = vpack.c.b16 %v8624, %v8622
        %v8645 = vpack.c.b16 %v8625, %v8623
        %v8646 = vpack.c.b16 %v8628, %v8626
        %v8647 = vpack.c.b16 %v8629, %v8627
        %v8648 = vpack.c.b16 %v8632, %v8630
        %v8649 = vpack.c.b16 %v8633, %v8631
        %v8698 = vunpack.c.l.b16 %v8554
        %v8699 = vunpack.c.l.b16 %v8555
        %v8700 = vunpack.c.l.b16 %v8556
        %v8701 = vunpack.c.l.b16 %v8557
        %v8702 = vunpack.c.l.b16 %v8558
        %v8703 = vunpack.c.l.b16 %v8559
        %v8704 = vunpack.c.l.b16 %v8560
        %v8705 = vunpack.c.l.b16 %v8561
        %v8706 = vunpack.c.l.b16 %v8562
        %v8707 = vunpack.c.l.b16 %v8563
        %v8708 = vunpack.c.l.b16 %v8564
        %v8709 = vunpack.c.l.b16 %v8565
        %v8710 = vunpack.c.l.b16 %v8566
        %v8711 = vunpack.c.l.b16 %v8567
        %v8712 = vunpack.c.l.b16 %v8568
        %v8713 = vunpack.c.l.b16 %v8569
        %v8714 = vunpack.c.l.b16 %v8570
        %v8715 = vunpack.c.l.b16 %v8571
        %v8716 = vunpack.c.l.b16 %v8572
        %v8717 = vunpack.c.l.b16 %v8573
        %v8718 = vunpack.c.l.b16 %v8574
        %v8719 = vunpack.c.l.b16 %v8575
        %v8720 = vunpack.c.l.b16 %v8576
        %v8721 = vunpack.c.l.b16 %v8577
        %v8722 = vunpack.c.l.b16 %v8578
        %v8723 = vunpack.c.l.b16 %v8579
        %v8724 = vunpack.c.l.b16 %v8580
        %v8725 = vunpack.c.l.b16 %v8581
        %v8726 = vunpack.c.l.b16 %v8582
        %v8727 = vunpack.c.l.b16 %v8583
        %v8728 = vunpack.c.l.b16 %v8584
        %v8729 = vunpack.c.l.b16 %v8585
        %v8730 = vpack.c.b16 %v8699, %v8698
        %v8731 = vpack.c.b16 %v8701, %v8700
        %v8732 = vpack.c.b16 %v8703, %v8702
        %v8733 = vpack.c.b16 %v8705, %v8704
        %v8734 = vpack.c.b16 %v8707, %v8706
        %v8735 = vpack.c.b16 %v8709, %v8708
        %v8736 = vpack.c.b16 %v8711, %v8710
        %v8737 = vpack.c.b16 %v8713, %v8712
        %v8738 = vpack.c.b16 %v8715, %v8714
        %v8739 = vpack.c.b16 %v8717, %v8716
        %v8740 = vpack.c.b16 %v8719, %v8718
        %v8741 = vpack.c.b16 %v8721, %v8720
        %v8742 = vpack.c.b16 %v8723, %v8722
        %v8743 = vpack.c.b16 %v8725, %v8724
        %v8744 = vpack.c.b16 %v8727, %v8726
        %v8745 = vpack.c.b16 %v8729, %v8728
        %8762 = vmatpush.bf16.msra.mxu0 %v8737
        %8763 = vmatpush.bf16.msra.mxu0 %v8736
        %8764 = vmatpush.bf16.msra.mxu0 %v8735
        %8765 = vmatpush.bf16.msra.mxu0 %v8734
        %8766 = vmatpush.bf16.msra.mxu0 %v8733
        %8767 = vmatpush.bf16.msra.mxu0 %v8732
        %8768 = vmatpush.bf16.msra.mxu0 %v8731
        %8769 = vmatpush.bf16.msra.mxu0 %v8730
        %8770 = vmatmul.bf16.gmra.mxu0 %v8634
        %v8771 = vpop.f32.mrf.mxu0
        %v8772 = vadd.f32 0.0, %v8771
        %v8773 = vpop.f32.mrf.mxu0
        %v8774 = vadd.f32 0.0, %v8773
        %8775 = vmatmul.bf16.gmra.mxu0 %v8636
        %v8776 = vpop.f32.mrf.mxu0
        %v8777 = vadd.f32 0.0, %v8776
        %v8778 = vpop.f32.mrf.mxu0
        %v8779 = vadd.f32 0.0, %v8778
        %8780 = vmatmul.bf16.gmra.mxu0 %v8638
        %v8781 = vpop.f32.mrf.mxu0
        %v8782 = vadd.f32 0.0, %v8781
        %v8783 = vpop.f32.mrf.mxu0
        %v8784 = vadd.f32 0.0, %v8783
        %8785 = vmatmul.bf16.gmra.mxu0 %v8640
        %v8786 = vpop.f32.mrf.mxu0
        %v8787 = vadd.f32 0.0, %v8786
        %v8788 = vpop.f32.mrf.mxu0
        %v8789 = vadd.f32 0.0, %v8788
        %8790 = vmatmul.bf16.gmra.mxu0 %v8642
        %v8791 = vpop.f32.mrf.mxu0
        %v8792 = vadd.f32 0.0, %v8791
        %v8793 = vpop.f32.mrf.mxu0
        %v8794 = vadd.f32 0.0, %v8793
        %8795 = vmatmul.bf16.gmra.mxu0 %v8644
        %v8796 = vpop.f32.mrf.mxu0
        %v8797 = vadd.f32 0.0, %v8796
        %v8798 = vpop.f32.mrf.mxu0
        %v8799 = vadd.f32 0.0, %v8798
        %8800 = vmatmul.bf16.gmra.mxu0 %v8646
        %v8801 = vpop.f32.mrf.mxu0
        %v8802 = vadd.f32 0.0, %v8801
        %v8803 = vpop.f32.mrf.mxu0
        %v8804 = vadd.f32 0.0, %v8803
        %8805 = vmatmul.bf16.gmra.mxu0 %v8648
        %v8806 = vpop.f32.mrf.mxu0
        %v8807 = vadd.f32 0.0, %v8806
        %v8808 = vpop.f32.mrf.mxu0
        %v8809 = vadd.f32 0.0, %v8808
        %8810 = vdwg.mxu0
        %8811 = vmatpush.bf16.msra.mxu0 %v8745
        %8812 = vmatpush.bf16.msra.mxu0 %v8744
        %8813 = vmatpush.bf16.msra.mxu0 %v8743
        %8814 = vmatpush.bf16.msra.mxu0 %v8742
        %8815 = vmatpush.bf16.msra.mxu0 %v8741
        %8816 = vmatpush.bf16.msra.mxu0 %v8740
        %8817 = vmatpush.bf16.msra.mxu0 %v8739
        %8818 = vmatpush.bf16.msra.mxu0 %v8738
        %8819 = vmatmul.bf16.gmra.mxu0 %v8635
        %v8820 = vpop.f32.mrf.mxu0
        %v8821 = vadd.f32 %v8772, %v8820
        %v8822 = vpop.f32.mrf.mxu0
        %v8823 = vadd.f32 %v8774, %v8822
        %8824 = vmatmul.bf16.gmra.mxu0 %v8637
        %v8825 = vpop.f32.mrf.mxu0
        %v8826 = vadd.f32 %v8777, %v8825
        %v8827 = vpop.f32.mrf.mxu0
        %v8828 = vadd.f32 %v8779, %v8827
        %8829 = vmatmul.bf16.gmra.mxu0 %v8639
        %v8830 = vpop.f32.mrf.mxu0
        %v8831 = vadd.f32 %v8782, %v8830
        %v8832 = vpop.f32.mrf.mxu0
        %v8833 = vadd.f32 %v8784, %v8832
        %8834 = vmatmul.bf16.gmra.mxu0 %v8641
        %v8835 = vpop.f32.mrf.mxu0
        %v8836 = vadd.f32 %v8787, %v8835
        %v8837 = vpop.f32.mrf.mxu0
        %v8838 = vadd.f32 %v8789, %v8837
        %8839 = vmatmul.bf16.gmra.mxu0 %v8643
        %v8840 = vpop.f32.mrf.mxu0
        %v8841 = vadd.f32 %v8792, %v8840
        %v8842 = vpop.f32.mrf.mxu0
        %v8843 = vadd.f32 %v8794, %v8842
        %8844 = vmatmul.bf16.gmra.mxu0 %v8645
        %v8845 = vpop.f32.mrf.mxu0
        %v8846 = vadd.f32 %v8797, %v8845
        %v8847 = vpop.f32.mrf.mxu0
        %v8848 = vadd.f32 %v8799, %v8847
        %8849 = vmatmul.bf16.gmra.mxu0 %v8647
        %v8850 = vpop.f32.mrf.mxu0
        %v8851 = vadd.f32 %v8802, %v8850
        %v8852 = vpop.f32.mrf.mxu0
        %v8853 = vadd.f32 %v8804, %v8852
        %8854 = vmatmul.bf16.gmra.mxu0 %v8649
        %v8855 = vpop.f32.mrf.mxu0
        %v8856 = vadd.f32 %v8807, %v8855
        %v8857 = vpop.f32.mrf.mxu0
        %v8858 = vadd.f32 %v8809, %v8857
        %8859 = vdwg.mxu0
        %v8860 = vadd.f32 %v8537, %v8821
        %v8861 = vadd.f32 %v8538, %v8823
        %v8862 = vadd.f32 %v8539, %v8826
        %v8863 = vadd.f32 %v8540, %v8828
        %v8864 = vadd.f32 %v8541, %v8831
        %v8865 = vadd.f32 %v8542, %v8833
        %v8866 = vadd.f32 %v8543, %v8836
        %v8867 = vadd.f32 %v8544, %v8838
        %v8868 = vadd.f32 %v8545, %v8841
        %v8869 = vadd.f32 %v8546, %v8843
        %v8870 = vadd.f32 %v8547, %v8846
        %v8871 = vadd.f32 %v8548, %v8848
        %v8872 = vadd.f32 %v8549, %v8851
        %v8873 = vadd.f32 %v8550, %v8853
        %v8874 = vadd.f32 %v8551, %v8856
        %v8875 = vadd.f32 %v8552, %v8858
        %v8876 = vld [vmem:[%s8045 + $0x8] sm:$0xff]
        %v8877 = vld [vmem:[%s8045 + $0x10] sm:$0xff]
        %v8878 = vld [vmem:[%s8045 + $0x18] sm:$0x11]
        %v8879 = vld [vmem:[%s8045 + $0x28] sm:$0xff]
        %v8880 = vld [vmem:[%s8045 + $0x30] sm:$0xff]
        %v8881 = vld [vmem:[%s8045 + $0x38] sm:$0x11]
        %v8882 = vld [vmem:[%s8045 + $0x48] sm:$0xff]
        %v8883 = vld [vmem:[%s8045 + $0x50] sm:$0xff]
        %v8884 = vld [vmem:[%s8045 + $0x58] sm:$0x11]
        %v8885 = vld [vmem:[%s8045 + $0x68] sm:$0xff]
        %v8886 = vld [vmem:[%s8045 + $0x70] sm:$0xff]
        %v8887 = vld [vmem:[%s8045 + $0x78] sm:$0x11]
        %v8888 = vld [vmem:[%s8045 + $0x88] sm:$0xff]
        %v8889 = vld [vmem:[%s8045 + $0x90] sm:$0xff]
        %v8890 = vld [vmem:[%s8045 + $0x98] sm:$0x11]
        %v8891 = vld [vmem:[%s8045 + $0xa8] sm:$0xff]
        %v8892 = vld [vmem:[%s8045 + $0xb0] sm:$0xff]
        %v8893 = vld [vmem:[%s8045 + $0xb8] sm:$0x11]
        %v8894 = vld [vmem:[%s8045 + $0xc8] sm:$0xff]
        %v8895 = vld [vmem:[%s8045 + $0xd0] sm:$0xff]
        %v8896 = vld [vmem:[%s8045 + $0xd8] sm:$0x11]
        %v8897 = vld [vmem:[%s8045 + $0xe8] sm:$0xff]
        %v8898 = vld [vmem:[%s8045 + $0xf0] sm:$0xff]
        %v8899 = vld [vmem:[%s8045 + $0xf8] sm:$0x11]
        %v8901 = vshrl.u32 %v8876, 16
        %v8903 = vrot.slane %v8901, 4
        %v8904 = vshll.u32 %v8876, 16
        %v8906 = vrot.slane %v8904, 5
        %v8907 = vor.u32 %v8903, %v8906
        %v8908 = vrot.slane %v8907, 4
        %v8910 = vshll.u32 %v8877, 16
        %v8912 = vrot.slane %v8910, 5
        %v8913 = vsel %vm361, %v8908, %v8912
        %v8914 = vshrl.u32 %v8877, 16
        %v8916 = vrot.slane %v8914, 4
        %v8917 = vor.u32 %v8916, %v8912
        %v8918 = vrot.slane %v8917, 4
        %v8920 = vshll.u32 %v8878, 16
        %v8922 = vrot.slane %v8920, 5
        %v8923 = vsel %vm361, %v8918, %v8922
        %v8925 = vshrl.u32 %v8879, 16
        %v8927 = vrot.slane %v8925, 4
        %v8928 = vshll.u32 %v8879, 16
        %v8930 = vrot.slane %v8928, 5
        %v8931 = vor.u32 %v8927, %v8930
        %v8932 = vrot.slane %v8931, 4
        %v8934 = vshll.u32 %v8880, 16
        %v8936 = vrot.slane %v8934, 5
        %v8937 = vsel %vm361, %v8932, %v8936
        %v8938 = vshrl.u32 %v8880, 16
        %v8940 = vrot.slane %v8938, 4
        %v8941 = vor.u32 %v8940, %v8936
        %v8942 = vrot.slane %v8941, 4
        %v8944 = vshll.u32 %v8881, 16
        %v8946 = vrot.slane %v8944, 5
        %v8947 = vsel %vm361, %v8942, %v8946
        %v8949 = vshrl.u32 %v8882, 16
        %v8951 = vrot.slane %v8949, 4
        %v8952 = vshll.u32 %v8882, 16
        %v8954 = vrot.slane %v8952, 5
        %v8955 = vor.u32 %v8951, %v8954
        %v8956 = vrot.slane %v8955, 4
        %v8958 = vshll.u32 %v8883, 16
        %v8960 = vrot.slane %v8958, 5
        %v8961 = vsel %vm361, %v8956, %v8960
        %v8962 = vshrl.u32 %v8883, 16
        %v8964 = vrot.slane %v8962, 4
        %v8965 = vor.u32 %v8964, %v8960
        %v8966 = vrot.slane %v8965, 4
        %v8968 = vshll.u32 %v8884, 16
        %v8970 = vrot.slane %v8968, 5
        %v8971 = vsel %vm361, %v8966, %v8970
        %v8973 = vshrl.u32 %v8885, 16
        %v8975 = vrot.slane %v8973, 4
        %v8976 = vshll.u32 %v8885, 16
        %v8978 = vrot.slane %v8976, 5
        %v8979 = vor.u32 %v8975, %v8978
        %v8980 = vrot.slane %v8979, 4
        %v8982 = vshll.u32 %v8886, 16
        %v8984 = vrot.slane %v8982, 5
        %v8985 = vsel %vm361, %v8980, %v8984
        %v8986 = vshrl.u32 %v8886, 16
        %v8988 = vrot.slane %v8986, 4
        %v8989 = vor.u32 %v8988, %v8984
        %v8990 = vrot.slane %v8989, 4
        %v8992 = vshll.u32 %v8887, 16
        %v8994 = vrot.slane %v8992, 5
        %v8995 = vsel %vm361, %v8990, %v8994
        %v8997 = vshrl.u32 %v8888, 16
        %v8999 = vrot.slane %v8997, 4
        %v9000 = vshll.u32 %v8888, 16
        %v9002 = vrot.slane %v9000, 5
        %v9003 = vor.u32 %v8999, %v9002
        %v9004 = vrot.slane %v9003, 4
        %v9006 = vshll.u32 %v8889, 16
        %v9008 = vrot.slane %v9006, 5
        %v9009 = vsel %vm361, %v9004, %v9008
        %v9010 = vshrl.u32 %v8889, 16
        %v9012 = vrot.slane %v9010, 4
        %v9013 = vor.u32 %v9012, %v9008
        %v9014 = vrot.slane %v9013, 4
        %v9016 = vshll.u32 %v8890, 16
        %v9018 = vrot.slane %v9016, 5
        %v9019 = vsel %vm361, %v9014, %v9018
        %v9021 = vshrl.u32 %v8891, 16
        %v9023 = vrot.slane %v9021, 4
        %v9024 = vshll.u32 %v8891, 16
        %v9026 = vrot.slane %v9024, 5
        %v9027 = vor.u32 %v9023, %v9026
        %v9028 = vrot.slane %v9027, 4
        %v9030 = vshll.u32 %v8892, 16
        %v9032 = vrot.slane %v9030, 5
        %v9033 = vsel %vm361, %v9028, %v9032
        %v9034 = vshrl.u32 %v8892, 16
        %v9036 = vrot.slane %v9034, 4
        %v9037 = vor.u32 %v9036, %v9032
        %v9038 = vrot.slane %v9037, 4
        %v9040 = vshll.u32 %v8893, 16
        %v9042 = vrot.slane %v9040, 5
        %v9043 = vsel %vm361, %v9038, %v9042
        %v9045 = vshrl.u32 %v8894, 16
        %v9047 = vrot.slane %v9045, 4
        %v9048 = vshll.u32 %v8894, 16
        %v9050 = vrot.slane %v9048, 5
        %v9051 = vor.u32 %v9047, %v9050
        %v9052 = vrot.slane %v9051, 4
        %v9054 = vshll.u32 %v8895, 16
        %v9056 = vrot.slane %v9054, 5
        %v9057 = vsel %vm361, %v9052, %v9056
        %v9058 = vshrl.u32 %v8895, 16
        %v9060 = vrot.slane %v9058, 4
        %v9061 = vor.u32 %v9060, %v9056
        %v9062 = vrot.slane %v9061, 4
        %v9064 = vshll.u32 %v8896, 16
        %v9066 = vrot.slane %v9064, 5
        %v9067 = vsel %vm361, %v9062, %v9066
        %v9069 = vshrl.u32 %v8897, 16
        %v9071 = vrot.slane %v9069, 4
        %v9072 = vshll.u32 %v8897, 16
        %v9074 = vrot.slane %v9072, 5
        %v9075 = vor.u32 %v9071, %v9074
        %v9076 = vrot.slane %v9075, 4
        %v9078 = vshll.u32 %v8898, 16
        %v9080 = vrot.slane %v9078, 5
        %v9081 = vsel %vm361, %v9076, %v9080
        %v9082 = vshrl.u32 %v8898, 16
        %v9084 = vrot.slane %v9082, 4
        %v9085 = vor.u32 %v9084, %v9080
        %v9086 = vrot.slane %v9085, 4
        %v9088 = vshll.u32 %v8899, 16
        %v9090 = vrot.slane %v9088, 5
        %v9091 = vsel %vm361, %v9086, %v9090
        %s9092 = scalar_lea.vmem %s2, 1024
        %v9093 = vld [vmem:[%s9092] sm:$0xf]
        %v9094 = vld [vmem:[%s9092 + $0x4] sm:$0xf]
        %v9095 = vld [vmem:[%s9092 + $0x8] sm:$0xf]
        %v9096 = vld [vmem:[%s9092 + $0xc] sm:$0xf]
        %v9097 = vld [vmem:[%s9092 + $0x10] sm:$0xf]
        %v9098 = vld [vmem:[%s9092 + $0x14] sm:$0xf]
        %v9099 = vld [vmem:[%s9092 + $0x18] sm:$0xf]
        %v9100 = vld [vmem:[%s9092 + $0x1c] sm:$0xf]
        %v9101 = vld [vmem:[%s9092 + $0x20] sm:$0xf]
        %v9102 = vld [vmem:[%s9092 + $0x24] sm:$0xf]
        %v9103 = vld [vmem:[%s9092 + $0x28] sm:$0xf]
        %v9104 = vld [vmem:[%s9092 + $0x2c] sm:$0xf]
        %v9105 = vld [vmem:[%s9092 + $0x30] sm:$0xf]
        %v9106 = vld [vmem:[%s9092 + $0x34] sm:$0xf]
        %v9107 = vld [vmem:[%s9092 + $0x38] sm:$0xf]
        %v9108 = vld [vmem:[%s9092 + $0x3c] sm:$0xf]
        %v9109 = vld [vmem:[%s9092 + $0x40] sm:$0xf]
        %v9110 = vld [vmem:[%s9092 + $0x44] sm:$0xf]
        %v9111 = vld [vmem:[%s9092 + $0x48] sm:$0xf]
        %v9112 = vld [vmem:[%s9092 + $0x4c] sm:$0xf]
        %v9113 = vld [vmem:[%s9092 + $0x50] sm:$0xf]
        %v9114 = vld [vmem:[%s9092 + $0x54] sm:$0xf]
        %v9115 = vld [vmem:[%s9092 + $0x58] sm:$0xf]
        %v9116 = vld [vmem:[%s9092 + $0x5c] sm:$0xf]
        %v9117 = vld [vmem:[%s9092 + $0x60] sm:$0xf]
        %v9118 = vld [vmem:[%s9092 + $0x64] sm:$0xf]
        %v9119 = vld [vmem:[%s9092 + $0x68] sm:$0xf]
        %v9120 = vld [vmem:[%s9092 + $0x6c] sm:$0xf]
        %v9121 = vld [vmem:[%s9092 + $0x70] sm:$0xf]
        %v9122 = vld [vmem:[%s9092 + $0x74] sm:$0xf]
        %v9123 = vld [vmem:[%s9092 + $0x78] sm:$0xf]
        %v9124 = vld [vmem:[%s9092 + $0x7c] sm:$0xf]
        %v9125 = vunpack.c.l.b16 %v8913
        %v9126 = vunpack.c.h.b16 %v8913
        %v9127 = vunpack.c.l.b16 %v8923
        %v9128 = vunpack.c.h.b16 %v8923
        %v9129 = vunpack.c.l.b16 %v8937
        %v9130 = vunpack.c.h.b16 %v8937
        %v9131 = vunpack.c.l.b16 %v8947
        %v9132 = vunpack.c.h.b16 %v8947
        %v9133 = vunpack.c.l.b16 %v8961
        %v9134 = vunpack.c.h.b16 %v8961
        %v9135 = vunpack.c.l.b16 %v8971
        %v9136 = vunpack.c.h.b16 %v8971
        %v9137 = vunpack.c.l.b16 %v8985
        %v9138 = vunpack.c.h.b16 %v8985
        %v9139 = vunpack.c.l.b16 %v8995
        %v9140 = vunpack.c.h.b16 %v8995
        %v9141 = vunpack.c.l.b16 %v9009
        %v9142 = vunpack.c.h.b16 %v9009
        %v9143 = vunpack.c.l.b16 %v9019
        %v9144 = vunpack.c.h.b16 %v9019
        %v9145 = vunpack.c.l.b16 %v9033
        %v9146 = vunpack.c.h.b16 %v9033
        %v9147 = vunpack.c.l.b16 %v9043
        %v9148 = vunpack.c.h.b16 %v9043
        %v9149 = vunpack.c.l.b16 %v9057
        %v9150 = vunpack.c.h.b16 %v9057
        %v9151 = vunpack.c.l.b16 %v9067
        %v9152 = vunpack.c.h.b16 %v9067
        %v9153 = vunpack.c.l.b16 %v9081
        %v9154 = vunpack.c.h.b16 %v9081
        %v9155 = vunpack.c.l.b16 %v9091
        %v9156 = vunpack.c.h.b16 %v9091
        %v9157 = vpack.c.b16 %v9127, %v9125
        %v9158 = vpack.c.b16 %v9128, %v9126
        %v9159 = vpack.c.b16 %v9131, %v9129
        %v9160 = vpack.c.b16 %v9132, %v9130
        %v9161 = vpack.c.b16 %v9135, %v9133
        %v9162 = vpack.c.b16 %v9136, %v9134
        %v9163 = vpack.c.b16 %v9139, %v9137
        %v9164 = vpack.c.b16 %v9140, %v9138
        %v9165 = vpack.c.b16 %v9143, %v9141
        %v9166 = vpack.c.b16 %v9144, %v9142
        %v9167 = vpack.c.b16 %v9147, %v9145
        %v9168 = vpack.c.b16 %v9148, %v9146
        %v9169 = vpack.c.b16 %v9151, %v9149
        %v9170 = vpack.c.b16 %v9152, %v9150
        %v9171 = vpack.c.b16 %v9155, %v9153
        %v9172 = vpack.c.b16 %v9156, %v9154
        %v9221 = vunpack.c.l.b16 %v9093
        %v9222 = vunpack.c.l.b16 %v9094
        %v9223 = vunpack.c.l.b16 %v9095
        %v9224 = vunpack.c.l.b16 %v9096
        %v9225 = vunpack.c.l.b16 %v9097
        %v9226 = vunpack.c.l.b16 %v9098
        %v9227 = vunpack.c.l.b16 %v9099
        %v9228 = vunpack.c.l.b16 %v9100
        %v9229 = vunpack.c.l.b16 %v9101
        %v9230 = vunpack.c.l.b16 %v9102
        %v9231 = vunpack.c.l.b16 %v9103
        %v9232 = vunpack.c.l.b16 %v9104
        %v9233 = vunpack.c.l.b16 %v9105
        %v9234 = vunpack.c.l.b16 %v9106
        %v9235 = vunpack.c.l.b16 %v9107
        %v9236 = vunpack.c.l.b16 %v9108
        %v9237 = vunpack.c.l.b16 %v9109
        %v9238 = vunpack.c.l.b16 %v9110
        %v9239 = vunpack.c.l.b16 %v9111
        %v9240 = vunpack.c.l.b16 %v9112
        %v9241 = vunpack.c.l.b16 %v9113
        %v9242 = vunpack.c.l.b16 %v9114
        %v9243 = vunpack.c.l.b16 %v9115
        %v9244 = vunpack.c.l.b16 %v9116
        %v9245 = vunpack.c.l.b16 %v9117
        %v9246 = vunpack.c.l.b16 %v9118
        %v9247 = vunpack.c.l.b16 %v9119
        %v9248 = vunpack.c.l.b16 %v9120
        %v9249 = vunpack.c.l.b16 %v9121
        %v9250 = vunpack.c.l.b16 %v9122
        %v9251 = vunpack.c.l.b16 %v9123
        %v9252 = vunpack.c.l.b16 %v9124
        %v9253 = vpack.c.b16 %v9222, %v9221
        %v9254 = vpack.c.b16 %v9224, %v9223
        %v9255 = vpack.c.b16 %v9226, %v9225
        %v9256 = vpack.c.b16 %v9228, %v9227
        %v9257 = vpack.c.b16 %v9230, %v9229
        %v9258 = vpack.c.b16 %v9232, %v9231
        %v9259 = vpack.c.b16 %v9234, %v9233
        %v9260 = vpack.c.b16 %v9236, %v9235
        %v9261 = vpack.c.b16 %v9238, %v9237
        %v9262 = vpack.c.b16 %v9240, %v9239
        %v9263 = vpack.c.b16 %v9242, %v9241
        %v9264 = vpack.c.b16 %v9244, %v9243
        %v9265 = vpack.c.b16 %v9246, %v9245
        %v9266 = vpack.c.b16 %v9248, %v9247
        %v9267 = vpack.c.b16 %v9250, %v9249
        %v9268 = vpack.c.b16 %v9252, %v9251
        %9285 = vmatpush.bf16.msra.mxu0 %v9260
        %9286 = vmatpush.bf16.msra.mxu0 %v9259
        %9287 = vmatpush.bf16.msra.mxu0 %v9258
        %9288 = vmatpush.bf16.msra.mxu0 %v9257
        %9289 = vmatpush.bf16.msra.mxu0 %v9256
        %9290 = vmatpush.bf16.msra.mxu0 %v9255
        %9291 = vmatpush.bf16.msra.mxu0 %v9254
        %9292 = vmatpush.bf16.msra.mxu0 %v9253
        %9293 = vmatmul.bf16.gmra.mxu0 %v9157
        %v9294 = vpop.f32.mrf.mxu0
        %v9295 = vadd.f32 0.0, %v9294
        %v9296 = vpop.f32.mrf.mxu0
        %v9297 = vadd.f32 0.0, %v9296
        %9298 = vmatmul.bf16.gmra.mxu0 %v9159
        %v9299 = vpop.f32.mrf.mxu0
        %v9300 = vadd.f32 0.0, %v9299
        %v9301 = vpop.f32.mrf.mxu0
        %v9302 = vadd.f32 0.0, %v9301
        %9303 = vmatmul.bf16.gmra.mxu0 %v9161
        %v9304 = vpop.f32.mrf.mxu0
        %v9305 = vadd.f32 0.0, %v9304
        %v9306 = vpop.f32.mrf.mxu0
        %v9307 = vadd.f32 0.0, %v9306
        %9308 = vmatmul.bf16.gmra.mxu0 %v9163
        %v9309 = vpop.f32.mrf.mxu0
        %v9310 = vadd.f32 0.0, %v9309
        %v9311 = vpop.f32.mrf.mxu0
        %v9312 = vadd.f32 0.0, %v9311
        %9313 = vmatmul.bf16.gmra.mxu0 %v9165
        %v9314 = vpop.f32.mrf.mxu0
        %v9315 = vadd.f32 0.0, %v9314
        %v9316 = vpop.f32.mrf.mxu0
        %v9317 = vadd.f32 0.0, %v9316
        %9318 = vmatmul.bf16.gmra.mxu0 %v9167
        %v9319 = vpop.f32.mrf.mxu0
        %v9320 = vadd.f32 0.0, %v9319
        %v9321 = vpop.f32.mrf.mxu0
        %v9322 = vadd.f32 0.0, %v9321
        %9323 = vmatmul.bf16.gmra.mxu0 %v9169
        %v9324 = vpop.f32.mrf.mxu0
        %v9325 = vadd.f32 0.0, %v9324
        %v9326 = vpop.f32.mrf.mxu0
        %v9327 = vadd.f32 0.0, %v9326
        %9328 = vmatmul.bf16.gmra.mxu0 %v9171
        %v9329 = vpop.f32.mrf.mxu0
        %v9330 = vadd.f32 0.0, %v9329
        %v9331 = vpop.f32.mrf.mxu0
        %v9332 = vadd.f32 0.0, %v9331
        %9333 = vdwg.mxu0
        %9334 = vmatpush.bf16.msra.mxu0 %v9268
        %9335 = vmatpush.bf16.msra.mxu0 %v9267
        %9336 = vmatpush.bf16.msra.mxu0 %v9266
        %9337 = vmatpush.bf16.msra.mxu0 %v9265
        %9338 = vmatpush.bf16.msra.mxu0 %v9264
        %9339 = vmatpush.bf16.msra.mxu0 %v9263
        %9340 = vmatpush.bf16.msra.mxu0 %v9262
        %9341 = vmatpush.bf16.msra.mxu0 %v9261
        %9342 = vmatmul.bf16.gmra.mxu0 %v9158
        %v9343 = vpop.f32.mrf.mxu0
        %v9344 = vadd.f32 %v9295, %v9343
        %v9345 = vpop.f32.mrf.mxu0
        %v9346 = vadd.f32 %v9297, %v9345
        %9347 = vmatmul.bf16.gmra.mxu0 %v9160
        %v9348 = vpop.f32.mrf.mxu0
        %v9349 = vadd.f32 %v9300, %v9348
        %v9350 = vpop.f32.mrf.mxu0
        %v9351 = vadd.f32 %v9302, %v9350
        %9352 = vmatmul.bf16.gmra.mxu0 %v9162
        %v9353 = vpop.f32.mrf.mxu0
        %v9354 = vadd.f32 %v9305, %v9353
        %v9355 = vpop.f32.mrf.mxu0
        %v9356 = vadd.f32 %v9307, %v9355
        %9357 = vmatmul.bf16.gmra.mxu0 %v9164
        %v9358 = vpop.f32.mrf.mxu0
        %v9359 = vadd.f32 %v9310, %v9358
        %v9360 = vpop.f32.mrf.mxu0
        %v9361 = vadd.f32 %v9312, %v9360
        %9362 = vmatmul.bf16.gmra.mxu0 %v9166
        %v9363 = vpop.f32.mrf.mxu0
        %v9364 = vadd.f32 %v9315, %v9363
        %v9365 = vpop.f32.mrf.mxu0
        %v9366 = vadd.f32 %v9317, %v9365
        %9367 = vmatmul.bf16.gmra.mxu0 %v9168
        %v9368 = vpop.f32.mrf.mxu0
        %v9369 = vadd.f32 %v9320, %v9368
        %v9370 = vpop.f32.mrf.mxu0
        %v9371 = vadd.f32 %v9322, %v9370
        %9372 = vmatmul.bf16.gmra.mxu0 %v9170
        %v9373 = vpop.f32.mrf.mxu0
        %v9374 = vadd.f32 %v9325, %v9373
        %v9375 = vpop.f32.mrf.mxu0
        %v9376 = vadd.f32 %v9327, %v9375
        %9377 = vmatmul.bf16.gmra.mxu0 %v9172
        %v9378 = vpop.f32.mrf.mxu0
        %v9379 = vadd.f32 %v9330, %v9378
        %v9380 = vpop.f32.mrf.mxu0
        %v9381 = vadd.f32 %v9332, %v9380
        %9382 = vdwg.mxu0
        %v9383 = vadd.f32 %v8860, %v9344
        %v9384 = vadd.f32 %v8861, %v9346
        %v9385 = vadd.f32 %v8862, %v9349
        %v9386 = vadd.f32 %v8863, %v9351
        %v9387 = vadd.f32 %v8864, %v9354
        %v9388 = vadd.f32 %v8865, %v9356
        %v9389 = vadd.f32 %v8866, %v9359
        %v9390 = vadd.f32 %v8867, %v9361
        %v9391 = vadd.f32 %v8868, %v9364
        %v9392 = vadd.f32 %v8869, %v9366
        %v9393 = vadd.f32 %v8870, %v9369
        %v9394 = vadd.f32 %v8871, %v9371
        %v9395 = vadd.f32 %v8872, %v9374
        %v9396 = vadd.f32 %v8873, %v9376
        %v9397 = vadd.f32 %v8874, %v9379
        %v9398 = vadd.f32 %v8875, %v9381
        %v9400 = vperm.slane %v296, 0
        %v9402 = vmul.f32 %v9383, %v9400
        %v9403 = vmul.f32 %v9384, %v9400
        %v9404 = vmul.f32 %v9385, %v9400
        %v9405 = vmul.f32 %v9386, %v9400
        %v9406 = vmul.f32 %v9387, %v9400
        %v9407 = vmul.f32 %v9388, %v9400
        %v9408 = vmul.f32 %v9389, %v9400
        %v9409 = vmul.f32 %v9390, %v9400
        %v9410 = vmul.f32 %v9391, %v9400
        %v9411 = vmul.f32 %v9392, %v9400
        %v9412 = vmul.f32 %v9393, %v9400
        %v9413 = vmul.f32 %v9394, %v9400
        %v9414 = vmul.f32 %v9395, %v9400
        %v9415 = vmul.f32 %v9396, %v9400
        %v9416 = vmul.f32 %v9397, %v9400
        %v9417 = vmul.f32 %v9398, %v9400
        %v9419 = vperm.slane %v297, 0
        %v9421 = vadd.f32 %v9402, %v9419
        %v9422 = vadd.f32 %v9403, %v9419
        %v9423 = vadd.f32 %v9404, %v9419
        %v9424 = vadd.f32 %v9405, %v9419
        %v9425 = vadd.f32 %v9406, %v9419
        %v9426 = vadd.f32 %v9407, %v9419
        %v9427 = vadd.f32 %v9408, %v9419
        %v9428 = vadd.f32 %v9409, %v9419
        %v9429 = vadd.f32 %v9410, %v9419
        %v9430 = vadd.f32 %v9411, %v9419
        %v9431 = vadd.f32 %v9412, %v9419
        %v9432 = vadd.f32 %v9413, %v9419
        %v9433 = vadd.f32 %v9414, %v9419
        %v9434 = vadd.f32 %v9415, %v9419
        %v9435 = vadd.f32 %v9416, %v9419
        %v9436 = vadd.f32 %v9417, %v9419
        %9437 = vst [vmem:[%s285] sm:$0xff] %v9421
        %9438 = vst [vmem:[%s285 + $0x8] sm:$0xff] %v9422
        %9439 = vst [vmem:[%s285 + $0x10] sm:$0xff] %v9423
        %9440 = vst [vmem:[%s285 + $0x18] sm:$0xff] %v9424
        %9441 = vst [vmem:[%s285 + $0x20] sm:$0xff] %v9425
        %9442 = vst [vmem:[%s285 + $0x28] sm:$0xff] %v9426
        %9443 = vst [vmem:[%s285 + $0x30] sm:$0xff] %v9427
        %9444 = vst [vmem:[%s285 + $0x38] sm:$0xff] %v9428
        %9445 = vst [vmem:[%s285 + $0x40] sm:$0xff] %v9429
        %9446 = vst [vmem:[%s285 + $0x48] sm:$0xff] %v9430
        %9447 = vst [vmem:[%s285 + $0x50] sm:$0xff] %v9431
        %9448 = vst [vmem:[%s285 + $0x58] sm:$0xff] %v9432
        %9449 = vst [vmem:[%s285 + $0x60] sm:$0xff] %v9433
        %9450 = vst [vmem:[%s285 + $0x68] sm:$0xff] %v9434
        %9451 = vst [vmem:[%s285 + $0x70] sm:$0xff] %v9435
        %9452 = vst [vmem:[%s285 + $0x78] sm:$0xff] %v9436
        %s9453 = sand.u32 %s195, 1
        %s9454 = scalar_lea.sflag [#allocation4], %s9453
        %s9455 = sand.u32 %s195, 1
        %s9456 = smul.addr %s9455, 128
        %s9457 = scalar_lea.vmem [#allocation3], %s9456
        // Predicated region
        $region61: #{conv_block_forward.1} parent=47 // pred_check
          %p9458 = pneg %p205
        $region62: #{conv_block_forward.1} parent=47 // pred_check_branch
          %9460 = sbr.rel (%p9458) target = $region64
        $region63: #{conv_block_forward.1} parent=47 // pred_region
          %s9461 = smul.u32 8, %s26
          %9463 = vsyncadd %s9454, 0
          %s9464 = smul.addr %s9461, 2
          %s9465 = smul.addr %s25, 32
          %s9466 = sadd.s32 %s9464, %s9465
          %s9467 = smul.addr %s9466, 8
          %s9468 = scalar_lea.hbm %s7, %s9467
          %s9469 = sshll.u32 %s9457, 4
          %s9470 = int_to_ptr.vmem [resolvable:$true] %s9469
          %s9471 = sshll.u32 %s9468, 4
          %s9472 = int_to_ptr.hbm [resolvable:$true] %s9471
          %9477 = dma.vmem_to_hbm [thread:$0]  %s9470, 2048, %s9472, %s9454, 128, 128, 8
        $region64: #{conv_block_forward.1} parent=47 // pred_fallthru
          _
      $region48: #{conv_block_forward.1} parent=5 // pred_fallthru
        _
      %p9478 = scmp.le.s32.totalorder 2, %s16
      // Predicated region
      $region65: #{conv_block_forward.1} parent=5 // pred_check
        %p9479 = pneg %p9478
      $region66: #{conv_block_forward.1} parent=5 // pred_check_branch
        %9481 = sbr.rel (%p9479) target = $region68
      $region67: #{conv_block_forward.1} parent=5 // pred_region
        %s9482 = ssub.s32 %s16, 2
        // Predicated region
        $region69: #{conv_block_forward.1} parent=67 // pred_check
          %p9483 = pneg %p211
        $region70: #{conv_block_forward.1} parent=67 // pred_check_branch
          %9485 = sbr.rel (%p9483) target = $region72
        $region71: #{conv_block_forward.1} parent=67 // pred_region
          %s9486 = sand.u32 %s196, 1
          %s9487 = scalar_lea.sflag [#allocation4], %s9486
          %s9488 = sand.u32 %s196, 1
          %s9489 = smul.addr %s9488, 128
          %s9490 = scalar_lea.vmem [#allocation3], %s9489
          %9492 = dma.done %s9487, 2048
        $region72: #{conv_block_forward.1} parent=67 // pred_fallthru
          _
      $region68: #{conv_block_forward.1} parent=5 // pred_fallthru
        _
    $region6: #{conv_block_forward.1} parent=1 // loop_footer
      %s20 = sadd.s32 1, %s16
    $region7: #{conv_block_forward.1} parent=1 // loop_footer_branch
      %15 = sbr.rel target = $region3
    $region8: #{conv_block_forward.1} parent=1 // loop_exit
      _
    %9493 = vsyncpa [#allocation4], 1
    %s9494 = scalar_lea.sflag [#allocation4], 1
    %9495 = vsyncpa %s9494, 1

</llo_original>
